<compile_context>
chip_gen: v6e
topology: v6e:2x2x1
jax: 0.10.0
libtpu: 0.0.40
codegen_flags: <defaults>
</compile_context>

<pallas_src>
import jax
import jax.numpy as jnp
from jax import lax
from jax.experimental import pallas as pl
from jax.experimental.pallas import tpu as pltpu

BN_EPS = 1e-3


def _cdiv(a, b):
    return -(-a // b)


def _round_up(a, m):
    return _cdiv(a, m) * m


# ---------------------------------------------------------------------------
# Kernel 1: fused pointwise conv  --  o = relu(x @ w + b)
# ---------------------------------------------------------------------------

def _matmul_bias_relu_kernel(x_ref, w_ref, b_ref, o_ref):
    acc = jnp.dot(x_ref[...], w_ref[...], preferred_element_type=jnp.float32)
    o_ref[...] = jnp.maximum(acc + b_ref[...], 0.0).astype(o_ref.dtype)


def fused_matmul_bias_relu(x, w, bias, *, out_dtype=jnp.bfloat16, tm_max=1024):
    """x:(N,K) bf16 @ w:(K,Cout) bf16, + bias(1,Cout) f32, ReLU."""
    n, k = x.shape
    cout = w.shape[1]
    # Big lane-dense row tiles, but keep >=2 grid steps when possible (v7x).
    tm = min(tm_max, max(256, _round_up(_cdiv(n, 2), 8)))
    n_pad = _round_up(n, tm)
    if n_pad != n:
        x = jnp.pad(x, ((0, n_pad - n), (0, 0)))
    out = pl.pallas_call(
        _matmul_bias_relu_kernel,
        out_shape=jax.ShapeDtypeStruct((n_pad, cout), out_dtype),
        grid_spec=pltpu.PrefetchScalarGridSpec(
            num_scalar_prefetch=0,
            grid=(n_pad // tm,),
            in_specs=[
                pl.BlockSpec((tm, k), lambda i: (i, 0)),       # activations
                pl.BlockSpec((k, cout), lambda i: (0, 0)),     # folded weights
                pl.BlockSpec((1, cout), lambda i: (0, 0)),     # folded bias
            ],
            out_specs=pl.BlockSpec((tm, cout), lambda i: (i, 0)),
        ),
        compiler_params=pltpu.CompilerParams(dimension_semantics=("parallel",)),
    )(x, w, bias)
    return out[:n]


# ---------------------------------------------------------------------------
# Kernel 2: (1,3,3) spatial conv + BN + ReLU via 9 in-kernel shifted matmuls
# ---------------------------------------------------------------------------

def _spatial_conv_kernel(x_ref, w_ref, b_ref, o_ref):
    # x_ref: (1, TT, H+2, W+2, Cin) bf16, zero-padded spatially.
    # w_ref: (9, Cin, Cout) bf16 (BN scale folded); b_ref: (1, Cout) f32.
    tt, h, w, cout = o_ref.shape[1], o_ref.shape[2], o_ref.shape[3], o_ref.shape[4]
    cin = x_ref.shape[4]
    x = x_ref[0]
    acc = jnp.zeros((tt * h * w, cout), jnp.float32)
    for dh in range(3):
        for dw in range(3):
            tap = x[:, dh:dh + h, dw:dw + w, :].reshape(tt * h * w, cin)
            acc = acc + jnp.dot(tap, w_ref[dh * 3 + dw],
                                preferred_element_type=jnp.float32)
    y = jnp.maximum(acc + b_ref[...], 0.0)
    o_ref[0] = y.reshape(tt, h, w, cout).astype(o_ref.dtype)


def spatial_conv3x3(y, w_k, bias, *, rows_target=1024):
    """(1,3,3) conv, padding (0,1,1), on channels-last (B,T,H,W,Cin) bf16."""
    b, t, h, w, cin = y.shape
    cout = w_k.shape[-1]
    tt = max(1, min(t, rows_target // (h * w)))
    t_pad = _round_up(t, tt)
    yp = jnp.pad(y, ((0, 0), (0, t_pad - t), (1, 1), (1, 1), (0, 0)))
    out = pl.pallas_call(
        _spatial_conv_kernel,
        out_shape=jax.ShapeDtypeStruct((b, t_pad, h, w, cout), jnp.bfloat16),
        grid_spec=pltpu.PrefetchScalarGridSpec(
            num_scalar_prefetch=0,
            grid=(b, t_pad // tt),
            in_specs=[
                pl.BlockSpec((1, tt, h + 2, w + 2, cin),
                             lambda i, j: (i, j, 0, 0, 0)),
                pl.BlockSpec((3 * 3, cin, cout), lambda i, j: (0, 0, 0)),
                pl.BlockSpec((1, cout), lambda i, j: (0, 0)),
            ],
            out_specs=pl.BlockSpec((1, tt, h, w, cout),
                                   lambda i, j: (i, j, 0, 0, 0)),
        ),
        compiler_params=pltpu.CompilerParams(
            dimension_semantics=("parallel", "parallel")),
    )(yp, w_k, bias)
    return out[:, :t]


# ---------------------------------------------------------------------------
# Kernel 3: (3,1,1) temporal conv + BN + ReLU via 3 in-kernel shifted matmuls
# ---------------------------------------------------------------------------

def _temporal_conv_kernel(x_ref, w_ref, b_ref, o_ref):
    # x_ref: (1, T+2, H, W, Cin) bf16 zero-padded in T.
    # w_ref: (3, Cin, Cout) bf16 (BN scale folded); b_ref: (1, Cout) f32.
    t, h, w, cout = o_ref.shape[1], o_ref.shape[2], o_ref.shape[3], o_ref.shape[4]
    cin = x_ref.shape[4]
    x = x_ref[0]
    acc = jnp.zeros((t * h * w, cout), jnp.float32)
    for dt in range(3):
        tap = x[dt:dt + t].reshape(t * h * w, cin)
        acc = acc + jnp.dot(tap, w_ref[dt], preferred_element_type=jnp.float32)
    y = jnp.maximum(acc + b_ref[...], 0.0)
    o_ref[0] = y.reshape(t, h, w, cout).astype(o_ref.dtype)


def temporal_conv3(y, w_k, bias):
    """(3,1,1) conv, padding (1,0,0), on channels-last (B,T,H,W,Cin) bf16."""
    b, t, h, w, cin = y.shape
    cout = w_k.shape[-1]
    yp = jnp.pad(y, ((0, 0), (1, 1), (0, 0), (0, 0), (0, 0)))
    return pl.pallas_call(
        _temporal_conv_kernel,
        out_shape=jax.ShapeDtypeStruct((b, t, h, w, cout), jnp.float32),
        grid_spec=pltpu.PrefetchScalarGridSpec(
            num_scalar_prefetch=0,
            grid=(b,),
            in_specs=[
                pl.BlockSpec((1, t + 2, h, w, cin), lambda i: (i, 0, 0, 0, 0)),
                pl.BlockSpec((3, cin, cout), lambda i: (0, 0, 0)),
                pl.BlockSpec((1, cout), lambda i: (0, 0)),
            ],
            out_specs=pl.BlockSpec((1, t, h, w, cout), lambda i: (i, 0, 0, 0, 0)),
        ),
        compiler_params=pltpu.CompilerParams(dimension_semantics=("parallel",)),
    )(yp, w_k, bias)


# ---------------------------------------------------------------------------
# Kernel 4: MaxPool3d(3,1,1) fused with branch3's 1x1x1 conv + BN + ReLU
# ---------------------------------------------------------------------------

def _pool_conv_kernel(x_ref, w_ref, b_ref, o_ref):
    # x_ref: (1, T+2, H+2, W+2, C) bf16 padded with a large negative value.
    # w_ref: (C, Cout) bf16 (BN scale folded); b_ref: (1, Cout) f32.
    t, h, w, cout = o_ref.shape[1], o_ref.shape[2], o_ref.shape[3], o_ref.shape[4]
    c = x_ref.shape[4]
    x = x_ref[0]
    # Separable 3x3x3 max: T taps, then W taps, then H taps.
    mt = jnp.maximum(jnp.maximum(x[0:t], x[1:t + 1]), x[2:t + 2])
    mw = jnp.maximum(jnp.maximum(mt[:, :, 0:w], mt[:, :, 1:w + 1]),
                     mt[:, :, 2:w + 2])
    mh = jnp.maximum(jnp.maximum(mw[:, 0:h], mw[:, 1:h + 1]), mw[:, 2:h + 2])
    acc = jnp.dot(mh.reshape(t * h * w, c), w_ref[...],
                  preferred_element_type=jnp.float32)
    y = jnp.maximum(acc + b_ref[...], 0.0)
    o_ref[0] = y.reshape(t, h, w, cout).astype(o_ref.dtype)


def pool_conv(x_cl, p):
    """MaxPool3d(3,1,1,pad=1) + BasicConv3d(192->32) fused; x_cl bf16 NTHWC."""
    b, t, h, w, c = x_cl.shape
    cout = p["w"].shape[0]
    w2d, bias = _fold_bn_into_weights(p["w"].reshape(cout, c).T, p["bn"])
    neg = float(jnp.finfo(jnp.bfloat16).min)
    xp = jnp.pad(x_cl, ((0, 0), (1, 1), (1, 1), (1, 1), (0, 0)),
                 constant_values=neg)
    return pl.pallas_call(
        _pool_conv_kernel,
        out_shape=jax.ShapeDtypeStruct((b, t, h, w, cout), jnp.float32),
        grid_spec=pltpu.PrefetchScalarGridSpec(
            num_scalar_prefetch=0,
            grid=(b,),
            in_specs=[
                pl.BlockSpec((1, t + 2, h + 2, w + 2, c),
                             lambda i: (i, 0, 0, 0, 0)),
                pl.BlockSpec((c, cout), lambda i: (0, 0)),
                pl.BlockSpec((1, cout), lambda i: (0, 0)),
            ],
            out_specs=pl.BlockSpec((1, t, h, w, cout), lambda i: (i, 0, 0, 0, 0)),
        ),
        compiler_params=pltpu.CompilerParams(dimension_semantics=("parallel",)),
    )(xp, w2d, bias)


# ---------------------------------------------------------------------------
# Wrapper glue: BN folding, branch assembly
# ---------------------------------------------------------------------------

def _fold_bn_into_weights(w, bn, conv_bias=None):
    """Fold inference-mode BN (+ optional conv bias) into weights/bias.

    w has Cout as its LAST axis; returns (bf16 scaled weights, f32 (1,Cout) bias).
    """
    inv = bn["gamma"] / jnp.sqrt(bn["var"] + BN_EPS)              # (Cout,)
    cb = jnp.zeros_like(bn["mean"]) if conv_bias is None else conv_bias
    w_f = (w.astype(jnp.float32) * inv).astype(jnp.bfloat16)
    b_f = ((cb - bn["mean"]) * inv + bn["beta"]).astype(jnp.float32)
    return w_f, b_f.reshape(1, -1)


def _stconv(x_cl, p):
    """STConv3d: (1,3,3) conv+BN+ReLU then (3,1,1) conv+BN+ReLU (bf16 in)."""
    cout, cin = p["w1"].shape[:2]
    w_sp = jnp.transpose(p["w1"][:, :, 0], (2, 3, 1, 0)).reshape(9, cin, cout)
    w_sp, b_sp = _fold_bn_into_weights(w_sp, p["bn1"], p["b1"])
    y = spatial_conv3x3(x_cl, w_sp, b_sp)                         # bf16
    cout2, cin2 = p["w2"].shape[:2]
    w_t = jnp.transpose(p["w2"][:, :, :, 0, 0], (2, 1, 0))        # (3,Cin,Cout)
    w_t, b_t = _fold_bn_into_weights(w_t, p["bn2"], p["b2"])
    return temporal_conv3(y, w_t, b_t)                            # f32


def mixed_3b_forward(x, params):
    """Mixed_3b forward.  x: (B, 192, T, H, W) NCTHW float32."""
    assert x.shape[1] == 192, x.shape
    b, _, t, h, w = x.shape
    x_cl = jnp.transpose(x, (0, 2, 3, 4, 1)).astype(jnp.bfloat16)  # (B,T,H,W,192)

    # Fused stem: b0(64) + b1a(96) + b2a(16) 1x1x1 convs in one 192->176 matmul.
    w0, bias0 = _fold_bn_into_weights(
        params["b0"]["w"].reshape(64, 192).T, params["b0"]["bn"])
    w1a, bias1a = _fold_bn_into_weights(
        params["b1a"]["w"].reshape(96, 192).T, params["b1a"]["bn"])
    w2a, bias2a = _fold_bn_into_weights(
        params["b2a"]["w"].reshape(16, 192).T, params["b2a"]["bn"])
    w_stem = jnp.concatenate([w0, w1a, w2a], axis=1)               # (192,176)
    b_stem = jnp.concatenate([bias0, bias1a, bias2a], axis=1)      # (1,176)
    stem = fused_matmul_bias_relu(x_cl.reshape(-1, 192), w_stem, b_stem)
    stem = stem.reshape(b, t, h, w, 176)

    y0 = stem[..., 0:64]                                           # branch0 out
    y1 = _stconv(stem[..., 64:160], params["b1b"])                 # (..,128) f32
    y2 = _stconv(stem[..., 160:176], params["b2b"])                # (.., 32) f32
    y3 = pool_conv(x_cl, params["b3"])                             # (.., 32) f32

    out = jnp.concatenate([y0.astype(jnp.float32), y1, y2, y3], axis=-1)
    return jnp.transpose(out, (0, 4, 1, 2, 3))                     # (B,256,T,H,W)


# ---------------------------------------------------------------------------
# Parameter init (deterministic) and pure-JAX f32 reference for verification
# ---------------------------------------------------------------------------

def init_params(key):
    keys = iter(jax.random.split(key, 64))

    def conv_w(cout, cin, kt, kh, kw):
        fan_in = cin * kt * kh * kw
        return (jax.random.normal(next(keys), (cout, cin, kt, kh, kw), jnp.float32)
                / jnp.sqrt(fan_in))

    def bn(c):
        return dict(
            gamma=0.5 + jax.random.uniform(next(keys), (c,), jnp.float32),
            beta=0.1 * jax.random.normal(next(keys), (c,), jnp.float32),
            mean=0.1 * jax.random.normal(next(keys), (c,), jnp.float32),
            var=0.5 + jax.random.uniform(next(keys), (c,), jnp.float32),
        )

    def basic(cin, cout):
        return dict(w=conv_w(cout, cin, 1, 1, 1), bn=bn(cout))

    def stconv(cin, cout):
        return dict(
            w1=conv_w(cout, cin, 1, 3, 3),
            b1=0.1 * jax.random.normal(next(keys), (cout,), jnp.float32),
            bn1=bn(cout),
            w2=conv_w(cout, cout, 3, 1, 1),
            b2=0.1 * jax.random.normal(next(keys), (cout,), jnp.float32),
            bn2=bn(cout),
        )

    return dict(
        b0=basic(192, 64),
        b1a=basic(192, 96), b1b=stconv(96, 128),
        b2a=basic(192, 16), b2b=stconv(16, 32),
        b3=basic(192, 32),
    )


def _conv3d_ref(x, w, b, padding):
    dn = lax.conv_dimension_numbers(x.shape, w.shape, ("NCDHW", "OIDHW", "NCDHW"))
    y = lax.conv_general_dilated(x, w, window_strides=(1, 1, 1), padding=padding,
                                 dimension_numbers=dn,
                                 precision=lax.Precision.HIGHEST)
    if b is not None:
        y = y + b.reshape(1, -1, 1, 1, 1)
    return y


def _bn_relu_ref(x, bn):
    inv = (bn["gamma"] / jnp.sqrt(bn["var"] + BN_EPS)).reshape(1, -1, 1, 1, 1)
    y = (x - bn["mean"].reshape(1, -1, 1, 1, 1)) * inv + bn["beta"].reshape(1, -1, 1, 1, 1)
    return jnp.maximum(y, 0.0)


def _basic_ref(x, p):
    return _bn_relu_ref(_conv3d_ref(x, p["w"], None, [(0, 0)] * 3), p["bn"])


def _stconv_ref(x, p):
    y = _bn_relu_ref(_conv3d_ref(x, p["w1"], p["b1"], [(0, 0), (1, 1), (1, 1)]), p["bn1"])
    return _bn_relu_ref(_conv3d_ref(y, p["w2"], p["b2"], [(1, 1), (0, 0), (0, 0)]), p["bn2"])


def mixed_3b_reference(x, params):
    x0 = _basic_ref(x, params["b0"])
    x1 = _stconv_ref(_basic_ref(x, params["b1a"]), params["b1b"])
    x2 = _stconv_ref(_basic_ref(x, params["b2a"]), params["b2b"])
    xp = lax.reduce_window(x, -jnp.inf, lax.max, (1, 1, 3, 3, 3), (1, 1, 1, 1, 1),
                           padding=((0, 0), (0, 0), (1, 1), (1, 1), (1, 1)))
    x3 = _basic_ref(xp, params["b3"])
    return jnp.concatenate([x0, x1, x2, x3], axis=1)


# ---------------------------------------------------------------------------

if __name__ == "__main__":
    # Small shapes consistent with the module: 192 input channels (required),
    # B=2, T=4, H=W=8  ->  output (2, 256, 4, 8, 8).
    B, C, T, H, W = 2, 192, 4, 8, 8

    key = jax.random.PRNGKey(0)
    k_x, k_p = jax.random.split(key)
    x = jax.random.normal(k_x, (B, C, T, H, W), dtype=jnp.float32)
    params = init_params(k_p)

    y = jax.block_until_ready(jax.jit(mixed_3b_forward)(x, params))
    assert y.shape == (B, 256, T, H, W), y.shape

    ref = jax.block_until_ready(mixed_3b_reference(x, params))
    err = jnp.abs(y - ref)
    max_err = float(jnp.max(err))
    mean_err = float(jnp.mean(err))
    # bf16 matmul inputs / activations -> slightly looser atol than pure f32.
    assert jnp.allclose(y, ref, rtol=2e-2, atol=5e-2), (
        f"mismatch: max abs err={max_err}, mean abs err={mean_err}")
    assert mean_err < 1e-2, f"mean abs err too large: {mean_err}"

    print("KERNEL_OK")
</pallas_src>

<mosaic_0001>
module attributes {stable_mosaic.version = 11 : i64} {
  func.func @_pool_conv_kernel(%arg0: i32, %arg1: memref<1x6x10x10x192xbf16, #tpu.memory_space<vmem>>, %arg2: memref<192x32xbf16, #tpu.memory_space<vmem>>, %arg3: memref<1x32xf32, #tpu.memory_space<vmem>>, %arg4: memref<1x4x8x8x32xf32, #tpu.memory_space<vmem>>) attributes {dimension_semantics = [#tpu.dimension_semantics<parallel>], iteration_bounds = array<i64: 2>, scalar_prefetch = 0 : i64, scratch_operands = 0 : i64, tpu.core_type = #tpu.core_type<tc>, window_params = [{transform_indices = @transform_0, window_bounds = array<i64: 1, 6, 10, 10, 192>}, {pipeline_mode = #tpu.pipeline_mode<synchronous>, transform_indices = @transform_1, window_bounds = array<i64: 192, 32>}, {pipeline_mode = #tpu.pipeline_mode<synchronous>, transform_indices = @transform_2, window_bounds = array<i64: 1, 32>}, {transform_indices = @transform_3, window_bounds = array<i64: 1, 4, 8, 8, 32>}]} {
    %c0 = arith.constant 0 : index
    %c0_0 = arith.constant 0 : index
    %c0_1 = arith.constant 0 : index
    %c0_2 = arith.constant 0 : index
    %c0_3 = arith.constant 0 : index
    %0 = vector.load %arg1[%c0, %c0_0, %c0_1, %c0_2, %c0_3] : memref<1x6x10x10x192xbf16, #tpu.memory_space<vmem>>, vector<1x6x10x10x192xbf16>
    %1 = vector.shape_cast %0 : vector<1x6x10x10x192xbf16> to vector<6x10x10x192xbf16>
    %2 = vector.extract_strided_slice %1 {offsets = [0, 0, 0, 0], sizes = [4, 10, 10, 192], strides = [1, 1, 1, 1]} : vector<6x10x10x192xbf16> to vector<4x10x10x192xbf16>
    %3 = vector.extract_strided_slice %1 {offsets = [1, 0, 0, 0], sizes = [4, 10, 10, 192], strides = [1, 1, 1, 1]} : vector<6x10x10x192xbf16> to vector<4x10x10x192xbf16>
    %4 = arith.maximumf %2, %3 : vector<4x10x10x192xbf16>
    %5 = vector.extract_strided_slice %1 {offsets = [2, 0, 0, 0], sizes = [4, 10, 10, 192], strides = [1, 1, 1, 1]} : vector<6x10x10x192xbf16> to vector<4x10x10x192xbf16>
    %6 = arith.maximumf %4, %5 : vector<4x10x10x192xbf16>
    %7 = vector.extract_strided_slice %6 {offsets = [0, 0, 0, 0], sizes = [4, 10, 8, 192], strides = [1, 1, 1, 1]} : vector<4x10x10x192xbf16> to vector<4x10x8x192xbf16>
    %8 = vector.extract_strided_slice %6 {offsets = [0, 0, 1, 0], sizes = [4, 10, 8, 192], strides = [1, 1, 1, 1]} : vector<4x10x10x192xbf16> to vector<4x10x8x192xbf16>
    %9 = arith.maximumf %7, %8 : vector<4x10x8x192xbf16>
    %10 = vector.extract_strided_slice %6 {offsets = [0, 0, 2, 0], sizes = [4, 10, 8, 192], strides = [1, 1, 1, 1]} : vector<4x10x10x192xbf16> to vector<4x10x8x192xbf16>
    %11 = arith.maximumf %9, %10 : vector<4x10x8x192xbf16>
    %12 = vector.extract_strided_slice %11 {offsets = [0, 0, 0, 0], sizes = [4, 8, 8, 192], strides = [1, 1, 1, 1]} : vector<4x10x8x192xbf16> to vector<4x8x8x192xbf16>
    %13 = vector.extract_strided_slice %11 {offsets = [0, 1, 0, 0], sizes = [4, 8, 8, 192], strides = [1, 1, 1, 1]} : vector<4x10x8x192xbf16> to vector<4x8x8x192xbf16>
    %14 = arith.maximumf %12, %13 : vector<4x8x8x192xbf16>
    %15 = vector.extract_strided_slice %11 {offsets = [0, 2, 0, 0], sizes = [4, 8, 8, 192], strides = [1, 1, 1, 1]} : vector<4x10x8x192xbf16> to vector<4x8x8x192xbf16>
    %16 = arith.maximumf %14, %15 : vector<4x8x8x192xbf16>
    %17 = vector.shape_cast %16 : vector<4x8x8x192xbf16> to vector<256x192xbf16>
    %c0_4 = arith.constant 0 : index
    %c0_5 = arith.constant 0 : index
    %18 = vector.load %arg2[%c0_4, %c0_5] : memref<192x32xbf16, #tpu.memory_space<vmem>>, vector<192x32xbf16>
    %cst = arith.constant dense<0.000000e+00> : vector<256x32xf32>
    %19 = tpu.matmul %17, %18, %cst {dimension_numbers = #tpu.dot_dimension_numbers<[1], [0], [0], [1], [0, 0, 1, 1], [], []>} : vector<256x192xbf16>, vector<192x32xbf16>, vector<256x32xf32> -> vector<256x32xf32>
    %c0_6 = arith.constant 0 : index
    %c0_7 = arith.constant 0 : index
    %20 = vector.load %arg3[%c0_6, %c0_7] : memref<1x32xf32, #tpu.memory_space<vmem>>, vector<1x32xf32>
    %21 = vector.broadcast %20 : vector<1x32xf32> to vector<256x32xf32>
    %22 = arith.addf %19, %21 : vector<256x32xf32>
    %cst_8 = arith.constant 0.000000e+00 : f32
    %23 = vector.broadcast %cst_8 : f32 to vector<256x32xf32>
    %24 = arith.maximumf %22, %23 : vector<256x32xf32>
    %25 = vector.shape_cast %24 : vector<256x32xf32> to vector<4x8x8x32xf32>
    %c0_9 = arith.constant 0 : index
    %c0_10 = arith.constant 0 : index
    %c0_11 = arith.constant 0 : index
    %c0_12 = arith.constant 0 : index
    %c0_13 = arith.constant 0 : index
    %26 = vector.load %arg4[%c0_9, %c0_10, %c0_11, %c0_12, %c0_13] : memref<1x4x8x8x32xf32, #tpu.memory_space<vmem>>, vector<1x4x8x8x32xf32>
    %27 = vector.shape_cast %26 : vector<1x4x8x8x32xf32> to vector<4x8x8x32xf32>
    %28 = vector.shape_cast %25 : vector<4x8x8x32xf32> to vector<1x4x8x8x32xf32>
    tpu.vector_store %arg4[%c0_9, %c0_10, %c0_11, %c0_12, %c0_13], %28 {strides = array<i32>} : memref<1x4x8x8x32xf32, #tpu.memory_space<vmem>>, vector<1x4x8x8x32xf32>,
    return
  }
  func.func @transform_0(%arg0: i32) -> (i32, i32, i32, i32, i32) {
    %c0_i32 = arith.constant 0 : i32
    %c0_i32_0 = arith.constant 0 : i32
    %c0_i32_1 = arith.constant 0 : i32
    %c0_i32_2 = arith.constant 0 : i32
    %c0_i32_3 = arith.constant 0 : i32
    return %arg0, %c0_i32, %c0_i32_0, %c0_i32_1, %c0_i32_2 : i32, i32, i32, i32, i32
  }
  func.func @transform_1(%arg0: i32) -> (i32, i32) {
    %c0_i32 = arith.constant 0 : i32
    %c0_i32_0 = arith.constant 0 : i32
    %c0_i32_1 = arith.constant 0 : i32
    return %c0_i32, %c0_i32_0 : i32, i32
  }
  func.func @transform_2(%arg0: i32) -> (i32, i32) {
    %c0_i32 = arith.constant 0 : i32
    %c0_i32_0 = arith.constant 0 : i32
    %c0_i32_1 = arith.constant 0 : i32
    return %c0_i32, %c0_i32_0 : i32, i32
  }
  func.func @transform_3(%arg0: i32) -> (i32, i32, i32, i32, i32) {
    %c0_i32 = arith.constant 0 : i32
    %c0_i32_0 = arith.constant 0 : i32
    %c0_i32_1 = arith.constant 0 : i32
    %c0_i32_2 = arith.constant 0 : i32
    %c0_i32_3 = arith.constant 0 : i32
    return %arg0, %c0_i32, %c0_i32_0, %c0_i32_1, %c0_i32_2 : i32, i32, i32, i32, i32
  }
}

module attributes {stable_mosaic.version = 11 : i64} {
  func.func @_matmul_bias_relu_kernel(%arg0: i32, %arg1: memref<256x192xbf16, #tpu.memory_space<vmem>>, %arg2: memref<192x176xbf16, #tpu.memory_space<vmem>>, %arg3: memref<1x176xf32, #tpu.memory_space<vmem>>, %arg4: memref<256x176xbf16, #tpu.memory_space<vmem>>) attributes {dimension_semantics = [#tpu.dimension_semantics<parallel>], iteration_bounds = array<i64: 2>, scalar_prefetch = 0 : i64, scratch_operands = 0 : i64, tpu.core_type = #tpu.core_type<tc>, window_params = [{transform_indices = @transform_0, window_bounds = array<i64: 256, 192>}, {pipeline_mode = #tpu.pipeline_mode<synchronous>, transform_indices = @transform_1, window_bounds = array<i64: 192, 176>}, {pipeline_mode = #tpu.pipeline_mode<synchronous>, transform_indices = @transform_2, window_bounds = array<i64: 1, 176>}, {transform_indices = @transform_3, window_bounds = array<i64: 256, 176>}]} {
    %c0 = arith.constant 0 : index
    %c0_0 = arith.constant 0 : index
    %0 = vector.load %arg1[%c0, %c0_0] : memref<256x192xbf16, #tpu.memory_space<vmem>>, vector<256x192xbf16>
    %c0_1 = arith.constant 0 : index
    %c0_2 = arith.constant 0 : index
    %1 = vector.load %arg2[%c0_1, %c0_2] : memref<192x176xbf16, #tpu.memory_space<vmem>>, vector<192x176xbf16>
    %cst = arith.constant dense<0.000000e+00> : vector<256x176xf32>
    %2 = tpu.matmul %0, %1, %cst {dimension_numbers = #tpu.dot_dimension_numbers<[1], [0], [0], [1], [0, 0, 1, 1], [], []>} : vector<256x192xbf16>, vector<192x176xbf16>, vector<256x176xf32> -> vector<256x176xf32>
    %c0_3 = arith.constant 0 : index
    %c0_4 = arith.constant 0 : index
    %3 = vector.load %arg3[%c0_3, %c0_4] : memref<1x176xf32, #tpu.memory_space<vmem>>, vector<1x176xf32>
    %4 = vector.broadcast %3 : vector<1x176xf32> to vector<256x176xf32>
    %5 = arith.addf %2, %4 : vector<256x176xf32>
    %cst_5 = arith.constant 0.000000e+00 : f32
    %6 = vector.broadcast %cst_5 : f32 to vector<256x176xf32>
    %7 = arith.maximumf %5, %6 : vector<256x176xf32>
    %8 = arith.truncf %7 : vector<256x176xf32> to vector<256x176xbf16>
    %c0_6 = arith.constant 0 : index
    %c0_7 = arith.constant 0 : index
    %9 = vector.load %arg4[%c0_6, %c0_7] : memref<256x176xbf16, #tpu.memory_space<vmem>>, vector<256x176xbf16>
    tpu.vector_store %arg4[%c0_6, %c0_7], %8 {strides = array<i32>} : memref<256x176xbf16, #tpu.memory_space<vmem>>, vector<256x176xbf16>,
    return
  }
  func.func @transform_0(%arg0: i32) -> (i32, i32) {
    %c0_i32 = arith.constant 0 : i32
    %c0_i32_0 = arith.constant 0 : i32
    return %arg0, %c0_i32 : i32, i32
  }
  func.func @transform_1(%arg0: i32) -> (i32, i32) {
    %c0_i32 = arith.constant 0 : i32
    %c0_i32_0 = arith.constant 0 : i32
    %c0_i32_1 = arith.constant 0 : i32
    return %c0_i32, %c0_i32_0 : i32, i32
  }
  func.func @transform_2(%arg0: i32) -> (i32, i32) {
    %c0_i32 = arith.constant 0 : i32
    %c0_i32_0 = arith.constant 0 : i32
    %c0_i32_1 = arith.constant 0 : i32
    return %c0_i32, %c0_i32_0 : i32, i32
  }
  func.func @transform_3(%arg0: i32) -> (i32, i32) {
    %c0_i32 = arith.constant 0 : i32
    %c0_i32_0 = arith.constant 0 : i32
    return %arg0, %c0_i32 : i32, i32
  }
}

module attributes {stable_mosaic.version = 11 : i64} {
  func.func @_spatial_conv_kernel(%arg0: i32, %arg1: i32, %arg2: memref<1x4x10x10x16xbf16, #tpu.memory_space<vmem>>, %arg3: memref<9x16x32xbf16, #tpu.memory_space<vmem>>, %arg4: memref<1x32xf32, #tpu.memory_space<vmem>>, %arg5: memref<1x4x8x8x32xbf16, #tpu.memory_space<vmem>>) attributes {dimension_semantics = [#tpu.dimension_semantics<parallel>, #tpu.dimension_semantics<parallel>], iteration_bounds = array<i64: 2, 1>, scalar_prefetch = 0 : i64, scratch_operands = 0 : i64, tpu.core_type = #tpu.core_type<tc>, window_params = [{transform_indices = @transform_0, window_bounds = array<i64: 1, 4, 10, 10, 16>}, {pipeline_mode = #tpu.pipeline_mode<synchronous>, transform_indices = @transform_1, window_bounds = array<i64: 9, 16, 32>}, {pipeline_mode = #tpu.pipeline_mode<synchronous>, transform_indices = @transform_2, window_bounds = array<i64: 1, 32>}, {transform_indices = @transform_3, window_bounds = array<i64: 1, 4, 8, 8, 32>}]} {
    %c0 = arith.constant 0 : index
    %c0_0 = arith.constant 0 : index
    %c0_1 = arith.constant 0 : index
    %c0_2 = arith.constant 0 : index
    %c0_3 = arith.constant 0 : index
    %0 = vector.load %arg2[%c0, %c0_0, %c0_1, %c0_2, %c0_3] : memref<1x4x10x10x16xbf16, #tpu.memory_space<vmem>>, vector<1x4x10x10x16xbf16>
    %1 = vector.shape_cast %0 : vector<1x4x10x10x16xbf16> to vector<4x10x10x16xbf16>
    %cst = arith.constant 0.000000e+00 : f32
    %2 = vector.broadcast %cst : f32 to vector<256x32xf32>
    %3 = vector.extract_strided_slice %1 {offsets = [0, 0, 0, 0], sizes = [4, 8, 8, 16], strides = [1, 1, 1, 1]} : vector<4x10x10x16xbf16> to vector<4x8x8x16xbf16>
    %4 = vector.shape_cast %3 : vector<4x8x8x16xbf16> to vector<256x16xbf16>
    %c0_4 = arith.constant 0 : index
    %c0_5 = arith.constant 0 : index
    %c0_6 = arith.constant 0 : index
    %5 = vector.load %arg3[%c0_4, %c0_5, %c0_6] : memref<9x16x32xbf16, #tpu.memory_space<vmem>>, vector<1x16x32xbf16>
    %6 = vector.shape_cast %5 : vector<1x16x32xbf16> to vector<16x32xbf16>
    %cst_7 = arith.constant dense<0.000000e+00> : vector<256x32xf32>
    %7 = tpu.matmul %4, %6, %cst_7 {dimension_numbers = #tpu.dot_dimension_numbers<[1], [0], [0], [1], [0, 0, 1, 1], [], []>} : vector<256x16xbf16>, vector<16x32xbf16>, vector<256x32xf32> -> vector<256x32xf32>
    %8 = arith.addf %2, %7 : vector<256x32xf32>
    %9 = vector.extract_strided_slice %1 {offsets = [0, 0, 1, 0], sizes = [4, 8, 8, 16], strides = [1, 1, 1, 1]} : vector<4x10x10x16xbf16> to vector<4x8x8x16xbf16>
    %10 = vector.shape_cast %9 : vector<4x8x8x16xbf16> to vector<256x16xbf16>
    %c1 = arith.constant 1 : index
    %c0_8 = arith.constant 0 : index
    %c0_9 = arith.constant 0 : index
    %11 = vector.load %arg3[%c1, %c0_8, %c0_9] : memref<9x16x32xbf16, #tpu.memory_space<vmem>>, vector<1x16x32xbf16>
    %12 = vector.shape_cast %11 : vector<1x16x32xbf16> to vector<16x32xbf16>
    %cst_10 = arith.constant dense<0.000000e+00> : vector<256x32xf32>
    %13 = tpu.matmul %10, %12, %cst_10 {dimension_numbers = #tpu.dot_dimension_numbers<[1], [0], [0], [1], [0, 0, 1, 1], [], []>} : vector<256x16xbf16>, vector<16x32xbf16>, vector<256x32xf32> -> vector<256x32xf32>
    %14 = arith.addf %8, %13 : vector<256x32xf32>
    %15 = vector.extract_strided_slice %1 {offsets = [0, 0, 2, 0], sizes = [4, 8, 8, 16], strides = [1, 1, 1, 1]} : vector<4x10x10x16xbf16> to vector<4x8x8x16xbf16>
    %16 = vector.shape_cast %15 : vector<4x8x8x16xbf16> to vector<256x16xbf16>
    %c2 = arith.constant 2 : index
    %c0_11 = arith.constant 0 : index
    %c0_12 = arith.constant 0 : index
    %17 = vector.load %arg3[%c2, %c0_11, %c0_12] : memref<9x16x32xbf16, #tpu.memory_space<vmem>>, vector<1x16x32xbf16>
    %18 = vector.shape_cast %17 : vector<1x16x32xbf16> to vector<16x32xbf16>
    %cst_13 = arith.constant dense<0.000000e+00> : vector<256x32xf32>
    %19 = tpu.matmul %16, %18, %cst_13 {dimension_numbers = #tpu.dot_dimension_numbers<[1], [0], [0], [1], [0, 0, 1, 1], [], []>} : vector<256x16xbf16>, vector<16x32xbf16>, vector<256x32xf32> -> vector<256x32xf32>
    %20 = arith.addf %14, %19 : vector<256x32xf32>
    %21 = vector.extract_strided_slice %1 {offsets = [0, 1, 0, 0], sizes = [4, 8, 8, 16], strides = [1, 1, 1, 1]} : vector<4x10x10x16xbf16> to vector<4x8x8x16xbf16>
    %22 = vector.shape_cast %21 : vector<4x8x8x16xbf16> to vector<256x16xbf16>
    %c3 = arith.constant 3 : index
    %c0_14 = arith.constant 0 : index
    %c0_15 = arith.constant 0 : index
    %23 = vector.load %arg3[%c3, %c0_14, %c0_15] : memref<9x16x32xbf16, #tpu.memory_space<vmem>>, vector<1x16x32xbf16>
    %24 = vector.shape_cast %23 : vector<1x16x32xbf16> to vector<16x32xbf16>
    %cst_16 = arith.constant dense<0.000000e+00> : vector<256x32xf32>
    %25 = tpu.matmul %22, %24, %cst_16 {dimension_numbers = #tpu.dot_dimension_numbers<[1], [0], [0], [1], [0, 0, 1, 1], [], []>} : vector<256x16xbf16>, vector<16x32xbf16>, vector<256x32xf32> -> vector<256x32xf32>
    %26 = arith.addf %20, %25 : vector<256x32xf32>
    %27 = vector.extract_strided_slice %1 {offsets = [0, 1, 1, 0], sizes = [4, 8, 8, 16], strides = [1, 1, 1, 1]} : vector<4x10x10x16xbf16> to vector<4x8x8x16xbf16>
    %28 = vector.shape_cast %27 : vector<4x8x8x16xbf16> to vector<256x16xbf16>
    %c4 = arith.constant 4 : index
    %c0_17 = arith.constant 0 : index
    %c0_18 = arith.constant 0 : index
    %29 = vector.load %arg3[%c4, %c0_17, %c0_18] : memref<9x16x32xbf16, #tpu.memory_space<vmem>>, vector<1x16x32xbf16>
    %30 = vector.shape_cast %29 : vector<1x16x32xbf16> to vector<16x32xbf16>
    %cst_19 = arith.constant dense<0.000000e+00> : vector<256x32xf32>
    %31 = tpu.matmul %28, %30, %cst_19 {dimension_numbers = #tpu.dot_dimension_numbers<[1], [0], [0], [1], [0, 0, 1, 1], [], []>} : vector<256x16xbf16>, vector<16x32xbf16>, vector<256x32xf32> -> vector<256x32xf32>
    %32 = arith.addf %26, %31 : vector<256x32xf32>
    %33 = vector.extract_strided_slice %1 {offsets = [0, 1, 2, 0], sizes = [4, 8, 8, 16], strides = [1, 1, 1, 1]} : vector<4x10x10x16xbf16> to vector<4x8x8x16xbf16>
    %34 = vector.shape_cast %33 : vector<4x8x8x16xbf16> to vector<256x16xbf16>
    %c5 = arith.constant 5 : index
    %c0_20 = arith.constant 0 : index
    %c0_21 = arith.constant 0 : index
    %35 = vector.load %arg3[%c5, %c0_20, %c0_21] : memref<9x16x32xbf16, #tpu.memory_space<vmem>>, vector<1x16x32xbf16>
    %36 = vector.shape_cast %35 : vector<1x16x32xbf16> to vector<16x32xbf16>
    %cst_22 = arith.constant dense<0.000000e+00> : vector<256x32xf32>
    %37 = tpu.matmul %34, %36, %cst_22 {dimension_numbers = #tpu.dot_dimension_numbers<[1], [0], [0], [1], [0, 0, 1, 1], [], []>} : vector<256x16xbf16>, vector<16x32xbf16>, vector<256x32xf32> -> vector<256x32xf32>
    %38 = arith.addf %32, %37 : vector<256x32xf32>
    %39 = vector.extract_strided_slice %1 {offsets = [0, 2, 0, 0], sizes = [4, 8, 8, 16], strides = [1, 1, 1, 1]} : vector<4x10x10x16xbf16> to vector<4x8x8x16xbf16>
    %40 = vector.shape_cast %39 : vector<4x8x8x16xbf16> to vector<256x16xbf16>
    %c6 = arith.constant 6 : index
    %c0_23 = arith.constant 0 : index
    %c0_24 = arith.constant 0 : index
    %41 = vector.load %arg3[%c6, %c0_23, %c0_24] : memref<9x16x32xbf16, #tpu.memory_space<vmem>>, vector<1x16x32xbf16>
    %42 = vector.shape_cast %41 : vector<1x16x32xbf16> to vector<16x32xbf16>
    %cst_25 = arith.constant dense<0.000000e+00> : vector<256x32xf32>
    %43 = tpu.matmul %40, %42, %cst_25 {dimension_numbers = #tpu.dot_dimension_numbers<[1], [0], [0], [1], [0, 0, 1, 1], [], []>} : vector<256x16xbf16>, vector<16x32xbf16>, vector<256x32xf32> -> vector<256x32xf32>
    %44 = arith.addf %38, %43 : vector<256x32xf32>
    %45 = vector.extract_strided_slice %1 {offsets = [0, 2, 1, 0], sizes = [4, 8, 8, 16], strides = [1, 1, 1, 1]} : vector<4x10x10x16xbf16> to vector<4x8x8x16xbf16>
    %46 = vector.shape_cast %45 : vector<4x8x8x16xbf16> to vector<256x16xbf16>
    %c7 = arith.constant 7 : index
    %c0_26 = arith.constant 0 : index
    %c0_27 = arith.constant 0 : index
    %47 = vector.load %arg3[%c7, %c0_26, %c0_27] : memref<9x16x32xbf16, #tpu.memory_space<vmem>>, vector<1x16x32xbf16>
    %48 = vector.shape_cast %47 : vector<1x16x32xbf16> to vector<16x32xbf16>
    %cst_28 = arith.constant dense<0.000000e+00> : vector<256x32xf32>
    %49 = tpu.matmul %46, %48, %cst_28 {dimension_numbers = #tpu.dot_dimension_numbers<[1], [0], [0], [1], [0, 0, 1, 1], [], []>} : vector<256x16xbf16>, vector<16x32xbf16>, vector<256x32xf32> -> vector<256x32xf32>
    %50 = arith.addf %44, %49 : vector<256x32xf32>
    %51 = vector.extract_strided_slice %1 {offsets = [0, 2, 2, 0], sizes = [4, 8, 8, 16], strides = [1, 1, 1, 1]} : vector<4x10x10x16xbf16> to vector<4x8x8x16xbf16>
    %52 = vector.shape_cast %51 : vector<4x8x8x16xbf16> to vector<256x16xbf16>
    %c8 = arith.constant 8 : index
    %c0_29 = arith.constant 0 : index
    %c0_30 = arith.constant 0 : index
    %53 = vector.load %arg3[%c8, %c0_29, %c0_30] : memref<9x16x32xbf16, #tpu.memory_space<vmem>>, vector<1x16x32xbf16>
    %54 = vector.shape_cast %53 : vector<1x16x32xbf16> to vector<16x32xbf16>
    %cst_31 = arith.constant dense<0.000000e+00> : vector<256x32xf32>
    %55 = tpu.matmul %52, %54, %cst_31 {dimension_numbers = #tpu.dot_dimension_numbers<[1], [0], [0], [1], [0, 0, 1, 1], [], []>} : vector<256x16xbf16>, vector<16x32xbf16>, vector<256x32xf32> -> vector<256x32xf32>
    %56 = arith.addf %50, %55 : vector<256x32xf32>
    %c0_32 = arith.constant 0 : index
    %c0_33 = arith.constant 0 : index
    %57 = vector.load %arg4[%c0_32, %c0_33] : memref<1x32xf32, #tpu.memory_space<vmem>>, vector<1x32xf32>
    %58 = vector.broadcast %57 : vector<1x32xf32> to vector<256x32xf32>
    %59 = arith.addf %56, %58 : vector<256x32xf32>
    %cst_34 = arith.constant 0.000000e+00 : f32
    %60 = vector.broadcast %cst_34 : f32 to vector<256x32xf32>
    %61 = arith.maximumf %59, %60 : vector<256x32xf32>
    %62 = vector.shape_cast %61 : vector<256x32xf32> to vector<4x8x8x32xf32>
    %63 = arith.truncf %62 : vector<4x8x8x32xf32> to vector<4x8x8x32xbf16>
    %c0_35 = arith.constant 0 : index
    %c0_36 = arith.constant 0 : index
    %c0_37 = arith.constant 0 : index
    %c0_38 = arith.constant 0 : index
    %c0_39 = arith.constant 0 : index
    %64 = vector.load %arg5[%c0_35, %c0_36, %c0_37, %c0_38, %c0_39] : memref<1x4x8x8x32xbf16, #tpu.memory_space<vmem>>, vector<1x4x8x8x32xbf16>
    %65 = vector.shape_cast %64 : vector<1x4x8x8x32xbf16> to vector<4x8x8x32xbf16>
    %66 = vector.shape_cast %63 : vector<4x8x8x32xbf16> to vector<1x4x8x8x32xbf16>
    tpu.vector_store %arg5[%c0_35, %c0_36, %c0_37, %c0_38, %c0_39], %66 {strides = array<i32>} : memref<1x4x8x8x32xbf16, #tpu.memory_space<vmem>>, vector<1x4x8x8x32xbf16>,
    return
  }
  func.func @transform_0(%arg0: i32, %arg1: i32) -> (i32, i32, i32, i32, i32) {
    %c0_i32 = arith.constant 0 : i32
    %c0_i32_0 = arith.constant 0 : i32
    %c0_i32_1 = arith.constant 0 : i32
    %c0_i32_2 = arith.constant 0 : i32
    return %arg0, %arg1, %c0_i32, %c0_i32_0, %c0_i32_1 : i32, i32, i32, i32, i32
  }
  func.func @transform_1(%arg0: i32, %arg1: i32) -> (i32, i32, i32) {
    %c0_i32 = arith.constant 0 : i32
    %c0_i32_0 = arith.constant 0 : i32
    %c0_i32_1 = arith.constant 0 : i32
    %c0_i32_2 = arith.constant 0 : i32
    return %c0_i32, %c0_i32_0, %c0_i32_1 : i32, i32, i32
  }
  func.func @transform_2(%arg0: i32, %arg1: i32) -> (i32, i32) {
    %c0_i32 = arith.constant 0 : i32
    %c0_i32_0 = arith.constant 0 : i32
    %c0_i32_1 = arith.constant 0 : i32
    return %c0_i32, %c0_i32_0 : i32, i32
  }
  func.func @transform_3(%arg0: i32, %arg1: i32) -> (i32, i32, i32, i32, i32) {
    %c0_i32 = arith.constant 0 : i32
    %c0_i32_0 = arith.constant 0 : i32
    %c0_i32_1 = arith.constant 0 : i32
    %c0_i32_2 = arith.constant 0 : i32
    return %arg0, %arg1, %c0_i32, %c0_i32_0, %c0_i32_1 : i32, i32, i32, i32, i32
  }
}

module attributes {stable_mosaic.version = 11 : i64} {
  func.func @_temporal_conv_kernel(%arg0: i32, %arg1: memref<1x6x8x8x32xbf16, #tpu.memory_space<vmem>>, %arg2: memref<3x32x32xbf16, #tpu.memory_space<vmem>>, %arg3: memref<1x32xf32, #tpu.memory_space<vmem>>, %arg4: memref<1x4x8x8x32xf32, #tpu.memory_space<vmem>>) attributes {dimension_semantics = [#tpu.dimension_semantics<parallel>], iteration_bounds = array<i64: 2>, scalar_prefetch = 0 : i64, scratch_operands = 0 : i64, tpu.core_type = #tpu.core_type<tc>, window_params = [{transform_indices = @transform_0, window_bounds = array<i64: 1, 6, 8, 8, 32>}, {pipeline_mode = #tpu.pipeline_mode<synchronous>, transform_indices = @transform_1, window_bounds = array<i64: 3, 32, 32>}, {pipeline_mode = #tpu.pipeline_mode<synchronous>, transform_indices = @transform_2, window_bounds = array<i64: 1, 32>}, {transform_indices = @transform_3, window_bounds = array<i64: 1, 4, 8, 8, 32>}]} {
    %c0 = arith.constant 0 : index
    %c0_0 = arith.constant 0 : index
    %c0_1 = arith.constant 0 : index
    %c0_2 = arith.constant 0 : index
    %c0_3 = arith.constant 0 : index
    %0 = vector.load %arg1[%c0, %c0_0, %c0_1, %c0_2, %c0_3] : memref<1x6x8x8x32xbf16, #tpu.memory_space<vmem>>, vector<1x6x8x8x32xbf16>
    %1 = vector.shape_cast %0 : vector<1x6x8x8x32xbf16> to vector<6x8x8x32xbf16>
    %cst = arith.constant 0.000000e+00 : f32
    %2 = vector.broadcast %cst : f32 to vector<256x32xf32>
    %3 = vector.extract_strided_slice %1 {offsets = [0, 0, 0, 0], sizes = [4, 8, 8, 32], strides = [1, 1, 1, 1]} : vector<6x8x8x32xbf16> to vector<4x8x8x32xbf16>
    %4 = vector.shape_cast %3 : vector<4x8x8x32xbf16> to vector<256x32xbf16>
    %c0_4 = arith.constant 0 : index
    %c0_5 = arith.constant 0 : index
    %c0_6 = arith.constant 0 : index
    %5 = vector.load %arg2[%c0_4, %c0_5, %c0_6] : memref<3x32x32xbf16, #tpu.memory_space<vmem>>, vector<1x32x32xbf16>
    %6 = vector.shape_cast %5 : vector<1x32x32xbf16> to vector<32x32xbf16>
    %cst_7 = arith.constant dense<0.000000e+00> : vector<256x32xf32>
    %7 = tpu.matmul %4, %6, %cst_7 {dimension_numbers = #tpu.dot_dimension_numbers<[1], [0], [0], [1], [0, 0, 1, 1], [], []>} : vector<256x32xbf16>, vector<32x32xbf16>, vector<256x32xf32> -> vector<256x32xf32>
    %8 = arith.addf %2, %7 : vector<256x32xf32>
    %9 = vector.extract_strided_slice %1 {offsets = [1, 0, 0, 0], sizes = [4, 8, 8, 32], strides = [1, 1, 1, 1]} : vector<6x8x8x32xbf16> to vector<4x8x8x32xbf16>
    %10 = vector.shape_cast %9 : vector<4x8x8x32xbf16> to vector<256x32xbf16>
    %c1 = arith.constant 1 : index
    %c0_8 = arith.constant 0 : index
    %c0_9 = arith.constant 0 : index
    %11 = vector.load %arg2[%c1, %c0_8, %c0_9] : memref<3x32x32xbf16, #tpu.memory_space<vmem>>, vector<1x32x32xbf16>
    %12 = vector.shape_cast %11 : vector<1x32x32xbf16> to vector<32x32xbf16>
    %cst_10 = arith.constant dense<0.000000e+00> : vector<256x32xf32>
    %13 = tpu.matmul %10, %12, %cst_10 {dimension_numbers = #tpu.dot_dimension_numbers<[1], [0], [0], [1], [0, 0, 1, 1], [], []>} : vector<256x32xbf16>, vector<32x32xbf16>, vector<256x32xf32> -> vector<256x32xf32>
    %14 = arith.addf %8, %13 : vector<256x32xf32>
    %15 = vector.extract_strided_slice %1 {offsets = [2, 0, 0, 0], sizes = [4, 8, 8, 32], strides = [1, 1, 1, 1]} : vector<6x8x8x32xbf16> to vector<4x8x8x32xbf16>
    %16 = vector.shape_cast %15 : vector<4x8x8x32xbf16> to vector<256x32xbf16>
    %c2 = arith.constant 2 : index
    %c0_11 = arith.constant 0 : index
    %c0_12 = arith.constant 0 : index
    %17 = vector.load %arg2[%c2, %c0_11, %c0_12] : memref<3x32x32xbf16, #tpu.memory_space<vmem>>, vector<1x32x32xbf16>
    %18 = vector.shape_cast %17 : vector<1x32x32xbf16> to vector<32x32xbf16>
    %cst_13 = arith.constant dense<0.000000e+00> : vector<256x32xf32>
    %19 = tpu.matmul %16, %18, %cst_13 {dimension_numbers = #tpu.dot_dimension_numbers<[1], [0], [0], [1], [0, 0, 1, 1], [], []>} : vector<256x32xbf16>, vector<32x32xbf16>, vector<256x32xf32> -> vector<256x32xf32>
    %20 = arith.addf %14, %19 : vector<256x32xf32>
    %c0_14 = arith.constant 0 : index
    %c0_15 = arith.constant 0 : index
    %21 = vector.load %arg3[%c0_14, %c0_15] : memref<1x32xf32, #tpu.memory_space<vmem>>, vector<1x32xf32>
    %22 = vector.broadcast %21 : vector<1x32xf32> to vector<256x32xf32>
    %23 = arith.addf %20, %22 : vector<256x32xf32>
    %cst_16 = arith.constant 0.000000e+00 : f32
    %24 = vector.broadcast %cst_16 : f32 to vector<256x32xf32>
    %25 = arith.maximumf %23, %24 : vector<256x32xf32>
    %26 = vector.shape_cast %25 : vector<256x32xf32> to vector<4x8x8x32xf32>
    %c0_17 = arith.constant 0 : index
    %c0_18 = arith.constant 0 : index
    %c0_19 = arith.constant 0 : index
    %c0_20 = arith.constant 0 : index
    %c0_21 = arith.constant 0 : index
    %27 = vector.load %arg4[%c0_17, %c0_18, %c0_19, %c0_20, %c0_21] : memref<1x4x8x8x32xf32, #tpu.memory_space<vmem>>, vector<1x4x8x8x32xf32>
    %28 = vector.shape_cast %27 : vector<1x4x8x8x32xf32> to vector<4x8x8x32xf32>
    %29 = vector.shape_cast %26 : vector<4x8x8x32xf32> to vector<1x4x8x8x32xf32>
    tpu.vector_store %arg4[%c0_17, %c0_18, %c0_19, %c0_20, %c0_21], %29 {strides = array<i32>} : memref<1x4x8x8x32xf32, #tpu.memory_space<vmem>>, vector<1x4x8x8x32xf32>,
    return
  }
  func.func @transform_0(%arg0: i32) -> (i32, i32, i32, i32, i32) {
    %c0_i32 = arith.constant 0 : i32
    %c0_i32_0 = arith.constant 0 : i32
    %c0_i32_1 = arith.constant 0 : i32
    %c0_i32_2 = arith.constant 0 : i32
    %c0_i32_3 = arith.constant 0 : i32
    return %arg0, %c0_i32, %c0_i32_0, %c0_i32_1, %c0_i32_2 : i32, i32, i32, i32, i32
  }
  func.func @transform_1(%arg0: i32) -> (i32, i32, i32) {
    %c0_i32 = arith.constant 0 : i32
    %c0_i32_0 = arith.constant 0 : i32
    %c0_i32_1 = arith.constant 0 : i32
    %c0_i32_2 = arith.constant 0 : i32
    return %c0_i32, %c0_i32_0, %c0_i32_1 : i32, i32, i32
  }
  func.func @transform_2(%arg0: i32) -> (i32, i32) {
    %c0_i32 = arith.constant 0 : i32
    %c0_i32_0 = arith.constant 0 : i32
    %c0_i32_1 = arith.constant 0 : i32
    return %c0_i32, %c0_i32_0 : i32, i32
  }
  func.func @transform_3(%arg0: i32) -> (i32, i32, i32, i32, i32) {
    %c0_i32 = arith.constant 0 : i32
    %c0_i32_0 = arith.constant 0 : i32
    %c0_i32_1 = arith.constant 0 : i32
    %c0_i32_2 = arith.constant 0 : i32
    %c0_i32_3 = arith.constant 0 : i32
    return %arg0, %c0_i32, %c0_i32_0, %c0_i32_1, %c0_i32_2 : i32, i32, i32, i32, i32
  }
}

module attributes {stable_mosaic.version = 11 : i64} {
  func.func @_spatial_conv_kernel(%arg0: i32, %arg1: i32, %arg2: memref<1x4x10x10x96xbf16, #tpu.memory_space<vmem>>, %arg3: memref<9x96x128xbf16, #tpu.memory_space<vmem>>, %arg4: memref<1x128xf32, #tpu.memory_space<vmem>>, %arg5: memref<1x4x8x8x128xbf16, #tpu.memory_space<vmem>>) attributes {dimension_semantics = [#tpu.dimension_semantics<parallel>, #tpu.dimension_semantics<parallel>], iteration_bounds = array<i64: 2, 1>, scalar_prefetch = 0 : i64, scratch_operands = 0 : i64, tpu.core_type = #tpu.core_type<tc>, window_params = [{transform_indices = @transform_0, window_bounds = array<i64: 1, 4, 10, 10, 96>}, {pipeline_mode = #tpu.pipeline_mode<synchronous>, transform_indices = @transform_1, window_bounds = array<i64: 9, 96, 128>}, {pipeline_mode = #tpu.pipeline_mode<synchronous>, transform_indices = @transform_2, window_bounds = array<i64: 1, 128>}, {transform_indices = @transform_3, window_bounds = array<i64: 1, 4, 8, 8, 128>}]} {
    %c0 = arith.constant 0 : index
    %c0_0 = arith.constant 0 : index
    %c0_1 = arith.constant 0 : index
    %c0_2 = arith.constant 0 : index
    %c0_3 = arith.constant 0 : index
    %0 = vector.load %arg2[%c0, %c0_0, %c0_1, %c0_2, %c0_3] : memref<1x4x10x10x96xbf16, #tpu.memory_space<vmem>>, vector<1x4x10x10x96xbf16>
    %1 = vector.shape_cast %0 : vector<1x4x10x10x96xbf16> to vector<4x10x10x96xbf16>
    %cst = arith.constant 0.000000e+00 : f32
    %2 = vector.broadcast %cst : f32 to vector<256x128xf32>
    %3 = vector.extract_strided_slice %1 {offsets = [0, 0, 0, 0], sizes = [4, 8, 8, 96], strides = [1, 1, 1, 1]} : vector<4x10x10x96xbf16> to vector<4x8x8x96xbf16>
    %4 = vector.shape_cast %3 : vector<4x8x8x96xbf16> to vector<256x96xbf16>
    %c0_4 = arith.constant 0 : index
    %c0_5 = arith.constant 0 : index
    %c0_6 = arith.constant 0 : index
    %5 = vector.load %arg3[%c0_4, %c0_5, %c0_6] : memref<9x96x128xbf16, #tpu.memory_space<vmem>>, vector<1x96x128xbf16>
    %6 = vector.shape_cast %5 : vector<1x96x128xbf16> to vector<96x128xbf16>
    %cst_7 = arith.constant dense<0.000000e+00> : vector<256x128xf32>
    %7 = tpu.matmul %4, %6, %cst_7 {dimension_numbers = #tpu.dot_dimension_numbers<[1], [0], [0], [1], [0, 0, 1, 1], [], []>} : vector<256x96xbf16>, vector<96x128xbf16>, vector<256x128xf32> -> vector<256x128xf32>
    %8 = arith.addf %2, %7 : vector<256x128xf32>
    %9 = vector.extract_strided_slice %1 {offsets = [0, 0, 1, 0], sizes = [4, 8, 8, 96], strides = [1, 1, 1, 1]} : vector<4x10x10x96xbf16> to vector<4x8x8x96xbf16>
    %10 = vector.shape_cast %9 : vector<4x8x8x96xbf16> to vector<256x96xbf16>
    %c1 = arith.constant 1 : index
    %c0_8 = arith.constant 0 : index
    %c0_9 = arith.constant 0 : index
    %11 = vector.load %arg3[%c1, %c0_8, %c0_9] : memref<9x96x128xbf16, #tpu.memory_space<vmem>>, vector<1x96x128xbf16>
    %12 = vector.shape_cast %11 : vector<1x96x128xbf16> to vector<96x128xbf16>
    %cst_10 = arith.constant dense<0.000000e+00> : vector<256x128xf32>
    %13 = tpu.matmul %10, %12, %cst_10 {dimension_numbers = #tpu.dot_dimension_numbers<[1], [0], [0], [1], [0, 0, 1, 1], [], []>} : vector<256x96xbf16>, vector<96x128xbf16>, vector<256x128xf32> -> vector<256x128xf32>
    %14 = arith.addf %8, %13 : vector<256x128xf32>
    %15 = vector.extract_strided_slice %1 {offsets = [0, 0, 2, 0], sizes = [4, 8, 8, 96], strides = [1, 1, 1, 1]} : vector<4x10x10x96xbf16> to vector<4x8x8x96xbf16>
    %16 = vector.shape_cast %15 : vector<4x8x8x96xbf16> to vector<256x96xbf16>
    %c2 = arith.constant 2 : index
    %c0_11 = arith.constant 0 : index
    %c0_12 = arith.constant 0 : index
    %17 = vector.load %arg3[%c2, %c0_11, %c0_12] : memref<9x96x128xbf16, #tpu.memory_space<vmem>>, vector<1x96x128xbf16>
    %18 = vector.shape_cast %17 : vector<1x96x128xbf16> to vector<96x128xbf16>
    %cst_13 = arith.constant dense<0.000000e+00> : vector<256x128xf32>
    %19 = tpu.matmul %16, %18, %cst_13 {dimension_numbers = #tpu.dot_dimension_numbers<[1], [0], [0], [1], [0, 0, 1, 1], [], []>} : vector<256x96xbf16>, vector<96x128xbf16>, vector<256x128xf32> -> vector<256x128xf32>
    %20 = arith.addf %14, %19 : vector<256x128xf32>
    %21 = vector.extract_strided_slice %1 {offsets = [0, 1, 0, 0], sizes = [4, 8, 8, 96], strides = [1, 1, 1, 1]} : vector<4x10x10x96xbf16> to vector<4x8x8x96xbf16>
    %22 = vector.shape_cast %21 : vector<4x8x8x96xbf16> to vector<256x96xbf16>
    %c3 = arith.constant 3 : index
    %c0_14 = arith.constant 0 : index
    %c0_15 = arith.constant 0 : index
    %23 = vector.load %arg3[%c3, %c0_14, %c0_15] : memref<9x96x128xbf16, #tpu.memory_space<vmem>>, vector<1x96x128xbf16>
    %24 = vector.shape_cast %23 : vector<1x96x128xbf16> to vector<96x128xbf16>
    %cst_16 = arith.constant dense<0.000000e+00> : vector<256x128xf32>
    %25 = tpu.matmul %22, %24, %cst_16 {dimension_numbers = #tpu.dot_dimension_numbers<[1], [0], [0], [1], [0, 0, 1, 1], [], []>} : vector<256x96xbf16>, vector<96x128xbf16>, vector<256x128xf32> -> vector<256x128xf32>
    %26 = arith.addf %20, %25 : vector<256x128xf32>
    %27 = vector.extract_strided_slice %1 {offsets = [0, 1, 1, 0], sizes = [4, 8, 8, 96], strides = [1, 1, 1, 1]} : vector<4x10x10x96xbf16> to vector<4x8x8x96xbf16>
    %28 = vector.shape_cast %27 : vector<4x8x8x96xbf16> to vector<256x96xbf16>
    %c4 = arith.constant 4 : index
    %c0_17 = arith.constant 0 : index
    %c0_18 = arith.constant 0 : index
    %29 = vector.load %arg3[%c4, %c0_17, %c0_18] : memref<9x96x128xbf16, #tpu.memory_space<vmem>>, vector<1x96x128xbf16>
    %30 = vector.shape_cast %29 : vector<1x96x128xbf16> to vector<96x128xbf16>
    %cst_19 = arith.constant dense<0.000000e+00> : vector<256x128xf32>
    %31 = tpu.matmul %28, %30, %cst_19 {dimension_numbers = #tpu.dot_dimension_numbers<[1], [0], [0], [1], [0, 0, 1, 1], [], []>} : vector<256x96xbf16>, vector<96x128xbf16>, vector<256x128xf32> -> vector<256x128xf32>
    %32 = arith.addf %26, %31 : vector<256x128xf32>
    %33 = vector.extract_strided_slice %1 {offsets = [0, 1, 2, 0], sizes = [4, 8, 8, 96], strides = [1, 1, 1, 1]} : vector<4x10x10x96xbf16> to vector<4x8x8x96xbf16>
    %34 = vector.shape_cast %33 : vector<4x8x8x96xbf16> to vector<256x96xbf16>
    %c5 = arith.constant 5 : index
    %c0_20 = arith.constant 0 : index
    %c0_21 = arith.constant 0 : index
    %35 = vector.load %arg3[%c5, %c0_20, %c0_21] : memref<9x96x128xbf16, #tpu.memory_space<vmem>>, vector<1x96x128xbf16>
    %36 = vector.shape_cast %35 : vector<1x96x128xbf16> to vector<96x128xbf16>
    %cst_22 = arith.constant dense<0.000000e+00> : vector<256x128xf32>
    %37 = tpu.matmul %34, %36, %cst_22 {dimension_numbers = #tpu.dot_dimension_numbers<[1], [0], [0], [1], [0, 0, 1, 1], [], []>} : vector<256x96xbf16>, vector<96x128xbf16>, vector<256x128xf32> -> vector<256x128xf32>
    %38 = arith.addf %32, %37 : vector<256x128xf32>
    %39 = vector.extract_strided_slice %1 {offsets = [0, 2, 0, 0], sizes = [4, 8, 8, 96], strides = [1, 1, 1, 1]} : vector<4x10x10x96xbf16> to vector<4x8x8x96xbf16>
    %40 = vector.shape_cast %39 : vector<4x8x8x96xbf16> to vector<256x96xbf16>
    %c6 = arith.constant 6 : index
    %c0_23 = arith.constant 0 : index
    %c0_24 = arith.constant 0 : index
    %41 = vector.load %arg3[%c6, %c0_23, %c0_24] : memref<9x96x128xbf16, #tpu.memory_space<vmem>>, vector<1x96x128xbf16>
    %42 = vector.shape_cast %41 : vector<1x96x128xbf16> to vector<96x128xbf16>
    %cst_25 = arith.constant dense<0.000000e+00> : vector<256x128xf32>
    %43 = tpu.matmul %40, %42, %cst_25 {dimension_numbers = #tpu.dot_dimension_numbers<[1], [0], [0], [1], [0, 0, 1, 1], [], []>} : vector<256x96xbf16>, vector<96x128xbf16>, vector<256x128xf32> -> vector<256x128xf32>
    %44 = arith.addf %38, %43 : vector<256x128xf32>
    %45 = vector.extract_strided_slice %1 {offsets = [0, 2, 1, 0], sizes = [4, 8, 8, 96], strides = [1, 1, 1, 1]} : vector<4x10x10x96xbf16> to vector<4x8x8x96xbf16>
    %46 = vector.shape_cast %45 : vector<4x8x8x96xbf16> to vector<256x96xbf16>
    %c7 = arith.constant 7 : index
    %c0_26 = arith.constant 0 : index
    %c0_27 = arith.constant 0 : index
    %47 = vector.load %arg3[%c7, %c0_26, %c0_27] : memref<9x96x128xbf16, #tpu.memory_space<vmem>>, vector<1x96x128xbf16>
    %48 = vector.shape_cast %47 : vector<1x96x128xbf16> to vector<96x128xbf16>
    %cst_28 = arith.constant dense<0.000000e+00> : vector<256x128xf32>
    %49 = tpu.matmul %46, %48, %cst_28 {dimension_numbers = #tpu.dot_dimension_numbers<[1], [0], [0], [1], [0, 0, 1, 1], [], []>} : vector<256x96xbf16>, vector<96x128xbf16>, vector<256x128xf32> -> vector<256x128xf32>
    %50 = arith.addf %44, %49 : vector<256x128xf32>
    %51 = vector.extract_strided_slice %1 {offsets = [0, 2, 2, 0], sizes = [4, 8, 8, 96], strides = [1, 1, 1, 1]} : vector<4x10x10x96xbf16> to vector<4x8x8x96xbf16>
    %52 = vector.shape_cast %51 : vector<4x8x8x96xbf16> to vector<256x96xbf16>
    %c8 = arith.constant 8 : index
    %c0_29 = arith.constant 0 : index
    %c0_30 = arith.constant 0 : index
    %53 = vector.load %arg3[%c8, %c0_29, %c0_30] : memref<9x96x128xbf16, #tpu.memory_space<vmem>>, vector<1x96x128xbf16>
    %54 = vector.shape_cast %53 : vector<1x96x128xbf16> to vector<96x128xbf16>
    %cst_31 = arith.constant dense<0.000000e+00> : vector<256x128xf32>
    %55 = tpu.matmul %52, %54, %cst_31 {dimension_numbers = #tpu.dot_dimension_numbers<[1], [0], [0], [1], [0, 0, 1, 1], [], []>} : vector<256x96xbf16>, vector<96x128xbf16>, vector<256x128xf32> -> vector<256x128xf32>
    %56 = arith.addf %50, %55 : vector<256x128xf32>
    %c0_32 = arith.constant 0 : index
    %c0_33 = arith.constant 0 : index
    %57 = vector.load %arg4[%c0_32, %c0_33] : memref<1x128xf32, #tpu.memory_space<vmem>>, vector<1x128xf32>
    %58 = vector.broadcast %57 : vector<1x128xf32> to vector<256x128xf32>
    %59 = arith.addf %56, %58 : vector<256x128xf32>
    %cst_34 = arith.constant 0.000000e+00 : f32
    %60 = vector.broadcast %cst_34 : f32 to vector<256x128xf32>
    %61 = arith.maximumf %59, %60 : vector<256x128xf32>
    %62 = vector.shape_cast %61 : vector<256x128xf32> to vector<4x8x8x128xf32>
    %63 = arith.truncf %62 : vector<4x8x8x128xf32> to vector<4x8x8x128xbf16>
    %c0_35 = arith.constant 0 : index
    %c0_36 = arith.constant 0 : index
    %c0_37 = arith.constant 0 : index
    %c0_38 = arith.constant 0 : index
    %c0_39 = arith.constant 0 : index
    %64 = vector.load %arg5[%c0_35, %c0_36, %c0_37, %c0_38, %c0_39] : memref<1x4x8x8x128xbf16, #tpu.memory_space<vmem>>, vector<1x4x8x8x128xbf16>
    %65 = vector.shape_cast %64 : vector<1x4x8x8x128xbf16> to vector<4x8x8x128xbf16>
    %66 = vector.shape_cast %63 : vector<4x8x8x128xbf16> to vector<1x4x8x8x128xbf16>
    tpu.vector_store %arg5[%c0_35, %c0_36, %c0_37, %c0_38, %c0_39], %66 {strides = array<i32>} : memref<1x4x8x8x128xbf16, #tpu.memory_space<vmem>>, vector<1x4x8x8x128xbf16>,
    return
  }
  func.func @transform_0(%arg0: i32, %arg1: i32) -> (i32, i32, i32, i32, i32) {
    %c0_i32 = arith.constant 0 : i32
    %c0_i32_0 = arith.constant 0 : i32
    %c0_i32_1 = arith.constant 0 : i32
    %c0_i32_2 = arith.constant 0 : i32
    return %arg0, %arg1, %c0_i32, %c0_i32_0, %c0_i32_1 : i32, i32, i32, i32, i32
  }
  func.func @transform_1(%arg0: i32, %arg1: i32) -> (i32, i32, i32) {
    %c0_i32 = arith.constant 0 : i32
    %c0_i32_0 = arith.constant 0 : i32
    %c0_i32_1 = arith.constant 0 : i32
    %c0_i32_2 = arith.constant 0 : i32
    return %c0_i32, %c0_i32_0, %c0_i32_1 : i32, i32, i32
  }
  func.func @transform_2(%arg0: i32, %arg1: i32) -> (i32, i32) {
    %c0_i32 = arith.constant 0 : i32
    %c0_i32_0 = arith.constant 0 : i32
    %c0_i32_1 = arith.constant 0 : i32
    return %c0_i32, %c0_i32_0 : i32, i32
  }
  func.func @transform_3(%arg0: i32, %arg1: i32) -> (i32, i32, i32, i32, i32) {
    %c0_i32 = arith.constant 0 : i32
    %c0_i32_0 = arith.constant 0 : i32
    %c0_i32_1 = arith.constant 0 : i32
    %c0_i32_2 = arith.constant 0 : i32
    return %arg0, %arg1, %c0_i32, %c0_i32_0, %c0_i32_1 : i32, i32, i32, i32, i32
  }
}

module attributes {stable_mosaic.version = 11 : i64} {
  func.func @_temporal_conv_kernel(%arg0: i32, %arg1: memref<1x6x8x8x128xbf16, #tpu.memory_space<vmem>>, %arg2: memref<3x128x128xbf16, #tpu.memory_space<vmem>>, %arg3: memref<1x128xf32, #tpu.memory_space<vmem>>, %arg4: memref<1x4x8x8x128xf32, #tpu.memory_space<vmem>>) attributes {dimension_semantics = [#tpu.dimension_semantics<parallel>], iteration_bounds = array<i64: 2>, scalar_prefetch = 0 : i64, scratch_operands = 0 : i64, tpu.core_type = #tpu.core_type<tc>, window_params = [{transform_indices = @transform_0, window_bounds = array<i64: 1, 6, 8, 8, 128>}, {pipeline_mode = #tpu.pipeline_mode<synchronous>, transform_indices = @transform_1, window_bounds = array<i64: 3, 128, 128>}, {pipeline_mode = #tpu.pipeline_mode<synchronous>, transform_indices = @transform_2, window_bounds = array<i64: 1, 128>}, {transform_indices = @transform_3, window_bounds = array<i64: 1, 4, 8, 8, 128>}]} {
    %c0 = arith.constant 0 : index
    %c0_0 = arith.constant 0 : index
    %c0_1 = arith.constant 0 : index
    %c0_2 = arith.constant 0 : index
    %c0_3 = arith.constant 0 : index
    %0 = vector.load %arg1[%c0, %c0_0, %c0_1, %c0_2, %c0_3] : memref<1x6x8x8x128xbf16, #tpu.memory_space<vmem>>, vector<1x6x8x8x128xbf16>
    %1 = vector.shape_cast %0 : vector<1x6x8x8x128xbf16> to vector<6x8x8x128xbf16>
    %cst = arith.constant 0.000000e+00 : f32
    %2 = vector.broadcast %cst : f32 to vector<256x128xf32>
    %3 = vector.extract_strided_slice %1 {offsets = [0, 0, 0, 0], sizes = [4, 8, 8, 128], strides = [1, 1, 1, 1]} : vector<6x8x8x128xbf16> to vector<4x8x8x128xbf16>
    %4 = vector.shape_cast %3 : vector<4x8x8x128xbf16> to vector<256x128xbf16>
    %c0_4 = arith.constant 0 : index
    %c0_5 = arith.constant 0 : index
    %c0_6 = arith.constant 0 : index
    %5 = vector.load %arg2[%c0_4, %c0_5, %c0_6] : memref<3x128x128xbf16, #tpu.memory_space<vmem>>, vector<1x128x128xbf16>
    %6 = vector.shape_cast %5 : vector<1x128x128xbf16> to vector<128x128xbf16>
    %cst_7 = arith.constant dense<0.000000e+00> : vector<256x128xf32>
    %7 = tpu.matmul %4, %6, %cst_7 {dimension_numbers = #tpu.dot_dimension_numbers<[1], [0], [0], [1], [0, 0, 1, 1], [], []>} : vector<256x128xbf16>, vector<128x128xbf16>, vector<256x128xf32> -> vector<256x128xf32>
    %8 = arith.addf %2, %7 : vector<256x128xf32>
    %9 = vector.extract_strided_slice %1 {offsets = [1, 0, 0, 0], sizes = [4, 8, 8, 128], strides = [1, 1, 1, 1]} : vector<6x8x8x128xbf16> to vector<4x8x8x128xbf16>
    %10 = vector.shape_cast %9 : vector<4x8x8x128xbf16> to vector<256x128xbf16>
    %c1 = arith.constant 1 : index
    %c0_8 = arith.constant 0 : index
    %c0_9 = arith.constant 0 : index
    %11 = vector.load %arg2[%c1, %c0_8, %c0_9] : memref<3x128x128xbf16, #tpu.memory_space<vmem>>, vector<1x128x128xbf16>
    %12 = vector.shape_cast %11 : vector<1x128x128xbf16> to vector<128x128xbf16>
    %cst_10 = arith.constant dense<0.000000e+00> : vector<256x128xf32>
    %13 = tpu.matmul %10, %12, %cst_10 {dimension_numbers = #tpu.dot_dimension_numbers<[1], [0], [0], [1], [0, 0, 1, 1], [], []>} : vector<256x128xbf16>, vector<128x128xbf16>, vector<256x128xf32> -> vector<256x128xf32>
    %14 = arith.addf %8, %13 : vector<256x128xf32>
    %15 = vector.extract_strided_slice %1 {offsets = [2, 0, 0, 0], sizes = [4, 8, 8, 128], strides = [1, 1, 1, 1]} : vector<6x8x8x128xbf16> to vector<4x8x8x128xbf16>
    %16 = vector.shape_cast %15 : vector<4x8x8x128xbf16> to vector<256x128xbf16>
    %c2 = arith.constant 2 : index
    %c0_11 = arith.constant 0 : index
    %c0_12 = arith.constant 0 : index
    %17 = vector.load %arg2[%c2, %c0_11, %c0_12] : memref<3x128x128xbf16, #tpu.memory_space<vmem>>, vector<1x128x128xbf16>
    %18 = vector.shape_cast %17 : vector<1x128x128xbf16> to vector<128x128xbf16>
    %cst_13 = arith.constant dense<0.000000e+00> : vector<256x128xf32>
    %19 = tpu.matmul %16, %18, %cst_13 {dimension_numbers = #tpu.dot_dimension_numbers<[1], [0], [0], [1], [0, 0, 1, 1], [], []>} : vector<256x128xbf16>, vector<128x128xbf16>, vector<256x128xf32> -> vector<256x128xf32>
    %20 = arith.addf %14, %19 : vector<256x128xf32>
    %c0_14 = arith.constant 0 : index
    %c0_15 = arith.constant 0 : index
    %21 = vector.load %arg3[%c0_14, %c0_15] : memref<1x128xf32, #tpu.memory_space<vmem>>, vector<1x128xf32>
    %22 = vector.broadcast %21 : vector<1x128xf32> to vector<256x128xf32>
    %23 = arith.addf %20, %22 : vector<256x128xf32>
    %cst_16 = arith.constant 0.000000e+00 : f32
    %24 = vector.broadcast %cst_16 : f32 to vector<256x128xf32>
    %25 = arith.maximumf %23, %24 : vector<256x128xf32>
    %26 = vector.shape_cast %25 : vector<256x128xf32> to vector<4x8x8x128xf32>
    %c0_17 = arith.constant 0 : index
    %c0_18 = arith.constant 0 : index
    %c0_19 = arith.constant 0 : index
    %c0_20 = arith.constant 0 : index
    %c0_21 = arith.constant 0 : index
    %27 = vector.load %arg4[%c0_17, %c0_18, %c0_19, %c0_20, %c0_21] : memref<1x4x8x8x128xf32, #tpu.memory_space<vmem>>, vector<1x4x8x8x128xf32>
    %28 = vector.shape_cast %27 : vector<1x4x8x8x128xf32> to vector<4x8x8x128xf32>
    %29 = vector.shape_cast %26 : vector<4x8x8x128xf32> to vector<1x4x8x8x128xf32>
    tpu.vector_store %arg4[%c0_17, %c0_18, %c0_19, %c0_20, %c0_21], %29 {strides = array<i32>} : memref<1x4x8x8x128xf32, #tpu.memory_space<vmem>>, vector<1x4x8x8x128xf32>,
    return
  }
  func.func @transform_0(%arg0: i32) -> (i32, i32, i32, i32, i32) {
    %c0_i32 = arith.constant 0 : i32
    %c0_i32_0 = arith.constant 0 : i32
    %c0_i32_1 = arith.constant 0 : i32
    %c0_i32_2 = arith.constant 0 : i32
    %c0_i32_3 = arith.constant 0 : i32
    return %arg0, %c0_i32, %c0_i32_0, %c0_i32_1, %c0_i32_2 : i32, i32, i32, i32, i32
  }
  func.func @transform_1(%arg0: i32) -> (i32, i32, i32) {
    %c0_i32 = arith.constant 0 : i32
    %c0_i32_0 = arith.constant 0 : i32
    %c0_i32_1 = arith.constant 0 : i32
    %c0_i32_2 = arith.constant 0 : i32
    return %c0_i32, %c0_i32_0, %c0_i32_1 : i32, i32, i32
  }
  func.func @transform_2(%arg0: i32) -> (i32, i32) {
    %c0_i32 = arith.constant 0 : i32
    %c0_i32_0 = arith.constant 0 : i32
    %c0_i32_1 = arith.constant 0 : i32
    return %c0_i32, %c0_i32_0 : i32, i32
  }
  func.func @transform_3(%arg0: i32) -> (i32, i32, i32, i32, i32) {
    %c0_i32 = arith.constant 0 : i32
    %c0_i32_0 = arith.constant 0 : i32
    %c0_i32_1 = arith.constant 0 : i32
    %c0_i32_2 = arith.constant 0 : i32
    %c0_i32_3 = arith.constant 0 : i32
    return %arg0, %c0_i32, %c0_i32_0, %c0_i32_1, %c0_i32_2 : i32, i32, i32, i32, i32
  }
}

</mosaic_0001>

<llo_original>
// kernel: mixed_3b_forward.6
$region0: #{mixed_3b_forward.6}
  #allocation0 [shape = 'u32[]', space=smem, size = 0x4, offset = 0x4, fixed_abs, tag = 'smem constant byte address 0x4 - core index']
  #allocation1 [shape = 'u32[144,128]{1,0:T(1,128)}', space=vmem, size = 0x12000, scoped, tag = 'internal scratch']
  %s0 = inlined_call_operand.vmem [shape: bf16[512,192], index: 0, kind: input, shape index: {}]
  %s1 = inlined_call_operand.vmem [shape: bf16[192,176], index: 1, kind: input, shape index: {}]
  %s2 = inlined_call_operand.vmem [shape: f32[1,176], index: 2, kind: input, shape index: {}]
  %s3 = inlined_call_operand.vmem [shape: bf16[512,176], index: 3, kind: output, shape index: {}]
  %s4 = sld [smem:[#allocation0]]
  $region45: #{mixed_3b_forward.6} parent=0
    _
  %s6 = ssub.s32 1, %s4
  %s7 = scalar_select 0, %s6, %s4
  loop: start=0, step=1, limit=4
  $region2: #{mixed_3b_forward.6} parent=0 // loop_pre_header
    _
  $region3: #{mixed_3b_forward.6} parent=0 // loop_header
    %s9 = sphi 0, %s13
    %p10 = scmp.ge.s32.totalorder %s9, 4
    %s19 = sphi 0, %s21
    %s22 = sphi 0, %s19
    %s23 = sphi 0, %s22
    %s39 = sphi 0, %s23
    %s43 = sphi 0, %s43
    %s45 = sphi 0, %s43
    %s46 = sphi 0, %s45
    %s60 = sphi 0, %s46
    %s64 = sphi 0, %s64
    %s66 = sphi 0, %s64
    %s67 = sphi 0, %s66
    %s81 = sphi 0, %s67
    %s87 = sphi 0, %s89
    %s90 = sphi 0, %s87
    %s91 = sphi 0, %s90
    %s107 = sphi 0, %s91
  $region4: #{mixed_3b_forward.6} parent=0 // loop_header_branch
    %12 = sbr.rel (%p10) target = $region8
  $region5: #{mixed_3b_forward.6} parent=0 // loop_body
    %s14 = ssub.s32 %s9, 1
    %s15 = ssub.s32 %s9, 2
    %s16 = sadd.s32 %s9, 1
    %s17 = ssub.s32 %s9, %s16
    %p18 = scmp.eq.s32.totalorder %s17, 0
    %s20 = sadd.s32 %s19, 1
    %s21 = scalar_select %p18, %s19, %s20
    %p24 = pneg %p18
    %p25 = scmp.eq.s32.totalorder %s9, 1
    %p26 = por %p24, %p25
    %p27 = scmp.ne.s32.totalorder %s19, %s22
    %p28 = scmp.eq.s32.totalorder %s9, 0
    %p29 = por %p27, %p28
    %p30 = scmp.ne.s32.totalorder %s19, %s22
    %p31 = scmp.eq.s32.totalorder %s14, 1
    %p32 = por %p30, %p31
    %p33 = scmp.ne.s32.totalorder %s22, %s23
    %p34 = scmp.eq.s32.totalorder %s14, 0
    %p35 = por %p33, %p34
    %p36 = scmp.ne.s32.totalorder %s22, %s23
    %p37 = scmp.eq.s32.totalorder %s15, 1
    %p38 = por %p36, %p37
    %p40 = scmp.ne.s32.totalorder %s23, %s39
    %p41 = scmp.eq.s32.totalorder %s15, 0
    %p42 = por %p40, %p41
    %s44 = sadd.s32 %s43, 1
    %p47 = scmp.eq.s32.totalorder %s9, 1
    %p48 = scmp.ne.s32.totalorder %s43, %s45
    %p49 = scmp.eq.s32.totalorder %s9, 0
    %p50 = por %p48, %p49
    %p51 = scmp.ne.s32.totalorder %s43, %s45
    %p52 = scmp.eq.s32.totalorder %s14, 1
    %p53 = por %p51, %p52
    %p54 = scmp.ne.s32.totalorder %s45, %s46
    %p55 = scmp.eq.s32.totalorder %s14, 0
    %p56 = por %p54, %p55
    %p57 = scmp.ne.s32.totalorder %s45, %s46
    %p58 = scmp.eq.s32.totalorder %s15, 1
    %p59 = por %p57, %p58
    %p61 = scmp.ne.s32.totalorder %s46, %s60
    %p62 = scmp.eq.s32.totalorder %s15, 0
    %p63 = por %p61, %p62
    %s65 = sadd.s32 %s64, 1
    %p68 = scmp.eq.s32.totalorder %s9, 1
    %p69 = scmp.ne.s32.totalorder %s64, %s66
    %p70 = scmp.eq.s32.totalorder %s9, 0
    %p71 = por %p69, %p70
    %p72 = scmp.ne.s32.totalorder %s64, %s66
    %p73 = scmp.eq.s32.totalorder %s14, 1
    %p74 = por %p72, %p73
    %p75 = scmp.ne.s32.totalorder %s66, %s67
    %p76 = scmp.eq.s32.totalorder %s14, 0
    %p77 = por %p75, %p76
    %p78 = scmp.ne.s32.totalorder %s66, %s67
    %p79 = scmp.eq.s32.totalorder %s15, 1
    %p80 = por %p78, %p79
    %p82 = scmp.ne.s32.totalorder %s67, %s81
    %p83 = scmp.eq.s32.totalorder %s15, 0
    %p84 = por %p82, %p83
    %s85 = ssub.s32 %s9, %s16
    %p86 = scmp.eq.s32.totalorder %s85, 0
    %s88 = sadd.s32 %s87, 1
    %s89 = scalar_select %p86, %s87, %s88
    %p92 = pneg %p86
    %p93 = scmp.eq.s32.totalorder %s9, 1
    %p94 = por %p92, %p93
    %p95 = scmp.ne.s32.totalorder %s87, %s90
    %p96 = scmp.eq.s32.totalorder %s9, 0
    %p97 = por %p95, %p96
    %p98 = scmp.ne.s32.totalorder %s87, %s90
    %p99 = scmp.eq.s32.totalorder %s14, 1
    %p100 = por %p98, %p99
    %p101 = scmp.ne.s32.totalorder %s90, %s91
    %p102 = scmp.eq.s32.totalorder %s14, 0
    %p103 = por %p101, %p102
    %p104 = scmp.ne.s32.totalorder %s90, %s91
    %p105 = scmp.eq.s32.totalorder %s15, 1
    %p106 = por %p104, %p105
    %p108 = scmp.ne.s32.totalorder %s91, %s107
    %p109 = scmp.eq.s32.totalorder %s15, 0
    %p110 = por %p108, %p109
    %p111 = scmp.le.s32.totalorder 1, %s9
    %p112 = scmp.lt.s32.totalorder %s9, 3
    %p113 = pnand %p111, %p112
    %p114 = pneg %p113
    // Predicated region
    $region9: #{mixed_3b_forward.6} parent=5 // pred_check
      _
    $region10: #{mixed_3b_forward.6} parent=5 // pred_check_branch
      %116 = sbr.rel (%p113) target = $region12
    $region11: #{mixed_3b_forward.6} parent=5 // pred_region
      %s117 = ssub.s32 %s9, 1
      // Predicated region
      $region13: #{mixed_3b_forward.6} parent=11 // pred_check
        %p118 = pneg %p56
      $region14: #{mixed_3b_forward.6} parent=11 // pred_check_branch
        %120 = sbr.rel (%p118) target = $region16
      $region15: #{mixed_3b_forward.6} parent=11 // pred_region
        _
      $region16: #{mixed_3b_forward.6} parent=11 // pred_fallthru
        _
      // Predicated region
      $region17: #{mixed_3b_forward.6} parent=11 // pred_check
        %p121 = pneg %p77
      $region18: #{mixed_3b_forward.6} parent=11 // pred_check_branch
        %123 = sbr.rel (%p121) target = $region20
      $region19: #{mixed_3b_forward.6} parent=11 // pred_region
        _
      $region20: #{mixed_3b_forward.6} parent=11 // pred_fallthru
        _
    $region12: #{mixed_3b_forward.6} parent=5 // pred_fallthru
      _
    %p124 = scmp.lt.s32.totalorder %s9, 2
    // Predicated region
    $region21: #{mixed_3b_forward.6} parent=5 // pred_check
      %p125 = pneg %p124
    $region22: #{mixed_3b_forward.6} parent=5 // pred_check_branch
      %127 = sbr.rel (%p125) target = $region24
    $region23: #{mixed_3b_forward.6} parent=5 // pred_region
      // Predicated region
      $region25: #{mixed_3b_forward.6} parent=23 // pred_check
        %p128 = pneg %p29
      $region26: #{mixed_3b_forward.6} parent=23 // pred_check_branch
        %130 = sbr.rel (%p128) target = $region28
      $region27: #{mixed_3b_forward.6} parent=23 // pred_region
        %s131 = smul.u32 32, %s9
        %p132 = scmp.lt.s32.totalorder %s131, 63
        %s133 = scalar_select %p132, %s131, 63
        %s134 = smul.addr %s133, 2
        %s135 = smul.addr %s134, 4
        %s136 = scalar_lea.vmem %s0, %s135
        %s137 = smul.u32 32, %s9
      $region28: #{mixed_3b_forward.6} parent=23 // pred_fallthru
        _
    $region24: #{mixed_3b_forward.6} parent=5 // pred_fallthru
      _
    %p138 = scmp.le.s32.totalorder 1, %s9
    %p139 = scmp.lt.s32.totalorder %s9, 3
    %p140 = pnand %p138, %p139
    %p141 = pneg %p140
    // Predicated region
    $region29: #{mixed_3b_forward.6} parent=5 // pred_check
      _
    $region30: #{mixed_3b_forward.6} parent=5 // pred_check_branch
      %143 = sbr.rel (%p140) target = $region32
    $region31: #{mixed_3b_forward.6} parent=5 // pred_region
      %s144 = ssub.s32 %s9, 1
      %s145 = smul.u32 32, %s14
      %p146 = scmp.lt.s32.totalorder %s145, 63
      %s147 = scalar_select %p146, %s145, 63
      %s148 = smul.addr %s147, 2
      %s149 = smul.addr %s148, 4
      %s150 = scalar_lea.vmem %s0, %s149
      %p151 = pneg %p35
      %p152 = pneg %p32
      %p153 = pneg %p56
      %p154 = pneg %p53
      %p155 = pneg %p77
      %p156 = pneg %p74
      %p157 = pneg %p103
      %p158 = pneg %p100
      %s159 = smul.u32 32, %s14
      %p160 = scmp.lt.s32.totalorder %s159, 63
      %s161 = scalar_select %p160, %s159, 63
      %s162 = smul.addr %s161, 2
      %s163 = smul.addr %s162, 4
      %s164 = scalar_lea.vmem %s3, %s163
      %s165 = smul.u32 32, %s14
      %p166 = scmp.lt.s32.totalorder %s165, 63
      %s167 = scalar_select %p166, %s165, 63
      %s168 = smul.addr %s167, 2
      %s169 = smul.addr %s168, 4
      %s170 = scalar_lea.vmem %s0, %s169
      %s171 = smul.u32 32, %s14
      %s172 = smul.u32 32, %s14
      %p173 = scmp.lt.s32.totalorder %s172, 63
      %s174 = scalar_select %p173, %s172, 63
      %s175 = smul.addr %s174, 2
      %s176 = smul.addr %s175, 4
      %s177 = scalar_lea.vmem %s3, %s176
      %s178 = smul.u32 32, %s14
      %v180 = vld [vmem:[%s170] sm:$0xff]
      %v181 = vld [vmem:[%s170 + $0x8] sm:$0xff]
      %v182 = vld [vmem:[%s170 + $0x10] sm:$0xff]
      %v183 = vld [vmem:[%s170 + $0x18] sm:$0xff]
      %v184 = vld [vmem:[%s170 + $0x20] sm:$0xff]
      %v185 = vld [vmem:[%s170 + $0x28] sm:$0xff]
      %v186 = vld [vmem:[%s170 + $0x30] sm:$0xff]
      %v187 = vld [vmem:[%s170 + $0x38] sm:$0xff]
      %v188 = vld [vmem:[%s170 + $0x40] sm:$0xff]
      %v189 = vld [vmem:[%s170 + $0x48] sm:$0xff]
      %v190 = vld [vmem:[%s170 + $0x50] sm:$0xff]
      %v191 = vld [vmem:[%s170 + $0x58] sm:$0xff]
      %v192 = vld [vmem:[%s170 + $0x60] sm:$0xff]
      %v193 = vld [vmem:[%s170 + $0x68] sm:$0xff]
      %v194 = vld [vmem:[%s170 + $0x70] sm:$0xff]
      %v195 = vld [vmem:[%s170 + $0x78] sm:$0xff]
      %v196 = vld [vmem:[%s170 + $0x80] sm:$0xff]
      %v197 = vld [vmem:[%s170 + $0x88] sm:$0xff]
      %v198 = vld [vmem:[%s170 + $0x90] sm:$0xff]
      %v199 = vld [vmem:[%s170 + $0x98] sm:$0xff]
      %v200 = vld [vmem:[%s170 + $0xa0] sm:$0xff]
      %v201 = vld [vmem:[%s170 + $0xa8] sm:$0xff]
      %v202 = vld [vmem:[%s170 + $0xb0] sm:$0xff]
      %v203 = vld [vmem:[%s170 + $0xb8] sm:$0xff]
      %v204 = vld [vmem:[%s170 + $0xc0] sm:$0xff]
      %v205 = vld [vmem:[%s170 + $0xc8] sm:$0xff]
      %v206 = vld [vmem:[%s170 + $0xd0] sm:$0xff]
      %v207 = vld [vmem:[%s170 + $0xd8] sm:$0xff]
      %v208 = vld [vmem:[%s170 + $0xe0] sm:$0xff]
      %v209 = vld [vmem:[%s170 + $0xe8] sm:$0xff]
      %v210 = vld [vmem:[%s170 + $0xf0] sm:$0xff]
      %v211 = vld [vmem:[%s170 + $0xf8] sm:$0xff]
      %v212 = vld [vmem:[%s1] sm:$0xff]
      %v213 = vld [vmem:[%s1 + $0x8] sm:$0xff]
      %v214 = vld [vmem:[%s1 + $0x10] sm:$0xff]
      %v215 = vld [vmem:[%s1 + $0x18] sm:$0xff]
      %v216 = vld [vmem:[%s1 + $0x20] sm:$0xff]
      %v217 = vld [vmem:[%s1 + $0x28] sm:$0xff]
      %v218 = vld [vmem:[%s1 + $0x30] sm:$0xff]
      %v219 = vld [vmem:[%s1 + $0x38] sm:$0xff]
      %v220 = vld [vmem:[%s1 + $0x40] sm:$0xff]
      %v221 = vld [vmem:[%s1 + $0x48] sm:$0xff]
      %v222 = vld [vmem:[%s1 + $0x50] sm:$0xff]
      %v223 = vld [vmem:[%s1 + $0x58] sm:$0xff]
      %v224 = vld [vmem:[%s1 + $0x60] sm:$0xff]
      %v225 = vld [vmem:[%s1 + $0x68] sm:$0xff]
      %v226 = vld [vmem:[%s1 + $0x70] sm:$0xff]
      %v227 = vld [vmem:[%s1 + $0x78] sm:$0xff]
      %v228 = vld [vmem:[%s1 + $0x80] sm:$0xff]
      %v229 = vld [vmem:[%s1 + $0x88] sm:$0xff]
      %v230 = vld [vmem:[%s1 + $0x90] sm:$0xff]
      %v231 = vld [vmem:[%s1 + $0x98] sm:$0xff]
      %v232 = vld [vmem:[%s1 + $0xa0] sm:$0xff]
      %v233 = vld [vmem:[%s1 + $0xa8] sm:$0xff]
      %v234 = vld [vmem:[%s1 + $0xb0] sm:$0xff]
      %v235 = vld [vmem:[%s1 + $0xb8] sm:$0xff]
      %v236 = vld [vmem:[%s2] sm:$0x3]
      %v238 = vlaneseq
      %v239 = vshrl.u32 %v238, 7
      %v240 = vsub.s32 0, %v239
      %v241 = vrot.slane %v236, %v240
      %v242 = vlaneseq
      %v243 = vshrl.u32 %v242, 7
      %v244 = vsub.s32 1, %v243
      %v245 = vrot.slane %v236, %v244
      %v280 = vunpack.c.l.b16 %v180
      %v281 = vunpack.c.h.b16 %v180
      %v282 = vunpack.c.l.b16 %v181
      %v283 = vunpack.c.h.b16 %v181
      %v284 = vunpack.c.l.b16 %v182
      %v285 = vunpack.c.h.b16 %v182
      %v286 = vunpack.c.l.b16 %v183
      %v287 = vunpack.c.h.b16 %v183
      %v288 = vunpack.c.l.b16 %v184
      %v289 = vunpack.c.h.b16 %v184
      %v290 = vunpack.c.l.b16 %v185
      %v291 = vunpack.c.h.b16 %v185
      %v292 = vunpack.c.l.b16 %v186
      %v293 = vunpack.c.h.b16 %v186
      %v294 = vunpack.c.l.b16 %v187
      %v295 = vunpack.c.h.b16 %v187
      %v296 = vunpack.c.l.b16 %v188
      %v297 = vunpack.c.h.b16 %v188
      %v298 = vunpack.c.l.b16 %v189
      %v299 = vunpack.c.h.b16 %v189
      %v300 = vunpack.c.l.b16 %v190
      %v301 = vunpack.c.h.b16 %v190
      %v302 = vunpack.c.l.b16 %v191
      %v303 = vunpack.c.h.b16 %v191
      %v304 = vunpack.c.l.b16 %v192
      %v305 = vunpack.c.h.b16 %v192
      %v306 = vunpack.c.l.b16 %v193
      %v307 = vunpack.c.h.b16 %v193
      %v308 = vunpack.c.l.b16 %v194
      %v309 = vunpack.c.h.b16 %v194
      %v310 = vunpack.c.l.b16 %v195
      %v311 = vunpack.c.h.b16 %v195
      %v312 = vunpack.c.l.b16 %v196
      %v313 = vunpack.c.h.b16 %v196
      %v314 = vunpack.c.l.b16 %v197
      %v315 = vunpack.c.h.b16 %v197
      %v316 = vunpack.c.l.b16 %v198
      %v317 = vunpack.c.h.b16 %v198
      %v318 = vunpack.c.l.b16 %v199
      %v319 = vunpack.c.h.b16 %v199
      %v320 = vunpack.c.l.b16 %v200
      %v321 = vunpack.c.h.b16 %v200
      %v322 = vunpack.c.l.b16 %v201
      %v323 = vunpack.c.h.b16 %v201
      %v324 = vunpack.c.l.b16 %v202
      %v325 = vunpack.c.h.b16 %v202
      %v326 = vunpack.c.l.b16 %v203
      %v327 = vunpack.c.h.b16 %v203
      %v328 = vunpack.c.l.b16 %v204
      %v329 = vunpack.c.h.b16 %v204
      %v330 = vunpack.c.l.b16 %v205
      %v331 = vunpack.c.h.b16 %v205
      %v332 = vunpack.c.l.b16 %v206
      %v333 = vunpack.c.h.b16 %v206
      %v334 = vunpack.c.l.b16 %v207
      %v335 = vunpack.c.h.b16 %v207
      %v336 = vunpack.c.l.b16 %v208
      %v337 = vunpack.c.h.b16 %v208
      %v338 = vunpack.c.l.b16 %v209
      %v339 = vunpack.c.h.b16 %v209
      %v340 = vunpack.c.l.b16 %v210
      %v341 = vunpack.c.h.b16 %v210
      %v342 = vunpack.c.l.b16 %v211
      %v343 = vunpack.c.h.b16 %v211
      %v344 = vpack.c.b16 %v282, %v280
      %v345 = vpack.c.b16 %v283, %v281
      %v346 = vpack.c.b16 %v286, %v284
      %v347 = vpack.c.b16 %v287, %v285
      %v348 = vpack.c.b16 %v290, %v288
      %v349 = vpack.c.b16 %v291, %v289
      %v350 = vpack.c.b16 %v294, %v292
      %v351 = vpack.c.b16 %v295, %v293
      %v352 = vpack.c.b16 %v298, %v296
      %v353 = vpack.c.b16 %v299, %v297
      %v354 = vpack.c.b16 %v302, %v300
      %v355 = vpack.c.b16 %v303, %v301
      %v356 = vpack.c.b16 %v306, %v304
      %v357 = vpack.c.b16 %v307, %v305
      %v358 = vpack.c.b16 %v310, %v308
      %v359 = vpack.c.b16 %v311, %v309
      %v360 = vpack.c.b16 %v314, %v312
      %v361 = vpack.c.b16 %v315, %v313
      %v362 = vpack.c.b16 %v318, %v316
      %v363 = vpack.c.b16 %v319, %v317
      %v364 = vpack.c.b16 %v322, %v320
      %v365 = vpack.c.b16 %v323, %v321
      %v366 = vpack.c.b16 %v326, %v324
      %v367 = vpack.c.b16 %v327, %v325
      %v368 = vpack.c.b16 %v330, %v328
      %v369 = vpack.c.b16 %v331, %v329
      %v370 = vpack.c.b16 %v334, %v332
      %v371 = vpack.c.b16 %v335, %v333
      %v372 = vpack.c.b16 %v338, %v336
      %v373 = vpack.c.b16 %v339, %v337
      %v374 = vpack.c.b16 %v342, %v340
      %v375 = vpack.c.b16 %v343, %v341
      %v416 = vunpack.c.l.b16 %v212
      %v417 = vunpack.c.h.b16 %v212
      %v418 = vunpack.c.l.b16 %v213
      %v419 = vunpack.c.h.b16 %v213
      %v420 = vunpack.c.l.b16 %v214
      %v421 = vunpack.c.h.b16 %v214
      %v422 = vunpack.c.l.b16 %v215
      %v423 = vunpack.c.h.b16 %v215
      %v424 = vunpack.c.l.b16 %v216
      %v425 = vunpack.c.h.b16 %v216
      %v426 = vunpack.c.l.b16 %v217
      %v427 = vunpack.c.h.b16 %v217
      %v428 = vunpack.c.l.b16 %v218
      %v429 = vunpack.c.h.b16 %v218
      %v430 = vunpack.c.l.b16 %v219
      %v431 = vunpack.c.h.b16 %v219
      %v432 = vunpack.c.l.b16 %v220
      %v433 = vunpack.c.h.b16 %v220
      %v434 = vunpack.c.l.b16 %v221
      %v435 = vunpack.c.h.b16 %v221
      %v436 = vunpack.c.l.b16 %v222
      %v437 = vunpack.c.h.b16 %v222
      %v438 = vunpack.c.l.b16 %v223
      %v439 = vunpack.c.h.b16 %v223
      %v440 = vunpack.c.l.b16 %v224
      %v441 = vunpack.c.h.b16 %v224
      %v442 = vunpack.c.l.b16 %v225
      %v443 = vunpack.c.h.b16 %v225
      %v444 = vunpack.c.l.b16 %v226
      %v445 = vunpack.c.h.b16 %v226
      %v446 = vunpack.c.l.b16 %v227
      %v447 = vunpack.c.h.b16 %v227
      %v448 = vunpack.c.l.b16 %v228
      %v449 = vunpack.c.h.b16 %v228
      %v450 = vunpack.c.l.b16 %v229
      %v451 = vunpack.c.h.b16 %v229
      %v452 = vunpack.c.l.b16 %v230
      %v453 = vunpack.c.h.b16 %v230
      %v454 = vunpack.c.l.b16 %v231
      %v455 = vunpack.c.h.b16 %v231
      %v456 = vunpack.c.l.b16 %v232
      %v457 = vunpack.c.h.b16 %v232
      %v458 = vunpack.c.l.b16 %v233
      %v459 = vunpack.c.h.b16 %v233
      %v460 = vunpack.c.l.b16 %v234
      %v461 = vunpack.c.h.b16 %v234
      %v462 = vunpack.c.l.b16 %v235
      %v463 = vunpack.c.h.b16 %v235
      %v464 = vpack.c.b16 %v418, %v416
      %v465 = vpack.c.b16 %v419, %v417
      %v466 = vpack.c.b16 %v422, %v420
      %v467 = vpack.c.b16 %v423, %v421
      %v468 = vpack.c.b16 %v426, %v424
      %v469 = vpack.c.b16 %v427, %v425
      %v470 = vpack.c.b16 %v430, %v428
      %v471 = vpack.c.b16 %v431, %v429
      %v472 = vpack.c.b16 %v434, %v432
      %v473 = vpack.c.b16 %v435, %v433
      %v474 = vpack.c.b16 %v438, %v436
      %v475 = vpack.c.b16 %v439, %v437
      %v476 = vpack.c.b16 %v442, %v440
      %v477 = vpack.c.b16 %v443, %v441
      %v478 = vpack.c.b16 %v446, %v444
      %v479 = vpack.c.b16 %v447, %v445
      %v480 = vpack.c.b16 %v450, %v448
      %v481 = vpack.c.b16 %v451, %v449
      %v482 = vpack.c.b16 %v454, %v452
      %v483 = vpack.c.b16 %v455, %v453
      %v484 = vpack.c.b16 %v458, %v456
      %v485 = vpack.c.b16 %v459, %v457
      %v486 = vpack.c.b16 %v462, %v460
      %v487 = vpack.c.b16 %v463, %v461
      %vm512 = vcmask 523264
      %v514 = vsel %vm512, %v345, 0
      %v517 = vsel %vm512, %v347, 0
      %v520 = vsel %vm512, %v349, 0
      %v523 = vsel %vm512, %v351, 0
      %v526 = vsel %vm512, %v353, 0
      %v529 = vsel %vm512, %v355, 0
      %v532 = vsel %vm512, %v357, 0
      %v535 = vsel %vm512, %v359, 0
      %v538 = vsel %vm512, %v361, 0
      %v541 = vsel %vm512, %v363, 0
      %v544 = vsel %vm512, %v365, 0
      %v547 = vsel %vm512, %v367, 0
      %v550 = vsel %vm512, %v369, 0
      %v553 = vsel %vm512, %v371, 0
      %v556 = vsel %vm512, %v373, 0
      %v559 = vsel %vm512, %v375, 0
      %561 = vmatprep.subr.bf16.mxu0 %v479
      %562 = vmatpush1.bf16.msra.mxu0 %v478
      %563 = vmatprep.subr.bf16.mxu0 %v477
      %564 = vmatpush1.bf16.msra.mxu0 %v476
      %565 = vmatprep.subr.bf16.mxu0 %v475
      %566 = vmatpush1.bf16.msra.mxu0 %v474
      %567 = vmatprep.subr.bf16.mxu0 %v473
      %568 = vmatpush1.bf16.msra.mxu0 %v472
      %569 = vmatprep.subr.bf16.mxu0 %v471
      %570 = vmatpush1.bf16.msra.mxu0 %v470
      %571 = vmatprep.subr.bf16.mxu0 %v469
      %572 = vmatpush1.bf16.msra.mxu0 %v468
      %573 = vmatprep.subr.bf16.mxu0 %v467
      %574 = vmatpush1.bf16.msra.mxu0 %v466
      %575 = vmatprep.subr.bf16.mxu0 %v465
      %576 = vmatpush1.bf16.msra.mxu0 %v464
      %577 = vmatprep.subr.bf16.mxu0 0
      %578 = vmatpush2.bf16.msra.mxu0 0
      %579 = vmatprep.subr.bf16.mxu0 0
      %580 = vmatpush2.bf16.msra.mxu0 0
      %581 = vmatprep.subr.bf16.mxu0 0
      %582 = vmatpush2.bf16.msra.mxu0 0
      %583 = vmatprep.subr.bf16.mxu0 0
      %584 = vmatpush2.bf16.msra.mxu0 0
      %585 = vmatprep.subr.bf16.mxu0 %v487
      %586 = vmatpush2.bf16.msra.mxu0 %v486
      %587 = vmatprep.subr.bf16.mxu0 %v485
      %588 = vmatpush2.bf16.msra.mxu0 %v484
      %589 = vmatprep.subr.bf16.mxu0 %v483
      %590 = vmatpush2.bf16.msra.mxu0 %v482
      %591 = vmatprep.subr.bf16.mxu0 %v481
      %592 = vmatpush2.bf16.msra.mxu0 %v480
      %593 = vmatprep.mubr.bf16.mxu0 %v514
      %594 = vmatmul.mubr.bf16.gmra.mxu0 %v344
      %v595 = vpop.f32.mrf.mxu0
      %v596 = vadd.f32 %v241, %v595
      %v597 = vpop.f32.mrf.mxu0
      %v598 = vadd.f32 %v245, %v597
      %v599 = vpop.f32.mrf.mxu0
      %v600 = vadd.f32 %v241, %v599
      %v601 = vpop.f32.mrf.mxu0
      %v602 = vadd.f32 %v245, %v601
      %603 = vmatprep.mubr.bf16.mxu0 %v517
      %604 = vmatmul.mubr.bf16.gmra.mxu0 %v346
      %v605 = vpop.f32.mrf.mxu0
      %v606 = vadd.f32 %v241, %v605
      %v607 = vpop.f32.mrf.mxu0
      %v608 = vadd.f32 %v245, %v607
      %v609 = vpop.f32.mrf.mxu0
      %v610 = vadd.f32 %v241, %v609
      %v611 = vpop.f32.mrf.mxu0
      %v612 = vadd.f32 %v245, %v611
      %613 = vmatprep.mubr.bf16.mxu0 %v520
      %614 = vmatmul.mubr.bf16.gmra.mxu0 %v348
      %v615 = vpop.f32.mrf.mxu0
      %v616 = vadd.f32 %v241, %v615
      %v617 = vpop.f32.mrf.mxu0
      %v618 = vadd.f32 %v245, %v617
      %v619 = vpop.f32.mrf.mxu0
      %v620 = vadd.f32 %v241, %v619
      %v621 = vpop.f32.mrf.mxu0
      %v622 = vadd.f32 %v245, %v621
      %623 = vmatprep.mubr.bf16.mxu0 %v523
      %624 = vmatmul.mubr.bf16.gmra.mxu0 %v350
      %v625 = vpop.f32.mrf.mxu0
      %v626 = vadd.f32 %v241, %v625
      %v627 = vpop.f32.mrf.mxu0
      %v628 = vadd.f32 %v245, %v627
      %v629 = vpop.f32.mrf.mxu0
      %v630 = vadd.f32 %v241, %v629
      %v631 = vpop.f32.mrf.mxu0
      %v632 = vadd.f32 %v245, %v631
      %633 = vmatprep.mubr.bf16.mxu0 %v526
      %634 = vmatmul.mubr.bf16.gmra.mxu0 %v352
      %v635 = vpop.f32.mrf.mxu0
      %v636 = vadd.f32 %v241, %v635
      %v637 = vpop.f32.mrf.mxu0
      %v638 = vadd.f32 %v245, %v637
      %v639 = vpop.f32.mrf.mxu0
      %v640 = vadd.f32 %v241, %v639
      %v641 = vpop.f32.mrf.mxu0
      %v642 = vadd.f32 %v245, %v641
      %643 = vmatprep.mubr.bf16.mxu0 %v529
      %644 = vmatmul.mubr.bf16.gmra.mxu0 %v354
      %v645 = vpop.f32.mrf.mxu0
      %v646 = vadd.f32 %v241, %v645
      %v647 = vpop.f32.mrf.mxu0
      %v648 = vadd.f32 %v245, %v647
      %v649 = vpop.f32.mrf.mxu0
      %v650 = vadd.f32 %v241, %v649
      %v651 = vpop.f32.mrf.mxu0
      %v652 = vadd.f32 %v245, %v651
      %653 = vmatprep.mubr.bf16.mxu0 %v532
      %654 = vmatmul.mubr.bf16.gmra.mxu0 %v356
      %v655 = vpop.f32.mrf.mxu0
      %v656 = vadd.f32 %v241, %v655
      %v657 = vpop.f32.mrf.mxu0
      %v658 = vadd.f32 %v245, %v657
      %v659 = vpop.f32.mrf.mxu0
      %v660 = vadd.f32 %v241, %v659
      %v661 = vpop.f32.mrf.mxu0
      %v662 = vadd.f32 %v245, %v661
      %663 = vmatprep.mubr.bf16.mxu0 %v535
      %664 = vmatmul.mubr.bf16.gmra.mxu0 %v358
      %v665 = vpop.f32.mrf.mxu0
      %v666 = vadd.f32 %v241, %v665
      %v667 = vpop.f32.mrf.mxu0
      %v668 = vadd.f32 %v245, %v667
      %v669 = vpop.f32.mrf.mxu0
      %v670 = vadd.f32 %v241, %v669
      %v671 = vpop.f32.mrf.mxu0
      %v672 = vadd.f32 %v245, %v671
      %673 = vmatprep.mubr.bf16.mxu0 %v538
      %674 = vmatmul.mubr.bf16.gmra.mxu0 %v360
      %v675 = vpop.f32.mrf.mxu0
      %v676 = vadd.f32 %v241, %v675
      %v677 = vpop.f32.mrf.mxu0
      %v678 = vadd.f32 %v245, %v677
      %v679 = vpop.f32.mrf.mxu0
      %v680 = vadd.f32 %v241, %v679
      %v681 = vpop.f32.mrf.mxu0
      %v682 = vadd.f32 %v245, %v681
      %683 = vmatprep.mubr.bf16.mxu0 %v541
      %684 = vmatmul.mubr.bf16.gmra.mxu0 %v362
      %v685 = vpop.f32.mrf.mxu0
      %v686 = vadd.f32 %v241, %v685
      %v687 = vpop.f32.mrf.mxu0
      %v688 = vadd.f32 %v245, %v687
      %v689 = vpop.f32.mrf.mxu0
      %v690 = vadd.f32 %v241, %v689
      %v691 = vpop.f32.mrf.mxu0
      %v692 = vadd.f32 %v245, %v691
      %693 = vmatprep.mubr.bf16.mxu0 %v544
      %694 = vmatmul.mubr.bf16.gmra.mxu0 %v364
      %v695 = vpop.f32.mrf.mxu0
      %v696 = vadd.f32 %v241, %v695
      %v697 = vpop.f32.mrf.mxu0
      %v698 = vadd.f32 %v245, %v697
      %v699 = vpop.f32.mrf.mxu0
      %v700 = vadd.f32 %v241, %v699
      %v701 = vpop.f32.mrf.mxu0
      %v702 = vadd.f32 %v245, %v701
      %703 = vmatprep.mubr.bf16.mxu0 %v547
      %704 = vmatmul.mubr.bf16.gmra.mxu0 %v366
      %v705 = vpop.f32.mrf.mxu0
      %v706 = vadd.f32 %v241, %v705
      %v707 = vpop.f32.mrf.mxu0
      %v708 = vadd.f32 %v245, %v707
      %v709 = vpop.f32.mrf.mxu0
      %v710 = vadd.f32 %v241, %v709
      %v711 = vpop.f32.mrf.mxu0
      %v712 = vadd.f32 %v245, %v711
      %713 = vmatprep.mubr.bf16.mxu0 %v550
      %714 = vmatmul.mubr.bf16.gmra.mxu0 %v368
      %v715 = vpop.f32.mrf.mxu0
      %v716 = vadd.f32 %v241, %v715
      %v717 = vpop.f32.mrf.mxu0
      %v718 = vadd.f32 %v245, %v717
      %v719 = vpop.f32.mrf.mxu0
      %v720 = vadd.f32 %v241, %v719
      %v721 = vpop.f32.mrf.mxu0
      %v722 = vadd.f32 %v245, %v721
      %723 = vmatprep.mubr.bf16.mxu0 %v553
      %724 = vmatmul.mubr.bf16.gmra.mxu0 %v370
      %v725 = vpop.f32.mrf.mxu0
      %v726 = vadd.f32 %v241, %v725
      %v727 = vpop.f32.mrf.mxu0
      %v728 = vadd.f32 %v245, %v727
      %v729 = vpop.f32.mrf.mxu0
      %v730 = vadd.f32 %v241, %v729
      %v731 = vpop.f32.mrf.mxu0
      %v732 = vadd.f32 %v245, %v731
      %733 = vmatprep.mubr.bf16.mxu0 %v556
      %734 = vmatmul.mubr.bf16.gmra.mxu0 %v372
      %v735 = vpop.f32.mrf.mxu0
      %v736 = vadd.f32 %v241, %v735
      %v737 = vpop.f32.mrf.mxu0
      %v738 = vadd.f32 %v245, %v737
      %v739 = vpop.f32.mrf.mxu0
      %v740 = vadd.f32 %v241, %v739
      %v741 = vpop.f32.mrf.mxu0
      %v742 = vadd.f32 %v245, %v741
      %743 = vmatprep.mubr.bf16.mxu0 %v559
      %744 = vmatmul.mubr.bf16.gmra.mxu0 %v374
      %v745 = vpop.f32.mrf.mxu0
      %v746 = vadd.f32 %v241, %v745
      %v747 = vpop.f32.mrf.mxu0
      %v748 = vadd.f32 %v245, %v747
      %v749 = vpop.f32.mrf.mxu0
      %v750 = vadd.f32 %v241, %v749
      %v751 = vpop.f32.mrf.mxu0
      %v752 = vadd.f32 %v245, %v751
      %753 = vdwg.mxu0
      %v754 = vmax.f32 %v596, 0.0
      %v755 = vmax.f32 %v598, 0.0
      %v756 = vmax.f32 %v600, 0.0
      %v757 = vmax.f32 %v602, 0.0
      %v758 = vmax.f32 %v606, 0.0
      %v759 = vmax.f32 %v608, 0.0
      %v760 = vmax.f32 %v610, 0.0
      %v761 = vmax.f32 %v612, 0.0
      %v762 = vmax.f32 %v616, 0.0
      %v763 = vmax.f32 %v618, 0.0
      %v764 = vmax.f32 %v620, 0.0
      %v765 = vmax.f32 %v622, 0.0
      %v766 = vmax.f32 %v626, 0.0
      %v767 = vmax.f32 %v628, 0.0
      %v768 = vmax.f32 %v630, 0.0
      %v769 = vmax.f32 %v632, 0.0
      %v770 = vmax.f32 %v636, 0.0
      %v771 = vmax.f32 %v638, 0.0
      %v772 = vmax.f32 %v640, 0.0
      %v773 = vmax.f32 %v642, 0.0
      %v774 = vmax.f32 %v646, 0.0
      %v775 = vmax.f32 %v648, 0.0
      %v776 = vmax.f32 %v650, 0.0
      %v777 = vmax.f32 %v652, 0.0
      %v778 = vmax.f32 %v656, 0.0
      %v779 = vmax.f32 %v658, 0.0
      %v780 = vmax.f32 %v660, 0.0
      %v781 = vmax.f32 %v662, 0.0
      %v782 = vmax.f32 %v666, 0.0
      %v783 = vmax.f32 %v668, 0.0
      %v784 = vmax.f32 %v670, 0.0
      %v785 = vmax.f32 %v672, 0.0
      %v786 = vmax.f32 %v676, 0.0
      %v787 = vmax.f32 %v678, 0.0
      %v788 = vmax.f32 %v680, 0.0
      %v789 = vmax.f32 %v682, 0.0
      %v790 = vmax.f32 %v686, 0.0
      %v791 = vmax.f32 %v688, 0.0
      %v792 = vmax.f32 %v690, 0.0
      %v793 = vmax.f32 %v692, 0.0
      %v794 = vmax.f32 %v696, 0.0
      %v795 = vmax.f32 %v698, 0.0
      %v796 = vmax.f32 %v700, 0.0
      %v797 = vmax.f32 %v702, 0.0
      %v798 = vmax.f32 %v706, 0.0
      %v799 = vmax.f32 %v708, 0.0
      %v800 = vmax.f32 %v710, 0.0
      %v801 = vmax.f32 %v712, 0.0
      %v802 = vmax.f32 %v716, 0.0
      %v803 = vmax.f32 %v718, 0.0
      %v804 = vmax.f32 %v720, 0.0
      %v805 = vmax.f32 %v722, 0.0
      %v806 = vmax.f32 %v726, 0.0
      %v807 = vmax.f32 %v728, 0.0
      %v808 = vmax.f32 %v730, 0.0
      %v809 = vmax.f32 %v732, 0.0
      %v810 = vmax.f32 %v736, 0.0
      %v811 = vmax.f32 %v738, 0.0
      %v812 = vmax.f32 %v740, 0.0
      %v813 = vmax.f32 %v742, 0.0
      %v814 = vmax.f32 %v746, 0.0
      %v815 = vmax.f32 %v748, 0.0
      %v816 = vmax.f32 %v750, 0.0
      %v817 = vmax.f32 %v752, 0.0
      %v818 = vpack.c.bf16 %v756, %v754
      %v819 = vpack.c.bf16 %v757, %v755
      %v820 = vpack.c.bf16 %v760, %v758
      %v821 = vpack.c.bf16 %v761, %v759
      %v822 = vpack.c.bf16 %v764, %v762
      %v823 = vpack.c.bf16 %v765, %v763
      %v824 = vpack.c.bf16 %v768, %v766
      %v825 = vpack.c.bf16 %v769, %v767
      %v826 = vpack.c.bf16 %v772, %v770
      %v827 = vpack.c.bf16 %v773, %v771
      %v828 = vpack.c.bf16 %v776, %v774
      %v829 = vpack.c.bf16 %v777, %v775
      %v830 = vpack.c.bf16 %v780, %v778
      %v831 = vpack.c.bf16 %v781, %v779
      %v832 = vpack.c.bf16 %v784, %v782
      %v833 = vpack.c.bf16 %v785, %v783
      %v834 = vpack.c.bf16 %v788, %v786
      %v835 = vpack.c.bf16 %v789, %v787
      %v836 = vpack.c.bf16 %v792, %v790
      %v837 = vpack.c.bf16 %v793, %v791
      %v838 = vpack.c.bf16 %v796, %v794
      %v839 = vpack.c.bf16 %v797, %v795
      %v840 = vpack.c.bf16 %v800, %v798
      %v841 = vpack.c.bf16 %v801, %v799
      %v842 = vpack.c.bf16 %v804, %v802
      %v843 = vpack.c.bf16 %v805, %v803
      %v844 = vpack.c.bf16 %v808, %v806
      %v845 = vpack.c.bf16 %v809, %v807
      %v846 = vpack.c.bf16 %v812, %v810
      %v847 = vpack.c.bf16 %v813, %v811
      %v848 = vpack.c.bf16 %v816, %v814
      %v849 = vpack.c.bf16 %v817, %v815
      %v882 = vunpack.c.l.b16 %v818
      %v883 = vunpack.c.l.b16 %v819
      %v884 = vunpack.c.h.b16 %v818
      %v885 = vunpack.c.h.b16 %v819
      %v886 = vunpack.c.l.b16 %v820
      %v887 = vunpack.c.l.b16 %v821
      %v888 = vunpack.c.h.b16 %v820
      %v889 = vunpack.c.h.b16 %v821
      %v890 = vunpack.c.l.b16 %v822
      %v891 = vunpack.c.l.b16 %v823
      %v892 = vunpack.c.h.b16 %v822
      %v893 = vunpack.c.h.b16 %v823
      %v894 = vunpack.c.l.b16 %v824
      %v895 = vunpack.c.l.b16 %v825
      %v896 = vunpack.c.h.b16 %v824
      %v897 = vunpack.c.h.b16 %v825
      %v898 = vunpack.c.l.b16 %v826
      %v899 = vunpack.c.l.b16 %v827
      %v900 = vunpack.c.h.b16 %v826
      %v901 = vunpack.c.h.b16 %v827
      %v902 = vunpack.c.l.b16 %v828
      %v903 = vunpack.c.l.b16 %v829
      %v904 = vunpack.c.h.b16 %v828
      %v905 = vunpack.c.h.b16 %v829
      %v906 = vunpack.c.l.b16 %v830
      %v907 = vunpack.c.l.b16 %v831
      %v908 = vunpack.c.h.b16 %v830
      %v909 = vunpack.c.h.b16 %v831
      %v910 = vunpack.c.l.b16 %v832
      %v911 = vunpack.c.l.b16 %v833
      %v912 = vunpack.c.h.b16 %v832
      %v913 = vunpack.c.h.b16 %v833
      %v914 = vunpack.c.l.b16 %v834
      %v915 = vunpack.c.l.b16 %v835
      %v916 = vunpack.c.h.b16 %v834
      %v917 = vunpack.c.h.b16 %v835
      %v918 = vunpack.c.l.b16 %v836
      %v919 = vunpack.c.l.b16 %v837
      %v920 = vunpack.c.h.b16 %v836
      %v921 = vunpack.c.h.b16 %v837
      %v922 = vunpack.c.l.b16 %v838
      %v923 = vunpack.c.l.b16 %v839
      %v924 = vunpack.c.h.b16 %v838
      %v925 = vunpack.c.h.b16 %v839
      %v926 = vunpack.c.l.b16 %v840
      %v927 = vunpack.c.l.b16 %v841
      %v928 = vunpack.c.h.b16 %v840
      %v929 = vunpack.c.h.b16 %v841
      %v930 = vunpack.c.l.b16 %v842
      %v931 = vunpack.c.l.b16 %v843
      %v932 = vunpack.c.h.b16 %v842
      %v933 = vunpack.c.h.b16 %v843
      %v934 = vunpack.c.l.b16 %v844
      %v935 = vunpack.c.l.b16 %v845
      %v936 = vunpack.c.h.b16 %v844
      %v937 = vunpack.c.h.b16 %v845
      %v938 = vunpack.c.l.b16 %v846
      %v939 = vunpack.c.l.b16 %v847
      %v940 = vunpack.c.h.b16 %v846
      %v941 = vunpack.c.h.b16 %v847
      %v942 = vunpack.c.l.b16 %v848
      %v943 = vunpack.c.l.b16 %v849
      %v944 = vunpack.c.h.b16 %v848
      %v945 = vunpack.c.h.b16 %v849
      %v946 = vpack.c.b16 %v883, %v882
      %v947 = vpack.c.b16 %v885, %v884
      %v948 = vpack.c.b16 %v887, %v886
      %v949 = vpack.c.b16 %v889, %v888
      %v950 = vpack.c.b16 %v891, %v890
      %v951 = vpack.c.b16 %v893, %v892
      %v952 = vpack.c.b16 %v895, %v894
      %v953 = vpack.c.b16 %v897, %v896
      %v954 = vpack.c.b16 %v899, %v898
      %v955 = vpack.c.b16 %v901, %v900
      %v956 = vpack.c.b16 %v903, %v902
      %v957 = vpack.c.b16 %v905, %v904
      %v958 = vpack.c.b16 %v907, %v906
      %v959 = vpack.c.b16 %v909, %v908
      %v960 = vpack.c.b16 %v911, %v910
      %v961 = vpack.c.b16 %v913, %v912
      %v962 = vpack.c.b16 %v915, %v914
      %v963 = vpack.c.b16 %v917, %v916
      %v964 = vpack.c.b16 %v919, %v918
      %v965 = vpack.c.b16 %v921, %v920
      %v966 = vpack.c.b16 %v923, %v922
      %v967 = vpack.c.b16 %v925, %v924
      %v968 = vpack.c.b16 %v927, %v926
      %v969 = vpack.c.b16 %v929, %v928
      %v970 = vpack.c.b16 %v931, %v930
      %v971 = vpack.c.b16 %v933, %v932
      %v972 = vpack.c.b16 %v935, %v934
      %v973 = vpack.c.b16 %v937, %v936
      %v974 = vpack.c.b16 %v939, %v938
      %v975 = vpack.c.b16 %v941, %v940
      %v976 = vpack.c.b16 %v943, %v942
      %v977 = vpack.c.b16 %v945, %v944
      %vm1010 = vcmask 1043456
      %vm1011 = vcmask 392196
      %vm1012 = vmor %vm1011, %vm1010
      %1013 = vst.msk [vmem:[%s177] sm:$0xff] %vm1012, %v946
      %1014 = vst.msk [vmem:[%s177 + $0x8] sm:$0xff] %vm1012, %v947
      %1015 = vst.msk [vmem:[%s177 + $0x10] sm:$0xff] %vm1012, %v948
      %1016 = vst.msk [vmem:[%s177 + $0x18] sm:$0xff] %vm1012, %v949
      %1017 = vst.msk [vmem:[%s177 + $0x20] sm:$0xff] %vm1012, %v950
      %1018 = vst.msk [vmem:[%s177 + $0x28] sm:$0xff] %vm1012, %v951
      %1019 = vst.msk [vmem:[%s177 + $0x30] sm:$0xff] %vm1012, %v952
      %1020 = vst.msk [vmem:[%s177 + $0x38] sm:$0xff] %vm1012, %v953
      %1021 = vst.msk [vmem:[%s177 + $0x40] sm:$0xff] %vm1012, %v954
      %1022 = vst.msk [vmem:[%s177 + $0x48] sm:$0xff] %vm1012, %v955
      %1023 = vst.msk [vmem:[%s177 + $0x50] sm:$0xff] %vm1012, %v956
      %1024 = vst.msk [vmem:[%s177 + $0x58] sm:$0xff] %vm1012, %v957
      %1025 = vst.msk [vmem:[%s177 + $0x60] sm:$0xff] %vm1012, %v958
      %1026 = vst.msk [vmem:[%s177 + $0x68] sm:$0xff] %vm1012, %v959
      %1027 = vst.msk [vmem:[%s177 + $0x70] sm:$0xff] %vm1012, %v960
      %1028 = vst.msk [vmem:[%s177 + $0x78] sm:$0xff] %vm1012, %v961
      %1029 = vst.msk [vmem:[%s177 + $0x80] sm:$0xff] %vm1012, %v962
      %1030 = vst.msk [vmem:[%s177 + $0x88] sm:$0xff] %vm1012, %v963
      %1031 = vst.msk [vmem:[%s177 + $0x90] sm:$0xff] %vm1012, %v964
      %1032 = vst.msk [vmem:[%s177 + $0x98] sm:$0xff] %vm1012, %v965
      %1033 = vst.msk [vmem:[%s177 + $0xa0] sm:$0xff] %vm1012, %v966
      %1034 = vst.msk [vmem:[%s177 + $0xa8] sm:$0xff] %vm1012, %v967
      %1035 = vst.msk [vmem:[%s177 + $0xb0] sm:$0xff] %vm1012, %v968
      %1036 = vst.msk [vmem:[%s177 + $0xb8] sm:$0xff] %vm1012, %v969
      %1037 = vst.msk [vmem:[%s177 + $0xc0] sm:$0xff] %vm1012, %v970
      %1038 = vst.msk [vmem:[%s177 + $0xc8] sm:$0xff] %vm1012, %v971
      %1039 = vst.msk [vmem:[%s177 + $0xd0] sm:$0xff] %vm1012, %v972
      %1040 = vst.msk [vmem:[%s177 + $0xd8] sm:$0xff] %vm1012, %v973
      %1041 = vst.msk [vmem:[%s177 + $0xe0] sm:$0xff] %vm1012, %v974
      %1042 = vst.msk [vmem:[%s177 + $0xe8] sm:$0xff] %vm1012, %v975
      %1043 = vst.msk [vmem:[%s177 + $0xf0] sm:$0xff] %vm1012, %v976
      %1044 = vst.msk [vmem:[%s177 + $0xf8] sm:$0xff] %vm1012, %v977
      %s1045 = smul.u32 32, %s14
      %p1046 = scmp.lt.s32.totalorder %s1045, 63
      %s1047 = scalar_select %p1046, %s1045, 63
      %s1048 = smul.addr %s1047, 2
      %s1049 = smul.addr %s1048, 4
      %s1050 = scalar_lea.vmem %s3, %s1049
      // Predicated region
      $region33: #{mixed_3b_forward.6} parent=31 // pred_check
        %p1051 = pneg %p100
      $region34: #{mixed_3b_forward.6} parent=31 // pred_check_branch
        %1053 = sbr.rel (%p1051) target = $region36
      $region35: #{mixed_3b_forward.6} parent=31 // pred_region
        %s1054 = smul.u32 32, %s14
      $region36: #{mixed_3b_forward.6} parent=31 // pred_fallthru
        _
    $region32: #{mixed_3b_forward.6} parent=5 // pred_fallthru
      _
    %p1055 = scmp.le.s32.totalorder 2, %s9
    // Predicated region
    $region37: #{mixed_3b_forward.6} parent=5 // pred_check
      %p1056 = pneg %p1055
    $region38: #{mixed_3b_forward.6} parent=5 // pred_check_branch
      %1058 = sbr.rel (%p1056) target = $region40
    $region39: #{mixed_3b_forward.6} parent=5 // pred_region
      %s1059 = ssub.s32 %s9, 2
      // Predicated region
      $region41: #{mixed_3b_forward.6} parent=39 // pred_check
        %p1060 = pneg %p106
      $region42: #{mixed_3b_forward.6} parent=39 // pred_check_branch
        %1062 = sbr.rel (%p1060) target = $region44
      $region43: #{mixed_3b_forward.6} parent=39 // pred_region
        %s1063 = smul.u32 32, %s15
        %p1064 = scmp.lt.s32.totalorder %s1063, 63
        %s1065 = scalar_select %p1064, %s1063, 63
        %s1066 = smul.addr %s1065, 2
        %s1067 = smul.addr %s1066, 4
        %s1068 = scalar_lea.vmem %s3, %s1067
      $region44: #{mixed_3b_forward.6} parent=39 // pred_fallthru
        _
    $region40: #{mixed_3b_forward.6} parent=5 // pred_fallthru
      _
  $region6: #{mixed_3b_forward.6} parent=0 // loop_footer
    %s13 = sadd.s32 1, %s9
  $region7: #{mixed_3b_forward.6} parent=0 // loop_footer_branch
    %8 = sbr.rel target = $region3
  $region8: #{mixed_3b_forward.6} parent=0 // loop_exit
    _

// kernel: mixed_3b_forward.11
$region0: #{mixed_3b_forward.11}
  #allocation0 [shape = 'u32[]', space=smem, size = 0x4, offset = 0x4, fixed_abs, tag = 'smem constant byte address 0x4 - core index']
  #allocation1 [shape = 'u32[144,128]{1,0:T(1,128)}', space=vmem, size = 0x12000, scoped, tag = 'internal scratch']
  %s0 = inlined_call_operand.vmem [shape: bf16[2,6,10,10,192], index: 0, kind: input, shape index: {}]
  %s1 = inlined_call_operand.vmem [shape: bf16[192,32], index: 1, kind: input, shape index: {}]
  %s2 = inlined_call_operand.vmem [shape: f32[1,32], index: 2, kind: input, shape index: {}]
  %s3 = inlined_call_operand.vmem [shape: f32[2,4,8,8,32], index: 3, kind: output, shape index: {}]
  %s4 = sld [smem:[#allocation0]]
  $region45: #{mixed_3b_forward.11} parent=0
    _
  %s6 = ssub.s32 1, %s4
  %s7 = scalar_select 0, %s6, %s4
  loop: start=0, step=1, limit=4
  $region2: #{mixed_3b_forward.11} parent=0 // loop_pre_header
    _
  $region3: #{mixed_3b_forward.11} parent=0 // loop_header
    %s9 = sphi 0, %s13
    %p10 = scmp.ge.s32.totalorder %s9, 4
    %s19 = sphi 0, %s21
    %s22 = sphi 0, %s19
    %s23 = sphi 0, %s22
    %s39 = sphi 0, %s23
    %s43 = sphi 0, %s43
    %s45 = sphi 0, %s43
    %s46 = sphi 0, %s45
    %s60 = sphi 0, %s46
    %s64 = sphi 0, %s64
    %s66 = sphi 0, %s64
    %s67 = sphi 0, %s66
    %s81 = sphi 0, %s67
    %s87 = sphi 0, %s89
    %s90 = sphi 0, %s87
    %s91 = sphi 0, %s90
    %s107 = sphi 0, %s91
  $region4: #{mixed_3b_forward.11} parent=0 // loop_header_branch
    %12 = sbr.rel (%p10) target = $region8
  $region5: #{mixed_3b_forward.11} parent=0 // loop_body
    %s14 = ssub.s32 %s9, 1
    %s15 = ssub.s32 %s9, 2
    %s16 = sadd.s32 %s9, 1
    %s17 = ssub.s32 %s9, %s16
    %p18 = scmp.eq.s32.totalorder %s17, 0
    %s20 = sadd.s32 %s19, 1
    %s21 = scalar_select %p18, %s19, %s20
    %p24 = pneg %p18
    %p25 = scmp.eq.s32.totalorder %s9, 1
    %p26 = por %p24, %p25
    %p27 = scmp.ne.s32.totalorder %s19, %s22
    %p28 = scmp.eq.s32.totalorder %s9, 0
    %p29 = por %p27, %p28
    %p30 = scmp.ne.s32.totalorder %s19, %s22
    %p31 = scmp.eq.s32.totalorder %s14, 1
    %p32 = por %p30, %p31
    %p33 = scmp.ne.s32.totalorder %s22, %s23
    %p34 = scmp.eq.s32.totalorder %s14, 0
    %p35 = por %p33, %p34
    %p36 = scmp.ne.s32.totalorder %s22, %s23
    %p37 = scmp.eq.s32.totalorder %s15, 1
    %p38 = por %p36, %p37
    %p40 = scmp.ne.s32.totalorder %s23, %s39
    %p41 = scmp.eq.s32.totalorder %s15, 0
    %p42 = por %p40, %p41
    %s44 = sadd.s32 %s43, 1
    %p47 = scmp.eq.s32.totalorder %s9, 1
    %p48 = scmp.ne.s32.totalorder %s43, %s45
    %p49 = scmp.eq.s32.totalorder %s9, 0
    %p50 = por %p48, %p49
    %p51 = scmp.ne.s32.totalorder %s43, %s45
    %p52 = scmp.eq.s32.totalorder %s14, 1
    %p53 = por %p51, %p52
    %p54 = scmp.ne.s32.totalorder %s45, %s46
    %p55 = scmp.eq.s32.totalorder %s14, 0
    %p56 = por %p54, %p55
    %p57 = scmp.ne.s32.totalorder %s45, %s46
    %p58 = scmp.eq.s32.totalorder %s15, 1
    %p59 = por %p57, %p58
    %p61 = scmp.ne.s32.totalorder %s46, %s60
    %p62 = scmp.eq.s32.totalorder %s15, 0
    %p63 = por %p61, %p62
    %s65 = sadd.s32 %s64, 1
    %p68 = scmp.eq.s32.totalorder %s9, 1
    %p69 = scmp.ne.s32.totalorder %s64, %s66
    %p70 = scmp.eq.s32.totalorder %s9, 0
    %p71 = por %p69, %p70
    %p72 = scmp.ne.s32.totalorder %s64, %s66
    %p73 = scmp.eq.s32.totalorder %s14, 1
    %p74 = por %p72, %p73
    %p75 = scmp.ne.s32.totalorder %s66, %s67
    %p76 = scmp.eq.s32.totalorder %s14, 0
    %p77 = por %p75, %p76
    %p78 = scmp.ne.s32.totalorder %s66, %s67
    %p79 = scmp.eq.s32.totalorder %s15, 1
    %p80 = por %p78, %p79
    %p82 = scmp.ne.s32.totalorder %s67, %s81
    %p83 = scmp.eq.s32.totalorder %s15, 0
    %p84 = por %p82, %p83
    %s85 = ssub.s32 %s9, %s16
    %p86 = scmp.eq.s32.totalorder %s85, 0
    %s88 = sadd.s32 %s87, 1
    %s89 = scalar_select %p86, %s87, %s88
    %p92 = pneg %p86
    %p93 = scmp.eq.s32.totalorder %s9, 1
    %p94 = por %p92, %p93
    %p95 = scmp.ne.s32.totalorder %s87, %s90
    %p96 = scmp.eq.s32.totalorder %s9, 0
    %p97 = por %p95, %p96
    %p98 = scmp.ne.s32.totalorder %s87, %s90
    %p99 = scmp.eq.s32.totalorder %s14, 1
    %p100 = por %p98, %p99
    %p101 = scmp.ne.s32.totalorder %s90, %s91
    %p102 = scmp.eq.s32.totalorder %s14, 0
    %p103 = por %p101, %p102
    %p104 = scmp.ne.s32.totalorder %s90, %s91
    %p105 = scmp.eq.s32.totalorder %s15, 1
    %p106 = por %p104, %p105
    %p108 = scmp.ne.s32.totalorder %s91, %s107
    %p109 = scmp.eq.s32.totalorder %s15, 0
    %p110 = por %p108, %p109
    %p111 = scmp.le.s32.totalorder 1, %s9
    %p112 = scmp.lt.s32.totalorder %s9, 3
    %p113 = pnand %p111, %p112
    %p114 = pneg %p113
    // Predicated region
    $region9: #{mixed_3b_forward.11} parent=5 // pred_check
      _
    $region10: #{mixed_3b_forward.11} parent=5 // pred_check_branch
      %116 = sbr.rel (%p113) target = $region12
    $region11: #{mixed_3b_forward.11} parent=5 // pred_region
      %s117 = ssub.s32 %s9, 1
      // Predicated region
      $region13: #{mixed_3b_forward.11} parent=11 // pred_check
        %p118 = pneg %p56
      $region14: #{mixed_3b_forward.11} parent=11 // pred_check_branch
        %120 = sbr.rel (%p118) target = $region16
      $region15: #{mixed_3b_forward.11} parent=11 // pred_region
        _
      $region16: #{mixed_3b_forward.11} parent=11 // pred_fallthru
        _
      // Predicated region
      $region17: #{mixed_3b_forward.11} parent=11 // pred_check
        %p121 = pneg %p77
      $region18: #{mixed_3b_forward.11} parent=11 // pred_check_branch
        %123 = sbr.rel (%p121) target = $region20
      $region19: #{mixed_3b_forward.11} parent=11 // pred_region
        _
      $region20: #{mixed_3b_forward.11} parent=11 // pred_fallthru
        _
    $region12: #{mixed_3b_forward.11} parent=5 // pred_fallthru
      _
    %p124 = scmp.lt.s32.totalorder %s9, 2
    // Predicated region
    $region21: #{mixed_3b_forward.11} parent=5 // pred_check
      %p125 = pneg %p124
    $region22: #{mixed_3b_forward.11} parent=5 // pred_check_branch
      %127 = sbr.rel (%p125) target = $region24
    $region23: #{mixed_3b_forward.11} parent=5 // pred_region
      // Predicated region
      $region25: #{mixed_3b_forward.11} parent=23 // pred_check
        %p128 = pneg %p29
      $region26: #{mixed_3b_forward.11} parent=23 // pred_check_branch
        %130 = sbr.rel (%p128) target = $region28
      $region27: #{mixed_3b_forward.11} parent=23 // pred_region
        %p131 = scmp.lt.s32.totalorder %s9, 1
        %s132 = scalar_select %p131, %s9, 1
        %s133 = smul.addr %s132, 240
        %s134 = smul.addr %s133, 4
        %s135 = scalar_lea.vmem %s0, %s134
      $region28: #{mixed_3b_forward.11} parent=23 // pred_fallthru
        _
    $region24: #{mixed_3b_forward.11} parent=5 // pred_fallthru
      _
    %p136 = scmp.le.s32.totalorder 1, %s9
    %p137 = scmp.lt.s32.totalorder %s9, 3
    %p138 = pnand %p136, %p137
    %p139 = pneg %p138
    // Predicated region
    $region29: #{mixed_3b_forward.11} parent=5 // pred_check
      _
    $region30: #{mixed_3b_forward.11} parent=5 // pred_check_branch
      %141 = sbr.rel (%p138) target = $region32
    $region31: #{mixed_3b_forward.11} parent=5 // pred_region
      %s142 = ssub.s32 %s9, 1
      %p143 = scmp.lt.s32.totalorder %s14, 1
      %s144 = scalar_select %p143, %s14, 1
      %s145 = smul.addr %s144, 240
      %s146 = smul.addr %s145, 4
      %s147 = scalar_lea.vmem %s0, %s146
      %p148 = pneg %p35
      %p149 = pneg %p32
      %p150 = pneg %p56
      %p151 = pneg %p53
      %p152 = pneg %p77
      %p153 = pneg %p74
      %p154 = pneg %p103
      %p155 = pneg %p100
      %p156 = scmp.lt.s32.totalorder %s14, 1
      %s157 = scalar_select %p156, %s14, 1
      %s158 = smul.addr %s157, 32
      %s159 = smul.addr %s158, 8
      %s160 = scalar_lea.vmem %s3, %s159
      %p161 = scmp.lt.s32.totalorder %s14, 1
      %s162 = scalar_select %p161, %s14, 1
      %s163 = smul.addr %s162, 240
      %s164 = smul.addr %s163, 4
      %s165 = scalar_lea.vmem %s0, %s164
      %p166 = scmp.lt.s32.totalorder %s14, 1
      %s167 = scalar_select %p166, %s14, 1
      %s168 = smul.addr %s167, 32
      %s169 = smul.addr %s168, 8
      %s170 = scalar_lea.vmem %s3, %s169
      %v172 = vld [vmem:[%s165] sm:$0xff]
      %v173 = vld [vmem:[%s165 + $0x8] sm:$0x11]
      %v174 = vld [vmem:[%s165 + $0x10] sm:$0xff]
      %v175 = vld [vmem:[%s165 + $0x18] sm:$0x11]
      %v176 = vld [vmem:[%s165 + $0x20] sm:$0xff]
      %v177 = vld [vmem:[%s165 + $0x28] sm:$0x11]
      %v178 = vld [vmem:[%s165 + $0x30] sm:$0xff]
      %v179 = vld [vmem:[%s165 + $0x38] sm:$0x11]
      %v180 = vld [vmem:[%s165 + $0x40] sm:$0xff]
      %v181 = vld [vmem:[%s165 + $0x48] sm:$0x11]
      %v182 = vld [vmem:[%s165 + $0x50] sm:$0xff]
      %v183 = vld [vmem:[%s165 + $0x58] sm:$0x11]
      %v184 = vld [vmem:[%s165 + $0x60] sm:$0xff]
      %v185 = vld [vmem:[%s165 + $0x68] sm:$0x11]
      %v186 = vld [vmem:[%s165 + $0x70] sm:$0xff]
      %v187 = vld [vmem:[%s165 + $0x78] sm:$0x11]
      %v188 = vld [vmem:[%s165 + $0x80] sm:$0xff]
      %v189 = vld [vmem:[%s165 + $0x88] sm:$0x11]
      %v190 = vld [vmem:[%s165 + $0x90] sm:$0xff]
      %v191 = vld [vmem:[%s165 + $0x98] sm:$0x11]
      %v192 = vld [vmem:[%s165 + $0xa0] sm:$0xff]
      %v193 = vld [vmem:[%s165 + $0xa8] sm:$0x11]
      %v194 = vld [vmem:[%s165 + $0xb0] sm:$0xff]
      %v195 = vld [vmem:[%s165 + $0xb8] sm:$0x11]
      %v196 = vld [vmem:[%s165 + $0xc0] sm:$0xff]
      %v197 = vld [vmem:[%s165 + $0xc8] sm:$0x11]
      %v198 = vld [vmem:[%s165 + $0xd0] sm:$0xff]
      %v199 = vld [vmem:[%s165 + $0xd8] sm:$0x11]
      %v200 = vld [vmem:[%s165 + $0xe0] sm:$0xff]
      %v201 = vld [vmem:[%s165 + $0xe8] sm:$0x11]
      %v202 = vld [vmem:[%s165 + $0xf0] sm:$0xff]
      %v203 = vld [vmem:[%s165 + $0xf8] sm:$0x11]
      %v204 = vld [vmem:[%s165 + $0x100] sm:$0xff]
      %v205 = vld [vmem:[%s165 + $0x108] sm:$0x11]
      %v206 = vld [vmem:[%s165 + $0x110] sm:$0xff]
      %v207 = vld [vmem:[%s165 + $0x118] sm:$0x11]
      %v208 = vld [vmem:[%s165 + $0x120] sm:$0xff]
      %v209 = vld [vmem:[%s165 + $0x128] sm:$0x11]
      %v210 = vld [vmem:[%s165 + $0x130] sm:$0xff]
      %v211 = vld [vmem:[%s165 + $0x138] sm:$0x11]
      %v212 = vld [vmem:[%s165 + $0x140] sm:$0xff]
      %v213 = vld [vmem:[%s165 + $0x148] sm:$0x11]
      %v214 = vld [vmem:[%s165 + $0x150] sm:$0xff]
      %v215 = vld [vmem:[%s165 + $0x158] sm:$0x11]
      %v216 = vld [vmem:[%s165 + $0x160] sm:$0xff]
      %v217 = vld [vmem:[%s165 + $0x168] sm:$0x11]
      %v218 = vld [vmem:[%s165 + $0x170] sm:$0xff]
      %v219 = vld [vmem:[%s165 + $0x178] sm:$0x11]
      %v220 = vld [vmem:[%s165 + $0x180] sm:$0xff]
      %v221 = vld [vmem:[%s165 + $0x188] sm:$0x11]
      %v222 = vld [vmem:[%s165 + $0x190] sm:$0xff]
      %v223 = vld [vmem:[%s165 + $0x198] sm:$0x11]
      %v224 = vld [vmem:[%s165 + $0x1a0] sm:$0xff]
      %v225 = vld [vmem:[%s165 + $0x1a8] sm:$0x11]
      %v226 = vld [vmem:[%s165 + $0x1b0] sm:$0xff]
      %v227 = vld [vmem:[%s165 + $0x1b8] sm:$0x11]
      %v228 = vld [vmem:[%s165 + $0x1c0] sm:$0xff]
      %v229 = vld [vmem:[%s165 + $0x1c8] sm:$0x11]
      %v230 = vld [vmem:[%s165 + $0x1d0] sm:$0xff]
      %v231 = vld [vmem:[%s165 + $0x1d8] sm:$0x11]
      %v232 = vld [vmem:[%s165 + $0x1e0] sm:$0xff]
      %v233 = vld [vmem:[%s165 + $0x1e8] sm:$0x11]
      %v234 = vld [vmem:[%s165 + $0x1f0] sm:$0xff]
      %v235 = vld [vmem:[%s165 + $0x1f8] sm:$0x11]
      %v236 = vld [vmem:[%s165 + $0x200] sm:$0xff]
      %v237 = vld [vmem:[%s165 + $0x208] sm:$0x11]
      %v238 = vld [vmem:[%s165 + $0x210] sm:$0xff]
      %v239 = vld [vmem:[%s165 + $0x218] sm:$0x11]
      %v240 = vld [vmem:[%s165 + $0x220] sm:$0xff]
      %v241 = vld [vmem:[%s165 + $0x228] sm:$0x11]
      %v242 = vld [vmem:[%s165 + $0x230] sm:$0xff]
      %v243 = vld [vmem:[%s165 + $0x238] sm:$0x11]
      %v244 = vld [vmem:[%s165 + $0x240] sm:$0xff]
      %v245 = vld [vmem:[%s165 + $0x248] sm:$0x11]
      %v246 = vld [vmem:[%s165 + $0x250] sm:$0xff]
      %v247 = vld [vmem:[%s165 + $0x258] sm:$0x11]
      %v248 = vld [vmem:[%s165 + $0x260] sm:$0xff]
      %v249 = vld [vmem:[%s165 + $0x268] sm:$0x11]
      %v250 = vld [vmem:[%s165 + $0x270] sm:$0xff]
      %v251 = vld [vmem:[%s165 + $0x278] sm:$0x11]
      %v252 = vld [vmem:[%s165 + $0x280] sm:$0xff]
      %v253 = vld [vmem:[%s165 + $0x288] sm:$0x11]
      %v254 = vld [vmem:[%s165 + $0x290] sm:$0xff]
      %v255 = vld [vmem:[%s165 + $0x298] sm:$0x11]
      %v256 = vld [vmem:[%s165 + $0x2a0] sm:$0xff]
      %v257 = vld [vmem:[%s165 + $0x2a8] sm:$0x11]
      %v258 = vld [vmem:[%s165 + $0x2b0] sm:$0xff]
      %v259 = vld [vmem:[%s165 + $0x2b8] sm:$0x11]
      %v260 = vld [vmem:[%s165 + $0x2c0] sm:$0xff]
      %v261 = vld [vmem:[%s165 + $0x2c8] sm:$0x11]
      %v262 = vld [vmem:[%s165 + $0x2d0] sm:$0xff]
      %v263 = vld [vmem:[%s165 + $0x2d8] sm:$0x11]
      %v264 = vld [vmem:[%s165 + $0x2e0] sm:$0xff]
      %v265 = vld [vmem:[%s165 + $0x2e8] sm:$0x11]
      %v266 = vld [vmem:[%s165 + $0x2f0] sm:$0xff]
      %v267 = vld [vmem:[%s165 + $0x2f8] sm:$0x11]
      %v268 = vld [vmem:[%s165 + $0x300] sm:$0xff]
      %v269 = vld [vmem:[%s165 + $0x308] sm:$0x11]
      %v270 = vld [vmem:[%s165 + $0x310] sm:$0xff]
      %v271 = vld [vmem:[%s165 + $0x318] sm:$0x11]
      %v272 = vld [vmem:[%s165 + $0x320] sm:$0xff]
      %v273 = vld [vmem:[%s165 + $0x328] sm:$0x11]
      %v274 = vld [vmem:[%s165 + $0x330] sm:$0xff]
      %v275 = vld [vmem:[%s165 + $0x338] sm:$0x11]
      %v276 = vld [vmem:[%s165 + $0x340] sm:$0xff]
      %v277 = vld [vmem:[%s165 + $0x348] sm:$0x11]
      %v278 = vld [vmem:[%s165 + $0x350] sm:$0xff]
      %v279 = vld [vmem:[%s165 + $0x358] sm:$0x11]
      %v280 = vld [vmem:[%s165 + $0x360] sm:$0xff]
      %v281 = vld [vmem:[%s165 + $0x368] sm:$0x11]
      %v282 = vld [vmem:[%s165 + $0x370] sm:$0xff]
      %v283 = vld [vmem:[%s165 + $0x378] sm:$0x11]
      %v284 = vld [vmem:[%s165 + $0x380] sm:$0xff]
      %v285 = vld [vmem:[%s165 + $0x388] sm:$0x11]
      %v286 = vld [vmem:[%s165 + $0x390] sm:$0xff]
      %v287 = vld [vmem:[%s165 + $0x398] sm:$0x11]
      %v288 = vld [vmem:[%s165 + $0x3a0] sm:$0xff]
      %v289 = vld [vmem:[%s165 + $0x3a8] sm:$0x11]
      %v290 = vld [vmem:[%s165 + $0x3b0] sm:$0xff]
      %v291 = vld [vmem:[%s165 + $0x3b8] sm:$0x11]
      %v292 = vmax.bf16 %v172, %v192
      %v293 = vmax.bf16 %v173, %v193
      %v294 = vmax.bf16 %v174, %v194
      %v295 = vmax.bf16 %v175, %v195
      %v296 = vmax.bf16 %v176, %v196
      %v297 = vmax.bf16 %v177, %v197
      %v298 = vmax.bf16 %v178, %v198
      %v299 = vmax.bf16 %v179, %v199
      %v300 = vmax.bf16 %v180, %v200
      %v301 = vmax.bf16 %v181, %v201
      %v302 = vmax.bf16 %v182, %v202
      %v303 = vmax.bf16 %v183, %v203
      %v304 = vmax.bf16 %v184, %v204
      %v305 = vmax.bf16 %v185, %v205
      %v306 = vmax.bf16 %v186, %v206
      %v307 = vmax.bf16 %v187, %v207
      %v308 = vmax.bf16 %v188, %v208
      %v309 = vmax.bf16 %v189, %v209
      %v310 = vmax.bf16 %v190, %v210
      %v311 = vmax.bf16 %v191, %v211
      %v312 = vmax.bf16 %v192, %v212
      %v313 = vmax.bf16 %v193, %v213
      %v314 = vmax.bf16 %v194, %v214
      %v315 = vmax.bf16 %v195, %v215
      %v316 = vmax.bf16 %v196, %v216
      %v317 = vmax.bf16 %v197, %v217
      %v318 = vmax.bf16 %v198, %v218
      %v319 = vmax.bf16 %v199, %v219
      %v320 = vmax.bf16 %v200, %v220
      %v321 = vmax.bf16 %v201, %v221
      %v322 = vmax.bf16 %v202, %v222
      %v323 = vmax.bf16 %v203, %v223
      %v324 = vmax.bf16 %v204, %v224
      %v325 = vmax.bf16 %v205, %v225
      %v326 = vmax.bf16 %v206, %v226
      %v327 = vmax.bf16 %v207, %v227
      %v328 = vmax.bf16 %v208, %v228
      %v329 = vmax.bf16 %v209, %v229
      %v330 = vmax.bf16 %v210, %v230
      %v331 = vmax.bf16 %v211, %v231
      %v332 = vmax.bf16 %v212, %v232
      %v333 = vmax.bf16 %v213, %v233
      %v334 = vmax.bf16 %v214, %v234
      %v335 = vmax.bf16 %v215, %v235
      %v336 = vmax.bf16 %v216, %v236
      %v337 = vmax.bf16 %v217, %v237
      %v338 = vmax.bf16 %v218, %v238
      %v339 = vmax.bf16 %v219, %v239
      %v340 = vmax.bf16 %v220, %v240
      %v341 = vmax.bf16 %v221, %v241
      %v342 = vmax.bf16 %v222, %v242
      %v343 = vmax.bf16 %v223, %v243
      %v344 = vmax.bf16 %v224, %v244
      %v345 = vmax.bf16 %v225, %v245
      %v346 = vmax.bf16 %v226, %v246
      %v347 = vmax.bf16 %v227, %v247
      %v348 = vmax.bf16 %v228, %v248
      %v349 = vmax.bf16 %v229, %v249
      %v350 = vmax.bf16 %v230, %v250
      %v351 = vmax.bf16 %v231, %v251
      %v352 = vmax.bf16 %v232, %v252
      %v353 = vmax.bf16 %v233, %v253
      %v354 = vmax.bf16 %v234, %v254
      %v355 = vmax.bf16 %v235, %v255
      %v356 = vmax.bf16 %v236, %v256
      %v357 = vmax.bf16 %v237, %v257
      %v358 = vmax.bf16 %v238, %v258
      %v359 = vmax.bf16 %v239, %v259
      %v360 = vmax.bf16 %v240, %v260
      %v361 = vmax.bf16 %v241, %v261
      %v362 = vmax.bf16 %v242, %v262
      %v363 = vmax.bf16 %v243, %v263
      %v364 = vmax.bf16 %v244, %v264
      %v365 = vmax.bf16 %v245, %v265
      %v366 = vmax.bf16 %v246, %v266
      %v367 = vmax.bf16 %v247, %v267
      %v368 = vmax.bf16 %v248, %v268
      %v369 = vmax.bf16 %v249, %v269
      %v370 = vmax.bf16 %v250, %v270
      %v371 = vmax.bf16 %v251, %v271
      %v372 = vmax.bf16 %v292, %v212
      %v373 = vmax.bf16 %v293, %v213
      %v374 = vmax.bf16 %v294, %v214
      %v375 = vmax.bf16 %v295, %v215
      %v376 = vmax.bf16 %v296, %v216
      %v377 = vmax.bf16 %v297, %v217
      %v378 = vmax.bf16 %v298, %v218
      %v379 = vmax.bf16 %v299, %v219
      %v380 = vmax.bf16 %v300, %v220
      %v381 = vmax.bf16 %v301, %v221
      %v382 = vmax.bf16 %v302, %v222
      %v383 = vmax.bf16 %v303, %v223
      %v384 = vmax.bf16 %v304, %v224
      %v385 = vmax.bf16 %v305, %v225
      %v386 = vmax.bf16 %v306, %v226
      %v387 = vmax.bf16 %v307, %v227
      %v388 = vmax.bf16 %v308, %v228
      %v389 = vmax.bf16 %v309, %v229
      %v390 = vmax.bf16 %v310, %v230
      %v391 = vmax.bf16 %v311, %v231
      %v392 = vmax.bf16 %v312, %v232
      %v393 = vmax.bf16 %v313, %v233
      %v394 = vmax.bf16 %v314, %v234
      %v395 = vmax.bf16 %v315, %v235
      %v396 = vmax.bf16 %v316, %v236
      %v397 = vmax.bf16 %v317, %v237
      %v398 = vmax.bf16 %v318, %v238
      %v399 = vmax.bf16 %v319, %v239
      %v400 = vmax.bf16 %v320, %v240
      %v401 = vmax.bf16 %v321, %v241
      %v402 = vmax.bf16 %v322, %v242
      %v403 = vmax.bf16 %v323, %v243
      %v404 = vmax.bf16 %v324, %v244
      %v405 = vmax.bf16 %v325, %v245
      %v406 = vmax.bf16 %v326, %v246
      %v407 = vmax.bf16 %v327, %v247
      %v408 = vmax.bf16 %v328, %v248
      %v409 = vmax.bf16 %v329, %v249
      %v410 = vmax.bf16 %v330, %v250
      %v411 = vmax.bf16 %v331, %v251
      %v412 = vmax.bf16 %v332, %v252
      %v413 = vmax.bf16 %v333, %v253
      %v414 = vmax.bf16 %v334, %v254
      %v415 = vmax.bf16 %v335, %v255
      %v416 = vmax.bf16 %v336, %v256
      %v417 = vmax.bf16 %v337, %v257
      %v418 = vmax.bf16 %v338, %v258
      %v419 = vmax.bf16 %v339, %v259
      %v420 = vmax.bf16 %v340, %v260
      %v421 = vmax.bf16 %v341, %v261
      %v422 = vmax.bf16 %v342, %v262
      %v423 = vmax.bf16 %v343, %v263
      %v424 = vmax.bf16 %v344, %v264
      %v425 = vmax.bf16 %v345, %v265
      %v426 = vmax.bf16 %v346, %v266
      %v427 = vmax.bf16 %v347, %v267
      %v428 = vmax.bf16 %v348, %v268
      %v429 = vmax.bf16 %v349, %v269
      %v430 = vmax.bf16 %v350, %v270
      %v431 = vmax.bf16 %v351, %v271
      %v432 = vmax.bf16 %v352, %v272
      %v433 = vmax.bf16 %v353, %v273
      %v434 = vmax.bf16 %v354, %v274
      %v435 = vmax.bf16 %v355, %v275
      %v436 = vmax.bf16 %v356, %v276
      %v437 = vmax.bf16 %v357, %v277
      %v438 = vmax.bf16 %v358, %v278
      %v439 = vmax.bf16 %v359, %v279
      %v440 = vmax.bf16 %v360, %v280
      %v441 = vmax.bf16 %v361, %v281
      %v442 = vmax.bf16 %v362, %v282
      %v443 = vmax.bf16 %v363, %v283
      %v444 = vmax.bf16 %v364, %v284
      %v445 = vmax.bf16 %v365, %v285
      %v446 = vmax.bf16 %v366, %v286
      %v447 = vmax.bf16 %v367, %v287
      %v448 = vmax.bf16 %v368, %v288
      %v449 = vmax.bf16 %v369, %v289
      %v450 = vmax.bf16 %v370, %v290
      %v451 = vmax.bf16 %v371, %v291
      %vm452 = vsmask.f32 3328
      %vm453 = vsmask.f32 7440
      %vm454 = vmor %vm452, %vm453
      %v456 = vshrl.u32 %v372, 16
      %v458 = vrot.slane %v456, 4
      %v459 = vshll.u32 %v372, 16
      %v461 = vrot.slane %v459, 5
      %v462 = vor.u32 %v458, %v461
      %v463 = vrot.slane %v462, 4
      %v465 = vshll.u32 %v373, 16
      %v467 = vrot.slane %v465, 5
      %v468 = vsel %vm454, %v463, %v467
      %v470 = vshrl.u32 %v374, 16
      %v472 = vrot.slane %v470, 4
      %v473 = vshll.u32 %v374, 16
      %v475 = vrot.slane %v473, 5
      %v476 = vor.u32 %v472, %v475
      %v477 = vrot.slane %v476, 4
      %v479 = vshll.u32 %v375, 16
      %v481 = vrot.slane %v479, 5
      %v482 = vsel %vm454, %v477, %v481
      %v484 = vshrl.u32 %v376, 16
      %v486 = vrot.slane %v484, 4
      %v487 = vshll.u32 %v376, 16
      %v489 = vrot.slane %v487, 5
      %v490 = vor.u32 %v486, %v489
      %v491 = vrot.slane %v490, 4
      %v493 = vshll.u32 %v377, 16
      %v495 = vrot.slane %v493, 5
      %v496 = vsel %vm454, %v491, %v495
      %v498 = vshrl.u32 %v378, 16
      %v500 = vrot.slane %v498, 4
      %v501 = vshll.u32 %v378, 16
      %v503 = vrot.slane %v501, 5
      %v504 = vor.u32 %v500, %v503
      %v505 = vrot.slane %v504, 4
      %v507 = vshll.u32 %v379, 16
      %v509 = vrot.slane %v507, 5
      %v510 = vsel %vm454, %v505, %v509
      %v512 = vshrl.u32 %v380, 16
      %v514 = vrot.slane %v512, 4
      %v515 = vshll.u32 %v380, 16
      %v517 = vrot.slane %v515, 5
      %v518 = vor.u32 %v514, %v517
      %v519 = vrot.slane %v518, 4
      %v521 = vshll.u32 %v381, 16
      %v523 = vrot.slane %v521, 5
      %v524 = vsel %vm454, %v519, %v523
      %v526 = vshrl.u32 %v382, 16
      %v528 = vrot.slane %v526, 4
      %v529 = vshll.u32 %v382, 16
      %v531 = vrot.slane %v529, 5
      %v532 = vor.u32 %v528, %v531
      %v533 = vrot.slane %v532, 4
      %v535 = vshll.u32 %v383, 16
      %v537 = vrot.slane %v535, 5
      %v538 = vsel %vm454, %v533, %v537
      %v540 = vshrl.u32 %v384, 16
      %v542 = vrot.slane %v540, 4
      %v543 = vshll.u32 %v384, 16
      %v545 = vrot.slane %v543, 5
      %v546 = vor.u32 %v542, %v545
      %v547 = vrot.slane %v546, 4
      %v549 = vshll.u32 %v385, 16
      %v551 = vrot.slane %v549, 5
      %v552 = vsel %vm454, %v547, %v551
      %v554 = vshrl.u32 %v386, 16
      %v556 = vrot.slane %v554, 4
      %v557 = vshll.u32 %v386, 16
      %v559 = vrot.slane %v557, 5
      %v560 = vor.u32 %v556, %v559
      %v561 = vrot.slane %v560, 4
      %v563 = vshll.u32 %v387, 16
      %v565 = vrot.slane %v563, 5
      %v566 = vsel %vm454, %v561, %v565
      %v568 = vshrl.u32 %v388, 16
      %v570 = vrot.slane %v568, 4
      %v571 = vshll.u32 %v388, 16
      %v573 = vrot.slane %v571, 5
      %v574 = vor.u32 %v570, %v573
      %v575 = vrot.slane %v574, 4
      %v577 = vshll.u32 %v389, 16
      %v579 = vrot.slane %v577, 5
      %v580 = vsel %vm454, %v575, %v579
      %v582 = vshrl.u32 %v390, 16
      %v584 = vrot.slane %v582, 4
      %v585 = vshll.u32 %v390, 16
      %v587 = vrot.slane %v585, 5
      %v588 = vor.u32 %v584, %v587
      %v589 = vrot.slane %v588, 4
      %v591 = vshll.u32 %v391, 16
      %v593 = vrot.slane %v591, 5
      %v594 = vsel %vm454, %v589, %v593
      %v596 = vshrl.u32 %v392, 16
      %v598 = vrot.slane %v596, 4
      %v599 = vshll.u32 %v392, 16
      %v601 = vrot.slane %v599, 5
      %v602 = vor.u32 %v598, %v601
      %v603 = vrot.slane %v602, 4
      %v605 = vshll.u32 %v393, 16
      %v607 = vrot.slane %v605, 5
      %v608 = vsel %vm454, %v603, %v607
      %v610 = vshrl.u32 %v394, 16
      %v612 = vrot.slane %v610, 4
      %v613 = vshll.u32 %v394, 16
      %v615 = vrot.slane %v613, 5
      %v616 = vor.u32 %v612, %v615
      %v617 = vrot.slane %v616, 4
      %v619 = vshll.u32 %v395, 16
      %v621 = vrot.slane %v619, 5
      %v622 = vsel %vm454, %v617, %v621
      %v624 = vshrl.u32 %v396, 16
      %v626 = vrot.slane %v624, 4
      %v627 = vshll.u32 %v396, 16
      %v629 = vrot.slane %v627, 5
      %v630 = vor.u32 %v626, %v629
      %v631 = vrot.slane %v630, 4
      %v633 = vshll.u32 %v397, 16
      %v635 = vrot.slane %v633, 5
      %v636 = vsel %vm454, %v631, %v635
      %v638 = vshrl.u32 %v398, 16
      %v640 = vrot.slane %v638, 4
      %v641 = vshll.u32 %v398, 16
      %v643 = vrot.slane %v641, 5
      %v644 = vor.u32 %v640, %v643
      %v645 = vrot.slane %v644, 4
      %v647 = vshll.u32 %v399, 16
      %v649 = vrot.slane %v647, 5
      %v650 = vsel %vm454, %v645, %v649
      %v652 = vshrl.u32 %v400, 16
      %v654 = vrot.slane %v652, 4
      %v655 = vshll.u32 %v400, 16
      %v657 = vrot.slane %v655, 5
      %v658 = vor.u32 %v654, %v657
      %v659 = vrot.slane %v658, 4
      %v661 = vshll.u32 %v401, 16
      %v663 = vrot.slane %v661, 5
      %v664 = vsel %vm454, %v659, %v663
      %v666 = vshrl.u32 %v402, 16
      %v668 = vrot.slane %v666, 4
      %v669 = vshll.u32 %v402, 16
      %v671 = vrot.slane %v669, 5
      %v672 = vor.u32 %v668, %v671
      %v673 = vrot.slane %v672, 4
      %v675 = vshll.u32 %v403, 16
      %v677 = vrot.slane %v675, 5
      %v678 = vsel %vm454, %v673, %v677
      %v680 = vshrl.u32 %v404, 16
      %v682 = vrot.slane %v680, 4
      %v683 = vshll.u32 %v404, 16
      %v685 = vrot.slane %v683, 5
      %v686 = vor.u32 %v682, %v685
      %v687 = vrot.slane %v686, 4
      %v689 = vshll.u32 %v405, 16
      %v691 = vrot.slane %v689, 5
      %v692 = vsel %vm454, %v687, %v691
      %v694 = vshrl.u32 %v406, 16
      %v696 = vrot.slane %v694, 4
      %v697 = vshll.u32 %v406, 16
      %v699 = vrot.slane %v697, 5
      %v700 = vor.u32 %v696, %v699
      %v701 = vrot.slane %v700, 4
      %v703 = vshll.u32 %v407, 16
      %v705 = vrot.slane %v703, 5
      %v706 = vsel %vm454, %v701, %v705
      %v708 = vshrl.u32 %v408, 16
      %v710 = vrot.slane %v708, 4
      %v711 = vshll.u32 %v408, 16
      %v713 = vrot.slane %v711, 5
      %v714 = vor.u32 %v710, %v713
      %v715 = vrot.slane %v714, 4
      %v717 = vshll.u32 %v409, 16
      %v719 = vrot.slane %v717, 5
      %v720 = vsel %vm454, %v715, %v719
      %v722 = vshrl.u32 %v410, 16
      %v724 = vrot.slane %v722, 4
      %v725 = vshll.u32 %v410, 16
      %v727 = vrot.slane %v725, 5
      %v728 = vor.u32 %v724, %v727
      %v729 = vrot.slane %v728, 4
      %v731 = vshll.u32 %v411, 16
      %v733 = vrot.slane %v731, 5
      %v734 = vsel %vm454, %v729, %v733
      %v736 = vshrl.u32 %v412, 16
      %v738 = vrot.slane %v736, 4
      %v739 = vshll.u32 %v412, 16
      %v741 = vrot.slane %v739, 5
      %v742 = vor.u32 %v738, %v741
      %v743 = vrot.slane %v742, 4
      %v745 = vshll.u32 %v413, 16
      %v747 = vrot.slane %v745, 5
      %v748 = vsel %vm454, %v743, %v747
      %v750 = vshrl.u32 %v414, 16
      %v752 = vrot.slane %v750, 4
      %v753 = vshll.u32 %v414, 16
      %v755 = vrot.slane %v753, 5
      %v756 = vor.u32 %v752, %v755
      %v757 = vrot.slane %v756, 4
      %v759 = vshll.u32 %v415, 16
      %v761 = vrot.slane %v759, 5
      %v762 = vsel %vm454, %v757, %v761
      %v764 = vshrl.u32 %v416, 16
      %v766 = vrot.slane %v764, 4
      %v767 = vshll.u32 %v416, 16
      %v769 = vrot.slane %v767, 5
      %v770 = vor.u32 %v766, %v769
      %v771 = vrot.slane %v770, 4
      %v773 = vshll.u32 %v417, 16
      %v775 = vrot.slane %v773, 5
      %v776 = vsel %vm454, %v771, %v775
      %v778 = vshrl.u32 %v418, 16
      %v780 = vrot.slane %v778, 4
      %v781 = vshll.u32 %v418, 16
      %v783 = vrot.slane %v781, 5
      %v784 = vor.u32 %v780, %v783
      %v785 = vrot.slane %v784, 4
      %v787 = vshll.u32 %v419, 16
      %v789 = vrot.slane %v787, 5
      %v790 = vsel %vm454, %v785, %v789
      %v792 = vshrl.u32 %v420, 16
      %v794 = vrot.slane %v792, 4
      %v795 = vshll.u32 %v420, 16
      %v797 = vrot.slane %v795, 5
      %v798 = vor.u32 %v794, %v797
      %v799 = vrot.slane %v798, 4
      %v801 = vshll.u32 %v421, 16
      %v803 = vrot.slane %v801, 5
      %v804 = vsel %vm454, %v799, %v803
      %v806 = vshrl.u32 %v422, 16
      %v808 = vrot.slane %v806, 4
      %v809 = vshll.u32 %v422, 16
      %v811 = vrot.slane %v809, 5
      %v812 = vor.u32 %v808, %v811
      %v813 = vrot.slane %v812, 4
      %v815 = vshll.u32 %v423, 16
      %v817 = vrot.slane %v815, 5
      %v818 = vsel %vm454, %v813, %v817
      %v820 = vshrl.u32 %v424, 16
      %v822 = vrot.slane %v820, 4
      %v823 = vshll.u32 %v424, 16
      %v825 = vrot.slane %v823, 5
      %v826 = vor.u32 %v822, %v825
      %v827 = vrot.slane %v826, 4
      %v829 = vshll.u32 %v425, 16
      %v831 = vrot.slane %v829, 5
      %v832 = vsel %vm454, %v827, %v831
      %v834 = vshrl.u32 %v426, 16
      %v836 = vrot.slane %v834, 4
      %v837 = vshll.u32 %v426, 16
      %v839 = vrot.slane %v837, 5
      %v840 = vor.u32 %v836, %v839
      %v841 = vrot.slane %v840, 4
      %v843 = vshll.u32 %v427, 16
      %v845 = vrot.slane %v843, 5
      %v846 = vsel %vm454, %v841, %v845
      %v848 = vshrl.u32 %v428, 16
      %v850 = vrot.slane %v848, 4
      %v851 = vshll.u32 %v428, 16
      %v853 = vrot.slane %v851, 5
      %v854 = vor.u32 %v850, %v853
      %v855 = vrot.slane %v854, 4
      %v857 = vshll.u32 %v429, 16
      %v859 = vrot.slane %v857, 5
      %v860 = vsel %vm454, %v855, %v859
      %v862 = vshrl.u32 %v430, 16
      %v864 = vrot.slane %v862, 4
      %v865 = vshll.u32 %v430, 16
      %v867 = vrot.slane %v865, 5
      %v868 = vor.u32 %v864, %v867
      %v869 = vrot.slane %v868, 4
      %v871 = vshll.u32 %v431, 16
      %v873 = vrot.slane %v871, 5
      %v874 = vsel %vm454, %v869, %v873
      %v876 = vshrl.u32 %v432, 16
      %v878 = vrot.slane %v876, 4
      %v879 = vshll.u32 %v432, 16
      %v881 = vrot.slane %v879, 5
      %v882 = vor.u32 %v878, %v881
      %v883 = vrot.slane %v882, 4
      %v885 = vshll.u32 %v433, 16
      %v887 = vrot.slane %v885, 5
      %v888 = vsel %vm454, %v883, %v887
      %v890 = vshrl.u32 %v434, 16
      %v892 = vrot.slane %v890, 4
      %v893 = vshll.u32 %v434, 16
      %v895 = vrot.slane %v893, 5
      %v896 = vor.u32 %v892, %v895
      %v897 = vrot.slane %v896, 4
      %v899 = vshll.u32 %v435, 16
      %v901 = vrot.slane %v899, 5
      %v902 = vsel %vm454, %v897, %v901
      %v904 = vshrl.u32 %v436, 16
      %v906 = vrot.slane %v904, 4
      %v907 = vshll.u32 %v436, 16
      %v909 = vrot.slane %v907, 5
      %v910 = vor.u32 %v906, %v909
      %v911 = vrot.slane %v910, 4
      %v913 = vshll.u32 %v437, 16
      %v915 = vrot.slane %v913, 5
      %v916 = vsel %vm454, %v911, %v915
      %v918 = vshrl.u32 %v438, 16
      %v920 = vrot.slane %v918, 4
      %v921 = vshll.u32 %v438, 16
      %v923 = vrot.slane %v921, 5
      %v924 = vor.u32 %v920, %v923
      %v925 = vrot.slane %v924, 4
      %v927 = vshll.u32 %v439, 16
      %v929 = vrot.slane %v927, 5
      %v930 = vsel %vm454, %v925, %v929
      %v932 = vshrl.u32 %v440, 16
      %v934 = vrot.slane %v932, 4
      %v935 = vshll.u32 %v440, 16
      %v937 = vrot.slane %v935, 5
      %v938 = vor.u32 %v934, %v937
      %v939 = vrot.slane %v938, 4
      %v941 = vshll.u32 %v441, 16
      %v943 = vrot.slane %v941, 5
      %v944 = vsel %vm454, %v939, %v943
      %v946 = vshrl.u32 %v442, 16
      %v948 = vrot.slane %v946, 4
      %v949 = vshll.u32 %v442, 16
      %v951 = vrot.slane %v949, 5
      %v952 = vor.u32 %v948, %v951
      %v953 = vrot.slane %v952, 4
      %v955 = vshll.u32 %v443, 16
      %v957 = vrot.slane %v955, 5
      %v958 = vsel %vm454, %v953, %v957
      %v960 = vshrl.u32 %v444, 16
      %v962 = vrot.slane %v960, 4
      %v963 = vshll.u32 %v444, 16
      %v965 = vrot.slane %v963, 5
      %v966 = vor.u32 %v962, %v965
      %v967 = vrot.slane %v966, 4
      %v969 = vshll.u32 %v445, 16
      %v971 = vrot.slane %v969, 5
      %v972 = vsel %vm454, %v967, %v971
      %v974 = vshrl.u32 %v446, 16
      %v976 = vrot.slane %v974, 4
      %v977 = vshll.u32 %v446, 16
      %v979 = vrot.slane %v977, 5
      %v980 = vor.u32 %v976, %v979
      %v981 = vrot.slane %v980, 4
      %v983 = vshll.u32 %v447, 16
      %v985 = vrot.slane %v983, 5
      %v986 = vsel %vm454, %v981, %v985
      %v988 = vshrl.u32 %v448, 16
      %v990 = vrot.slane %v988, 4
      %v991 = vshll.u32 %v448, 16
      %v993 = vrot.slane %v991, 5
      %v994 = vor.u32 %v990, %v993
      %v995 = vrot.slane %v994, 4
      %v997 = vshll.u32 %v449, 16
      %v999 = vrot.slane %v997, 5
      %v1000 = vsel %vm454, %v995, %v999
      %v1002 = vshrl.u32 %v450, 16
      %v1004 = vrot.slane %v1002, 4
      %v1005 = vshll.u32 %v450, 16
      %v1007 = vrot.slane %v1005, 5
      %v1008 = vor.u32 %v1004, %v1007
      %v1009 = vrot.slane %v1008, 4
      %v1011 = vshll.u32 %v451, 16
      %v1013 = vrot.slane %v1011, 5
      %v1014 = vsel %vm454, %v1009, %v1013
      %v1055 = vmax.bf16 %v372, %v468
      %v1056 = vmax.bf16 %v374, %v482
      %v1057 = vmax.bf16 %v376, %v496
      %v1058 = vmax.bf16 %v378, %v510
      %v1059 = vmax.bf16 %v380, %v524
      %v1060 = vmax.bf16 %v382, %v538
      %v1061 = vmax.bf16 %v384, %v552
      %v1062 = vmax.bf16 %v386, %v566
      %v1063 = vmax.bf16 %v388, %v580
      %v1064 = vmax.bf16 %v390, %v594
      %v1065 = vmax.bf16 %v392, %v608
      %v1066 = vmax.bf16 %v394, %v622
      %v1067 = vmax.bf16 %v396, %v636
      %v1068 = vmax.bf16 %v398, %v650
      %v1069 = vmax.bf16 %v400, %v664
      %v1070 = vmax.bf16 %v402, %v678
      %v1071 = vmax.bf16 %v404, %v692
      %v1072 = vmax.bf16 %v406, %v706
      %v1073 = vmax.bf16 %v408, %v720
      %v1074 = vmax.bf16 %v410, %v734
      %v1075 = vmax.bf16 %v412, %v748
      %v1076 = vmax.bf16 %v414, %v762
      %v1077 = vmax.bf16 %v416, %v776
      %v1078 = vmax.bf16 %v418, %v790
      %v1079 = vmax.bf16 %v420, %v804
      %v1080 = vmax.bf16 %v422, %v818
      %v1081 = vmax.bf16 %v424, %v832
      %v1082 = vmax.bf16 %v426, %v846
      %v1083 = vmax.bf16 %v428, %v860
      %v1084 = vmax.bf16 %v430, %v874
      %v1085 = vmax.bf16 %v432, %v888
      %v1086 = vmax.bf16 %v434, %v902
      %v1087 = vmax.bf16 %v436, %v916
      %v1088 = vmax.bf16 %v438, %v930
      %v1089 = vmax.bf16 %v440, %v944
      %v1090 = vmax.bf16 %v442, %v958
      %v1091 = vmax.bf16 %v444, %v972
      %v1092 = vmax.bf16 %v446, %v986
      %v1093 = vmax.bf16 %v448, %v1000
      %v1094 = vmax.bf16 %v450, %v1014
      %vm1175 = vcmask 1042432
      %vm1176 = vcmask 1046532
      %vm1177 = vmor %vm1175, %vm1176
      %v1178 = vrot.slane %v372, 5
      %v1179 = vrot.slane %v1178, 4
      %v1180 = vrot.slane %v373, 5
      %v1181 = vsel %vm1177, %v1179, %v1180
      %v1182 = vrot.slane %v374, 5
      %v1183 = vrot.slane %v1182, 4
      %v1184 = vrot.slane %v375, 5
      %v1185 = vsel %vm1177, %v1183, %v1184
      %v1186 = vrot.slane %v376, 5
      %v1187 = vrot.slane %v1186, 4
      %v1188 = vrot.slane %v377, 5
      %v1189 = vsel %vm1177, %v1187, %v1188
      %v1190 = vrot.slane %v378, 5
      %v1191 = vrot.slane %v1190, 4
      %v1192 = vrot.slane %v379, 5
      %v1193 = vsel %vm1177, %v1191, %v1192
      %v1194 = vrot.slane %v380, 5
      %v1195 = vrot.slane %v1194, 4
      %v1196 = vrot.slane %v381, 5
      %v1197 = vsel %vm1177, %v1195, %v1196
      %v1198 = vrot.slane %v382, 5
      %v1199 = vrot.slane %v1198, 4
      %v1200 = vrot.slane %v383, 5
      %v1201 = vsel %vm1177, %v1199, %v1200
      %v1202 = vrot.slane %v384, 5
      %v1203 = vrot.slane %v1202, 4
      %v1204 = vrot.slane %v385, 5
      %v1205 = vsel %vm1177, %v1203, %v1204
      %v1206 = vrot.slane %v386, 5
      %v1207 = vrot.slane %v1206, 4
      %v1208 = vrot.slane %v387, 5
      %v1209 = vsel %vm1177, %v1207, %v1208
      %v1210 = vrot.slane %v388, 5
      %v1211 = vrot.slane %v1210, 4
      %v1212 = vrot.slane %v389, 5
      %v1213 = vsel %vm1177, %v1211, %v1212
      %v1214 = vrot.slane %v390, 5
      %v1215 = vrot.slane %v1214, 4
      %v1216 = vrot.slane %v391, 5
      %v1217 = vsel %vm1177, %v1215, %v1216
      %v1218 = vrot.slane %v392, 5
      %v1219 = vrot.slane %v1218, 4
      %v1220 = vrot.slane %v393, 5
      %v1221 = vsel %vm1177, %v1219, %v1220
      %v1222 = vrot.slane %v394, 5
      %v1223 = vrot.slane %v1222, 4
      %v1224 = vrot.slane %v395, 5
      %v1225 = vsel %vm1177, %v1223, %v1224
      %v1226 = vrot.slane %v396, 5
      %v1227 = vrot.slane %v1226, 4
      %v1228 = vrot.slane %v397, 5
      %v1229 = vsel %vm1177, %v1227, %v1228
      %v1230 = vrot.slane %v398, 5
      %v1231 = vrot.slane %v1230, 4
      %v1232 = vrot.slane %v399, 5
      %v1233 = vsel %vm1177, %v1231, %v1232
      %v1234 = vrot.slane %v400, 5
      %v1235 = vrot.slane %v1234, 4
      %v1236 = vrot.slane %v401, 5
      %v1237 = vsel %vm1177, %v1235, %v1236
      %v1238 = vrot.slane %v402, 5
      %v1239 = vrot.slane %v1238, 4
      %v1240 = vrot.slane %v403, 5
      %v1241 = vsel %vm1177, %v1239, %v1240
      %v1242 = vrot.slane %v404, 5
      %v1243 = vrot.slane %v1242, 4
      %v1244 = vrot.slane %v405, 5
      %v1245 = vsel %vm1177, %v1243, %v1244
      %v1246 = vrot.slane %v406, 5
      %v1247 = vrot.slane %v1246, 4
      %v1248 = vrot.slane %v407, 5
      %v1249 = vsel %vm1177, %v1247, %v1248
      %v1250 = vrot.slane %v408, 5
      %v1251 = vrot.slane %v1250, 4
      %v1252 = vrot.slane %v409, 5
      %v1253 = vsel %vm1177, %v1251, %v1252
      %v1254 = vrot.slane %v410, 5
      %v1255 = vrot.slane %v1254, 4
      %v1256 = vrot.slane %v411, 5
      %v1257 = vsel %vm1177, %v1255, %v1256
      %v1258 = vrot.slane %v412, 5
      %v1259 = vrot.slane %v1258, 4
      %v1260 = vrot.slane %v413, 5
      %v1261 = vsel %vm1177, %v1259, %v1260
      %v1262 = vrot.slane %v414, 5
      %v1263 = vrot.slane %v1262, 4
      %v1264 = vrot.slane %v415, 5
      %v1265 = vsel %vm1177, %v1263, %v1264
      %v1266 = vrot.slane %v416, 5
      %v1267 = vrot.slane %v1266, 4
      %v1268 = vrot.slane %v417, 5
      %v1269 = vsel %vm1177, %v1267, %v1268
      %v1270 = vrot.slane %v418, 5
      %v1271 = vrot.slane %v1270, 4
      %v1272 = vrot.slane %v419, 5
      %v1273 = vsel %vm1177, %v1271, %v1272
      %v1274 = vrot.slane %v420, 5
      %v1275 = vrot.slane %v1274, 4
      %v1276 = vrot.slane %v421, 5
      %v1277 = vsel %vm1177, %v1275, %v1276
      %v1278 = vrot.slane %v422, 5
      %v1279 = vrot.slane %v1278, 4
      %v1280 = vrot.slane %v423, 5
      %v1281 = vsel %vm1177, %v1279, %v1280
      %v1282 = vrot.slane %v424, 5
      %v1283 = vrot.slane %v1282, 4
      %v1284 = vrot.slane %v425, 5
      %v1285 = vsel %vm1177, %v1283, %v1284
      %v1286 = vrot.slane %v426, 5
      %v1287 = vrot.slane %v1286, 4
      %v1288 = vrot.slane %v427, 5
      %v1289 = vsel %vm1177, %v1287, %v1288
      %v1290 = vrot.slane %v428, 5
      %v1291 = vrot.slane %v1290, 4
      %v1292 = vrot.slane %v429, 5
      %v1293 = vsel %vm1177, %v1291, %v1292
      %v1294 = vrot.slane %v430, 5
      %v1295 = vrot.slane %v1294, 4
      %v1296 = vrot.slane %v431, 5
      %v1297 = vsel %vm1177, %v1295, %v1296
      %v1298 = vrot.slane %v432, 5
      %v1299 = vrot.slane %v1298, 4
      %v1300 = vrot.slane %v433, 5
      %v1301 = vsel %vm1177, %v1299, %v1300
      %v1302 = vrot.slane %v434, 5
      %v1303 = vrot.slane %v1302, 4
      %v1304 = vrot.slane %v435, 5
      %v1305 = vsel %vm1177, %v1303, %v1304
      %v1306 = vrot.slane %v436, 5
      %v1307 = vrot.slane %v1306, 4
      %v1308 = vrot.slane %v437, 5
      %v1309 = vsel %vm1177, %v1307, %v1308
      %v1310 = vrot.slane %v438, 5
      %v1311 = vrot.slane %v1310, 4
      %v1312 = vrot.slane %v439, 5
      %v1313 = vsel %vm1177, %v1311, %v1312
      %v1314 = vrot.slane %v440, 5
      %v1315 = vrot.slane %v1314, 4
      %v1316 = vrot.slane %v441, 5
      %v1317 = vsel %vm1177, %v1315, %v1316
      %v1318 = vrot.slane %v442, 5
      %v1319 = vrot.slane %v1318, 4
      %v1320 = vrot.slane %v443, 5
      %v1321 = vsel %vm1177, %v1319, %v1320
      %v1322 = vrot.slane %v444, 5
      %v1323 = vrot.slane %v1322, 4
      %v1324 = vrot.slane %v445, 5
      %v1325 = vsel %vm1177, %v1323, %v1324
      %v1326 = vrot.slane %v446, 5
      %v1327 = vrot.slane %v1326, 4
      %v1328 = vrot.slane %v447, 5
      %v1329 = vsel %vm1177, %v1327, %v1328
      %v1330 = vrot.slane %v448, 5
      %v1331 = vrot.slane %v1330, 4
      %v1332 = vrot.slane %v449, 5
      %v1333 = vsel %vm1177, %v1331, %v1332
      %v1334 = vrot.slane %v450, 5
      %v1335 = vrot.slane %v1334, 4
      %v1336 = vrot.slane %v451, 5
      %v1337 = vsel %vm1177, %v1335, %v1336
      %v1378 = vmax.bf16 %v1055, %v1181
      %v1379 = vmax.bf16 %v1056, %v1185
      %v1380 = vmax.bf16 %v1057, %v1189
      %v1381 = vmax.bf16 %v1058, %v1193
      %v1382 = vmax.bf16 %v1059, %v1197
      %v1383 = vmax.bf16 %v1060, %v1201
      %v1384 = vmax.bf16 %v1061, %v1205
      %v1385 = vmax.bf16 %v1062, %v1209
      %v1386 = vmax.bf16 %v1063, %v1213
      %v1387 = vmax.bf16 %v1064, %v1217
      %v1388 = vmax.bf16 %v1065, %v1221
      %v1389 = vmax.bf16 %v1066, %v1225
      %v1390 = vmax.bf16 %v1067, %v1229
      %v1391 = vmax.bf16 %v1068, %v1233
      %v1392 = vmax.bf16 %v1069, %v1237
      %v1393 = vmax.bf16 %v1070, %v1241
      %v1394 = vmax.bf16 %v1071, %v1245
      %v1395 = vmax.bf16 %v1072, %v1249
      %v1396 = vmax.bf16 %v1073, %v1253
      %v1397 = vmax.bf16 %v1074, %v1257
      %v1398 = vmax.bf16 %v1075, %v1261
      %v1399 = vmax.bf16 %v1076, %v1265
      %v1400 = vmax.bf16 %v1077, %v1269
      %v1401 = vmax.bf16 %v1078, %v1273
      %v1402 = vmax.bf16 %v1079, %v1277
      %v1403 = vmax.bf16 %v1080, %v1281
      %v1404 = vmax.bf16 %v1081, %v1285
      %v1405 = vmax.bf16 %v1082, %v1289
      %v1406 = vmax.bf16 %v1083, %v1293
      %v1407 = vmax.bf16 %v1084, %v1297
      %v1408 = vmax.bf16 %v1085, %v1301
      %v1409 = vmax.bf16 %v1086, %v1305
      %v1410 = vmax.bf16 %v1087, %v1309
      %v1411 = vmax.bf16 %v1088, %v1313
      %v1412 = vmax.bf16 %v1089, %v1317
      %v1413 = vmax.bf16 %v1090, %v1321
      %v1414 = vmax.bf16 %v1091, %v1325
      %v1415 = vmax.bf16 %v1092, %v1329
      %v1416 = vmax.bf16 %v1093, %v1333
      %v1417 = vmax.bf16 %v1094, %v1337
      %v1418 = vmax.bf16 %v1378, %v1379
      %v1419 = vmax.bf16 %v1379, %v1380
      %v1420 = vmax.bf16 %v1380, %v1381
      %v1421 = vmax.bf16 %v1381, %v1382
      %v1422 = vmax.bf16 %v1382, %v1383
      %v1423 = vmax.bf16 %v1383, %v1384
      %v1424 = vmax.bf16 %v1384, %v1385
      %v1425 = vmax.bf16 %v1385, %v1386
      %v1426 = vmax.bf16 %v1388, %v1389
      %v1427 = vmax.bf16 %v1389, %v1390
      %v1428 = vmax.bf16 %v1390, %v1391
      %v1429 = vmax.bf16 %v1391, %v1392
      %v1430 = vmax.bf16 %v1392, %v1393
      %v1431 = vmax.bf16 %v1393, %v1394
      %v1432 = vmax.bf16 %v1394, %v1395
      %v1433 = vmax.bf16 %v1395, %v1396
      %v1434 = vmax.bf16 %v1398, %v1399
      %v1435 = vmax.bf16 %v1399, %v1400
      %v1436 = vmax.bf16 %v1400, %v1401
      %v1437 = vmax.bf16 %v1401, %v1402
      %v1438 = vmax.bf16 %v1402, %v1403
      %v1439 = vmax.bf16 %v1403, %v1404
      %v1440 = vmax.bf16 %v1404, %v1405
      %v1441 = vmax.bf16 %v1405, %v1406
      %v1442 = vmax.bf16 %v1408, %v1409
      %v1443 = vmax.bf16 %v1409, %v1410
      %v1444 = vmax.bf16 %v1410, %v1411
      %v1445 = vmax.bf16 %v1411, %v1412
      %v1446 = vmax.bf16 %v1412, %v1413
      %v1447 = vmax.bf16 %v1413, %v1414
      %v1448 = vmax.bf16 %v1414, %v1415
      %v1449 = vmax.bf16 %v1415, %v1416
      %v1450 = vmax.bf16 %v1418, %v1380
      %v1451 = vmax.bf16 %v1419, %v1381
      %v1452 = vmax.bf16 %v1420, %v1382
      %v1453 = vmax.bf16 %v1421, %v1383
      %v1454 = vmax.bf16 %v1422, %v1384
      %v1455 = vmax.bf16 %v1423, %v1385
      %v1456 = vmax.bf16 %v1424, %v1386
      %v1457 = vmax.bf16 %v1425, %v1387
      %v1458 = vmax.bf16 %v1426, %v1390
      %v1459 = vmax.bf16 %v1427, %v1391
      %v1460 = vmax.bf16 %v1428, %v1392
      %v1461 = vmax.bf16 %v1429, %v1393
      %v1462 = vmax.bf16 %v1430, %v1394
      %v1463 = vmax.bf16 %v1431, %v1395
      %v1464 = vmax.bf16 %v1432, %v1396
      %v1465 = vmax.bf16 %v1433, %v1397
      %v1466 = vmax.bf16 %v1434, %v1400
      %v1467 = vmax.bf16 %v1435, %v1401
      %v1468 = vmax.bf16 %v1436, %v1402
      %v1469 = vmax.bf16 %v1437, %v1403
      %v1470 = vmax.bf16 %v1438, %v1404
      %v1471 = vmax.bf16 %v1439, %v1405
      %v1472 = vmax.bf16 %v1440, %v1406
      %v1473 = vmax.bf16 %v1441, %v1407
      %v1474 = vmax.bf16 %v1442, %v1410
      %v1475 = vmax.bf16 %v1443, %v1411
      %v1476 = vmax.bf16 %v1444, %v1412
      %v1477 = vmax.bf16 %v1445, %v1413
      %v1478 = vmax.bf16 %v1446, %v1414
      %v1479 = vmax.bf16 %v1447, %v1415
      %v1480 = vmax.bf16 %v1448, %v1416
      %v1481 = vmax.bf16 %v1449, %v1417
      %v1482 = vld [vmem:[%s1] sm:$0xf]
      %v1483 = vld [vmem:[%s1 + $0x4] sm:$0xf]
      %v1484 = vld [vmem:[%s1 + $0x8] sm:$0xf]
      %v1485 = vld [vmem:[%s1 + $0xc] sm:$0xf]
      %v1486 = vld [vmem:[%s1 + $0x10] sm:$0xf]
      %v1487 = vld [vmem:[%s1 + $0x14] sm:$0xf]
      %v1488 = vld [vmem:[%s1 + $0x18] sm:$0xf]
      %v1489 = vld [vmem:[%s1 + $0x1c] sm:$0xf]
      %v1490 = vld [vmem:[%s1 + $0x20] sm:$0xf]
      %v1491 = vld [vmem:[%s1 + $0x24] sm:$0xf]
      %v1492 = vld [vmem:[%s1 + $0x28] sm:$0xf]
      %v1493 = vld [vmem:[%s1 + $0x2c] sm:$0xf]
      %v1494 = vld [vmem:[%s1 + $0x30] sm:$0xf]
      %v1495 = vld [vmem:[%s1 + $0x34] sm:$0xf]
      %v1496 = vld [vmem:[%s1 + $0x38] sm:$0xf]
      %v1497 = vld [vmem:[%s1 + $0x3c] sm:$0xf]
      %v1498 = vld [vmem:[%s1 + $0x40] sm:$0xf]
      %v1499 = vld [vmem:[%s1 + $0x44] sm:$0xf]
      %v1500 = vld [vmem:[%s1 + $0x48] sm:$0xf]
      %v1501 = vld [vmem:[%s1 + $0x4c] sm:$0xf]
      %v1502 = vld [vmem:[%s1 + $0x50] sm:$0xf]
      %v1503 = vld [vmem:[%s1 + $0x54] sm:$0xf]
      %v1504 = vld [vmem:[%s1 + $0x58] sm:$0xf]
      %v1505 = vld [vmem:[%s1 + $0x5c] sm:$0xf]
      %v1506 = vld [vmem:[%s2] sm:$0x1]
      %v1508 = vlaneseq
      %v1509 = vshrl.u32 %v1508, 7
      %v1510 = vsub.s32 0, %v1509
      %v1511 = vrot.slane %v1506, %v1510
      %v1545 = vunpack.c.l.b16 %v1450
      %v1546 = vunpack.c.h.b16 %v1450
      %v1547 = vunpack.c.l.b16 %v1451
      %v1548 = vunpack.c.h.b16 %v1451
      %v1549 = vunpack.c.l.b16 %v1452
      %v1550 = vunpack.c.h.b16 %v1452
      %v1551 = vunpack.c.l.b16 %v1453
      %v1552 = vunpack.c.h.b16 %v1453
      %v1553 = vunpack.c.l.b16 %v1454
      %v1554 = vunpack.c.h.b16 %v1454
      %v1555 = vunpack.c.l.b16 %v1455
      %v1556 = vunpack.c.h.b16 %v1455
      %v1557 = vunpack.c.l.b16 %v1456
      %v1558 = vunpack.c.h.b16 %v1456
      %v1559 = vunpack.c.l.b16 %v1457
      %v1560 = vunpack.c.h.b16 %v1457
      %v1561 = vunpack.c.l.b16 %v1458
      %v1562 = vunpack.c.h.b16 %v1458
      %v1563 = vunpack.c.l.b16 %v1459
      %v1564 = vunpack.c.h.b16 %v1459
      %v1565 = vunpack.c.l.b16 %v1460
      %v1566 = vunpack.c.h.b16 %v1460
      %v1567 = vunpack.c.l.b16 %v1461
      %v1568 = vunpack.c.h.b16 %v1461
      %v1569 = vunpack.c.l.b16 %v1462
      %v1570 = vunpack.c.h.b16 %v1462
      %v1571 = vunpack.c.l.b16 %v1463
      %v1572 = vunpack.c.h.b16 %v1463
      %v1573 = vunpack.c.l.b16 %v1464
      %v1574 = vunpack.c.h.b16 %v1464
      %v1575 = vunpack.c.l.b16 %v1465
      %v1576 = vunpack.c.h.b16 %v1465
      %v1577 = vunpack.c.l.b16 %v1466
      %v1578 = vunpack.c.h.b16 %v1466
      %v1579 = vunpack.c.l.b16 %v1467
      %v1580 = vunpack.c.h.b16 %v1467
      %v1581 = vunpack.c.l.b16 %v1468
      %v1582 = vunpack.c.h.b16 %v1468
      %v1583 = vunpack.c.l.b16 %v1469
      %v1584 = vunpack.c.h.b16 %v1469
      %v1585 = vunpack.c.l.b16 %v1470
      %v1586 = vunpack.c.h.b16 %v1470
      %v1587 = vunpack.c.l.b16 %v1471
      %v1588 = vunpack.c.h.b16 %v1471
      %v1589 = vunpack.c.l.b16 %v1472
      %v1590 = vunpack.c.h.b16 %v1472
      %v1591 = vunpack.c.l.b16 %v1473
      %v1592 = vunpack.c.h.b16 %v1473
      %v1593 = vunpack.c.l.b16 %v1474
      %v1594 = vunpack.c.h.b16 %v1474
      %v1595 = vunpack.c.l.b16 %v1475
      %v1596 = vunpack.c.h.b16 %v1475
      %v1597 = vunpack.c.l.b16 %v1476
      %v1598 = vunpack.c.h.b16 %v1476
      %v1599 = vunpack.c.l.b16 %v1477
      %v1600 = vunpack.c.h.b16 %v1477
      %v1601 = vunpack.c.l.b16 %v1478
      %v1602 = vunpack.c.h.b16 %v1478
      %v1603 = vunpack.c.l.b16 %v1479
      %v1604 = vunpack.c.h.b16 %v1479
      %v1605 = vunpack.c.l.b16 %v1480
      %v1606 = vunpack.c.h.b16 %v1480
      %v1607 = vunpack.c.l.b16 %v1481
      %v1608 = vunpack.c.h.b16 %v1481
      %v1609 = vpack.c.b16 %v1547, %v1545
      %v1610 = vpack.c.b16 %v1548, %v1546
      %v1611 = vpack.c.b16 %v1551, %v1549
      %v1612 = vpack.c.b16 %v1552, %v1550
      %v1613 = vpack.c.b16 %v1555, %v1553
      %v1614 = vpack.c.b16 %v1556, %v1554
      %v1615 = vpack.c.b16 %v1559, %v1557
      %v1616 = vpack.c.b16 %v1560, %v1558
      %v1617 = vpack.c.b16 %v1563, %v1561
      %v1618 = vpack.c.b16 %v1564, %v1562
      %v1619 = vpack.c.b16 %v1567, %v1565
      %v1620 = vpack.c.b16 %v1568, %v1566
      %v1621 = vpack.c.b16 %v1571, %v1569
      %v1622 = vpack.c.b16 %v1572, %v1570
      %v1623 = vpack.c.b16 %v1575, %v1573
      %v1624 = vpack.c.b16 %v1576, %v1574
      %v1625 = vpack.c.b16 %v1579, %v1577
      %v1626 = vpack.c.b16 %v1580, %v1578
      %v1627 = vpack.c.b16 %v1583, %v1581
      %v1628 = vpack.c.b16 %v1584, %v1582
      %v1629 = vpack.c.b16 %v1587, %v1585
      %v1630 = vpack.c.b16 %v1588, %v1586
      %v1631 = vpack.c.b16 %v1591, %v1589
      %v1632 = vpack.c.b16 %v1592, %v1590
      %v1633 = vpack.c.b16 %v1595, %v1593
      %v1634 = vpack.c.b16 %v1596, %v1594
      %v1635 = vpack.c.b16 %v1599, %v1597
      %v1636 = vpack.c.b16 %v1600, %v1598
      %v1637 = vpack.c.b16 %v1603, %v1601
      %v1638 = vpack.c.b16 %v1604, %v1602
      %v1639 = vpack.c.b16 %v1607, %v1605
      %v1640 = vpack.c.b16 %v1608, %v1606
      %v1681 = vunpack.c.l.b16 %v1482
      %v1682 = vunpack.c.l.b16 %v1483
      %v1683 = vunpack.c.l.b16 %v1484
      %v1684 = vunpack.c.l.b16 %v1485
      %v1685 = vunpack.c.l.b16 %v1486
      %v1686 = vunpack.c.l.b16 %v1487
      %v1687 = vunpack.c.l.b16 %v1488
      %v1688 = vunpack.c.l.b16 %v1489
      %v1689 = vunpack.c.l.b16 %v1490
      %v1690 = vunpack.c.l.b16 %v1491
      %v1691 = vunpack.c.l.b16 %v1492
      %v1692 = vunpack.c.l.b16 %v1493
      %v1693 = vunpack.c.l.b16 %v1494
      %v1694 = vunpack.c.l.b16 %v1495
      %v1695 = vunpack.c.l.b16 %v1496
      %v1696 = vunpack.c.l.b16 %v1497
      %v1697 = vunpack.c.l.b16 %v1498
      %v1698 = vunpack.c.l.b16 %v1499
      %v1699 = vunpack.c.l.b16 %v1500
      %v1700 = vunpack.c.l.b16 %v1501
      %v1701 = vunpack.c.l.b16 %v1502
      %v1702 = vunpack.c.l.b16 %v1503
      %v1703 = vunpack.c.l.b16 %v1504
      %v1704 = vunpack.c.l.b16 %v1505
      %v1705 = vpack.c.b16 %v1682, %v1681
      %v1706 = vpack.c.b16 %v1684, %v1683
      %v1707 = vpack.c.b16 %v1686, %v1685
      %v1708 = vpack.c.b16 %v1688, %v1687
      %v1709 = vpack.c.b16 %v1690, %v1689
      %v1710 = vpack.c.b16 %v1692, %v1691
      %v1711 = vpack.c.b16 %v1694, %v1693
      %v1712 = vpack.c.b16 %v1696, %v1695
      %v1713 = vpack.c.b16 %v1698, %v1697
      %v1714 = vpack.c.b16 %v1700, %v1699
      %v1715 = vpack.c.b16 %v1702, %v1701
      %v1716 = vpack.c.b16 %v1704, %v1703
      %vm1729 = vcmask 523264
      %v1731 = vsel %vm1729, %v1610, 0
      %v1734 = vsel %vm1729, %v1612, 0
      %v1737 = vsel %vm1729, %v1614, 0
      %v1740 = vsel %vm1729, %v1616, 0
      %v1743 = vsel %vm1729, %v1618, 0
      %v1746 = vsel %vm1729, %v1620, 0
      %v1749 = vsel %vm1729, %v1622, 0
      %v1752 = vsel %vm1729, %v1624, 0
      %v1755 = vsel %vm1729, %v1626, 0
      %v1758 = vsel %vm1729, %v1628, 0
      %v1761 = vsel %vm1729, %v1630, 0
      %v1764 = vsel %vm1729, %v1632, 0
      %v1767 = vsel %vm1729, %v1634, 0
      %v1770 = vsel %vm1729, %v1636, 0
      %v1773 = vsel %vm1729, %v1638, 0
      %v1776 = vsel %vm1729, %v1640, 0
      %1778 = vmatprep.subr.bf16.mxu0 0
      %1779 = vmatpush1.bf16.msra.mxu0 %v1712
      %1780 = vmatprep.subr.bf16.mxu0 0
      %1781 = vmatpush1.bf16.msra.mxu0 %v1711
      %1782 = vmatprep.subr.bf16.mxu0 0
      %1783 = vmatpush1.bf16.msra.mxu0 %v1710
      %1784 = vmatprep.subr.bf16.mxu0 0
      %1785 = vmatpush1.bf16.msra.mxu0 %v1709
      %1786 = vmatprep.subr.bf16.mxu0 0
      %1787 = vmatpush1.bf16.msra.mxu0 %v1708
      %1788 = vmatprep.subr.bf16.mxu0 0
      %1789 = vmatpush1.bf16.msra.mxu0 %v1707
      %1790 = vmatprep.subr.bf16.mxu0 0
      %1791 = vmatpush1.bf16.msra.mxu0 %v1706
      %1792 = vmatprep.subr.bf16.mxu0 0
      %1793 = vmatpush1.bf16.msra.mxu0 %v1705
      %1794 = vmatprep.subr.bf16.mxu0 0
      %1795 = vmatpush2.bf16.msra.mxu0 0
      %1796 = vmatprep.subr.bf16.mxu0 0
      %1797 = vmatpush2.bf16.msra.mxu0 0
      %1798 = vmatprep.subr.bf16.mxu0 0
      %1799 = vmatpush2.bf16.msra.mxu0 0
      %1800 = vmatprep.subr.bf16.mxu0 0
      %1801 = vmatpush2.bf16.msra.mxu0 0
      %1802 = vmatprep.subr.bf16.mxu0 0
      %1803 = vmatpush2.bf16.msra.mxu0 %v1716
      %1804 = vmatprep.subr.bf16.mxu0 0
      %1805 = vmatpush2.bf16.msra.mxu0 %v1715
      %1806 = vmatprep.subr.bf16.mxu0 0
      %1807 = vmatpush2.bf16.msra.mxu0 %v1714
      %1808 = vmatprep.subr.bf16.mxu0 0
      %1809 = vmatpush2.bf16.msra.mxu0 %v1713
      %1810 = vmatprep.mubr.bf16.mxu0 %v1731
      %1811 = vmatmul.mubr.bf16.gmra.mxu0 %v1609
      %v1812 = vpop.f32.mrf.mxu0
      %v1813 = vadd.f32 %v1511, %v1812
      %v1814 = vpop.f32.mrf.mxu0
      %v1815 = vpop.f32.mrf.mxu0
      %v1816 = vadd.f32 %v1511, %v1815
      %v1817 = vpop.f32.mrf.mxu0
      %1818 = vmatprep.mubr.bf16.mxu0 %v1734
      %1819 = vmatmul.mubr.bf16.gmra.mxu0 %v1611
      %v1820 = vpop.f32.mrf.mxu0
      %v1821 = vadd.f32 %v1511, %v1820
      %v1822 = vpop.f32.mrf.mxu0
      %v1823 = vpop.f32.mrf.mxu0
      %v1824 = vadd.f32 %v1511, %v1823
      %v1825 = vpop.f32.mrf.mxu0
      %1826 = vmatprep.mubr.bf16.mxu0 %v1737
      %1827 = vmatmul.mubr.bf16.gmra.mxu0 %v1613
      %v1828 = vpop.f32.mrf.mxu0
      %v1829 = vadd.f32 %v1511, %v1828
      %v1830 = vpop.f32.mrf.mxu0
      %v1831 = vpop.f32.mrf.mxu0
      %v1832 = vadd.f32 %v1511, %v1831
      %v1833 = vpop.f32.mrf.mxu0
      %1834 = vmatprep.mubr.bf16.mxu0 %v1740
      %1835 = vmatmul.mubr.bf16.gmra.mxu0 %v1615
      %v1836 = vpop.f32.mrf.mxu0
      %v1837 = vadd.f32 %v1511, %v1836
      %v1838 = vpop.f32.mrf.mxu0
      %v1839 = vpop.f32.mrf.mxu0
      %v1840 = vadd.f32 %v1511, %v1839
      %v1841 = vpop.f32.mrf.mxu0
      %1842 = vmatprep.mubr.bf16.mxu0 %v1743
      %1843 = vmatmul.mubr.bf16.gmra.mxu0 %v1617
      %v1844 = vpop.f32.mrf.mxu0
      %v1845 = vadd.f32 %v1511, %v1844
      %v1846 = vpop.f32.mrf.mxu0
      %v1847 = vpop.f32.mrf.mxu0
      %v1848 = vadd.f32 %v1511, %v1847
      %v1849 = vpop.f32.mrf.mxu0
      %1850 = vmatprep.mubr.bf16.mxu0 %v1746
      %1851 = vmatmul.mubr.bf16.gmra.mxu0 %v1619
      %v1852 = vpop.f32.mrf.mxu0
      %v1853 = vadd.f32 %v1511, %v1852
      %v1854 = vpop.f32.mrf.mxu0
      %v1855 = vpop.f32.mrf.mxu0
      %v1856 = vadd.f32 %v1511, %v1855
      %v1857 = vpop.f32.mrf.mxu0
      %1858 = vmatprep.mubr.bf16.mxu0 %v1749
      %1859 = vmatmul.mubr.bf16.gmra.mxu0 %v1621
      %v1860 = vpop.f32.mrf.mxu0
      %v1861 = vadd.f32 %v1511, %v1860
      %v1862 = vpop.f32.mrf.mxu0
      %v1863 = vpop.f32.mrf.mxu0
      %v1864 = vadd.f32 %v1511, %v1863
      %v1865 = vpop.f32.mrf.mxu0
      %1866 = vmatprep.mubr.bf16.mxu0 %v1752
      %1867 = vmatmul.mubr.bf16.gmra.mxu0 %v1623
      %v1868 = vpop.f32.mrf.mxu0
      %v1869 = vadd.f32 %v1511, %v1868
      %v1870 = vpop.f32.mrf.mxu0
      %v1871 = vpop.f32.mrf.mxu0
      %v1872 = vadd.f32 %v1511, %v1871
      %v1873 = vpop.f32.mrf.mxu0
      %1874 = vmatprep.mubr.bf16.mxu0 %v1755
      %1875 = vmatmul.mubr.bf16.gmra.mxu0 %v1625
      %v1876 = vpop.f32.mrf.mxu0
      %v1877 = vadd.f32 %v1511, %v1876
      %v1878 = vpop.f32.mrf.mxu0
      %v1879 = vpop.f32.mrf.mxu0
      %v1880 = vadd.f32 %v1511, %v1879
      %v1881 = vpop.f32.mrf.mxu0
      %1882 = vmatprep.mubr.bf16.mxu0 %v1758
      %1883 = vmatmul.mubr.bf16.gmra.mxu0 %v1627
      %v1884 = vpop.f32.mrf.mxu0
      %v1885 = vadd.f32 %v1511, %v1884
      %v1886 = vpop.f32.mrf.mxu0
      %v1887 = vpop.f32.mrf.mxu0
      %v1888 = vadd.f32 %v1511, %v1887
      %v1889 = vpop.f32.mrf.mxu0
      %1890 = vmatprep.mubr.bf16.mxu0 %v1761
      %1891 = vmatmul.mubr.bf16.gmra.mxu0 %v1629
      %v1892 = vpop.f32.mrf.mxu0
      %v1893 = vadd.f32 %v1511, %v1892
      %v1894 = vpop.f32.mrf.mxu0
      %v1895 = vpop.f32.mrf.mxu0
      %v1896 = vadd.f32 %v1511, %v1895
      %v1897 = vpop.f32.mrf.mxu0
      %1898 = vmatprep.mubr.bf16.mxu0 %v1764
      %1899 = vmatmul.mubr.bf16.gmra.mxu0 %v1631
      %v1900 = vpop.f32.mrf.mxu0
      %v1901 = vadd.f32 %v1511, %v1900
      %v1902 = vpop.f32.mrf.mxu0
      %v1903 = vpop.f32.mrf.mxu0
      %v1904 = vadd.f32 %v1511, %v1903
      %v1905 = vpop.f32.mrf.mxu0
      %1906 = vmatprep.mubr.bf16.mxu0 %v1767
      %1907 = vmatmul.mubr.bf16.gmra.mxu0 %v1633
      %v1908 = vpop.f32.mrf.mxu0
      %v1909 = vadd.f32 %v1511, %v1908
      %v1910 = vpop.f32.mrf.mxu0
      %v1911 = vpop.f32.mrf.mxu0
      %v1912 = vadd.f32 %v1511, %v1911
      %v1913 = vpop.f32.mrf.mxu0
      %1914 = vmatprep.mubr.bf16.mxu0 %v1770
      %1915 = vmatmul.mubr.bf16.gmra.mxu0 %v1635
      %v1916 = vpop.f32.mrf.mxu0
      %v1917 = vadd.f32 %v1511, %v1916
      %v1918 = vpop.f32.mrf.mxu0
      %v1919 = vpop.f32.mrf.mxu0
      %v1920 = vadd.f32 %v1511, %v1919
      %v1921 = vpop.f32.mrf.mxu0
      %1922 = vmatprep.mubr.bf16.mxu0 %v1773
      %1923 = vmatmul.mubr.bf16.gmra.mxu0 %v1637
      %v1924 = vpop.f32.mrf.mxu0
      %v1925 = vadd.f32 %v1511, %v1924
      %v1926 = vpop.f32.mrf.mxu0
      %v1927 = vpop.f32.mrf.mxu0
      %v1928 = vadd.f32 %v1511, %v1927
      %v1929 = vpop.f32.mrf.mxu0
      %1930 = vmatprep.mubr.bf16.mxu0 %v1776
      %1931 = vmatmul.mubr.bf16.gmra.mxu0 %v1639
      %v1932 = vpop.f32.mrf.mxu0
      %v1933 = vadd.f32 %v1511, %v1932
      %v1934 = vpop.f32.mrf.mxu0
      %v1935 = vpop.f32.mrf.mxu0
      %v1936 = vadd.f32 %v1511, %v1935
      %v1937 = vpop.f32.mrf.mxu0
      %1938 = vdwg.mxu0
      %v1939 = vmax.f32 %v1813, 0.0
      %v1940 = vmax.f32 %v1816, 0.0
      %v1941 = vmax.f32 %v1821, 0.0
      %v1942 = vmax.f32 %v1824, 0.0
      %v1943 = vmax.f32 %v1829, 0.0
      %v1944 = vmax.f32 %v1832, 0.0
      %v1945 = vmax.f32 %v1837, 0.0
      %v1946 = vmax.f32 %v1840, 0.0
      %v1947 = vmax.f32 %v1845, 0.0
      %v1948 = vmax.f32 %v1848, 0.0
      %v1949 = vmax.f32 %v1853, 0.0
      %v1950 = vmax.f32 %v1856, 0.0
      %v1951 = vmax.f32 %v1861, 0.0
      %v1952 = vmax.f32 %v1864, 0.0
      %v1953 = vmax.f32 %v1869, 0.0
      %v1954 = vmax.f32 %v1872, 0.0
      %v1955 = vmax.f32 %v1877, 0.0
      %v1956 = vmax.f32 %v1880, 0.0
      %v1957 = vmax.f32 %v1885, 0.0
      %v1958 = vmax.f32 %v1888, 0.0
      %v1959 = vmax.f32 %v1893, 0.0
      %v1960 = vmax.f32 %v1896, 0.0
      %v1961 = vmax.f32 %v1901, 0.0
      %v1962 = vmax.f32 %v1904, 0.0
      %v1963 = vmax.f32 %v1909, 0.0
      %v1964 = vmax.f32 %v1912, 0.0
      %v1965 = vmax.f32 %v1917, 0.0
      %v1966 = vmax.f32 %v1920, 0.0
      %v1967 = vmax.f32 %v1925, 0.0
      %v1968 = vmax.f32 %v1928, 0.0
      %v1969 = vmax.f32 %v1933, 0.0
      %v1970 = vmax.f32 %v1936, 0.0
      %vm1971 = vcmask 261120
      %1972 = vst.msk [vmem:[%s170] sm:$0xff] %vm1971, %v1939
      %1973 = vst.msk [vmem:[%s170 + $0x8] sm:$0xff] %vm1971, %v1940
      %1974 = vst.msk [vmem:[%s170 + $0x10] sm:$0xff] %vm1971, %v1941
      %1975 = vst.msk [vmem:[%s170 + $0x18] sm:$0xff] %vm1971, %v1942
      %1976 = vst.msk [vmem:[%s170 + $0x20] sm:$0xff] %vm1971, %v1943
      %1977 = vst.msk [vmem:[%s170 + $0x28] sm:$0xff] %vm1971, %v1944
      %1978 = vst.msk [vmem:[%s170 + $0x30] sm:$0xff] %vm1971, %v1945
      %1979 = vst.msk [vmem:[%s170 + $0x38] sm:$0xff] %vm1971, %v1946
      %1980 = vst.msk [vmem:[%s170 + $0x40] sm:$0xff] %vm1971, %v1947
      %1981 = vst.msk [vmem:[%s170 + $0x48] sm:$0xff] %vm1971, %v1948
      %1982 = vst.msk [vmem:[%s170 + $0x50] sm:$0xff] %vm1971, %v1949
      %1983 = vst.msk [vmem:[%s170 + $0x58] sm:$0xff] %vm1971, %v1950
      %1984 = vst.msk [vmem:[%s170 + $0x60] sm:$0xff] %vm1971, %v1951
      %1985 = vst.msk [vmem:[%s170 + $0x68] sm:$0xff] %vm1971, %v1952
      %1986 = vst.msk [vmem:[%s170 + $0x70] sm:$0xff] %vm1971, %v1953
      %1987 = vst.msk [vmem:[%s170 + $0x78] sm:$0xff] %vm1971, %v1954
      %1988 = vst.msk [vmem:[%s170 + $0x80] sm:$0xff] %vm1971, %v1955
      %1989 = vst.msk [vmem:[%s170 + $0x88] sm:$0xff] %vm1971, %v1956
      %1990 = vst.msk [vmem:[%s170 + $0x90] sm:$0xff] %vm1971, %v1957
      %1991 = vst.msk [vmem:[%s170 + $0x98] sm:$0xff] %vm1971, %v1958
      %1992 = vst.msk [vmem:[%s170 + $0xa0] sm:$0xff] %vm1971, %v1959
      %1993 = vst.msk [vmem:[%s170 + $0xa8] sm:$0xff] %vm1971, %v1960
      %1994 = vst.msk [vmem:[%s170 + $0xb0] sm:$0xff] %vm1971, %v1961
      %1995 = vst.msk [vmem:[%s170 + $0xb8] sm:$0xff] %vm1971, %v1962
      %1996 = vst.msk [vmem:[%s170 + $0xc0] sm:$0xff] %vm1971, %v1963
      %1997 = vst.msk [vmem:[%s170 + $0xc8] sm:$0xff] %vm1971, %v1964
      %1998 = vst.msk [vmem:[%s170 + $0xd0] sm:$0xff] %vm1971, %v1965
      %1999 = vst.msk [vmem:[%s170 + $0xd8] sm:$0xff] %vm1971, %v1966
      %2000 = vst.msk [vmem:[%s170 + $0xe0] sm:$0xff] %vm1971, %v1967
      %2001 = vst.msk [vmem:[%s170 + $0xe8] sm:$0xff] %vm1971, %v1968
      %2002 = vst.msk [vmem:[%s170 + $0xf0] sm:$0xff] %vm1971, %v1969
      %2003 = vst.msk [vmem:[%s170 + $0xf8] sm:$0xff] %vm1971, %v1970
      %p2004 = scmp.lt.s32.totalorder %s14, 1
      %s2005 = scalar_select %p2004, %s14, 1
      %s2006 = smul.addr %s2005, 32
      %s2007 = smul.addr %s2006, 8
      %s2008 = scalar_lea.vmem %s3, %s2007
      // Predicated region
      $region33: #{mixed_3b_forward.11} parent=31 // pred_check
        %p2009 = pneg %p100
      $region34: #{mixed_3b_forward.11} parent=31 // pred_check_branch
        %2011 = sbr.rel (%p2009) target = $region36
      $region35: #{mixed_3b_forward.11} parent=31 // pred_region
        _
      $region36: #{mixed_3b_forward.11} parent=31 // pred_fallthru
        _
    $region32: #{mixed_3b_forward.11} parent=5 // pred_fallthru
      _
    %p2012 = scmp.le.s32.totalorder 2, %s9
    // Predicated region
    $region37: #{mixed_3b_forward.11} parent=5 // pred_check
      %p2013 = pneg %p2012
    $region38: #{mixed_3b_forward.11} parent=5 // pred_check_branch
      %2015 = sbr.rel (%p2013) target = $region40
    $region39: #{mixed_3b_forward.11} parent=5 // pred_region
      %s2016 = ssub.s32 %s9, 2
      // Predicated region
      $region41: #{mixed_3b_forward.11} parent=39 // pred_check
        %p2017 = pneg %p106
      $region42: #{mixed_3b_forward.11} parent=39 // pred_check_branch
        %2019 = sbr.rel (%p2017) target = $region44
      $region43: #{mixed_3b_forward.11} parent=39 // pred_region
        %p2020 = scmp.lt.s32.totalorder %s15, 1
        %s2021 = scalar_select %p2020, %s15, 1
        %s2022 = smul.addr %s2021, 32
        %s2023 = smul.addr %s2022, 8
        %s2024 = scalar_lea.vmem %s3, %s2023
      $region44: #{mixed_3b_forward.11} parent=39 // pred_fallthru
        _
    $region40: #{mixed_3b_forward.11} parent=5 // pred_fallthru
      _
  $region6: #{mixed_3b_forward.11} parent=0 // loop_footer
    %s13 = sadd.s32 1, %s9
  $region7: #{mixed_3b_forward.11} parent=0 // loop_footer_branch
    %8 = sbr.rel target = $region3
  $region8: #{mixed_3b_forward.11} parent=0 // loop_exit
    _

// kernel: mixed_3b_forward.10
$region0: #{mixed_3b_forward.10}
  #allocation0 [shape = 'u32[]', space=smem, size = 0x4, offset = 0x4, fixed_abs, tag = 'smem constant byte address 0x4 - core index']
  #allocation1 [shape = 'u32[144,128]{1,0:T(1,128)}', space=vmem, size = 0x12000, scoped, tag = 'internal scratch']
  %s0 = inlined_call_operand.vmem [shape: bf16[2,6,8,8,32], index: 0, kind: input, shape index: {}]
  %s1 = inlined_call_operand.vmem [shape: bf16[3,32,32], index: 1, kind: input, shape index: {}]
  %s2 = inlined_call_operand.vmem [shape: f32[1,32], index: 2, kind: input, shape index: {}]
  %s3 = inlined_call_operand.vmem [shape: f32[2,4,8,8,32], index: 3, kind: output, shape index: {}]
  %s4 = sld [smem:[#allocation0]]
  $region45: #{mixed_3b_forward.10} parent=0
    _
  %s6 = ssub.s32 1, %s4
  %s7 = scalar_select 0, %s6, %s4
  loop: start=0, step=1, limit=4
  $region2: #{mixed_3b_forward.10} parent=0 // loop_pre_header
    _
  $region3: #{mixed_3b_forward.10} parent=0 // loop_header
    %s9 = sphi 0, %s13
    %p10 = scmp.ge.s32.totalorder %s9, 4
    %s19 = sphi 0, %s21
    %s22 = sphi 0, %s19
    %s23 = sphi 0, %s22
    %s39 = sphi 0, %s23
    %s43 = sphi 0, %s43
    %s45 = sphi 0, %s43
    %s46 = sphi 0, %s45
    %s60 = sphi 0, %s46
    %s64 = sphi 0, %s64
    %s66 = sphi 0, %s64
    %s67 = sphi 0, %s66
    %s81 = sphi 0, %s67
    %s87 = sphi 0, %s89
    %s90 = sphi 0, %s87
    %s91 = sphi 0, %s90
    %s107 = sphi 0, %s91
  $region4: #{mixed_3b_forward.10} parent=0 // loop_header_branch
    %12 = sbr.rel (%p10) target = $region8
  $region5: #{mixed_3b_forward.10} parent=0 // loop_body
    %s14 = ssub.s32 %s9, 1
    %s15 = ssub.s32 %s9, 2
    %s16 = sadd.s32 %s9, 1
    %s17 = ssub.s32 %s9, %s16
    %p18 = scmp.eq.s32.totalorder %s17, 0
    %s20 = sadd.s32 %s19, 1
    %s21 = scalar_select %p18, %s19, %s20
    %p24 = pneg %p18
    %p25 = scmp.eq.s32.totalorder %s9, 1
    %p26 = por %p24, %p25
    %p27 = scmp.ne.s32.totalorder %s19, %s22
    %p28 = scmp.eq.s32.totalorder %s9, 0
    %p29 = por %p27, %p28
    %p30 = scmp.ne.s32.totalorder %s19, %s22
    %p31 = scmp.eq.s32.totalorder %s14, 1
    %p32 = por %p30, %p31
    %p33 = scmp.ne.s32.totalorder %s22, %s23
    %p34 = scmp.eq.s32.totalorder %s14, 0
    %p35 = por %p33, %p34
    %p36 = scmp.ne.s32.totalorder %s22, %s23
    %p37 = scmp.eq.s32.totalorder %s15, 1
    %p38 = por %p36, %p37
    %p40 = scmp.ne.s32.totalorder %s23, %s39
    %p41 = scmp.eq.s32.totalorder %s15, 0
    %p42 = por %p40, %p41
    %s44 = sadd.s32 %s43, 1
    %p47 = scmp.eq.s32.totalorder %s9, 1
    %p48 = scmp.ne.s32.totalorder %s43, %s45
    %p49 = scmp.eq.s32.totalorder %s9, 0
    %p50 = por %p48, %p49
    %p51 = scmp.ne.s32.totalorder %s43, %s45
    %p52 = scmp.eq.s32.totalorder %s14, 1
    %p53 = por %p51, %p52
    %p54 = scmp.ne.s32.totalorder %s45, %s46
    %p55 = scmp.eq.s32.totalorder %s14, 0
    %p56 = por %p54, %p55
    %p57 = scmp.ne.s32.totalorder %s45, %s46
    %p58 = scmp.eq.s32.totalorder %s15, 1
    %p59 = por %p57, %p58
    %p61 = scmp.ne.s32.totalorder %s46, %s60
    %p62 = scmp.eq.s32.totalorder %s15, 0
    %p63 = por %p61, %p62
    %s65 = sadd.s32 %s64, 1
    %p68 = scmp.eq.s32.totalorder %s9, 1
    %p69 = scmp.ne.s32.totalorder %s64, %s66
    %p70 = scmp.eq.s32.totalorder %s9, 0
    %p71 = por %p69, %p70
    %p72 = scmp.ne.s32.totalorder %s64, %s66
    %p73 = scmp.eq.s32.totalorder %s14, 1
    %p74 = por %p72, %p73
    %p75 = scmp.ne.s32.totalorder %s66, %s67
    %p76 = scmp.eq.s32.totalorder %s14, 0
    %p77 = por %p75, %p76
    %p78 = scmp.ne.s32.totalorder %s66, %s67
    %p79 = scmp.eq.s32.totalorder %s15, 1
    %p80 = por %p78, %p79
    %p82 = scmp.ne.s32.totalorder %s67, %s81
    %p83 = scmp.eq.s32.totalorder %s15, 0
    %p84 = por %p82, %p83
    %s85 = ssub.s32 %s9, %s16
    %p86 = scmp.eq.s32.totalorder %s85, 0
    %s88 = sadd.s32 %s87, 1
    %s89 = scalar_select %p86, %s87, %s88
    %p92 = pneg %p86
    %p93 = scmp.eq.s32.totalorder %s9, 1
    %p94 = por %p92, %p93
    %p95 = scmp.ne.s32.totalorder %s87, %s90
    %p96 = scmp.eq.s32.totalorder %s9, 0
    %p97 = por %p95, %p96
    %p98 = scmp.ne.s32.totalorder %s87, %s90
    %p99 = scmp.eq.s32.totalorder %s14, 1
    %p100 = por %p98, %p99
    %p101 = scmp.ne.s32.totalorder %s90, %s91
    %p102 = scmp.eq.s32.totalorder %s14, 0
    %p103 = por %p101, %p102
    %p104 = scmp.ne.s32.totalorder %s90, %s91
    %p105 = scmp.eq.s32.totalorder %s15, 1
    %p106 = por %p104, %p105
    %p108 = scmp.ne.s32.totalorder %s91, %s107
    %p109 = scmp.eq.s32.totalorder %s15, 0
    %p110 = por %p108, %p109
    %p111 = scmp.le.s32.totalorder 1, %s9
    %p112 = scmp.lt.s32.totalorder %s9, 3
    %p113 = pnand %p111, %p112
    %p114 = pneg %p113
    // Predicated region
    $region9: #{mixed_3b_forward.10} parent=5 // pred_check
      _
    $region10: #{mixed_3b_forward.10} parent=5 // pred_check_branch
      %116 = sbr.rel (%p113) target = $region12
    $region11: #{mixed_3b_forward.10} parent=5 // pred_region
      %s117 = ssub.s32 %s9, 1
      // Predicated region
      $region13: #{mixed_3b_forward.10} parent=11 // pred_check
        %p118 = pneg %p56
      $region14: #{mixed_3b_forward.10} parent=11 // pred_check_branch
        %120 = sbr.rel (%p118) target = $region16
      $region15: #{mixed_3b_forward.10} parent=11 // pred_region
        _
      $region16: #{mixed_3b_forward.10} parent=11 // pred_fallthru
        _
      // Predicated region
      $region17: #{mixed_3b_forward.10} parent=11 // pred_check
        %p121 = pneg %p77
      $region18: #{mixed_3b_forward.10} parent=11 // pred_check_branch
        %123 = sbr.rel (%p121) target = $region20
      $region19: #{mixed_3b_forward.10} parent=11 // pred_region
        _
      $region20: #{mixed_3b_forward.10} parent=11 // pred_fallthru
        _
    $region12: #{mixed_3b_forward.10} parent=5 // pred_fallthru
      _
    %p124 = scmp.lt.s32.totalorder %s9, 2
    // Predicated region
    $region21: #{mixed_3b_forward.10} parent=5 // pred_check
      %p125 = pneg %p124
    $region22: #{mixed_3b_forward.10} parent=5 // pred_check_branch
      %127 = sbr.rel (%p125) target = $region24
    $region23: #{mixed_3b_forward.10} parent=5 // pred_region
      // Predicated region
      $region25: #{mixed_3b_forward.10} parent=23 // pred_check
        %p128 = pneg %p29
      $region26: #{mixed_3b_forward.10} parent=23 // pred_check_branch
        %130 = sbr.rel (%p128) target = $region28
      $region27: #{mixed_3b_forward.10} parent=23 // pred_region
        %p131 = scmp.lt.s32.totalorder %s9, 1
        %s132 = scalar_select %p131, %s9, 1
        %s133 = smul.addr %s132, 48
        %s134 = smul.addr %s133, 4
        %s135 = scalar_lea.vmem %s0, %s134
      $region28: #{mixed_3b_forward.10} parent=23 // pred_fallthru
        _
    $region24: #{mixed_3b_forward.10} parent=5 // pred_fallthru
      _
    %p136 = scmp.le.s32.totalorder 1, %s9
    %p137 = scmp.lt.s32.totalorder %s9, 3
    %p138 = pnand %p136, %p137
    %p139 = pneg %p138
    // Predicated region
    $region29: #{mixed_3b_forward.10} parent=5 // pred_check
      _
    $region30: #{mixed_3b_forward.10} parent=5 // pred_check_branch
      %141 = sbr.rel (%p138) target = $region32
    $region31: #{mixed_3b_forward.10} parent=5 // pred_region
      %s142 = ssub.s32 %s9, 1
      %p143 = scmp.lt.s32.totalorder %s14, 1
      %s144 = scalar_select %p143, %s14, 1
      %s145 = smul.addr %s144, 48
      %s146 = smul.addr %s145, 4
      %s147 = scalar_lea.vmem %s0, %s146
      %p148 = pneg %p35
      %p149 = pneg %p32
      %p150 = pneg %p56
      %p151 = pneg %p53
      %p152 = pneg %p77
      %p153 = pneg %p74
      %p154 = pneg %p103
      %p155 = pneg %p100
      %p156 = scmp.lt.s32.totalorder %s14, 1
      %s157 = scalar_select %p156, %s14, 1
      %s158 = smul.addr %s157, 32
      %s159 = smul.addr %s158, 8
      %s160 = scalar_lea.vmem %s3, %s159
      %p161 = scmp.lt.s32.totalorder %s14, 1
      %s162 = scalar_select %p161, %s14, 1
      %s163 = smul.addr %s162, 48
      %s164 = smul.addr %s163, 4
      %s165 = scalar_lea.vmem %s0, %s164
      %p166 = scmp.lt.s32.totalorder %s14, 1
      %s167 = scalar_select %p166, %s14, 1
      %s168 = smul.addr %s167, 32
      %s169 = smul.addr %s168, 8
      %s170 = scalar_lea.vmem %s3, %s169
      %v172 = vld [vmem:[%s165] sm:$0xf]
      %v173 = vld [vmem:[%s165 + $0x4] sm:$0xf]
      %v174 = vld [vmem:[%s165 + $0x8] sm:$0xf]
      %v175 = vld [vmem:[%s165 + $0xc] sm:$0xf]
      %v176 = vld [vmem:[%s165 + $0x10] sm:$0xf]
      %v177 = vld [vmem:[%s165 + $0x14] sm:$0xf]
      %v178 = vld [vmem:[%s165 + $0x18] sm:$0xf]
      %v179 = vld [vmem:[%s165 + $0x1c] sm:$0xf]
      %v180 = vld [vmem:[%s165 + $0x20] sm:$0xf]
      %v181 = vld [vmem:[%s165 + $0x24] sm:$0xf]
      %v182 = vld [vmem:[%s165 + $0x28] sm:$0xf]
      %v183 = vld [vmem:[%s165 + $0x2c] sm:$0xf]
      %v184 = vld [vmem:[%s165 + $0x30] sm:$0xf]
      %v185 = vld [vmem:[%s165 + $0x34] sm:$0xf]
      %v186 = vld [vmem:[%s165 + $0x38] sm:$0xf]
      %v187 = vld [vmem:[%s165 + $0x3c] sm:$0xf]
      %v188 = vld [vmem:[%s165 + $0x40] sm:$0xf]
      %v189 = vld [vmem:[%s165 + $0x44] sm:$0xf]
      %v190 = vld [vmem:[%s165 + $0x48] sm:$0xf]
      %v191 = vld [vmem:[%s165 + $0x4c] sm:$0xf]
      %v192 = vld [vmem:[%s165 + $0x50] sm:$0xf]
      %v193 = vld [vmem:[%s165 + $0x54] sm:$0xf]
      %v194 = vld [vmem:[%s165 + $0x58] sm:$0xf]
      %v195 = vld [vmem:[%s165 + $0x5c] sm:$0xf]
      %v196 = vld [vmem:[%s165 + $0x60] sm:$0xf]
      %v197 = vld [vmem:[%s165 + $0x64] sm:$0xf]
      %v198 = vld [vmem:[%s165 + $0x68] sm:$0xf]
      %v199 = vld [vmem:[%s165 + $0x6c] sm:$0xf]
      %v200 = vld [vmem:[%s165 + $0x70] sm:$0xf]
      %v201 = vld [vmem:[%s165 + $0x74] sm:$0xf]
      %v202 = vld [vmem:[%s165 + $0x78] sm:$0xf]
      %v203 = vld [vmem:[%s165 + $0x7c] sm:$0xf]
      %v204 = vld [vmem:[%s165 + $0x80] sm:$0xf]
      %v205 = vld [vmem:[%s165 + $0x84] sm:$0xf]
      %v206 = vld [vmem:[%s165 + $0x88] sm:$0xf]
      %v207 = vld [vmem:[%s165 + $0x8c] sm:$0xf]
      %v208 = vld [vmem:[%s165 + $0x90] sm:$0xf]
      %v209 = vld [vmem:[%s165 + $0x94] sm:$0xf]
      %v210 = vld [vmem:[%s165 + $0x98] sm:$0xf]
      %v211 = vld [vmem:[%s165 + $0x9c] sm:$0xf]
      %v212 = vld [vmem:[%s165 + $0xa0] sm:$0xf]
      %v213 = vld [vmem:[%s165 + $0xa4] sm:$0xf]
      %v214 = vld [vmem:[%s165 + $0xa8] sm:$0xf]
      %v215 = vld [vmem:[%s165 + $0xac] sm:$0xf]
      %v216 = vld [vmem:[%s165 + $0xb0] sm:$0xf]
      %v217 = vld [vmem:[%s165 + $0xb4] sm:$0xf]
      %v218 = vld [vmem:[%s165 + $0xb8] sm:$0xf]
      %v219 = vld [vmem:[%s165 + $0xbc] sm:$0xf]
      %v220 = vld [vmem:[%s1] sm:$0xf]
      %v221 = vld [vmem:[%s1 + $0x4] sm:$0xf]
      %v222 = vld [vmem:[%s1 + $0x8] sm:$0xf]
      %v223 = vld [vmem:[%s1 + $0xc] sm:$0xf]
      %s224 = scalar_lea.vmem %s1, 16
      %v225 = vld [vmem:[%s224] sm:$0xf]
      %v226 = vld [vmem:[%s224 + $0x4] sm:$0xf]
      %v227 = vld [vmem:[%s224 + $0x8] sm:$0xf]
      %v228 = vld [vmem:[%s224 + $0xc] sm:$0xf]
      %v261 = vunpack.c.l.b16 %v180
      %v262 = vunpack.c.l.b16 %v181
      %v263 = vunpack.c.l.b16 %v182
      %v264 = vunpack.c.l.b16 %v183
      %v265 = vunpack.c.l.b16 %v184
      %v266 = vunpack.c.l.b16 %v185
      %v267 = vunpack.c.l.b16 %v186
      %v268 = vunpack.c.l.b16 %v187
      %v269 = vunpack.c.l.b16 %v188
      %v270 = vunpack.c.l.b16 %v189
      %v271 = vunpack.c.l.b16 %v190
      %v272 = vunpack.c.l.b16 %v191
      %v273 = vunpack.c.l.b16 %v192
      %v274 = vunpack.c.l.b16 %v193
      %v275 = vunpack.c.l.b16 %v194
      %v276 = vunpack.c.l.b16 %v195
      %v277 = vunpack.c.l.b16 %v196
      %v278 = vunpack.c.l.b16 %v197
      %v279 = vunpack.c.l.b16 %v198
      %v280 = vunpack.c.l.b16 %v199
      %v281 = vunpack.c.l.b16 %v200
      %v282 = vunpack.c.l.b16 %v201
      %v283 = vunpack.c.l.b16 %v202
      %v284 = vunpack.c.l.b16 %v203
      %v285 = vunpack.c.l.b16 %v204
      %v286 = vunpack.c.l.b16 %v205
      %v287 = vunpack.c.l.b16 %v206
      %v288 = vunpack.c.l.b16 %v207
      %v289 = vunpack.c.l.b16 %v208
      %v290 = vunpack.c.l.b16 %v209
      %v291 = vunpack.c.l.b16 %v210
      %v292 = vunpack.c.l.b16 %v211
      %v293 = vpack.c.b16 %v262, %v261
      %v294 = vpack.c.b16 %v264, %v263
      %v295 = vpack.c.b16 %v266, %v265
      %v296 = vpack.c.b16 %v268, %v267
      %v297 = vpack.c.b16 %v270, %v269
      %v298 = vpack.c.b16 %v272, %v271
      %v299 = vpack.c.b16 %v274, %v273
      %v300 = vpack.c.b16 %v276, %v275
      %v301 = vpack.c.b16 %v278, %v277
      %v302 = vpack.c.b16 %v280, %v279
      %v303 = vpack.c.b16 %v282, %v281
      %v304 = vpack.c.b16 %v284, %v283
      %v305 = vpack.c.b16 %v286, %v285
      %v306 = vpack.c.b16 %v288, %v287
      %v307 = vpack.c.b16 %v290, %v289
      %v308 = vpack.c.b16 %v292, %v291
      %v313 = vunpack.c.l.b16 %v225
      %v314 = vunpack.c.l.b16 %v226
      %v315 = vunpack.c.l.b16 %v227
      %v316 = vunpack.c.l.b16 %v228
      %v317 = vpack.c.b16 %v314, %v313
      %v318 = vpack.c.b16 %v316, %v315
      %vm321 = vcmask 261120
      %v323 = vsel %vm321, %v293, 0
      %v326 = vsel %vm321, %v294, 0
      %v329 = vsel %vm321, %v295, 0
      %v332 = vsel %vm321, %v296, 0
      %v335 = vsel %vm321, %v297, 0
      %v338 = vsel %vm321, %v298, 0
      %v341 = vsel %vm321, %v299, 0
      %v344 = vsel %vm321, %v300, 0
      %v347 = vsel %vm321, %v301, 0
      %v350 = vsel %vm321, %v302, 0
      %v353 = vsel %vm321, %v303, 0
      %v356 = vsel %vm321, %v304, 0
      %v359 = vsel %vm321, %v305, 0
      %v362 = vsel %vm321, %v306, 0
      %v365 = vsel %vm321, %v307, 0
      %v368 = vsel %vm321, %v308, 0
      %370 = vmatprep.subr.bf16.mxu0 0
      %371 = vmatpush1.bf16.msra.mxu0 0
      %372 = vmatprep.subr.bf16.mxu0 0
      %373 = vmatpush1.bf16.msra.mxu0 0
      %374 = vmatprep.subr.bf16.mxu0 0
      %375 = vmatpush1.bf16.msra.mxu0 0
      %376 = vmatprep.subr.bf16.mxu0 0
      %377 = vmatpush1.bf16.msra.mxu0 0
      %378 = vmatprep.subr.bf16.mxu0 0
      %379 = vmatpush1.bf16.msra.mxu0 0
      %380 = vmatprep.subr.bf16.mxu0 0
      %381 = vmatpush1.bf16.msra.mxu0 0
      %382 = vmatprep.subr.bf16.mxu0 0
      %383 = vmatpush1.bf16.msra.mxu0 %v318
      %384 = vmatprep.subr.bf16.mxu0 0
      %385 = vmatpush1.bf16.msra.mxu0 %v317
      %386 = vmatprep.subr.bf16.mxu0 0
      %387 = vmatpush2.bf16.msra.mxu0 0
      %388 = vmatprep.subr.bf16.mxu0 0
      %389 = vmatpush2.bf16.msra.mxu0 0
      %390 = vmatprep.subr.bf16.mxu0 0
      %391 = vmatpush2.bf16.msra.mxu0 0
      %392 = vmatprep.subr.bf16.mxu0 0
      %393 = vmatpush2.bf16.msra.mxu0 0
      %394 = vmatprep.subr.bf16.mxu0 0
      %395 = vmatpush2.bf16.msra.mxu0 0
      %396 = vmatprep.subr.bf16.mxu0 0
      %397 = vmatpush2.bf16.msra.mxu0 0
      %398 = vmatprep.subr.bf16.mxu0 0
      %399 = vmatpush2.bf16.msra.mxu0 0
      %400 = vmatprep.subr.bf16.mxu0 0
      %401 = vmatpush2.bf16.msra.mxu0 0
      %402 = vmatprep.mubr.bf16.mxu0 0
      %403 = vmatmul.mubr.bf16.gmra.mxu0 %v323
      %v404 = vpop.f32.mrf.mxu0
      %v405 = vadd.f32 0.0, %v404
      %v406 = vpop.f32.mrf.mxu0
      %v407 = vpop.f32.mrf.mxu0
      %v408 = vadd.f32 0.0, %v407
      %v409 = vpop.f32.mrf.mxu0
      %410 = vmatprep.mubr.bf16.mxu0 0
      %411 = vmatmul.mubr.bf16.gmra.mxu0 %v326
      %v412 = vpop.f32.mrf.mxu0
      %v413 = vadd.f32 0.0, %v412
      %v414 = vpop.f32.mrf.mxu0
      %v415 = vpop.f32.mrf.mxu0
      %v416 = vadd.f32 0.0, %v415
      %v417 = vpop.f32.mrf.mxu0
      %418 = vmatprep.mubr.bf16.mxu0 0
      %419 = vmatmul.mubr.bf16.gmra.mxu0 %v329
      %v420 = vpop.f32.mrf.mxu0
      %v421 = vadd.f32 0.0, %v420
      %v422 = vpop.f32.mrf.mxu0
      %v423 = vpop.f32.mrf.mxu0
      %v424 = vadd.f32 0.0, %v423
      %v425 = vpop.f32.mrf.mxu0
      %426 = vmatprep.mubr.bf16.mxu0 0
      %427 = vmatmul.mubr.bf16.gmra.mxu0 %v332
      %v428 = vpop.f32.mrf.mxu0
      %v429 = vadd.f32 0.0, %v428
      %v430 = vpop.f32.mrf.mxu0
      %v431 = vpop.f32.mrf.mxu0
      %v432 = vadd.f32 0.0, %v431
      %v433 = vpop.f32.mrf.mxu0
      %434 = vmatprep.mubr.bf16.mxu0 0
      %435 = vmatmul.mubr.bf16.gmra.mxu0 %v335
      %v436 = vpop.f32.mrf.mxu0
      %v437 = vadd.f32 0.0, %v436
      %v438 = vpop.f32.mrf.mxu0
      %v439 = vpop.f32.mrf.mxu0
      %v440 = vadd.f32 0.0, %v439
      %v441 = vpop.f32.mrf.mxu0
      %442 = vmatprep.mubr.bf16.mxu0 0
      %443 = vmatmul.mubr.bf16.gmra.mxu0 %v338
      %v444 = vpop.f32.mrf.mxu0
      %v445 = vadd.f32 0.0, %v444
      %v446 = vpop.f32.mrf.mxu0
      %v447 = vpop.f32.mrf.mxu0
      %v448 = vadd.f32 0.0, %v447
      %v449 = vpop.f32.mrf.mxu0
      %450 = vmatprep.mubr.bf16.mxu0 0
      %451 = vmatmul.mubr.bf16.gmra.mxu0 %v341
      %v452 = vpop.f32.mrf.mxu0
      %v453 = vadd.f32 0.0, %v452
      %v454 = vpop.f32.mrf.mxu0
      %v455 = vpop.f32.mrf.mxu0
      %v456 = vadd.f32 0.0, %v455
      %v457 = vpop.f32.mrf.mxu0
      %458 = vmatprep.mubr.bf16.mxu0 0
      %459 = vmatmul.mubr.bf16.gmra.mxu0 %v344
      %v460 = vpop.f32.mrf.mxu0
      %v461 = vadd.f32 0.0, %v460
      %v462 = vpop.f32.mrf.mxu0
      %v463 = vpop.f32.mrf.mxu0
      %v464 = vadd.f32 0.0, %v463
      %v465 = vpop.f32.mrf.mxu0
      %466 = vmatprep.mubr.bf16.mxu0 0
      %467 = vmatmul.mubr.bf16.gmra.mxu0 %v347
      %v468 = vpop.f32.mrf.mxu0
      %v469 = vadd.f32 0.0, %v468
      %v470 = vpop.f32.mrf.mxu0
      %v471 = vpop.f32.mrf.mxu0
      %v472 = vadd.f32 0.0, %v471
      %v473 = vpop.f32.mrf.mxu0
      %474 = vmatprep.mubr.bf16.mxu0 0
      %475 = vmatmul.mubr.bf16.gmra.mxu0 %v350
      %v476 = vpop.f32.mrf.mxu0
      %v477 = vadd.f32 0.0, %v476
      %v478 = vpop.f32.mrf.mxu0
      %v479 = vpop.f32.mrf.mxu0
      %v480 = vadd.f32 0.0, %v479
      %v481 = vpop.f32.mrf.mxu0
      %482 = vmatprep.mubr.bf16.mxu0 0
      %483 = vmatmul.mubr.bf16.gmra.mxu0 %v353
      %v484 = vpop.f32.mrf.mxu0
      %v485 = vadd.f32 0.0, %v484
      %v486 = vpop.f32.mrf.mxu0
      %v487 = vpop.f32.mrf.mxu0
      %v488 = vadd.f32 0.0, %v487
      %v489 = vpop.f32.mrf.mxu0
      %490 = vmatprep.mubr.bf16.mxu0 0
      %491 = vmatmul.mubr.bf16.gmra.mxu0 %v356
      %v492 = vpop.f32.mrf.mxu0
      %v493 = vadd.f32 0.0, %v492
      %v494 = vpop.f32.mrf.mxu0
      %v495 = vpop.f32.mrf.mxu0
      %v496 = vadd.f32 0.0, %v495
      %v497 = vpop.f32.mrf.mxu0
      %498 = vmatprep.mubr.bf16.mxu0 0
      %499 = vmatmul.mubr.bf16.gmra.mxu0 %v359
      %v500 = vpop.f32.mrf.mxu0
      %v501 = vadd.f32 0.0, %v500
      %v502 = vpop.f32.mrf.mxu0
      %v503 = vpop.f32.mrf.mxu0
      %v504 = vadd.f32 0.0, %v503
      %v505 = vpop.f32.mrf.mxu0
      %506 = vmatprep.mubr.bf16.mxu0 0
      %507 = vmatmul.mubr.bf16.gmra.mxu0 %v362
      %v508 = vpop.f32.mrf.mxu0
      %v509 = vadd.f32 0.0, %v508
      %v510 = vpop.f32.mrf.mxu0
      %v511 = vpop.f32.mrf.mxu0
      %v512 = vadd.f32 0.0, %v511
      %v513 = vpop.f32.mrf.mxu0
      %514 = vmatprep.mubr.bf16.mxu0 0
      %515 = vmatmul.mubr.bf16.gmra.mxu0 %v365
      %v516 = vpop.f32.mrf.mxu0
      %v517 = vadd.f32 0.0, %v516
      %v518 = vpop.f32.mrf.mxu0
      %v519 = vpop.f32.mrf.mxu0
      %v520 = vadd.f32 0.0, %v519
      %v521 = vpop.f32.mrf.mxu0
      %522 = vmatprep.mubr.bf16.mxu0 0
      %523 = vmatmul.mubr.bf16.gmra.mxu0 %v368
      %v524 = vpop.f32.mrf.mxu0
      %v525 = vadd.f32 0.0, %v524
      %v526 = vpop.f32.mrf.mxu0
      %v527 = vpop.f32.mrf.mxu0
      %v528 = vadd.f32 0.0, %v527
      %v529 = vpop.f32.mrf.mxu0
      %530 = vdwg.mxu0
      %v539 = vunpack.c.l.b16 %v172
      %v540 = vunpack.c.l.b16 %v173
      %v541 = vunpack.c.l.b16 %v174
      %v542 = vunpack.c.l.b16 %v175
      %v543 = vunpack.c.l.b16 %v176
      %v544 = vunpack.c.l.b16 %v177
      %v545 = vunpack.c.l.b16 %v178
      %v546 = vunpack.c.l.b16 %v179
      %v547 = vpack.c.b16 %v540, %v539
      %v548 = vpack.c.b16 %v542, %v541
      %v549 = vpack.c.b16 %v544, %v543
      %v550 = vpack.c.b16 %v546, %v545
      %v555 = vunpack.c.l.b16 %v220
      %v556 = vunpack.c.l.b16 %v221
      %v557 = vunpack.c.l.b16 %v222
      %v558 = vunpack.c.l.b16 %v223
      %v559 = vpack.c.b16 %v556, %v555
      %v560 = vpack.c.b16 %v558, %v557
      %v564 = vsel %vm321, %v547, 0
      %v567 = vsel %vm321, %v548, 0
      %v570 = vsel %vm321, %v549, 0
      %v573 = vsel %vm321, %v550, 0
      %575 = vmatprep.subr.bf16.mxu0 0
      %576 = vmatpush1.bf16.msra.mxu0 0
      %577 = vmatprep.subr.bf16.mxu0 0
      %578 = vmatpush1.bf16.msra.mxu0 0
      %579 = vmatprep.subr.bf16.mxu0 0
      %580 = vmatpush1.bf16.msra.mxu0 0
      %581 = vmatprep.subr.bf16.mxu0 0
      %582 = vmatpush1.bf16.msra.mxu0 0
      %583 = vmatprep.subr.bf16.mxu0 0
      %584 = vmatpush1.bf16.msra.mxu0 0
      %585 = vmatprep.subr.bf16.mxu0 0
      %586 = vmatpush1.bf16.msra.mxu0 0
      %587 = vmatprep.subr.bf16.mxu0 0
      %588 = vmatpush1.bf16.msra.mxu0 %v560
      %589 = vmatprep.subr.bf16.mxu0 0
      %590 = vmatpush1.bf16.msra.mxu0 %v559
      %591 = vmatprep.subr.bf16.mxu0 0
      %592 = vmatpush2.bf16.msra.mxu0 0
      %593 = vmatprep.subr.bf16.mxu0 0
      %594 = vmatpush2.bf16.msra.mxu0 0
      %595 = vmatprep.subr.bf16.mxu0 0
      %596 = vmatpush2.bf16.msra.mxu0 0
      %597 = vmatprep.subr.bf16.mxu0 0
      %598 = vmatpush2.bf16.msra.mxu0 0
      %599 = vmatprep.subr.bf16.mxu0 0
      %600 = vmatpush2.bf16.msra.mxu0 0
      %601 = vmatprep.subr.bf16.mxu0 0
      %602 = vmatpush2.bf16.msra.mxu0 0
      %603 = vmatprep.subr.bf16.mxu0 0
      %604 = vmatpush2.bf16.msra.mxu0 0
      %605 = vmatprep.subr.bf16.mxu0 0
      %606 = vmatpush2.bf16.msra.mxu0 0
      %607 = vmatprep.mubr.bf16.mxu0 0
      %608 = vmatmul.mubr.bf16.gmra.mxu0 %v564
      %v609 = vpop.f32.mrf.mxu0
      %v610 = vadd.f32 %v405, %v609
      %v611 = vpop.f32.mrf.mxu0
      %v612 = vpop.f32.mrf.mxu0
      %v613 = vadd.f32 %v408, %v612
      %v614 = vpop.f32.mrf.mxu0
      %615 = vmatprep.mubr.bf16.mxu0 0
      %616 = vmatmul.mubr.bf16.gmra.mxu0 %v567
      %v617 = vpop.f32.mrf.mxu0
      %v618 = vadd.f32 %v413, %v617
      %v619 = vpop.f32.mrf.mxu0
      %v620 = vpop.f32.mrf.mxu0
      %v621 = vadd.f32 %v416, %v620
      %v622 = vpop.f32.mrf.mxu0
      %623 = vmatprep.mubr.bf16.mxu0 0
      %624 = vmatmul.mubr.bf16.gmra.mxu0 %v570
      %v625 = vpop.f32.mrf.mxu0
      %v626 = vadd.f32 %v421, %v625
      %v627 = vpop.f32.mrf.mxu0
      %v628 = vpop.f32.mrf.mxu0
      %v629 = vadd.f32 %v424, %v628
      %v630 = vpop.f32.mrf.mxu0
      %631 = vmatprep.mubr.bf16.mxu0 0
      %632 = vmatmul.mubr.bf16.gmra.mxu0 %v573
      %v633 = vpop.f32.mrf.mxu0
      %v634 = vadd.f32 %v429, %v633
      %v635 = vpop.f32.mrf.mxu0
      %v636 = vpop.f32.mrf.mxu0
      %v637 = vadd.f32 %v432, %v636
      %v638 = vpop.f32.mrf.mxu0
      %639 = vmatprep.mubr.bf16.mxu0 0
      %640 = vmatmul.mubr.bf16.gmra.mxu0 %v323
      %v641 = vpop.f32.mrf.mxu0
      %v642 = vadd.f32 %v437, %v641
      %v643 = vpop.f32.mrf.mxu0
      %v644 = vpop.f32.mrf.mxu0
      %v645 = vadd.f32 %v440, %v644
      %v646 = vpop.f32.mrf.mxu0
      %647 = vmatprep.mubr.bf16.mxu0 0
      %648 = vmatmul.mubr.bf16.gmra.mxu0 %v326
      %v649 = vpop.f32.mrf.mxu0
      %v650 = vadd.f32 %v445, %v649
      %v651 = vpop.f32.mrf.mxu0
      %v652 = vpop.f32.mrf.mxu0
      %v653 = vadd.f32 %v448, %v652
      %v654 = vpop.f32.mrf.mxu0
      %655 = vmatprep.mubr.bf16.mxu0 0
      %656 = vmatmul.mubr.bf16.gmra.mxu0 %v329
      %v657 = vpop.f32.mrf.mxu0
      %v658 = vadd.f32 %v453, %v657
      %v659 = vpop.f32.mrf.mxu0
      %v660 = vpop.f32.mrf.mxu0
      %v661 = vadd.f32 %v456, %v660
      %v662 = vpop.f32.mrf.mxu0
      %663 = vmatprep.mubr.bf16.mxu0 0
      %664 = vmatmul.mubr.bf16.gmra.mxu0 %v332
      %v665 = vpop.f32.mrf.mxu0
      %v666 = vadd.f32 %v461, %v665
      %v667 = vpop.f32.mrf.mxu0
      %v668 = vpop.f32.mrf.mxu0
      %v669 = vadd.f32 %v464, %v668
      %v670 = vpop.f32.mrf.mxu0
      %671 = vmatprep.mubr.bf16.mxu0 0
      %672 = vmatmul.mubr.bf16.gmra.mxu0 %v335
      %v673 = vpop.f32.mrf.mxu0
      %v674 = vadd.f32 %v469, %v673
      %v675 = vpop.f32.mrf.mxu0
      %v676 = vpop.f32.mrf.mxu0
      %v677 = vadd.f32 %v472, %v676
      %v678 = vpop.f32.mrf.mxu0
      %679 = vmatprep.mubr.bf16.mxu0 0
      %680 = vmatmul.mubr.bf16.gmra.mxu0 %v338
      %v681 = vpop.f32.mrf.mxu0
      %v682 = vadd.f32 %v477, %v681
      %v683 = vpop.f32.mrf.mxu0
      %v684 = vpop.f32.mrf.mxu0
      %v685 = vadd.f32 %v480, %v684
      %v686 = vpop.f32.mrf.mxu0
      %687 = vmatprep.mubr.bf16.mxu0 0
      %688 = vmatmul.mubr.bf16.gmra.mxu0 %v341
      %v689 = vpop.f32.mrf.mxu0
      %v690 = vadd.f32 %v485, %v689
      %v691 = vpop.f32.mrf.mxu0
      %v692 = vpop.f32.mrf.mxu0
      %v693 = vadd.f32 %v488, %v692
      %v694 = vpop.f32.mrf.mxu0
      %695 = vmatprep.mubr.bf16.mxu0 0
      %696 = vmatmul.mubr.bf16.gmra.mxu0 %v344
      %v697 = vpop.f32.mrf.mxu0
      %v698 = vadd.f32 %v493, %v697
      %v699 = vpop.f32.mrf.mxu0
      %v700 = vpop.f32.mrf.mxu0
      %v701 = vadd.f32 %v496, %v700
      %v702 = vpop.f32.mrf.mxu0
      %703 = vmatprep.mubr.bf16.mxu0 0
      %704 = vmatmul.mubr.bf16.gmra.mxu0 %v347
      %v705 = vpop.f32.mrf.mxu0
      %v706 = vadd.f32 %v501, %v705
      %v707 = vpop.f32.mrf.mxu0
      %v708 = vpop.f32.mrf.mxu0
      %v709 = vadd.f32 %v504, %v708
      %v710 = vpop.f32.mrf.mxu0
      %711 = vmatprep.mubr.bf16.mxu0 0
      %712 = vmatmul.mubr.bf16.gmra.mxu0 %v350
      %v713 = vpop.f32.mrf.mxu0
      %v714 = vadd.f32 %v509, %v713
      %v715 = vpop.f32.mrf.mxu0
      %v716 = vpop.f32.mrf.mxu0
      %v717 = vadd.f32 %v512, %v716
      %v718 = vpop.f32.mrf.mxu0
      %719 = vmatprep.mubr.bf16.mxu0 0
      %720 = vmatmul.mubr.bf16.gmra.mxu0 %v353
      %v721 = vpop.f32.mrf.mxu0
      %v722 = vadd.f32 %v517, %v721
      %v723 = vpop.f32.mrf.mxu0
      %v724 = vpop.f32.mrf.mxu0
      %v725 = vadd.f32 %v520, %v724
      %v726 = vpop.f32.mrf.mxu0
      %727 = vmatprep.mubr.bf16.mxu0 0
      %728 = vmatmul.mubr.bf16.gmra.mxu0 %v356
      %v729 = vpop.f32.mrf.mxu0
      %v730 = vadd.f32 %v525, %v729
      %v731 = vpop.f32.mrf.mxu0
      %v732 = vpop.f32.mrf.mxu0
      %v733 = vadd.f32 %v528, %v732
      %v734 = vpop.f32.mrf.mxu0
      %735 = vdwg.mxu0
      %s736 = scalar_lea.vmem %s1, 32
      %v737 = vld [vmem:[%s736] sm:$0xf]
      %v738 = vld [vmem:[%s736 + $0x4] sm:$0xf]
      %v739 = vld [vmem:[%s736 + $0x8] sm:$0xf]
      %v740 = vld [vmem:[%s736 + $0xc] sm:$0xf]
      %v749 = vunpack.c.l.b16 %v212
      %v750 = vunpack.c.l.b16 %v213
      %v751 = vunpack.c.l.b16 %v214
      %v752 = vunpack.c.l.b16 %v215
      %v753 = vunpack.c.l.b16 %v216
      %v754 = vunpack.c.l.b16 %v217
      %v755 = vunpack.c.l.b16 %v218
      %v756 = vunpack.c.l.b16 %v219
      %v757 = vpack.c.b16 %v750, %v749
      %v758 = vpack.c.b16 %v752, %v751
      %v759 = vpack.c.b16 %v754, %v753
      %v760 = vpack.c.b16 %v756, %v755
      %v765 = vunpack.c.l.b16 %v737
      %v766 = vunpack.c.l.b16 %v738
      %v767 = vunpack.c.l.b16 %v739
      %v768 = vunpack.c.l.b16 %v740
      %v769 = vpack.c.b16 %v766, %v765
      %v770 = vpack.c.b16 %v768, %v767
      %v774 = vsel %vm321, %v757, 0
      %v777 = vsel %vm321, %v758, 0
      %v780 = vsel %vm321, %v759, 0
      %v783 = vsel %vm321, %v760, 0
      %785 = vmatprep.subr.bf16.mxu0 0
      %786 = vmatpush1.bf16.msra.mxu0 0
      %787 = vmatprep.subr.bf16.mxu0 0
      %788 = vmatpush1.bf16.msra.mxu0 0
      %789 = vmatprep.subr.bf16.mxu0 0
      %790 = vmatpush1.bf16.msra.mxu0 0
      %791 = vmatprep.subr.bf16.mxu0 0
      %792 = vmatpush1.bf16.msra.mxu0 0
      %793 = vmatprep.subr.bf16.mxu0 0
      %794 = vmatpush1.bf16.msra.mxu0 0
      %795 = vmatprep.subr.bf16.mxu0 0
      %796 = vmatpush1.bf16.msra.mxu0 0
      %797 = vmatprep.subr.bf16.mxu0 0
      %798 = vmatpush1.bf16.msra.mxu0 %v770
      %799 = vmatprep.subr.bf16.mxu0 0
      %800 = vmatpush1.bf16.msra.mxu0 %v769
      %801 = vmatprep.subr.bf16.mxu0 0
      %802 = vmatpush2.bf16.msra.mxu0 0
      %803 = vmatprep.subr.bf16.mxu0 0
      %804 = vmatpush2.bf16.msra.mxu0 0
      %805 = vmatprep.subr.bf16.mxu0 0
      %806 = vmatpush2.bf16.msra.mxu0 0
      %807 = vmatprep.subr.bf16.mxu0 0
      %808 = vmatpush2.bf16.msra.mxu0 0
      %809 = vmatprep.subr.bf16.mxu0 0
      %810 = vmatpush2.bf16.msra.mxu0 0
      %811 = vmatprep.subr.bf16.mxu0 0
      %812 = vmatpush2.bf16.msra.mxu0 0
      %813 = vmatprep.subr.bf16.mxu0 0
      %814 = vmatpush2.bf16.msra.mxu0 0
      %815 = vmatprep.subr.bf16.mxu0 0
      %816 = vmatpush2.bf16.msra.mxu0 0
      %817 = vmatprep.mubr.bf16.mxu0 0
      %818 = vmatmul.mubr.bf16.gmra.mxu0 %v335
      %v819 = vpop.f32.mrf.mxu0
      %v820 = vadd.f32 0.0, %v819
      %v821 = vpop.f32.mrf.mxu0
      %v822 = vpop.f32.mrf.mxu0
      %v823 = vadd.f32 0.0, %v822
      %v824 = vpop.f32.mrf.mxu0
      %825 = vmatprep.mubr.bf16.mxu0 0
      %826 = vmatmul.mubr.bf16.gmra.mxu0 %v338
      %v827 = vpop.f32.mrf.mxu0
      %v828 = vadd.f32 0.0, %v827
      %v829 = vpop.f32.mrf.mxu0
      %v830 = vpop.f32.mrf.mxu0
      %v831 = vadd.f32 0.0, %v830
      %v832 = vpop.f32.mrf.mxu0
      %833 = vmatprep.mubr.bf16.mxu0 0
      %834 = vmatmul.mubr.bf16.gmra.mxu0 %v341
      %v835 = vpop.f32.mrf.mxu0
      %v836 = vadd.f32 0.0, %v835
      %v837 = vpop.f32.mrf.mxu0
      %v838 = vpop.f32.mrf.mxu0
      %v839 = vadd.f32 0.0, %v838
      %v840 = vpop.f32.mrf.mxu0
      %841 = vmatprep.mubr.bf16.mxu0 0
      %842 = vmatmul.mubr.bf16.gmra.mxu0 %v344
      %v843 = vpop.f32.mrf.mxu0
      %v844 = vadd.f32 0.0, %v843
      %v845 = vpop.f32.mrf.mxu0
      %v846 = vpop.f32.mrf.mxu0
      %v847 = vadd.f32 0.0, %v846
      %v848 = vpop.f32.mrf.mxu0
      %849 = vmatprep.mubr.bf16.mxu0 0
      %850 = vmatmul.mubr.bf16.gmra.mxu0 %v347
      %v851 = vpop.f32.mrf.mxu0
      %v852 = vadd.f32 0.0, %v851
      %v853 = vpop.f32.mrf.mxu0
      %v854 = vpop.f32.mrf.mxu0
      %v855 = vadd.f32 0.0, %v854
      %v856 = vpop.f32.mrf.mxu0
      %857 = vmatprep.mubr.bf16.mxu0 0
      %858 = vmatmul.mubr.bf16.gmra.mxu0 %v350
      %v859 = vpop.f32.mrf.mxu0
      %v860 = vadd.f32 0.0, %v859
      %v861 = vpop.f32.mrf.mxu0
      %v862 = vpop.f32.mrf.mxu0
      %v863 = vadd.f32 0.0, %v862
      %v864 = vpop.f32.mrf.mxu0
      %865 = vmatprep.mubr.bf16.mxu0 0
      %866 = vmatmul.mubr.bf16.gmra.mxu0 %v353
      %v867 = vpop.f32.mrf.mxu0
      %v868 = vadd.f32 0.0, %v867
      %v869 = vpop.f32.mrf.mxu0
      %v870 = vpop.f32.mrf.mxu0
      %v871 = vadd.f32 0.0, %v870
      %v872 = vpop.f32.mrf.mxu0
      %873 = vmatprep.mubr.bf16.mxu0 0
      %874 = vmatmul.mubr.bf16.gmra.mxu0 %v356
      %v875 = vpop.f32.mrf.mxu0
      %v876 = vadd.f32 0.0, %v875
      %v877 = vpop.f32.mrf.mxu0
      %v878 = vpop.f32.mrf.mxu0
      %v879 = vadd.f32 0.0, %v878
      %v880 = vpop.f32.mrf.mxu0
      %881 = vmatprep.mubr.bf16.mxu0 0
      %882 = vmatmul.mubr.bf16.gmra.mxu0 %v359
      %v883 = vpop.f32.mrf.mxu0
      %v884 = vadd.f32 0.0, %v883
      %v885 = vpop.f32.mrf.mxu0
      %v886 = vpop.f32.mrf.mxu0
      %v887 = vadd.f32 0.0, %v886
      %v888 = vpop.f32.mrf.mxu0
      %889 = vmatprep.mubr.bf16.mxu0 0
      %890 = vmatmul.mubr.bf16.gmra.mxu0 %v362
      %v891 = vpop.f32.mrf.mxu0
      %v892 = vadd.f32 0.0, %v891
      %v893 = vpop.f32.mrf.mxu0
      %v894 = vpop.f32.mrf.mxu0
      %v895 = vadd.f32 0.0, %v894
      %v896 = vpop.f32.mrf.mxu0
      %897 = vmatprep.mubr.bf16.mxu0 0
      %898 = vmatmul.mubr.bf16.gmra.mxu0 %v365
      %v899 = vpop.f32.mrf.mxu0
      %v900 = vadd.f32 0.0, %v899
      %v901 = vpop.f32.mrf.mxu0
      %v902 = vpop.f32.mrf.mxu0
      %v903 = vadd.f32 0.0, %v902
      %v904 = vpop.f32.mrf.mxu0
      %905 = vmatprep.mubr.bf16.mxu0 0
      %906 = vmatmul.mubr.bf16.gmra.mxu0 %v368
      %v907 = vpop.f32.mrf.mxu0
      %v908 = vadd.f32 0.0, %v907
      %v909 = vpop.f32.mrf.mxu0
      %v910 = vpop.f32.mrf.mxu0
      %v911 = vadd.f32 0.0, %v910
      %v912 = vpop.f32.mrf.mxu0
      %913 = vmatprep.mubr.bf16.mxu0 0
      %914 = vmatmul.mubr.bf16.gmra.mxu0 %v774
      %v915 = vpop.f32.mrf.mxu0
      %v916 = vadd.f32 0.0, %v915
      %v917 = vpop.f32.mrf.mxu0
      %v918 = vpop.f32.mrf.mxu0
      %v919 = vadd.f32 0.0, %v918
      %v920 = vpop.f32.mrf.mxu0
      %921 = vmatprep.mubr.bf16.mxu0 0
      %922 = vmatmul.mubr.bf16.gmra.mxu0 %v777
      %v923 = vpop.f32.mrf.mxu0
      %v924 = vadd.f32 0.0, %v923
      %v925 = vpop.f32.mrf.mxu0
      %v926 = vpop.f32.mrf.mxu0
      %v927 = vadd.f32 0.0, %v926
      %v928 = vpop.f32.mrf.mxu0
      %929 = vmatprep.mubr.bf16.mxu0 0
      %930 = vmatmul.mubr.bf16.gmra.mxu0 %v780
      %v931 = vpop.f32.mrf.mxu0
      %v932 = vadd.f32 0.0, %v931
      %v933 = vpop.f32.mrf.mxu0
      %v934 = vpop.f32.mrf.mxu0
      %v935 = vadd.f32 0.0, %v934
      %v936 = vpop.f32.mrf.mxu0
      %937 = vmatprep.mubr.bf16.mxu0 0
      %938 = vmatmul.mubr.bf16.gmra.mxu0 %v783
      %v939 = vpop.f32.mrf.mxu0
      %v940 = vadd.f32 0.0, %v939
      %v941 = vpop.f32.mrf.mxu0
      %v942 = vpop.f32.mrf.mxu0
      %v943 = vadd.f32 0.0, %v942
      %v944 = vpop.f32.mrf.mxu0
      %945 = vdwg.mxu0
      %v946 = vadd.f32 %v610, %v820
      %v947 = vadd.f32 %v613, %v823
      %v948 = vadd.f32 %v618, %v828
      %v949 = vadd.f32 %v621, %v831
      %v950 = vadd.f32 %v626, %v836
      %v951 = vadd.f32 %v629, %v839
      %v952 = vadd.f32 %v634, %v844
      %v953 = vadd.f32 %v637, %v847
      %v954 = vadd.f32 %v642, %v852
      %v955 = vadd.f32 %v645, %v855
      %v956 = vadd.f32 %v650, %v860
      %v957 = vadd.f32 %v653, %v863
      %v958 = vadd.f32 %v658, %v868
      %v959 = vadd.f32 %v661, %v871
      %v960 = vadd.f32 %v666, %v876
      %v961 = vadd.f32 %v669, %v879
      %v962 = vadd.f32 %v674, %v884
      %v963 = vadd.f32 %v677, %v887
      %v964 = vadd.f32 %v682, %v892
      %v965 = vadd.f32 %v685, %v895
      %v966 = vadd.f32 %v690, %v900
      %v967 = vadd.f32 %v693, %v903
      %v968 = vadd.f32 %v698, %v908
      %v969 = vadd.f32 %v701, %v911
      %v970 = vadd.f32 %v706, %v916
      %v971 = vadd.f32 %v709, %v919
      %v972 = vadd.f32 %v714, %v924
      %v973 = vadd.f32 %v717, %v927
      %v974 = vadd.f32 %v722, %v932
      %v975 = vadd.f32 %v725, %v935
      %v976 = vadd.f32 %v730, %v940
      %v977 = vadd.f32 %v733, %v943
      %v978 = vld [vmem:[%s2] sm:$0x1]
      %v980 = vlaneseq
      %v981 = vshrl.u32 %v980, 7
      %v982 = vsub.s32 0, %v981
      %v983 = vrot.slane %v978, %v982
      %v985 = vadd.f32 %v946, %v983
      %v986 = vadd.f32 %v947, %v983
      %v987 = vadd.f32 %v948, %v983
      %v988 = vadd.f32 %v949, %v983
      %v989 = vadd.f32 %v950, %v983
      %v990 = vadd.f32 %v951, %v983
      %v991 = vadd.f32 %v952, %v983
      %v992 = vadd.f32 %v953, %v983
      %v993 = vadd.f32 %v954, %v983
      %v994 = vadd.f32 %v955, %v983
      %v995 = vadd.f32 %v956, %v983
      %v996 = vadd.f32 %v957, %v983
      %v997 = vadd.f32 %v958, %v983
      %v998 = vadd.f32 %v959, %v983
      %v999 = vadd.f32 %v960, %v983
      %v1000 = vadd.f32 %v961, %v983
      %v1001 = vadd.f32 %v962, %v983
      %v1002 = vadd.f32 %v963, %v983
      %v1003 = vadd.f32 %v964, %v983
      %v1004 = vadd.f32 %v965, %v983
      %v1005 = vadd.f32 %v966, %v983
      %v1006 = vadd.f32 %v967, %v983
      %v1007 = vadd.f32 %v968, %v983
      %v1008 = vadd.f32 %v969, %v983
      %v1009 = vadd.f32 %v970, %v983
      %v1010 = vadd.f32 %v971, %v983
      %v1011 = vadd.f32 %v972, %v983
      %v1012 = vadd.f32 %v973, %v983
      %v1013 = vadd.f32 %v974, %v983
      %v1014 = vadd.f32 %v975, %v983
      %v1015 = vadd.f32 %v976, %v983
      %v1016 = vadd.f32 %v977, %v983
      %v1017 = vmax.f32 %v985, 0.0
      %v1018 = vmax.f32 %v986, 0.0
      %v1019 = vmax.f32 %v987, 0.0
      %v1020 = vmax.f32 %v988, 0.0
      %v1021 = vmax.f32 %v989, 0.0
      %v1022 = vmax.f32 %v990, 0.0
      %v1023 = vmax.f32 %v991, 0.0
      %v1024 = vmax.f32 %v992, 0.0
      %v1025 = vmax.f32 %v993, 0.0
      %v1026 = vmax.f32 %v994, 0.0
      %v1027 = vmax.f32 %v995, 0.0
      %v1028 = vmax.f32 %v996, 0.0
      %v1029 = vmax.f32 %v997, 0.0
      %v1030 = vmax.f32 %v998, 0.0
      %v1031 = vmax.f32 %v999, 0.0
      %v1032 = vmax.f32 %v1000, 0.0
      %v1033 = vmax.f32 %v1001, 0.0
      %v1034 = vmax.f32 %v1002, 0.0
      %v1035 = vmax.f32 %v1003, 0.0
      %v1036 = vmax.f32 %v1004, 0.0
      %v1037 = vmax.f32 %v1005, 0.0
      %v1038 = vmax.f32 %v1006, 0.0
      %v1039 = vmax.f32 %v1007, 0.0
      %v1040 = vmax.f32 %v1008, 0.0
      %v1041 = vmax.f32 %v1009, 0.0
      %v1042 = vmax.f32 %v1010, 0.0
      %v1043 = vmax.f32 %v1011, 0.0
      %v1044 = vmax.f32 %v1012, 0.0
      %v1045 = vmax.f32 %v1013, 0.0
      %v1046 = vmax.f32 %v1014, 0.0
      %v1047 = vmax.f32 %v1015, 0.0
      %v1048 = vmax.f32 %v1016, 0.0
      %1049 = vst.msk [vmem:[%s170] sm:$0xff] %vm321, %v1017
      %1050 = vst.msk [vmem:[%s170 + $0x8] sm:$0xff] %vm321, %v1018
      %1051 = vst.msk [vmem:[%s170 + $0x10] sm:$0xff] %vm321, %v1019
      %1052 = vst.msk [vmem:[%s170 + $0x18] sm:$0xff] %vm321, %v1020
      %1053 = vst.msk [vmem:[%s170 + $0x20] sm:$0xff] %vm321, %v1021
      %1054 = vst.msk [vmem:[%s170 + $0x28] sm:$0xff] %vm321, %v1022
      %1055 = vst.msk [vmem:[%s170 + $0x30] sm:$0xff] %vm321, %v1023
      %1056 = vst.msk [vmem:[%s170 + $0x38] sm:$0xff] %vm321, %v1024
      %1057 = vst.msk [vmem:[%s170 + $0x40] sm:$0xff] %vm321, %v1025
      %1058 = vst.msk [vmem:[%s170 + $0x48] sm:$0xff] %vm321, %v1026
      %1059 = vst.msk [vmem:[%s170 + $0x50] sm:$0xff] %vm321, %v1027
      %1060 = vst.msk [vmem:[%s170 + $0x58] sm:$0xff] %vm321, %v1028
      %1061 = vst.msk [vmem:[%s170 + $0x60] sm:$0xff] %vm321, %v1029
      %1062 = vst.msk [vmem:[%s170 + $0x68] sm:$0xff] %vm321, %v1030
      %1063 = vst.msk [vmem:[%s170 + $0x70] sm:$0xff] %vm321, %v1031
      %1064 = vst.msk [vmem:[%s170 + $0x78] sm:$0xff] %vm321, %v1032
      %1065 = vst.msk [vmem:[%s170 + $0x80] sm:$0xff] %vm321, %v1033
      %1066 = vst.msk [vmem:[%s170 + $0x88] sm:$0xff] %vm321, %v1034
      %1067 = vst.msk [vmem:[%s170 + $0x90] sm:$0xff] %vm321, %v1035
      %1068 = vst.msk [vmem:[%s170 + $0x98] sm:$0xff] %vm321, %v1036
      %1069 = vst.msk [vmem:[%s170 + $0xa0] sm:$0xff] %vm321, %v1037
      %1070 = vst.msk [vmem:[%s170 + $0xa8] sm:$0xff] %vm321, %v1038
      %1071 = vst.msk [vmem:[%s170 + $0xb0] sm:$0xff] %vm321, %v1039
      %1072 = vst.msk [vmem:[%s170 + $0xb8] sm:$0xff] %vm321, %v1040
      %1073 = vst.msk [vmem:[%s170 + $0xc0] sm:$0xff] %vm321, %v1041
      %1074 = vst.msk [vmem:[%s170 + $0xc8] sm:$0xff] %vm321, %v1042
      %1075 = vst.msk [vmem:[%s170 + $0xd0] sm:$0xff] %vm321, %v1043
      %1076 = vst.msk [vmem:[%s170 + $0xd8] sm:$0xff] %vm321, %v1044
      %1077 = vst.msk [vmem:[%s170 + $0xe0] sm:$0xff] %vm321, %v1045
      %1078 = vst.msk [vmem:[%s170 + $0xe8] sm:$0xff] %vm321, %v1046
      %1079 = vst.msk [vmem:[%s170 + $0xf0] sm:$0xff] %vm321, %v1047
      %1080 = vst.msk [vmem:[%s170 + $0xf8] sm:$0xff] %vm321, %v1048
      %p1081 = scmp.lt.s32.totalorder %s14, 1
      %s1082 = scalar_select %p1081, %s14, 1
      %s1083 = smul.addr %s1082, 32
      %s1084 = smul.addr %s1083, 8
      %s1085 = scalar_lea.vmem %s3, %s1084
      // Predicated region
      $region33: #{mixed_3b_forward.10} parent=31 // pred_check
        %p1086 = pneg %p100
      $region34: #{mixed_3b_forward.10} parent=31 // pred_check_branch
        %1088 = sbr.rel (%p1086) target = $region36
      $region35: #{mixed_3b_forward.10} parent=31 // pred_region
        _
      $region36: #{mixed_3b_forward.10} parent=31 // pred_fallthru
        _
    $region32: #{mixed_3b_forward.10} parent=5 // pred_fallthru
      _
    %p1089 = scmp.le.s32.totalorder 2, %s9
    // Predicated region
    $region37: #{mixed_3b_forward.10} parent=5 // pred_check
      %p1090 = pneg %p1089
    $region38: #{mixed_3b_forward.10} parent=5 // pred_check_branch
      %1092 = sbr.rel (%p1090) target = $region40
    $region39: #{mixed_3b_forward.10} parent=5 // pred_region
      %s1093 = ssub.s32 %s9, 2
      // Predicated region
      $region41: #{mixed_3b_forward.10} parent=39 // pred_check
        %p1094 = pneg %p106
      $region42: #{mixed_3b_forward.10} parent=39 // pred_check_branch
        %1096 = sbr.rel (%p1094) target = $region44
      $region43: #{mixed_3b_forward.10} parent=39 // pred_region
        %p1097 = scmp.lt.s32.totalorder %s15, 1
        %s1098 = scalar_select %p1097, %s15, 1
        %s1099 = smul.addr %s1098, 32
        %s1100 = smul.addr %s1099, 8
        %s1101 = scalar_lea.vmem %s3, %s1100
      $region44: #{mixed_3b_forward.10} parent=39 // pred_fallthru
        _
    $region40: #{mixed_3b_forward.10} parent=5 // pred_fallthru
      _
  $region6: #{mixed_3b_forward.10} parent=0 // loop_footer
    %s13 = sadd.s32 1, %s9
  $region7: #{mixed_3b_forward.10} parent=0 // loop_footer_branch
    %8 = sbr.rel target = $region3
  $region8: #{mixed_3b_forward.10} parent=0 // loop_exit
    _

// kernel: mixed_3b_forward.9
$region0: #{mixed_3b_forward.9}
  #allocation0 [shape = 'u32[]', space=smem, size = 0x4, offset = 0x4, fixed_abs, tag = 'smem constant byte address 0x4 - core index']
  #allocation1 [shape = 'u32[144,128]{1,0:T(1,128)}', space=vmem, size = 0x12000, scoped, tag = 'internal scratch']
  %s0 = inlined_call_operand.vmem [shape: bf16[2,4,10,10,16], index: 0, kind: input, shape index: {}]
  %s1 = inlined_call_operand.vmem [shape: bf16[9,16,32], index: 1, kind: input, shape index: {}]
  %s2 = inlined_call_operand.vmem [shape: f32[1,32], index: 2, kind: input, shape index: {}]
  %s3 = inlined_call_operand.vmem [shape: bf16[2,4,8,8,32], index: 3, kind: output, shape index: {}]
  %s4 = sld [smem:[#allocation0]]
  $region45: #{mixed_3b_forward.9} parent=0
    _
  %s6 = ssub.s32 1, %s4
  %s7 = scalar_select 0, %s6, %s4
  loop: start=0, step=1, limit=4
  $region2: #{mixed_3b_forward.9} parent=0 // loop_pre_header
    _
  $region3: #{mixed_3b_forward.9} parent=0 // loop_header
    %s9 = sphi 0, %s13
    %p10 = scmp.ge.s32.totalorder %s9, 4
    %s16 = sphi 0, %s28
    %s17 = sphi 0, %s24
    %s18 = sphi 0, %s16
    %s19 = sphi 0, %s17
    %s20 = sphi 0, %s18
    %s21 = sphi 0, %s19
    %s33 = sphi 0, %s35
    %s36 = sphi 0, %s33
    %s37 = sphi 0, %s36
    %s53 = sphi 0, %s37
    %s57 = sphi 0, %s57
    %s59 = sphi 0, %s57
    %s60 = sphi 0, %s59
    %s74 = sphi 0, %s60
    %s78 = sphi 0, %s78
    %s80 = sphi 0, %s78
    %s81 = sphi 0, %s80
    %s95 = sphi 0, %s81
    %s103 = sphi 0, %s105
    %s106 = sphi 0, %s103
    %s107 = sphi 0, %s106
    %s123 = sphi 0, %s107
  $region4: #{mixed_3b_forward.9} parent=0 // loop_header_branch
    %12 = sbr.rel (%p10) target = $region8
  $region5: #{mixed_3b_forward.9} parent=0 // loop_body
    %s14 = ssub.s32 %s9, 1
    %s15 = ssub.s32 %s9, 2
    %s22 = sadd.s32 1, %s17
    %p23 = scmp.ge.s32.totalorder %s22, 1
    %s24 = scalar_select %p23, 0, %s22
    %s25 = sadd.s32 1, %s16
    %s26 = scalar_select %p23, %s25, %s16
    %p27 = scmp.ge.s32.totalorder %s26, 2
    %s28 = scalar_select %p27, 0, %s26
    %s29 = ssub.s32 %s16, %s28
    %s30 = ssub.s32 %s17, %s24
    %s31 = sor.u32 %s29, %s30
    %p32 = scmp.eq.s32.totalorder %s31, 0
    %s34 = sadd.s32 %s33, 1
    %s35 = scalar_select %p32, %s33, %s34
    %p38 = pneg %p32
    %p39 = scmp.eq.s32.totalorder %s9, 1
    %p40 = por %p38, %p39
    %p41 = scmp.ne.s32.totalorder %s33, %s36
    %p42 = scmp.eq.s32.totalorder %s9, 0
    %p43 = por %p41, %p42
    %p44 = scmp.ne.s32.totalorder %s33, %s36
    %p45 = scmp.eq.s32.totalorder %s14, 1
    %p46 = por %p44, %p45
    %p47 = scmp.ne.s32.totalorder %s36, %s37
    %p48 = scmp.eq.s32.totalorder %s14, 0
    %p49 = por %p47, %p48
    %p50 = scmp.ne.s32.totalorder %s36, %s37
    %p51 = scmp.eq.s32.totalorder %s15, 1
    %p52 = por %p50, %p51
    %p54 = scmp.ne.s32.totalorder %s37, %s53
    %p55 = scmp.eq.s32.totalorder %s15, 0
    %p56 = por %p54, %p55
    %s58 = sadd.s32 %s57, 1
    %p61 = scmp.eq.s32.totalorder %s9, 1
    %p62 = scmp.ne.s32.totalorder %s57, %s59
    %p63 = scmp.eq.s32.totalorder %s9, 0
    %p64 = por %p62, %p63
    %p65 = scmp.ne.s32.totalorder %s57, %s59
    %p66 = scmp.eq.s32.totalorder %s14, 1
    %p67 = por %p65, %p66
    %p68 = scmp.ne.s32.totalorder %s59, %s60
    %p69 = scmp.eq.s32.totalorder %s14, 0
    %p70 = por %p68, %p69
    %p71 = scmp.ne.s32.totalorder %s59, %s60
    %p72 = scmp.eq.s32.totalorder %s15, 1
    %p73 = por %p71, %p72
    %p75 = scmp.ne.s32.totalorder %s60, %s74
    %p76 = scmp.eq.s32.totalorder %s15, 0
    %p77 = por %p75, %p76
    %s79 = sadd.s32 %s78, 1
    %p82 = scmp.eq.s32.totalorder %s9, 1
    %p83 = scmp.ne.s32.totalorder %s78, %s80
    %p84 = scmp.eq.s32.totalorder %s9, 0
    %p85 = por %p83, %p84
    %p86 = scmp.ne.s32.totalorder %s78, %s80
    %p87 = scmp.eq.s32.totalorder %s14, 1
    %p88 = por %p86, %p87
    %p89 = scmp.ne.s32.totalorder %s80, %s81
    %p90 = scmp.eq.s32.totalorder %s14, 0
    %p91 = por %p89, %p90
    %p92 = scmp.ne.s32.totalorder %s80, %s81
    %p93 = scmp.eq.s32.totalorder %s15, 1
    %p94 = por %p92, %p93
    %p96 = scmp.ne.s32.totalorder %s81, %s95
    %p97 = scmp.eq.s32.totalorder %s15, 0
    %p98 = por %p96, %p97
    %s99 = ssub.s32 %s16, %s28
    %s100 = ssub.s32 %s17, %s24
    %s101 = sor.u32 %s99, %s100
    %p102 = scmp.eq.s32.totalorder %s101, 0
    %s104 = sadd.s32 %s103, 1
    %s105 = scalar_select %p102, %s103, %s104
    %p108 = pneg %p102
    %p109 = scmp.eq.s32.totalorder %s9, 1
    %p110 = por %p108, %p109
    %p111 = scmp.ne.s32.totalorder %s103, %s106
    %p112 = scmp.eq.s32.totalorder %s9, 0
    %p113 = por %p111, %p112
    %p114 = scmp.ne.s32.totalorder %s103, %s106
    %p115 = scmp.eq.s32.totalorder %s14, 1
    %p116 = por %p114, %p115
    %p117 = scmp.ne.s32.totalorder %s106, %s107
    %p118 = scmp.eq.s32.totalorder %s14, 0
    %p119 = por %p117, %p118
    %p120 = scmp.ne.s32.totalorder %s106, %s107
    %p121 = scmp.eq.s32.totalorder %s15, 1
    %p122 = por %p120, %p121
    %p124 = scmp.ne.s32.totalorder %s107, %s123
    %p125 = scmp.eq.s32.totalorder %s15, 0
    %p126 = por %p124, %p125
    %p127 = scmp.le.s32.totalorder 1, %s9
    %p128 = scmp.lt.s32.totalorder %s9, 3
    %p129 = pnand %p127, %p128
    %p130 = pneg %p129
    // Predicated region
    $region9: #{mixed_3b_forward.9} parent=5 // pred_check
      _
    $region10: #{mixed_3b_forward.9} parent=5 // pred_check_branch
      %132 = sbr.rel (%p129) target = $region12
    $region11: #{mixed_3b_forward.9} parent=5 // pred_region
      %s133 = ssub.s32 %s9, 1
      // Predicated region
      $region13: #{mixed_3b_forward.9} parent=11 // pred_check
        %p134 = pneg %p70
      $region14: #{mixed_3b_forward.9} parent=11 // pred_check_branch
        %136 = sbr.rel (%p134) target = $region16
      $region15: #{mixed_3b_forward.9} parent=11 // pred_region
        _
      $region16: #{mixed_3b_forward.9} parent=11 // pred_fallthru
        _
      // Predicated region
      $region17: #{mixed_3b_forward.9} parent=11 // pred_check
        %p137 = pneg %p91
      $region18: #{mixed_3b_forward.9} parent=11 // pred_check_branch
        %139 = sbr.rel (%p137) target = $region20
      $region19: #{mixed_3b_forward.9} parent=11 // pred_region
        _
      $region20: #{mixed_3b_forward.9} parent=11 // pred_fallthru
        _
    $region12: #{mixed_3b_forward.9} parent=5 // pred_fallthru
      _
    %p140 = scmp.lt.s32.totalorder %s9, 2
    // Predicated region
    $region21: #{mixed_3b_forward.9} parent=5 // pred_check
      %p141 = pneg %p140
    $region22: #{mixed_3b_forward.9} parent=5 // pred_check_branch
      %143 = sbr.rel (%p141) target = $region24
    $region23: #{mixed_3b_forward.9} parent=5 // pred_region
      // Predicated region
      $region25: #{mixed_3b_forward.9} parent=23 // pred_check
        %p144 = pneg %p43
      $region26: #{mixed_3b_forward.9} parent=23 // pred_check_branch
        %146 = sbr.rel (%p144) target = $region28
      $region27: #{mixed_3b_forward.9} parent=23 // pred_region
        %s147 = smul.u32 4, %s17
        %p148 = scmp.lt.s32.totalorder %s16, 1
        %s149 = scalar_select %p148, %s16, 1
        %p150 = scmp.lt.s32.totalorder %s147, 3
        %s151 = scalar_select %p150, %s147, 3
        %s152 = smul.addr %s151, 20
        %s153 = smul.addr %s149, 80
        %s154 = sadd.s32 %s152, %s153
        %s155 = smul.addr %s154, 4
        %s156 = scalar_lea.vmem %s0, %s155
        %s157 = smul.u32 4, %s17
      $region28: #{mixed_3b_forward.9} parent=23 // pred_fallthru
        _
    $region24: #{mixed_3b_forward.9} parent=5 // pred_fallthru
      _
    %p158 = scmp.le.s32.totalorder 1, %s9
    %p159 = scmp.lt.s32.totalorder %s9, 3
    %p160 = pnand %p158, %p159
    %p161 = pneg %p160
    // Predicated region
    $region29: #{mixed_3b_forward.9} parent=5 // pred_check
      _
    $region30: #{mixed_3b_forward.9} parent=5 // pred_check_branch
      %163 = sbr.rel (%p160) target = $region32
    $region31: #{mixed_3b_forward.9} parent=5 // pred_region
      %s164 = ssub.s32 %s9, 1
      %s165 = smul.u32 4, %s19
      %p166 = scmp.lt.s32.totalorder %s18, 1
      %s167 = scalar_select %p166, %s18, 1
      %p168 = scmp.lt.s32.totalorder %s165, 3
      %s169 = scalar_select %p168, %s165, 3
      %s170 = smul.addr %s169, 20
      %s171 = smul.addr %s167, 80
      %s172 = sadd.s32 %s170, %s171
      %s173 = smul.addr %s172, 4
      %s174 = scalar_lea.vmem %s0, %s173
      %p175 = pneg %p49
      %p176 = pneg %p46
      %p177 = pneg %p70
      %p178 = pneg %p67
      %p179 = pneg %p91
      %p180 = pneg %p88
      %p181 = pneg %p119
      %p182 = pneg %p116
      %s183 = smul.u32 4, %s19
      %p184 = scmp.lt.s32.totalorder %s18, 1
      %s185 = scalar_select %p184, %s18, 1
      %p186 = scmp.lt.s32.totalorder %s183, 3
      %s187 = scalar_select %p186, %s183, 3
      %s188 = smul.addr %s187, 8
      %s189 = smul.addr %s185, 32
      %s190 = sadd.s32 %s188, %s189
      %s191 = smul.addr %s190, 4
      %s192 = scalar_lea.vmem %s3, %s191
      %s193 = smul.u32 4, %s19
      %p194 = scmp.lt.s32.totalorder %s18, 1
      %s195 = scalar_select %p194, %s18, 1
      %p196 = scmp.lt.s32.totalorder %s193, 3
      %s197 = scalar_select %p196, %s193, 3
      %s198 = smul.addr %s197, 20
      %s199 = smul.addr %s195, 80
      %s200 = sadd.s32 %s198, %s199
      %s201 = smul.addr %s200, 4
      %s202 = scalar_lea.vmem %s0, %s201
      %s203 = smul.u32 4, %s19
      %s204 = smul.u32 4, %s19
      %p205 = scmp.lt.s32.totalorder %s18, 1
      %s206 = scalar_select %p205, %s18, 1
      %p207 = scmp.lt.s32.totalorder %s204, 3
      %s208 = scalar_select %p207, %s204, 3
      %s209 = smul.addr %s208, 8
      %s210 = smul.addr %s206, 32
      %s211 = sadd.s32 %s209, %s210
      %s212 = smul.addr %s211, 4
      %s213 = scalar_lea.vmem %s3, %s212
      %s214 = smul.u32 4, %s19
      %v216 = vld [vmem:[%s202] sm:$0xf]
      %v217 = vld [vmem:[%s202 + $0x4] sm:$0x1]
      %v218 = vld [vmem:[%s202 + $0x8] sm:$0xf]
      %v219 = vld [vmem:[%s202 + $0xc] sm:$0x1]
      %v220 = vld [vmem:[%s202 + $0x10] sm:$0xf]
      %v221 = vld [vmem:[%s202 + $0x14] sm:$0x1]
      %v222 = vld [vmem:[%s202 + $0x18] sm:$0xf]
      %v223 = vld [vmem:[%s202 + $0x1c] sm:$0x1]
      %v224 = vld [vmem:[%s202 + $0x20] sm:$0xf]
      %v225 = vld [vmem:[%s202 + $0x24] sm:$0x1]
      %v226 = vld [vmem:[%s202 + $0x28] sm:$0xf]
      %v227 = vld [vmem:[%s202 + $0x2c] sm:$0x1]
      %v228 = vld [vmem:[%s202 + $0x30] sm:$0xf]
      %v229 = vld [vmem:[%s202 + $0x34] sm:$0x1]
      %v230 = vld [vmem:[%s202 + $0x38] sm:$0xf]
      %v231 = vld [vmem:[%s202 + $0x3c] sm:$0x1]
      %v232 = vld [vmem:[%s202 + $0x40] sm:$0xf]
      %v233 = vld [vmem:[%s202 + $0x44] sm:$0x1]
      %v234 = vld [vmem:[%s202 + $0x48] sm:$0xf]
      %v235 = vld [vmem:[%s202 + $0x4c] sm:$0x1]
      %v236 = vld [vmem:[%s202 + $0x50] sm:$0xf]
      %v237 = vld [vmem:[%s202 + $0x54] sm:$0x1]
      %v238 = vld [vmem:[%s202 + $0x58] sm:$0xf]
      %v239 = vld [vmem:[%s202 + $0x5c] sm:$0x1]
      %v240 = vld [vmem:[%s202 + $0x60] sm:$0xf]
      %v241 = vld [vmem:[%s202 + $0x64] sm:$0x1]
      %v242 = vld [vmem:[%s202 + $0x68] sm:$0xf]
      %v243 = vld [vmem:[%s202 + $0x6c] sm:$0x1]
      %v244 = vld [vmem:[%s202 + $0x70] sm:$0xf]
      %v245 = vld [vmem:[%s202 + $0x74] sm:$0x1]
      %v246 = vld [vmem:[%s202 + $0x78] sm:$0xf]
      %v247 = vld [vmem:[%s202 + $0x7c] sm:$0x1]
      %v248 = vld [vmem:[%s202 + $0x80] sm:$0xf]
      %v249 = vld [vmem:[%s202 + $0x84] sm:$0x1]
      %v250 = vld [vmem:[%s202 + $0x88] sm:$0xf]
      %v251 = vld [vmem:[%s202 + $0x8c] sm:$0x1]
      %v252 = vld [vmem:[%s202 + $0x90] sm:$0xf]
      %v253 = vld [vmem:[%s202 + $0x94] sm:$0x1]
      %v254 = vld [vmem:[%s202 + $0x98] sm:$0xf]
      %v255 = vld [vmem:[%s202 + $0x9c] sm:$0x1]
      %v256 = vld [vmem:[%s202 + $0xa0] sm:$0xf]
      %v257 = vld [vmem:[%s202 + $0xa4] sm:$0x1]
      %v258 = vld [vmem:[%s202 + $0xa8] sm:$0xf]
      %v259 = vld [vmem:[%s202 + $0xac] sm:$0x1]
      %v260 = vld [vmem:[%s202 + $0xb0] sm:$0xf]
      %v261 = vld [vmem:[%s202 + $0xb4] sm:$0x1]
      %v262 = vld [vmem:[%s202 + $0xb8] sm:$0xf]
      %v263 = vld [vmem:[%s202 + $0xbc] sm:$0x1]
      %v264 = vld [vmem:[%s202 + $0xc0] sm:$0xf]
      %v265 = vld [vmem:[%s202 + $0xc4] sm:$0x1]
      %v266 = vld [vmem:[%s202 + $0xc8] sm:$0xf]
      %v267 = vld [vmem:[%s202 + $0xcc] sm:$0x1]
      %v268 = vld [vmem:[%s202 + $0xd0] sm:$0xf]
      %v269 = vld [vmem:[%s202 + $0xd4] sm:$0x1]
      %v270 = vld [vmem:[%s202 + $0xd8] sm:$0xf]
      %v271 = vld [vmem:[%s202 + $0xdc] sm:$0x1]
      %v272 = vld [vmem:[%s202 + $0xe0] sm:$0xf]
      %v273 = vld [vmem:[%s202 + $0xe4] sm:$0x1]
      %v274 = vld [vmem:[%s202 + $0xe8] sm:$0xf]
      %v275 = vld [vmem:[%s202 + $0xec] sm:$0x1]
      %v276 = vld [vmem:[%s202 + $0xf0] sm:$0xf]
      %v277 = vld [vmem:[%s202 + $0xf4] sm:$0x1]
      %v278 = vld [vmem:[%s202 + $0xf8] sm:$0xf]
      %v279 = vld [vmem:[%s202 + $0xfc] sm:$0x1]
      %v280 = vld [vmem:[%s202 + $0x100] sm:$0xf]
      %v281 = vld [vmem:[%s202 + $0x104] sm:$0x1]
      %v282 = vld [vmem:[%s202 + $0x108] sm:$0xf]
      %v283 = vld [vmem:[%s202 + $0x10c] sm:$0x1]
      %v284 = vld [vmem:[%s202 + $0x110] sm:$0xf]
      %v285 = vld [vmem:[%s202 + $0x114] sm:$0x1]
      %v286 = vld [vmem:[%s202 + $0x118] sm:$0xf]
      %v287 = vld [vmem:[%s202 + $0x11c] sm:$0x1]
      %v288 = vld [vmem:[%s202 + $0x120] sm:$0xf]
      %v289 = vld [vmem:[%s202 + $0x124] sm:$0x1]
      %v290 = vld [vmem:[%s202 + $0x128] sm:$0xf]
      %v291 = vld [vmem:[%s202 + $0x12c] sm:$0x1]
      %v292 = vld [vmem:[%s202 + $0x130] sm:$0xf]
      %v293 = vld [vmem:[%s202 + $0x134] sm:$0x1]
      %v294 = vld [vmem:[%s202 + $0x138] sm:$0xf]
      %v295 = vld [vmem:[%s202 + $0x13c] sm:$0x1]
      %v296 = vld [vmem:[%s1] sm:$0xf]
      %v297 = vld [vmem:[%s1 + $0x4] sm:$0xf]
      %vm298 = vsmask.f32 3328
      %vm299 = vsmask.f32 7440
      %vm300 = vmor %vm298, %vm299
      %v302 = vshrl.u32 %v216, 16
      %v304 = vrot.slane %v302, 4
      %v305 = vshll.u32 %v216, 16
      %v307 = vrot.slane %v305, 5
      %v308 = vor.u32 %v304, %v307
      %v309 = vrot.slane %v308, 4
      %v311 = vshll.u32 %v217, 16
      %v313 = vrot.slane %v311, 5
      %v314 = vsel %vm300, %v309, %v313
      %v316 = vshrl.u32 %v218, 16
      %v318 = vrot.slane %v316, 4
      %v319 = vshll.u32 %v218, 16
      %v321 = vrot.slane %v319, 5
      %v322 = vor.u32 %v318, %v321
      %v323 = vrot.slane %v322, 4
      %v325 = vshll.u32 %v219, 16
      %v327 = vrot.slane %v325, 5
      %v328 = vsel %vm300, %v323, %v327
      %v330 = vshrl.u32 %v220, 16
      %v332 = vrot.slane %v330, 4
      %v333 = vshll.u32 %v220, 16
      %v335 = vrot.slane %v333, 5
      %v336 = vor.u32 %v332, %v335
      %v337 = vrot.slane %v336, 4
      %v339 = vshll.u32 %v221, 16
      %v341 = vrot.slane %v339, 5
      %v342 = vsel %vm300, %v337, %v341
      %v344 = vshrl.u32 %v222, 16
      %v346 = vrot.slane %v344, 4
      %v347 = vshll.u32 %v222, 16
      %v349 = vrot.slane %v347, 5
      %v350 = vor.u32 %v346, %v349
      %v351 = vrot.slane %v350, 4
      %v353 = vshll.u32 %v223, 16
      %v355 = vrot.slane %v353, 5
      %v356 = vsel %vm300, %v351, %v355
      %v358 = vshrl.u32 %v224, 16
      %v360 = vrot.slane %v358, 4
      %v361 = vshll.u32 %v224, 16
      %v363 = vrot.slane %v361, 5
      %v364 = vor.u32 %v360, %v363
      %v365 = vrot.slane %v364, 4
      %v367 = vshll.u32 %v225, 16
      %v369 = vrot.slane %v367, 5
      %v370 = vsel %vm300, %v365, %v369
      %v372 = vshrl.u32 %v226, 16
      %v374 = vrot.slane %v372, 4
      %v375 = vshll.u32 %v226, 16
      %v377 = vrot.slane %v375, 5
      %v378 = vor.u32 %v374, %v377
      %v379 = vrot.slane %v378, 4
      %v381 = vshll.u32 %v227, 16
      %v383 = vrot.slane %v381, 5
      %v384 = vsel %vm300, %v379, %v383
      %v386 = vshrl.u32 %v228, 16
      %v388 = vrot.slane %v386, 4
      %v389 = vshll.u32 %v228, 16
      %v391 = vrot.slane %v389, 5
      %v392 = vor.u32 %v388, %v391
      %v393 = vrot.slane %v392, 4
      %v395 = vshll.u32 %v229, 16
      %v397 = vrot.slane %v395, 5
      %v398 = vsel %vm300, %v393, %v397
      %v400 = vshrl.u32 %v230, 16
      %v402 = vrot.slane %v400, 4
      %v403 = vshll.u32 %v230, 16
      %v405 = vrot.slane %v403, 5
      %v406 = vor.u32 %v402, %v405
      %v407 = vrot.slane %v406, 4
      %v409 = vshll.u32 %v231, 16
      %v411 = vrot.slane %v409, 5
      %v412 = vsel %vm300, %v407, %v411
      %v414 = vshrl.u32 %v236, 16
      %v416 = vrot.slane %v414, 4
      %v417 = vshll.u32 %v236, 16
      %v419 = vrot.slane %v417, 5
      %v420 = vor.u32 %v416, %v419
      %v421 = vrot.slane %v420, 4
      %v423 = vshll.u32 %v237, 16
      %v425 = vrot.slane %v423, 5
      %v426 = vsel %vm300, %v421, %v425
      %v428 = vshrl.u32 %v238, 16
      %v430 = vrot.slane %v428, 4
      %v431 = vshll.u32 %v238, 16
      %v433 = vrot.slane %v431, 5
      %v434 = vor.u32 %v430, %v433
      %v435 = vrot.slane %v434, 4
      %v437 = vshll.u32 %v239, 16
      %v439 = vrot.slane %v437, 5
      %v440 = vsel %vm300, %v435, %v439
      %v442 = vshrl.u32 %v240, 16
      %v444 = vrot.slane %v442, 4
      %v445 = vshll.u32 %v240, 16
      %v447 = vrot.slane %v445, 5
      %v448 = vor.u32 %v444, %v447
      %v449 = vrot.slane %v448, 4
      %v451 = vshll.u32 %v241, 16
      %v453 = vrot.slane %v451, 5
      %v454 = vsel %vm300, %v449, %v453
      %v456 = vshrl.u32 %v242, 16
      %v458 = vrot.slane %v456, 4
      %v459 = vshll.u32 %v242, 16
      %v461 = vrot.slane %v459, 5
      %v462 = vor.u32 %v458, %v461
      %v463 = vrot.slane %v462, 4
      %v465 = vshll.u32 %v243, 16
      %v467 = vrot.slane %v465, 5
      %v468 = vsel %vm300, %v463, %v467
      %v470 = vshrl.u32 %v244, 16
      %v472 = vrot.slane %v470, 4
      %v473 = vshll.u32 %v244, 16
      %v475 = vrot.slane %v473, 5
      %v476 = vor.u32 %v472, %v475
      %v477 = vrot.slane %v476, 4
      %v479 = vshll.u32 %v245, 16
      %v481 = vrot.slane %v479, 5
      %v482 = vsel %vm300, %v477, %v481
      %v484 = vshrl.u32 %v246, 16
      %v486 = vrot.slane %v484, 4
      %v487 = vshll.u32 %v246, 16
      %v489 = vrot.slane %v487, 5
      %v490 = vor.u32 %v486, %v489
      %v491 = vrot.slane %v490, 4
      %v493 = vshll.u32 %v247, 16
      %v495 = vrot.slane %v493, 5
      %v496 = vsel %vm300, %v491, %v495
      %v498 = vshrl.u32 %v248, 16
      %v500 = vrot.slane %v498, 4
      %v501 = vshll.u32 %v248, 16
      %v503 = vrot.slane %v501, 5
      %v504 = vor.u32 %v500, %v503
      %v505 = vrot.slane %v504, 4
      %v507 = vshll.u32 %v249, 16
      %v509 = vrot.slane %v507, 5
      %v510 = vsel %vm300, %v505, %v509
      %v512 = vshrl.u32 %v250, 16
      %v514 = vrot.slane %v512, 4
      %v515 = vshll.u32 %v250, 16
      %v517 = vrot.slane %v515, 5
      %v518 = vor.u32 %v514, %v517
      %v519 = vrot.slane %v518, 4
      %v521 = vshll.u32 %v251, 16
      %v523 = vrot.slane %v521, 5
      %v524 = vsel %vm300, %v519, %v523
      %v526 = vshrl.u32 %v256, 16
      %v528 = vrot.slane %v526, 4
      %v529 = vshll.u32 %v256, 16
      %v531 = vrot.slane %v529, 5
      %v532 = vor.u32 %v528, %v531
      %v533 = vrot.slane %v532, 4
      %v535 = vshll.u32 %v257, 16
      %v537 = vrot.slane %v535, 5
      %v538 = vsel %vm300, %v533, %v537
      %v540 = vshrl.u32 %v258, 16
      %v542 = vrot.slane %v540, 4
      %v543 = vshll.u32 %v258, 16
      %v545 = vrot.slane %v543, 5
      %v546 = vor.u32 %v542, %v545
      %v547 = vrot.slane %v546, 4
      %v549 = vshll.u32 %v259, 16
      %v551 = vrot.slane %v549, 5
      %v552 = vsel %vm300, %v547, %v551
      %v554 = vshrl.u32 %v260, 16
      %v556 = vrot.slane %v554, 4
      %v557 = vshll.u32 %v260, 16
      %v559 = vrot.slane %v557, 5
      %v560 = vor.u32 %v556, %v559
      %v561 = vrot.slane %v560, 4
      %v563 = vshll.u32 %v261, 16
      %v565 = vrot.slane %v563, 5
      %v566 = vsel %vm300, %v561, %v565
      %v568 = vshrl.u32 %v262, 16
      %v570 = vrot.slane %v568, 4
      %v571 = vshll.u32 %v262, 16
      %v573 = vrot.slane %v571, 5
      %v574 = vor.u32 %v570, %v573
      %v575 = vrot.slane %v574, 4
      %v577 = vshll.u32 %v263, 16
      %v579 = vrot.slane %v577, 5
      %v580 = vsel %vm300, %v575, %v579
      %v582 = vshrl.u32 %v264, 16
      %v584 = vrot.slane %v582, 4
      %v585 = vshll.u32 %v264, 16
      %v587 = vrot.slane %v585, 5
      %v588 = vor.u32 %v584, %v587
      %v589 = vrot.slane %v588, 4
      %v591 = vshll.u32 %v265, 16
      %v593 = vrot.slane %v591, 5
      %v594 = vsel %vm300, %v589, %v593
      %v596 = vshrl.u32 %v266, 16
      %v598 = vrot.slane %v596, 4
      %v599 = vshll.u32 %v266, 16
      %v601 = vrot.slane %v599, 5
      %v602 = vor.u32 %v598, %v601
      %v603 = vrot.slane %v602, 4
      %v605 = vshll.u32 %v267, 16
      %v607 = vrot.slane %v605, 5
      %v608 = vsel %vm300, %v603, %v607
      %v610 = vshrl.u32 %v268, 16
      %v612 = vrot.slane %v610, 4
      %v613 = vshll.u32 %v268, 16
      %v615 = vrot.slane %v613, 5
      %v616 = vor.u32 %v612, %v615
      %v617 = vrot.slane %v616, 4
      %v619 = vshll.u32 %v269, 16
      %v621 = vrot.slane %v619, 5
      %v622 = vsel %vm300, %v617, %v621
      %v624 = vshrl.u32 %v270, 16
      %v626 = vrot.slane %v624, 4
      %v627 = vshll.u32 %v270, 16
      %v629 = vrot.slane %v627, 5
      %v630 = vor.u32 %v626, %v629
      %v631 = vrot.slane %v630, 4
      %v633 = vshll.u32 %v271, 16
      %v635 = vrot.slane %v633, 5
      %v636 = vsel %vm300, %v631, %v635
      %v638 = vshrl.u32 %v276, 16
      %v640 = vrot.slane %v638, 4
      %v641 = vshll.u32 %v276, 16
      %v643 = vrot.slane %v641, 5
      %v644 = vor.u32 %v640, %v643
      %v645 = vrot.slane %v644, 4
      %v647 = vshll.u32 %v277, 16
      %v649 = vrot.slane %v647, 5
      %v650 = vsel %vm300, %v645, %v649
      %v652 = vshrl.u32 %v278, 16
      %v654 = vrot.slane %v652, 4
      %v655 = vshll.u32 %v278, 16
      %v657 = vrot.slane %v655, 5
      %v658 = vor.u32 %v654, %v657
      %v659 = vrot.slane %v658, 4
      %v661 = vshll.u32 %v279, 16
      %v663 = vrot.slane %v661, 5
      %v664 = vsel %vm300, %v659, %v663
      %v666 = vshrl.u32 %v280, 16
      %v668 = vrot.slane %v666, 4
      %v669 = vshll.u32 %v280, 16
      %v671 = vrot.slane %v669, 5
      %v672 = vor.u32 %v668, %v671
      %v673 = vrot.slane %v672, 4
      %v675 = vshll.u32 %v281, 16
      %v677 = vrot.slane %v675, 5
      %v678 = vsel %vm300, %v673, %v677
      %v680 = vshrl.u32 %v282, 16
      %v682 = vrot.slane %v680, 4
      %v683 = vshll.u32 %v282, 16
      %v685 = vrot.slane %v683, 5
      %v686 = vor.u32 %v682, %v685
      %v687 = vrot.slane %v686, 4
      %v689 = vshll.u32 %v283, 16
      %v691 = vrot.slane %v689, 5
      %v692 = vsel %vm300, %v687, %v691
      %v694 = vshrl.u32 %v284, 16
      %v696 = vrot.slane %v694, 4
      %v697 = vshll.u32 %v284, 16
      %v699 = vrot.slane %v697, 5
      %v700 = vor.u32 %v696, %v699
      %v701 = vrot.slane %v700, 4
      %v703 = vshll.u32 %v285, 16
      %v705 = vrot.slane %v703, 5
      %v706 = vsel %vm300, %v701, %v705
      %v708 = vshrl.u32 %v286, 16
      %v710 = vrot.slane %v708, 4
      %v711 = vshll.u32 %v286, 16
      %v713 = vrot.slane %v711, 5
      %v714 = vor.u32 %v710, %v713
      %v715 = vrot.slane %v714, 4
      %v717 = vshll.u32 %v287, 16
      %v719 = vrot.slane %v717, 5
      %v720 = vsel %vm300, %v715, %v719
      %v722 = vshrl.u32 %v288, 16
      %v724 = vrot.slane %v722, 4
      %v725 = vshll.u32 %v288, 16
      %v727 = vrot.slane %v725, 5
      %v728 = vor.u32 %v724, %v727
      %v729 = vrot.slane %v728, 4
      %v731 = vshll.u32 %v289, 16
      %v733 = vrot.slane %v731, 5
      %v734 = vsel %vm300, %v729, %v733
      %v736 = vshrl.u32 %v290, 16
      %v738 = vrot.slane %v736, 4
      %v739 = vshll.u32 %v290, 16
      %v741 = vrot.slane %v739, 5
      %v742 = vor.u32 %v738, %v741
      %v743 = vrot.slane %v742, 4
      %v745 = vshll.u32 %v291, 16
      %v747 = vrot.slane %v745, 5
      %v748 = vsel %vm300, %v743, %v747
      %s749 = scalar_lea.vmem %s1, 8
      %v750 = vld [vmem:[%s749] sm:$0xf]
      %v751 = vld [vmem:[%s749 + $0x4] sm:$0xf]
      %v752 = vunpack.c.l.b16 %v314
      %v753 = vunpack.c.l.b16 %v328
      %v754 = vunpack.c.l.b16 %v342
      %v755 = vunpack.c.l.b16 %v356
      %v756 = vunpack.c.l.b16 %v370
      %v757 = vunpack.c.l.b16 %v384
      %v758 = vunpack.c.l.b16 %v398
      %v759 = vunpack.c.l.b16 %v412
      %v760 = vunpack.c.l.b16 %v426
      %v761 = vunpack.c.l.b16 %v440
      %v762 = vunpack.c.l.b16 %v454
      %v763 = vunpack.c.l.b16 %v468
      %v764 = vunpack.c.l.b16 %v482
      %v765 = vunpack.c.l.b16 %v496
      %v766 = vunpack.c.l.b16 %v510
      %v767 = vunpack.c.l.b16 %v524
      %v768 = vunpack.c.l.b16 %v538
      %v769 = vunpack.c.l.b16 %v552
      %v770 = vunpack.c.l.b16 %v566
      %v771 = vunpack.c.l.b16 %v580
      %v772 = vunpack.c.l.b16 %v594
      %v773 = vunpack.c.l.b16 %v608
      %v774 = vunpack.c.l.b16 %v622
      %v775 = vunpack.c.l.b16 %v636
      %v776 = vunpack.c.l.b16 %v650
      %v777 = vunpack.c.l.b16 %v664
      %v778 = vunpack.c.l.b16 %v678
      %v779 = vunpack.c.l.b16 %v692
      %v780 = vunpack.c.l.b16 %v706
      %v781 = vunpack.c.l.b16 %v720
      %v782 = vunpack.c.l.b16 %v734
      %v783 = vunpack.c.l.b16 %v748
      %v784 = vpack.c.b16 %v753, %v752
      %v785 = vpack.c.b16 %v755, %v754
      %v786 = vpack.c.b16 %v757, %v756
      %v787 = vpack.c.b16 %v759, %v758
      %v788 = vpack.c.b16 %v761, %v760
      %v789 = vpack.c.b16 %v763, %v762
      %v790 = vpack.c.b16 %v765, %v764
      %v791 = vpack.c.b16 %v767, %v766
      %v792 = vpack.c.b16 %v769, %v768
      %v793 = vpack.c.b16 %v771, %v770
      %v794 = vpack.c.b16 %v773, %v772
      %v795 = vpack.c.b16 %v775, %v774
      %v796 = vpack.c.b16 %v777, %v776
      %v797 = vpack.c.b16 %v779, %v778
      %v798 = vpack.c.b16 %v781, %v780
      %v799 = vpack.c.b16 %v783, %v782
      %v802 = vunpack.c.l.b16 %v750
      %v803 = vunpack.c.l.b16 %v751
      %v804 = vpack.c.b16 %v803, %v802
      %vm806 = vcmask 130048
      %v808 = vsel %vm806, %v784, 0
      %v811 = vsel %vm806, %v785, 0
      %v814 = vsel %vm806, %v786, 0
      %v817 = vsel %vm806, %v787, 0
      %v820 = vsel %vm806, %v788, 0
      %v823 = vsel %vm806, %v789, 0
      %v826 = vsel %vm806, %v790, 0
      %v829 = vsel %vm806, %v791, 0
      %v832 = vsel %vm806, %v792, 0
      %v835 = vsel %vm806, %v793, 0
      %v838 = vsel %vm806, %v794, 0
      %v841 = vsel %vm806, %v795, 0
      %v844 = vsel %vm806, %v796, 0
      %v847 = vsel %vm806, %v797, 0
      %v850 = vsel %vm806, %v798, 0
      %v853 = vsel %vm806, %v799, 0
      %855 = vmatprep.subr.bf16.mxu0 0
      %856 = vmatpush1.bf16.msra.mxu0 0
      %857 = vmatprep.subr.bf16.mxu0 0
      %858 = vmatpush1.bf16.msra.mxu0 0
      %859 = vmatprep.subr.bf16.mxu0 0
      %860 = vmatpush1.bf16.msra.mxu0 0
      %861 = vmatprep.subr.bf16.mxu0 0
      %862 = vmatpush1.bf16.msra.mxu0 0
      %863 = vmatprep.subr.bf16.mxu0 0
      %864 = vmatpush1.bf16.msra.mxu0 0
      %865 = vmatprep.subr.bf16.mxu0 0
      %866 = vmatpush1.bf16.msra.mxu0 0
      %867 = vmatprep.subr.bf16.mxu0 0
      %868 = vmatpush1.bf16.msra.mxu0 0
      %869 = vmatprep.subr.bf16.mxu0 0
      %870 = vmatpush1.bf16.msra.mxu0 %v804
      %871 = vmatprep.subr.bf16.mxu0 0
      %872 = vmatpush2.bf16.msra.mxu0 0
      %873 = vmatprep.subr.bf16.mxu0 0
      %874 = vmatpush2.bf16.msra.mxu0 0
      %875 = vmatprep.subr.bf16.mxu0 0
      %876 = vmatpush2.bf16.msra.mxu0 0
      %877 = vmatprep.subr.bf16.mxu0 0
      %878 = vmatpush2.bf16.msra.mxu0 0
      %879 = vmatprep.subr.bf16.mxu0 0
      %880 = vmatpush2.bf16.msra.mxu0 0
      %881 = vmatprep.subr.bf16.mxu0 0
      %882 = vmatpush2.bf16.msra.mxu0 0
      %883 = vmatprep.subr.bf16.mxu0 0
      %884 = vmatpush2.bf16.msra.mxu0 0
      %885 = vmatprep.subr.bf16.mxu0 0
      %886 = vmatpush2.bf16.msra.mxu0 0
      %887 = vmatprep.mubr.bf16.mxu0 0
      %888 = vmatmul.mubr.bf16.gmra.mxu0 %v808
      %v889 = vpop.f32.mrf.mxu0
      %v890 = vadd.f32 0.0, %v889
      %v891 = vpop.f32.mrf.mxu0
      %v892 = vpop.f32.mrf.mxu0
      %v893 = vadd.f32 0.0, %v892
      %v894 = vpop.f32.mrf.mxu0
      %895 = vmatprep.mubr.bf16.mxu0 0
      %896 = vmatmul.mubr.bf16.gmra.mxu0 %v811
      %v897 = vpop.f32.mrf.mxu0
      %v898 = vadd.f32 0.0, %v897
      %v899 = vpop.f32.mrf.mxu0
      %v900 = vpop.f32.mrf.mxu0
      %v901 = vadd.f32 0.0, %v900
      %v902 = vpop.f32.mrf.mxu0
      %903 = vmatprep.mubr.bf16.mxu0 0
      %904 = vmatmul.mubr.bf16.gmra.mxu0 %v814
      %v905 = vpop.f32.mrf.mxu0
      %v906 = vadd.f32 0.0, %v905
      %v907 = vpop.f32.mrf.mxu0
      %v908 = vpop.f32.mrf.mxu0
      %v909 = vadd.f32 0.0, %v908
      %v910 = vpop.f32.mrf.mxu0
      %911 = vmatprep.mubr.bf16.mxu0 0
      %912 = vmatmul.mubr.bf16.gmra.mxu0 %v817
      %v913 = vpop.f32.mrf.mxu0
      %v914 = vadd.f32 0.0, %v913
      %v915 = vpop.f32.mrf.mxu0
      %v916 = vpop.f32.mrf.mxu0
      %v917 = vadd.f32 0.0, %v916
      %v918 = vpop.f32.mrf.mxu0
      %919 = vmatprep.mubr.bf16.mxu0 0
      %920 = vmatmul.mubr.bf16.gmra.mxu0 %v820
      %v921 = vpop.f32.mrf.mxu0
      %v922 = vadd.f32 0.0, %v921
      %v923 = vpop.f32.mrf.mxu0
      %v924 = vpop.f32.mrf.mxu0
      %v925 = vadd.f32 0.0, %v924
      %v926 = vpop.f32.mrf.mxu0
      %927 = vmatprep.mubr.bf16.mxu0 0
      %928 = vmatmul.mubr.bf16.gmra.mxu0 %v823
      %v929 = vpop.f32.mrf.mxu0
      %v930 = vadd.f32 0.0, %v929
      %v931 = vpop.f32.mrf.mxu0
      %v932 = vpop.f32.mrf.mxu0
      %v933 = vadd.f32 0.0, %v932
      %v934 = vpop.f32.mrf.mxu0
      %935 = vmatprep.mubr.bf16.mxu0 0
      %936 = vmatmul.mubr.bf16.gmra.mxu0 %v826
      %v937 = vpop.f32.mrf.mxu0
      %v938 = vadd.f32 0.0, %v937
      %v939 = vpop.f32.mrf.mxu0
      %v940 = vpop.f32.mrf.mxu0
      %v941 = vadd.f32 0.0, %v940
      %v942 = vpop.f32.mrf.mxu0
      %943 = vmatprep.mubr.bf16.mxu0 0
      %944 = vmatmul.mubr.bf16.gmra.mxu0 %v829
      %v945 = vpop.f32.mrf.mxu0
      %v946 = vadd.f32 0.0, %v945
      %v947 = vpop.f32.mrf.mxu0
      %v948 = vpop.f32.mrf.mxu0
      %v949 = vadd.f32 0.0, %v948
      %v950 = vpop.f32.mrf.mxu0
      %951 = vmatprep.mubr.bf16.mxu0 0
      %952 = vmatmul.mubr.bf16.gmra.mxu0 %v832
      %v953 = vpop.f32.mrf.mxu0
      %v954 = vadd.f32 0.0, %v953
      %v955 = vpop.f32.mrf.mxu0
      %v956 = vpop.f32.mrf.mxu0
      %v957 = vadd.f32 0.0, %v956
      %v958 = vpop.f32.mrf.mxu0
      %959 = vmatprep.mubr.bf16.mxu0 0
      %960 = vmatmul.mubr.bf16.gmra.mxu0 %v835
      %v961 = vpop.f32.mrf.mxu0
      %v962 = vadd.f32 0.0, %v961
      %v963 = vpop.f32.mrf.mxu0
      %v964 = vpop.f32.mrf.mxu0
      %v965 = vadd.f32 0.0, %v964
      %v966 = vpop.f32.mrf.mxu0
      %967 = vmatprep.mubr.bf16.mxu0 0
      %968 = vmatmul.mubr.bf16.gmra.mxu0 %v838
      %v969 = vpop.f32.mrf.mxu0
      %v970 = vadd.f32 0.0, %v969
      %v971 = vpop.f32.mrf.mxu0
      %v972 = vpop.f32.mrf.mxu0
      %v973 = vadd.f32 0.0, %v972
      %v974 = vpop.f32.mrf.mxu0
      %975 = vmatprep.mubr.bf16.mxu0 0
      %976 = vmatmul.mubr.bf16.gmra.mxu0 %v841
      %v977 = vpop.f32.mrf.mxu0
      %v978 = vadd.f32 0.0, %v977
      %v979 = vpop.f32.mrf.mxu0
      %v980 = vpop.f32.mrf.mxu0
      %v981 = vadd.f32 0.0, %v980
      %v982 = vpop.f32.mrf.mxu0
      %983 = vmatprep.mubr.bf16.mxu0 0
      %984 = vmatmul.mubr.bf16.gmra.mxu0 %v844
      %v985 = vpop.f32.mrf.mxu0
      %v986 = vadd.f32 0.0, %v985
      %v987 = vpop.f32.mrf.mxu0
      %v988 = vpop.f32.mrf.mxu0
      %v989 = vadd.f32 0.0, %v988
      %v990 = vpop.f32.mrf.mxu0
      %991 = vmatprep.mubr.bf16.mxu0 0
      %992 = vmatmul.mubr.bf16.gmra.mxu0 %v847
      %v993 = vpop.f32.mrf.mxu0
      %v994 = vadd.f32 0.0, %v993
      %v995 = vpop.f32.mrf.mxu0
      %v996 = vpop.f32.mrf.mxu0
      %v997 = vadd.f32 0.0, %v996
      %v998 = vpop.f32.mrf.mxu0
      %999 = vmatprep.mubr.bf16.mxu0 0
      %1000 = vmatmul.mubr.bf16.gmra.mxu0 %v850
      %v1001 = vpop.f32.mrf.mxu0
      %v1002 = vadd.f32 0.0, %v1001
      %v1003 = vpop.f32.mrf.mxu0
      %v1004 = vpop.f32.mrf.mxu0
      %v1005 = vadd.f32 0.0, %v1004
      %v1006 = vpop.f32.mrf.mxu0
      %1007 = vmatprep.mubr.bf16.mxu0 0
      %1008 = vmatmul.mubr.bf16.gmra.mxu0 %v853
      %v1009 = vpop.f32.mrf.mxu0
      %v1010 = vadd.f32 0.0, %v1009
      %v1011 = vpop.f32.mrf.mxu0
      %v1012 = vpop.f32.mrf.mxu0
      %v1013 = vadd.f32 0.0, %v1012
      %v1014 = vpop.f32.mrf.mxu0
      %1015 = vdwg.mxu0
      %v1048 = vunpack.c.l.b16 %v216
      %v1049 = vunpack.c.l.b16 %v218
      %v1050 = vunpack.c.l.b16 %v220
      %v1051 = vunpack.c.l.b16 %v222
      %v1052 = vunpack.c.l.b16 %v224
      %v1053 = vunpack.c.l.b16 %v226
      %v1054 = vunpack.c.l.b16 %v228
      %v1055 = vunpack.c.l.b16 %v230
      %v1056 = vunpack.c.l.b16 %v236
      %v1057 = vunpack.c.l.b16 %v238
      %v1058 = vunpack.c.l.b16 %v240
      %v1059 = vunpack.c.l.b16 %v242
      %v1060 = vunpack.c.l.b16 %v244
      %v1061 = vunpack.c.l.b16 %v246
      %v1062 = vunpack.c.l.b16 %v248
      %v1063 = vunpack.c.l.b16 %v250
      %v1064 = vunpack.c.l.b16 %v256
      %v1065 = vunpack.c.l.b16 %v258
      %v1066 = vunpack.c.l.b16 %v260
      %v1067 = vunpack.c.l.b16 %v262
      %v1068 = vunpack.c.l.b16 %v264
      %v1069 = vunpack.c.l.b16 %v266
      %v1070 = vunpack.c.l.b16 %v268
      %v1071 = vunpack.c.l.b16 %v270
      %v1072 = vunpack.c.l.b16 %v276
      %v1073 = vunpack.c.l.b16 %v278
      %v1074 = vunpack.c.l.b16 %v280
      %v1075 = vunpack.c.l.b16 %v282
      %v1076 = vunpack.c.l.b16 %v284
      %v1077 = vunpack.c.l.b16 %v286
      %v1078 = vunpack.c.l.b16 %v288
      %v1079 = vunpack.c.l.b16 %v290
      %v1080 = vpack.c.b16 %v1049, %v1048
      %v1081 = vpack.c.b16 %v1051, %v1050
      %v1082 = vpack.c.b16 %v1053, %v1052
      %v1083 = vpack.c.b16 %v1055, %v1054
      %v1084 = vpack.c.b16 %v1057, %v1056
      %v1085 = vpack.c.b16 %v1059, %v1058
      %v1086 = vpack.c.b16 %v1061, %v1060
      %v1087 = vpack.c.b16 %v1063, %v1062
      %v1088 = vpack.c.b16 %v1065, %v1064
      %v1089 = vpack.c.b16 %v1067, %v1066
      %v1090 = vpack.c.b16 %v1069, %v1068
      %v1091 = vpack.c.b16 %v1071, %v1070
      %v1092 = vpack.c.b16 %v1073, %v1072
      %v1093 = vpack.c.b16 %v1075, %v1074
      %v1094 = vpack.c.b16 %v1077, %v1076
      %v1095 = vpack.c.b16 %v1079, %v1078
      %v1098 = vunpack.c.l.b16 %v296
      %v1099 = vunpack.c.l.b16 %v297
      %v1100 = vpack.c.b16 %v1099, %v1098
      %v1103 = vsel %vm806, %v1080, 0
      %v1106 = vsel %vm806, %v1081, 0
      %v1109 = vsel %vm806, %v1082, 0
      %v1112 = vsel %vm806, %v1083, 0
      %v1115 = vsel %vm806, %v1084, 0
      %v1118 = vsel %vm806, %v1085, 0
      %v1121 = vsel %vm806, %v1086, 0
      %v1124 = vsel %vm806, %v1087, 0
      %v1127 = vsel %vm806, %v1088, 0
      %v1130 = vsel %vm806, %v1089, 0
      %v1133 = vsel %vm806, %v1090, 0
      %v1136 = vsel %vm806, %v1091, 0
      %v1139 = vsel %vm806, %v1092, 0
      %v1142 = vsel %vm806, %v1093, 0
      %v1145 = vsel %vm806, %v1094, 0
      %v1148 = vsel %vm806, %v1095, 0
      %1150 = vmatprep.subr.bf16.mxu0 0
      %1151 = vmatpush1.bf16.msra.mxu0 0
      %1152 = vmatprep.subr.bf16.mxu0 0
      %1153 = vmatpush1.bf16.msra.mxu0 0
      %1154 = vmatprep.subr.bf16.mxu0 0
      %1155 = vmatpush1.bf16.msra.mxu0 0
      %1156 = vmatprep.subr.bf16.mxu0 0
      %1157 = vmatpush1.bf16.msra.mxu0 0
      %1158 = vmatprep.subr.bf16.mxu0 0
      %1159 = vmatpush1.bf16.msra.mxu0 0
      %1160 = vmatprep.subr.bf16.mxu0 0
      %1161 = vmatpush1.bf16.msra.mxu0 0
      %1162 = vmatprep.subr.bf16.mxu0 0
      %1163 = vmatpush1.bf16.msra.mxu0 0
      %1164 = vmatprep.subr.bf16.mxu0 0
      %1165 = vmatpush1.bf16.msra.mxu0 %v1100
      %1166 = vmatprep.subr.bf16.mxu0 0
      %1167 = vmatpush2.bf16.msra.mxu0 0
      %1168 = vmatprep.subr.bf16.mxu0 0
      %1169 = vmatpush2.bf16.msra.mxu0 0
      %1170 = vmatprep.subr.bf16.mxu0 0
      %1171 = vmatpush2.bf16.msra.mxu0 0
      %1172 = vmatprep.subr.bf16.mxu0 0
      %1173 = vmatpush2.bf16.msra.mxu0 0
      %1174 = vmatprep.subr.bf16.mxu0 0
      %1175 = vmatpush2.bf16.msra.mxu0 0
      %1176 = vmatprep.subr.bf16.mxu0 0
      %1177 = vmatpush2.bf16.msra.mxu0 0
      %1178 = vmatprep.subr.bf16.mxu0 0
      %1179 = vmatpush2.bf16.msra.mxu0 0
      %1180 = vmatprep.subr.bf16.mxu0 0
      %1181 = vmatpush2.bf16.msra.mxu0 0
      %1182 = vmatprep.mubr.bf16.mxu0 0
      %1183 = vmatmul.mubr.bf16.gmra.mxu0 %v1103
      %v1184 = vpop.f32.mrf.mxu0
      %v1185 = vadd.f32 %v890, %v1184
      %v1186 = vpop.f32.mrf.mxu0
      %v1187 = vpop.f32.mrf.mxu0
      %v1188 = vadd.f32 %v893, %v1187
      %v1189 = vpop.f32.mrf.mxu0
      %1190 = vmatprep.mubr.bf16.mxu0 0
      %1191 = vmatmul.mubr.bf16.gmra.mxu0 %v1106
      %v1192 = vpop.f32.mrf.mxu0
      %v1193 = vadd.f32 %v898, %v1192
      %v1194 = vpop.f32.mrf.mxu0
      %v1195 = vpop.f32.mrf.mxu0
      %v1196 = vadd.f32 %v901, %v1195
      %v1197 = vpop.f32.mrf.mxu0
      %1198 = vmatprep.mubr.bf16.mxu0 0
      %1199 = vmatmul.mubr.bf16.gmra.mxu0 %v1109
      %v1200 = vpop.f32.mrf.mxu0
      %v1201 = vadd.f32 %v906, %v1200
      %v1202 = vpop.f32.mrf.mxu0
      %v1203 = vpop.f32.mrf.mxu0
      %v1204 = vadd.f32 %v909, %v1203
      %v1205 = vpop.f32.mrf.mxu0
      %1206 = vmatprep.mubr.bf16.mxu0 0
      %1207 = vmatmul.mubr.bf16.gmra.mxu0 %v1112
      %v1208 = vpop.f32.mrf.mxu0
      %v1209 = vadd.f32 %v914, %v1208
      %v1210 = vpop.f32.mrf.mxu0
      %v1211 = vpop.f32.mrf.mxu0
      %v1212 = vadd.f32 %v917, %v1211
      %v1213 = vpop.f32.mrf.mxu0
      %1214 = vmatprep.mubr.bf16.mxu0 0
      %1215 = vmatmul.mubr.bf16.gmra.mxu0 %v1115
      %v1216 = vpop.f32.mrf.mxu0
      %v1217 = vadd.f32 %v922, %v1216
      %v1218 = vpop.f32.mrf.mxu0
      %v1219 = vpop.f32.mrf.mxu0
      %v1220 = vadd.f32 %v925, %v1219
      %v1221 = vpop.f32.mrf.mxu0
      %1222 = vmatprep.mubr.bf16.mxu0 0
      %1223 = vmatmul.mubr.bf16.gmra.mxu0 %v1118
      %v1224 = vpop.f32.mrf.mxu0
      %v1225 = vadd.f32 %v930, %v1224
      %v1226 = vpop.f32.mrf.mxu0
      %v1227 = vpop.f32.mrf.mxu0
      %v1228 = vadd.f32 %v933, %v1227
      %v1229 = vpop.f32.mrf.mxu0
      %1230 = vmatprep.mubr.bf16.mxu0 0
      %1231 = vmatmul.mubr.bf16.gmra.mxu0 %v1121
      %v1232 = vpop.f32.mrf.mxu0
      %v1233 = vadd.f32 %v938, %v1232
      %v1234 = vpop.f32.mrf.mxu0
      %v1235 = vpop.f32.mrf.mxu0
      %v1236 = vadd.f32 %v941, %v1235
      %v1237 = vpop.f32.mrf.mxu0
      %1238 = vmatprep.mubr.bf16.mxu0 0
      %1239 = vmatmul.mubr.bf16.gmra.mxu0 %v1124
      %v1240 = vpop.f32.mrf.mxu0
      %v1241 = vadd.f32 %v946, %v1240
      %v1242 = vpop.f32.mrf.mxu0
      %v1243 = vpop.f32.mrf.mxu0
      %v1244 = vadd.f32 %v949, %v1243
      %v1245 = vpop.f32.mrf.mxu0
      %1246 = vmatprep.mubr.bf16.mxu0 0
      %1247 = vmatmul.mubr.bf16.gmra.mxu0 %v1127
      %v1248 = vpop.f32.mrf.mxu0
      %v1249 = vadd.f32 %v954, %v1248
      %v1250 = vpop.f32.mrf.mxu0
      %v1251 = vpop.f32.mrf.mxu0
      %v1252 = vadd.f32 %v957, %v1251
      %v1253 = vpop.f32.mrf.mxu0
      %1254 = vmatprep.mubr.bf16.mxu0 0
      %1255 = vmatmul.mubr.bf16.gmra.mxu0 %v1130
      %v1256 = vpop.f32.mrf.mxu0
      %v1257 = vadd.f32 %v962, %v1256
      %v1258 = vpop.f32.mrf.mxu0
      %v1259 = vpop.f32.mrf.mxu0
      %v1260 = vadd.f32 %v965, %v1259
      %v1261 = vpop.f32.mrf.mxu0
      %1262 = vmatprep.mubr.bf16.mxu0 0
      %1263 = vmatmul.mubr.bf16.gmra.mxu0 %v1133
      %v1264 = vpop.f32.mrf.mxu0
      %v1265 = vadd.f32 %v970, %v1264
      %v1266 = vpop.f32.mrf.mxu0
      %v1267 = vpop.f32.mrf.mxu0
      %v1268 = vadd.f32 %v973, %v1267
      %v1269 = vpop.f32.mrf.mxu0
      %1270 = vmatprep.mubr.bf16.mxu0 0
      %1271 = vmatmul.mubr.bf16.gmra.mxu0 %v1136
      %v1272 = vpop.f32.mrf.mxu0
      %v1273 = vadd.f32 %v978, %v1272
      %v1274 = vpop.f32.mrf.mxu0
      %v1275 = vpop.f32.mrf.mxu0
      %v1276 = vadd.f32 %v981, %v1275
      %v1277 = vpop.f32.mrf.mxu0
      %1278 = vmatprep.mubr.bf16.mxu0 0
      %1279 = vmatmul.mubr.bf16.gmra.mxu0 %v1139
      %v1280 = vpop.f32.mrf.mxu0
      %v1281 = vadd.f32 %v986, %v1280
      %v1282 = vpop.f32.mrf.mxu0
      %v1283 = vpop.f32.mrf.mxu0
      %v1284 = vadd.f32 %v989, %v1283
      %v1285 = vpop.f32.mrf.mxu0
      %1286 = vmatprep.mubr.bf16.mxu0 0
      %1287 = vmatmul.mubr.bf16.gmra.mxu0 %v1142
      %v1288 = vpop.f32.mrf.mxu0
      %v1289 = vadd.f32 %v994, %v1288
      %v1290 = vpop.f32.mrf.mxu0
      %v1291 = vpop.f32.mrf.mxu0
      %v1292 = vadd.f32 %v997, %v1291
      %v1293 = vpop.f32.mrf.mxu0
      %1294 = vmatprep.mubr.bf16.mxu0 0
      %1295 = vmatmul.mubr.bf16.gmra.mxu0 %v1145
      %v1296 = vpop.f32.mrf.mxu0
      %v1297 = vadd.f32 %v1002, %v1296
      %v1298 = vpop.f32.mrf.mxu0
      %v1299 = vpop.f32.mrf.mxu0
      %v1300 = vadd.f32 %v1005, %v1299
      %v1301 = vpop.f32.mrf.mxu0
      %1302 = vmatprep.mubr.bf16.mxu0 0
      %1303 = vmatmul.mubr.bf16.gmra.mxu0 %v1148
      %v1304 = vpop.f32.mrf.mxu0
      %v1305 = vadd.f32 %v1010, %v1304
      %v1306 = vpop.f32.mrf.mxu0
      %v1307 = vpop.f32.mrf.mxu0
      %v1308 = vadd.f32 %v1013, %v1307
      %v1309 = vpop.f32.mrf.mxu0
      %1310 = vdwg.mxu0
      %vm1343 = vcmask 1042432
      %vm1344 = vcmask 1046532
      %vm1345 = vmor %vm1343, %vm1344
      %v1346 = vrot.slane %v216, 5
      %v1347 = vrot.slane %v1346, 4
      %v1348 = vrot.slane %v217, 5
      %v1349 = vsel %vm1345, %v1347, %v1348
      %v1350 = vrot.slane %v218, 5
      %v1351 = vrot.slane %v1350, 4
      %v1352 = vrot.slane %v219, 5
      %v1353 = vsel %vm1345, %v1351, %v1352
      %v1354 = vrot.slane %v220, 5
      %v1355 = vrot.slane %v1354, 4
      %v1356 = vrot.slane %v221, 5
      %v1357 = vsel %vm1345, %v1355, %v1356
      %v1358 = vrot.slane %v222, 5
      %v1359 = vrot.slane %v1358, 4
      %v1360 = vrot.slane %v223, 5
      %v1361 = vsel %vm1345, %v1359, %v1360
      %v1362 = vrot.slane %v224, 5
      %v1363 = vrot.slane %v1362, 4
      %v1364 = vrot.slane %v225, 5
      %v1365 = vsel %vm1345, %v1363, %v1364
      %v1366 = vrot.slane %v226, 5
      %v1367 = vrot.slane %v1366, 4
      %v1368 = vrot.slane %v227, 5
      %v1369 = vsel %vm1345, %v1367, %v1368
      %v1370 = vrot.slane %v228, 5
      %v1371 = vrot.slane %v1370, 4
      %v1372 = vrot.slane %v229, 5
      %v1373 = vsel %vm1345, %v1371, %v1372
      %v1374 = vrot.slane %v230, 5
      %v1375 = vrot.slane %v1374, 4
      %v1376 = vrot.slane %v231, 5
      %v1377 = vsel %vm1345, %v1375, %v1376
      %v1378 = vrot.slane %v236, 5
      %v1379 = vrot.slane %v1378, 4
      %v1380 = vrot.slane %v237, 5
      %v1381 = vsel %vm1345, %v1379, %v1380
      %v1382 = vrot.slane %v238, 5
      %v1383 = vrot.slane %v1382, 4
      %v1384 = vrot.slane %v239, 5
      %v1385 = vsel %vm1345, %v1383, %v1384
      %v1386 = vrot.slane %v240, 5
      %v1387 = vrot.slane %v1386, 4
      %v1388 = vrot.slane %v241, 5
      %v1389 = vsel %vm1345, %v1387, %v1388
      %v1390 = vrot.slane %v242, 5
      %v1391 = vrot.slane %v1390, 4
      %v1392 = vrot.slane %v243, 5
      %v1393 = vsel %vm1345, %v1391, %v1392
      %v1394 = vrot.slane %v244, 5
      %v1395 = vrot.slane %v1394, 4
      %v1396 = vrot.slane %v245, 5
      %v1397 = vsel %vm1345, %v1395, %v1396
      %v1398 = vrot.slane %v246, 5
      %v1399 = vrot.slane %v1398, 4
      %v1400 = vrot.slane %v247, 5
      %v1401 = vsel %vm1345, %v1399, %v1400
      %v1402 = vrot.slane %v248, 5
      %v1403 = vrot.slane %v1402, 4
      %v1404 = vrot.slane %v249, 5
      %v1405 = vsel %vm1345, %v1403, %v1404
      %v1406 = vrot.slane %v250, 5
      %v1407 = vrot.slane %v1406, 4
      %v1408 = vrot.slane %v251, 5
      %v1409 = vsel %vm1345, %v1407, %v1408
      %v1410 = vrot.slane %v256, 5
      %v1411 = vrot.slane %v1410, 4
      %v1412 = vrot.slane %v257, 5
      %v1413 = vsel %vm1345, %v1411, %v1412
      %v1414 = vrot.slane %v258, 5
      %v1415 = vrot.slane %v1414, 4
      %v1416 = vrot.slane %v259, 5
      %v1417 = vsel %vm1345, %v1415, %v1416
      %v1418 = vrot.slane %v260, 5
      %v1419 = vrot.slane %v1418, 4
      %v1420 = vrot.slane %v261, 5
      %v1421 = vsel %vm1345, %v1419, %v1420
      %v1422 = vrot.slane %v262, 5
      %v1423 = vrot.slane %v1422, 4
      %v1424 = vrot.slane %v263, 5
      %v1425 = vsel %vm1345, %v1423, %v1424
      %v1426 = vrot.slane %v264, 5
      %v1427 = vrot.slane %v1426, 4
      %v1428 = vrot.slane %v265, 5
      %v1429 = vsel %vm1345, %v1427, %v1428
      %v1430 = vrot.slane %v266, 5
      %v1431 = vrot.slane %v1430, 4
      %v1432 = vrot.slane %v267, 5
      %v1433 = vsel %vm1345, %v1431, %v1432
      %v1434 = vrot.slane %v268, 5
      %v1435 = vrot.slane %v1434, 4
      %v1436 = vrot.slane %v269, 5
      %v1437 = vsel %vm1345, %v1435, %v1436
      %v1438 = vrot.slane %v270, 5
      %v1439 = vrot.slane %v1438, 4
      %v1440 = vrot.slane %v271, 5
      %v1441 = vsel %vm1345, %v1439, %v1440
      %v1442 = vrot.slane %v276, 5
      %v1443 = vrot.slane %v1442, 4
      %v1444 = vrot.slane %v277, 5
      %v1445 = vsel %vm1345, %v1443, %v1444
      %v1446 = vrot.slane %v278, 5
      %v1447 = vrot.slane %v1446, 4
      %v1448 = vrot.slane %v279, 5
      %v1449 = vsel %vm1345, %v1447, %v1448
      %v1450 = vrot.slane %v280, 5
      %v1451 = vrot.slane %v1450, 4
      %v1452 = vrot.slane %v281, 5
      %v1453 = vsel %vm1345, %v1451, %v1452
      %v1454 = vrot.slane %v282, 5
      %v1455 = vrot.slane %v1454, 4
      %v1456 = vrot.slane %v283, 5
      %v1457 = vsel %vm1345, %v1455, %v1456
      %v1458 = vrot.slane %v284, 5
      %v1459 = vrot.slane %v1458, 4
      %v1460 = vrot.slane %v285, 5
      %v1461 = vsel %vm1345, %v1459, %v1460
      %v1462 = vrot.slane %v286, 5
      %v1463 = vrot.slane %v1462, 4
      %v1464 = vrot.slane %v287, 5
      %v1465 = vsel %vm1345, %v1463, %v1464
      %v1466 = vrot.slane %v288, 5
      %v1467 = vrot.slane %v1466, 4
      %v1468 = vrot.slane %v289, 5
      %v1469 = vsel %vm1345, %v1467, %v1468
      %v1470 = vrot.slane %v290, 5
      %v1471 = vrot.slane %v1470, 4
      %v1472 = vrot.slane %v291, 5
      %v1473 = vsel %vm1345, %v1471, %v1472
      %s1474 = scalar_lea.vmem %s1, 16
      %v1475 = vld [vmem:[%s1474] sm:$0xf]
      %v1476 = vld [vmem:[%s1474 + $0x4] sm:$0xf]
      %v1477 = vunpack.c.l.b16 %v1349
      %v1478 = vunpack.c.l.b16 %v1353
      %v1479 = vunpack.c.l.b16 %v1357
      %v1480 = vunpack.c.l.b16 %v1361
      %v1481 = vunpack.c.l.b16 %v1365
      %v1482 = vunpack.c.l.b16 %v1369
      %v1483 = vunpack.c.l.b16 %v1373
      %v1484 = vunpack.c.l.b16 %v1377
      %v1485 = vunpack.c.l.b16 %v1381
      %v1486 = vunpack.c.l.b16 %v1385
      %v1487 = vunpack.c.l.b16 %v1389
      %v1488 = vunpack.c.l.b16 %v1393
      %v1489 = vunpack.c.l.b16 %v1397
      %v1490 = vunpack.c.l.b16 %v1401
      %v1491 = vunpack.c.l.b16 %v1405
      %v1492 = vunpack.c.l.b16 %v1409
      %v1493 = vunpack.c.l.b16 %v1413
      %v1494 = vunpack.c.l.b16 %v1417
      %v1495 = vunpack.c.l.b16 %v1421
      %v1496 = vunpack.c.l.b16 %v1425
      %v1497 = vunpack.c.l.b16 %v1429
      %v1498 = vunpack.c.l.b16 %v1433
      %v1499 = vunpack.c.l.b16 %v1437
      %v1500 = vunpack.c.l.b16 %v1441
      %v1501 = vunpack.c.l.b16 %v1445
      %v1502 = vunpack.c.l.b16 %v1449
      %v1503 = vunpack.c.l.b16 %v1453
      %v1504 = vunpack.c.l.b16 %v1457
      %v1505 = vunpack.c.l.b16 %v1461
      %v1506 = vunpack.c.l.b16 %v1465
      %v1507 = vunpack.c.l.b16 %v1469
      %v1508 = vunpack.c.l.b16 %v1473
      %v1509 = vpack.c.b16 %v1478, %v1477
      %v1510 = vpack.c.b16 %v1480, %v1479
      %v1511 = vpack.c.b16 %v1482, %v1481
      %v1512 = vpack.c.b16 %v1484, %v1483
      %v1513 = vpack.c.b16 %v1486, %v1485
      %v1514 = vpack.c.b16 %v1488, %v1487
      %v1515 = vpack.c.b16 %v1490, %v1489
      %v1516 = vpack.c.b16 %v1492, %v1491
      %v1517 = vpack.c.b16 %v1494, %v1493
      %v1518 = vpack.c.b16 %v1496, %v1495
      %v1519 = vpack.c.b16 %v1498, %v1497
      %v1520 = vpack.c.b16 %v1500, %v1499
      %v1521 = vpack.c.b16 %v1502, %v1501
      %v1522 = vpack.c.b16 %v1504, %v1503
      %v1523 = vpack.c.b16 %v1506, %v1505
      %v1524 = vpack.c.b16 %v1508, %v1507
      %v1527 = vunpack.c.l.b16 %v1475
      %v1528 = vunpack.c.l.b16 %v1476
      %v1529 = vpack.c.b16 %v1528, %v1527
      %v1532 = vsel %vm806, %v1509, 0
      %v1535 = vsel %vm806, %v1510, 0
      %v1538 = vsel %vm806, %v1511, 0
      %v1541 = vsel %vm806, %v1512, 0
      %v1544 = vsel %vm806, %v1513, 0
      %v1547 = vsel %vm806, %v1514, 0
      %v1550 = vsel %vm806, %v1515, 0
      %v1553 = vsel %vm806, %v1516, 0
      %v1556 = vsel %vm806, %v1517, 0
      %v1559 = vsel %vm806, %v1518, 0
      %v1562 = vsel %vm806, %v1519, 0
      %v1565 = vsel %vm806, %v1520, 0
      %v1568 = vsel %vm806, %v1521, 0
      %v1571 = vsel %vm806, %v1522, 0
      %v1574 = vsel %vm806, %v1523, 0
      %v1577 = vsel %vm806, %v1524, 0
      %1579 = vmatprep.subr.bf16.mxu0 0
      %1580 = vmatpush1.bf16.msra.mxu0 0
      %1581 = vmatprep.subr.bf16.mxu0 0
      %1582 = vmatpush1.bf16.msra.mxu0 0
      %1583 = vmatprep.subr.bf16.mxu0 0
      %1584 = vmatpush1.bf16.msra.mxu0 0
      %1585 = vmatprep.subr.bf16.mxu0 0
      %1586 = vmatpush1.bf16.msra.mxu0 0
      %1587 = vmatprep.subr.bf16.mxu0 0
      %1588 = vmatpush1.bf16.msra.mxu0 0
      %1589 = vmatprep.subr.bf16.mxu0 0
      %1590 = vmatpush1.bf16.msra.mxu0 0
      %1591 = vmatprep.subr.bf16.mxu0 0
      %1592 = vmatpush1.bf16.msra.mxu0 0
      %1593 = vmatprep.subr.bf16.mxu0 0
      %1594 = vmatpush1.bf16.msra.mxu0 %v1529
      %1595 = vmatprep.subr.bf16.mxu0 0
      %1596 = vmatpush2.bf16.msra.mxu0 0
      %1597 = vmatprep.subr.bf16.mxu0 0
      %1598 = vmatpush2.bf16.msra.mxu0 0
      %1599 = vmatprep.subr.bf16.mxu0 0
      %1600 = vmatpush2.bf16.msra.mxu0 0
      %1601 = vmatprep.subr.bf16.mxu0 0
      %1602 = vmatpush2.bf16.msra.mxu0 0
      %1603 = vmatprep.subr.bf16.mxu0 0
      %1604 = vmatpush2.bf16.msra.mxu0 0
      %1605 = vmatprep.subr.bf16.mxu0 0
      %1606 = vmatpush2.bf16.msra.mxu0 0
      %1607 = vmatprep.subr.bf16.mxu0 0
      %1608 = vmatpush2.bf16.msra.mxu0 0
      %1609 = vmatprep.subr.bf16.mxu0 0
      %1610 = vmatpush2.bf16.msra.mxu0 0
      %1611 = vmatprep.mubr.bf16.mxu0 0
      %1612 = vmatmul.mubr.bf16.gmra.mxu0 %v1532
      %v1613 = vpop.f32.mrf.mxu0
      %v1614 = vadd.f32 0.0, %v1613
      %v1615 = vpop.f32.mrf.mxu0
      %v1616 = vpop.f32.mrf.mxu0
      %v1617 = vadd.f32 0.0, %v1616
      %v1618 = vpop.f32.mrf.mxu0
      %1619 = vmatprep.mubr.bf16.mxu0 0
      %1620 = vmatmul.mubr.bf16.gmra.mxu0 %v1535
      %v1621 = vpop.f32.mrf.mxu0
      %v1622 = vadd.f32 0.0, %v1621
      %v1623 = vpop.f32.mrf.mxu0
      %v1624 = vpop.f32.mrf.mxu0
      %v1625 = vadd.f32 0.0, %v1624
      %v1626 = vpop.f32.mrf.mxu0
      %1627 = vmatprep.mubr.bf16.mxu0 0
      %1628 = vmatmul.mubr.bf16.gmra.mxu0 %v1538
      %v1629 = vpop.f32.mrf.mxu0
      %v1630 = vadd.f32 0.0, %v1629
      %v1631 = vpop.f32.mrf.mxu0
      %v1632 = vpop.f32.mrf.mxu0
      %v1633 = vadd.f32 0.0, %v1632
      %v1634 = vpop.f32.mrf.mxu0
      %1635 = vmatprep.mubr.bf16.mxu0 0
      %1636 = vmatmul.mubr.bf16.gmra.mxu0 %v1541
      %v1637 = vpop.f32.mrf.mxu0
      %v1638 = vadd.f32 0.0, %v1637
      %v1639 = vpop.f32.mrf.mxu0
      %v1640 = vpop.f32.mrf.mxu0
      %v1641 = vadd.f32 0.0, %v1640
      %v1642 = vpop.f32.mrf.mxu0
      %1643 = vmatprep.mubr.bf16.mxu0 0
      %1644 = vmatmul.mubr.bf16.gmra.mxu0 %v1544
      %v1645 = vpop.f32.mrf.mxu0
      %v1646 = vadd.f32 0.0, %v1645
      %v1647 = vpop.f32.mrf.mxu0
      %v1648 = vpop.f32.mrf.mxu0
      %v1649 = vadd.f32 0.0, %v1648
      %v1650 = vpop.f32.mrf.mxu0
      %1651 = vmatprep.mubr.bf16.mxu0 0
      %1652 = vmatmul.mubr.bf16.gmra.mxu0 %v1547
      %v1653 = vpop.f32.mrf.mxu0
      %v1654 = vadd.f32 0.0, %v1653
      %v1655 = vpop.f32.mrf.mxu0
      %v1656 = vpop.f32.mrf.mxu0
      %v1657 = vadd.f32 0.0, %v1656
      %v1658 = vpop.f32.mrf.mxu0
      %1659 = vmatprep.mubr.bf16.mxu0 0
      %1660 = vmatmul.mubr.bf16.gmra.mxu0 %v1550
      %v1661 = vpop.f32.mrf.mxu0
      %v1662 = vadd.f32 0.0, %v1661
      %v1663 = vpop.f32.mrf.mxu0
      %v1664 = vpop.f32.mrf.mxu0
      %v1665 = vadd.f32 0.0, %v1664
      %v1666 = vpop.f32.mrf.mxu0
      %1667 = vmatprep.mubr.bf16.mxu0 0
      %1668 = vmatmul.mubr.bf16.gmra.mxu0 %v1553
      %v1669 = vpop.f32.mrf.mxu0
      %v1670 = vadd.f32 0.0, %v1669
      %v1671 = vpop.f32.mrf.mxu0
      %v1672 = vpop.f32.mrf.mxu0
      %v1673 = vadd.f32 0.0, %v1672
      %v1674 = vpop.f32.mrf.mxu0
      %1675 = vmatprep.mubr.bf16.mxu0 0
      %1676 = vmatmul.mubr.bf16.gmra.mxu0 %v1556
      %v1677 = vpop.f32.mrf.mxu0
      %v1678 = vadd.f32 0.0, %v1677
      %v1679 = vpop.f32.mrf.mxu0
      %v1680 = vpop.f32.mrf.mxu0
      %v1681 = vadd.f32 0.0, %v1680
      %v1682 = vpop.f32.mrf.mxu0
      %1683 = vmatprep.mubr.bf16.mxu0 0
      %1684 = vmatmul.mubr.bf16.gmra.mxu0 %v1559
      %v1685 = vpop.f32.mrf.mxu0
      %v1686 = vadd.f32 0.0, %v1685
      %v1687 = vpop.f32.mrf.mxu0
      %v1688 = vpop.f32.mrf.mxu0
      %v1689 = vadd.f32 0.0, %v1688
      %v1690 = vpop.f32.mrf.mxu0
      %1691 = vmatprep.mubr.bf16.mxu0 0
      %1692 = vmatmul.mubr.bf16.gmra.mxu0 %v1562
      %v1693 = vpop.f32.mrf.mxu0
      %v1694 = vadd.f32 0.0, %v1693
      %v1695 = vpop.f32.mrf.mxu0
      %v1696 = vpop.f32.mrf.mxu0
      %v1697 = vadd.f32 0.0, %v1696
      %v1698 = vpop.f32.mrf.mxu0
      %1699 = vmatprep.mubr.bf16.mxu0 0
      %1700 = vmatmul.mubr.bf16.gmra.mxu0 %v1565
      %v1701 = vpop.f32.mrf.mxu0
      %v1702 = vadd.f32 0.0, %v1701
      %v1703 = vpop.f32.mrf.mxu0
      %v1704 = vpop.f32.mrf.mxu0
      %v1705 = vadd.f32 0.0, %v1704
      %v1706 = vpop.f32.mrf.mxu0
      %1707 = vmatprep.mubr.bf16.mxu0 0
      %1708 = vmatmul.mubr.bf16.gmra.mxu0 %v1568
      %v1709 = vpop.f32.mrf.mxu0
      %v1710 = vadd.f32 0.0, %v1709
      %v1711 = vpop.f32.mrf.mxu0
      %v1712 = vpop.f32.mrf.mxu0
      %v1713 = vadd.f32 0.0, %v1712
      %v1714 = vpop.f32.mrf.mxu0
      %1715 = vmatprep.mubr.bf16.mxu0 0
      %1716 = vmatmul.mubr.bf16.gmra.mxu0 %v1571
      %v1717 = vpop.f32.mrf.mxu0
      %v1718 = vadd.f32 0.0, %v1717
      %v1719 = vpop.f32.mrf.mxu0
      %v1720 = vpop.f32.mrf.mxu0
      %v1721 = vadd.f32 0.0, %v1720
      %v1722 = vpop.f32.mrf.mxu0
      %1723 = vmatprep.mubr.bf16.mxu0 0
      %1724 = vmatmul.mubr.bf16.gmra.mxu0 %v1574
      %v1725 = vpop.f32.mrf.mxu0
      %v1726 = vadd.f32 0.0, %v1725
      %v1727 = vpop.f32.mrf.mxu0
      %v1728 = vpop.f32.mrf.mxu0
      %v1729 = vadd.f32 0.0, %v1728
      %v1730 = vpop.f32.mrf.mxu0
      %1731 = vmatprep.mubr.bf16.mxu0 0
      %1732 = vmatmul.mubr.bf16.gmra.mxu0 %v1577
      %v1733 = vpop.f32.mrf.mxu0
      %v1734 = vadd.f32 0.0, %v1733
      %v1735 = vpop.f32.mrf.mxu0
      %v1736 = vpop.f32.mrf.mxu0
      %v1737 = vadd.f32 0.0, %v1736
      %v1738 = vpop.f32.mrf.mxu0
      %1739 = vdwg.mxu0
      %v1740 = vadd.f32 %v1185, %v1614
      %v1741 = vadd.f32 %v1188, %v1617
      %v1742 = vadd.f32 %v1193, %v1622
      %v1743 = vadd.f32 %v1196, %v1625
      %v1744 = vadd.f32 %v1201, %v1630
      %v1745 = vadd.f32 %v1204, %v1633
      %v1746 = vadd.f32 %v1209, %v1638
      %v1747 = vadd.f32 %v1212, %v1641
      %v1748 = vadd.f32 %v1217, %v1646
      %v1749 = vadd.f32 %v1220, %v1649
      %v1750 = vadd.f32 %v1225, %v1654
      %v1751 = vadd.f32 %v1228, %v1657
      %v1752 = vadd.f32 %v1233, %v1662
      %v1753 = vadd.f32 %v1236, %v1665
      %v1754 = vadd.f32 %v1241, %v1670
      %v1755 = vadd.f32 %v1244, %v1673
      %v1756 = vadd.f32 %v1249, %v1678
      %v1757 = vadd.f32 %v1252, %v1681
      %v1758 = vadd.f32 %v1257, %v1686
      %v1759 = vadd.f32 %v1260, %v1689
      %v1760 = vadd.f32 %v1265, %v1694
      %v1761 = vadd.f32 %v1268, %v1697
      %v1762 = vadd.f32 %v1273, %v1702
      %v1763 = vadd.f32 %v1276, %v1705
      %v1764 = vadd.f32 %v1281, %v1710
      %v1765 = vadd.f32 %v1284, %v1713
      %v1766 = vadd.f32 %v1289, %v1718
      %v1767 = vadd.f32 %v1292, %v1721
      %v1768 = vadd.f32 %v1297, %v1726
      %v1769 = vadd.f32 %v1300, %v1729
      %v1770 = vadd.f32 %v1305, %v1734
      %v1771 = vadd.f32 %v1308, %v1737
      %s1772 = scalar_lea.vmem %s1, 24
      %v1773 = vld [vmem:[%s1772] sm:$0xf]
      %v1774 = vld [vmem:[%s1772 + $0x4] sm:$0xf]
      %v1779 = vunpack.c.l.b16 %v232
      %v1780 = vunpack.c.l.b16 %v252
      %v1781 = vunpack.c.l.b16 %v272
      %v1782 = vunpack.c.l.b16 %v292
      %v1783 = vpack.c.b16 %v1050, %v1049
      %v1784 = vpack.c.b16 %v1052, %v1051
      %v1785 = vpack.c.b16 %v1054, %v1053
      %v1786 = vpack.c.b16 %v1779, %v1055
      %v1787 = vpack.c.b16 %v1058, %v1057
      %v1788 = vpack.c.b16 %v1060, %v1059
      %v1789 = vpack.c.b16 %v1062, %v1061
      %v1790 = vpack.c.b16 %v1780, %v1063
      %v1791 = vpack.c.b16 %v1066, %v1065
      %v1792 = vpack.c.b16 %v1068, %v1067
      %v1793 = vpack.c.b16 %v1070, %v1069
      %v1794 = vpack.c.b16 %v1781, %v1071
      %v1795 = vpack.c.b16 %v1074, %v1073
      %v1796 = vpack.c.b16 %v1076, %v1075
      %v1797 = vpack.c.b16 %v1078, %v1077
      %v1798 = vpack.c.b16 %v1782, %v1079
      %v1801 = vunpack.c.l.b16 %v1773
      %v1802 = vunpack.c.l.b16 %v1774
      %v1803 = vpack.c.b16 %v1802, %v1801
      %v1806 = vsel %vm806, %v1783, 0
      %v1809 = vsel %vm806, %v1784, 0
      %v1812 = vsel %vm806, %v1785, 0
      %v1815 = vsel %vm806, %v1786, 0
      %v1818 = vsel %vm806, %v1787, 0
      %v1821 = vsel %vm806, %v1788, 0
      %v1824 = vsel %vm806, %v1789, 0
      %v1827 = vsel %vm806, %v1790, 0
      %v1830 = vsel %vm806, %v1791, 0
      %v1833 = vsel %vm806, %v1792, 0
      %v1836 = vsel %vm806, %v1793, 0
      %v1839 = vsel %vm806, %v1794, 0
      %v1842 = vsel %vm806, %v1795, 0
      %v1845 = vsel %vm806, %v1796, 0
      %v1848 = vsel %vm806, %v1797, 0
      %v1851 = vsel %vm806, %v1798, 0
      %1853 = vmatprep.subr.bf16.mxu0 0
      %1854 = vmatpush1.bf16.msra.mxu0 0
      %1855 = vmatprep.subr.bf16.mxu0 0
      %1856 = vmatpush1.bf16.msra.mxu0 0
      %1857 = vmatprep.subr.bf16.mxu0 0
      %1858 = vmatpush1.bf16.msra.mxu0 0
      %1859 = vmatprep.subr.bf16.mxu0 0
      %1860 = vmatpush1.bf16.msra.mxu0 0
      %1861 = vmatprep.subr.bf16.mxu0 0
      %1862 = vmatpush1.bf16.msra.mxu0 0
      %1863 = vmatprep.subr.bf16.mxu0 0
      %1864 = vmatpush1.bf16.msra.mxu0 0
      %1865 = vmatprep.subr.bf16.mxu0 0
      %1866 = vmatpush1.bf16.msra.mxu0 0
      %1867 = vmatprep.subr.bf16.mxu0 0
      %1868 = vmatpush1.bf16.msra.mxu0 %v1803
      %1869 = vmatprep.subr.bf16.mxu0 0
      %1870 = vmatpush2.bf16.msra.mxu0 0
      %1871 = vmatprep.subr.bf16.mxu0 0
      %1872 = vmatpush2.bf16.msra.mxu0 0
      %1873 = vmatprep.subr.bf16.mxu0 0
      %1874 = vmatpush2.bf16.msra.mxu0 0
      %1875 = vmatprep.subr.bf16.mxu0 0
      %1876 = vmatpush2.bf16.msra.mxu0 0
      %1877 = vmatprep.subr.bf16.mxu0 0
      %1878 = vmatpush2.bf16.msra.mxu0 0
      %1879 = vmatprep.subr.bf16.mxu0 0
      %1880 = vmatpush2.bf16.msra.mxu0 0
      %1881 = vmatprep.subr.bf16.mxu0 0
      %1882 = vmatpush2.bf16.msra.mxu0 0
      %1883 = vmatprep.subr.bf16.mxu0 0
      %1884 = vmatpush2.bf16.msra.mxu0 0
      %1885 = vmatprep.mubr.bf16.mxu0 0
      %1886 = vmatmul.mubr.bf16.gmra.mxu0 %v1806
      %v1887 = vpop.f32.mrf.mxu0
      %v1888 = vadd.f32 0.0, %v1887
      %v1889 = vpop.f32.mrf.mxu0
      %v1890 = vpop.f32.mrf.mxu0
      %v1891 = vadd.f32 0.0, %v1890
      %v1892 = vpop.f32.mrf.mxu0
      %1893 = vmatprep.mubr.bf16.mxu0 0
      %1894 = vmatmul.mubr.bf16.gmra.mxu0 %v1809
      %v1895 = vpop.f32.mrf.mxu0
      %v1896 = vadd.f32 0.0, %v1895
      %v1897 = vpop.f32.mrf.mxu0
      %v1898 = vpop.f32.mrf.mxu0
      %v1899 = vadd.f32 0.0, %v1898
      %v1900 = vpop.f32.mrf.mxu0
      %1901 = vmatprep.mubr.bf16.mxu0 0
      %1902 = vmatmul.mubr.bf16.gmra.mxu0 %v1812
      %v1903 = vpop.f32.mrf.mxu0
      %v1904 = vadd.f32 0.0, %v1903
      %v1905 = vpop.f32.mrf.mxu0
      %v1906 = vpop.f32.mrf.mxu0
      %v1907 = vadd.f32 0.0, %v1906
      %v1908 = vpop.f32.mrf.mxu0
      %1909 = vmatprep.mubr.bf16.mxu0 0
      %1910 = vmatmul.mubr.bf16.gmra.mxu0 %v1815
      %v1911 = vpop.f32.mrf.mxu0
      %v1912 = vadd.f32 0.0, %v1911
      %v1913 = vpop.f32.mrf.mxu0
      %v1914 = vpop.f32.mrf.mxu0
      %v1915 = vadd.f32 0.0, %v1914
      %v1916 = vpop.f32.mrf.mxu0
      %1917 = vmatprep.mubr.bf16.mxu0 0
      %1918 = vmatmul.mubr.bf16.gmra.mxu0 %v1818
      %v1919 = vpop.f32.mrf.mxu0
      %v1920 = vadd.f32 0.0, %v1919
      %v1921 = vpop.f32.mrf.mxu0
      %v1922 = vpop.f32.mrf.mxu0
      %v1923 = vadd.f32 0.0, %v1922
      %v1924 = vpop.f32.mrf.mxu0
      %1925 = vmatprep.mubr.bf16.mxu0 0
      %1926 = vmatmul.mubr.bf16.gmra.mxu0 %v1821
      %v1927 = vpop.f32.mrf.mxu0
      %v1928 = vadd.f32 0.0, %v1927
      %v1929 = vpop.f32.mrf.mxu0
      %v1930 = vpop.f32.mrf.mxu0
      %v1931 = vadd.f32 0.0, %v1930
      %v1932 = vpop.f32.mrf.mxu0
      %1933 = vmatprep.mubr.bf16.mxu0 0
      %1934 = vmatmul.mubr.bf16.gmra.mxu0 %v1824
      %v1935 = vpop.f32.mrf.mxu0
      %v1936 = vadd.f32 0.0, %v1935
      %v1937 = vpop.f32.mrf.mxu0
      %v1938 = vpop.f32.mrf.mxu0
      %v1939 = vadd.f32 0.0, %v1938
      %v1940 = vpop.f32.mrf.mxu0
      %1941 = vmatprep.mubr.bf16.mxu0 0
      %1942 = vmatmul.mubr.bf16.gmra.mxu0 %v1827
      %v1943 = vpop.f32.mrf.mxu0
      %v1944 = vadd.f32 0.0, %v1943
      %v1945 = vpop.f32.mrf.mxu0
      %v1946 = vpop.f32.mrf.mxu0
      %v1947 = vadd.f32 0.0, %v1946
      %v1948 = vpop.f32.mrf.mxu0
      %1949 = vmatprep.mubr.bf16.mxu0 0
      %1950 = vmatmul.mubr.bf16.gmra.mxu0 %v1830
      %v1951 = vpop.f32.mrf.mxu0
      %v1952 = vadd.f32 0.0, %v1951
      %v1953 = vpop.f32.mrf.mxu0
      %v1954 = vpop.f32.mrf.mxu0
      %v1955 = vadd.f32 0.0, %v1954
      %v1956 = vpop.f32.mrf.mxu0
      %1957 = vmatprep.mubr.bf16.mxu0 0
      %1958 = vmatmul.mubr.bf16.gmra.mxu0 %v1833
      %v1959 = vpop.f32.mrf.mxu0
      %v1960 = vadd.f32 0.0, %v1959
      %v1961 = vpop.f32.mrf.mxu0
      %v1962 = vpop.f32.mrf.mxu0
      %v1963 = vadd.f32 0.0, %v1962
      %v1964 = vpop.f32.mrf.mxu0
      %1965 = vmatprep.mubr.bf16.mxu0 0
      %1966 = vmatmul.mubr.bf16.gmra.mxu0 %v1836
      %v1967 = vpop.f32.mrf.mxu0
      %v1968 = vadd.f32 0.0, %v1967
      %v1969 = vpop.f32.mrf.mxu0
      %v1970 = vpop.f32.mrf.mxu0
      %v1971 = vadd.f32 0.0, %v1970
      %v1972 = vpop.f32.mrf.mxu0
      %1973 = vmatprep.mubr.bf16.mxu0 0
      %1974 = vmatmul.mubr.bf16.gmra.mxu0 %v1839
      %v1975 = vpop.f32.mrf.mxu0
      %v1976 = vadd.f32 0.0, %v1975
      %v1977 = vpop.f32.mrf.mxu0
      %v1978 = vpop.f32.mrf.mxu0
      %v1979 = vadd.f32 0.0, %v1978
      %v1980 = vpop.f32.mrf.mxu0
      %1981 = vmatprep.mubr.bf16.mxu0 0
      %1982 = vmatmul.mubr.bf16.gmra.mxu0 %v1842
      %v1983 = vpop.f32.mrf.mxu0
      %v1984 = vadd.f32 0.0, %v1983
      %v1985 = vpop.f32.mrf.mxu0
      %v1986 = vpop.f32.mrf.mxu0
      %v1987 = vadd.f32 0.0, %v1986
      %v1988 = vpop.f32.mrf.mxu0
      %1989 = vmatprep.mubr.bf16.mxu0 0
      %1990 = vmatmul.mubr.bf16.gmra.mxu0 %v1845
      %v1991 = vpop.f32.mrf.mxu0
      %v1992 = vadd.f32 0.0, %v1991
      %v1993 = vpop.f32.mrf.mxu0
      %v1994 = vpop.f32.mrf.mxu0
      %v1995 = vadd.f32 0.0, %v1994
      %v1996 = vpop.f32.mrf.mxu0
      %1997 = vmatprep.mubr.bf16.mxu0 0
      %1998 = vmatmul.mubr.bf16.gmra.mxu0 %v1848
      %v1999 = vpop.f32.mrf.mxu0
      %v2000 = vadd.f32 0.0, %v1999
      %v2001 = vpop.f32.mrf.mxu0
      %v2002 = vpop.f32.mrf.mxu0
      %v2003 = vadd.f32 0.0, %v2002
      %v2004 = vpop.f32.mrf.mxu0
      %2005 = vmatprep.mubr.bf16.mxu0 0
      %2006 = vmatmul.mubr.bf16.gmra.mxu0 %v1851
      %v2007 = vpop.f32.mrf.mxu0
      %v2008 = vadd.f32 0.0, %v2007
      %v2009 = vpop.f32.mrf.mxu0
      %v2010 = vpop.f32.mrf.mxu0
      %v2011 = vadd.f32 0.0, %v2010
      %v2012 = vpop.f32.mrf.mxu0
      %2013 = vdwg.mxu0
      %v2014 = vadd.f32 %v1740, %v1888
      %v2015 = vadd.f32 %v1741, %v1891
      %v2016 = vadd.f32 %v1742, %v1896
      %v2017 = vadd.f32 %v1743, %v1899
      %v2018 = vadd.f32 %v1744, %v1904
      %v2019 = vadd.f32 %v1745, %v1907
      %v2020 = vadd.f32 %v1746, %v1912
      %v2021 = vadd.f32 %v1747, %v1915
      %v2022 = vadd.f32 %v1748, %v1920
      %v2023 = vadd.f32 %v1749, %v1923
      %v2024 = vadd.f32 %v1750, %v1928
      %v2025 = vadd.f32 %v1751, %v1931
      %v2026 = vadd.f32 %v1752, %v1936
      %v2027 = vadd.f32 %v1753, %v1939
      %v2028 = vadd.f32 %v1754, %v1944
      %v2029 = vadd.f32 %v1755, %v1947
      %v2030 = vadd.f32 %v1756, %v1952
      %v2031 = vadd.f32 %v1757, %v1955
      %v2032 = vadd.f32 %v1758, %v1960
      %v2033 = vadd.f32 %v1759, %v1963
      %v2034 = vadd.f32 %v1760, %v1968
      %v2035 = vadd.f32 %v1761, %v1971
      %v2036 = vadd.f32 %v1762, %v1976
      %v2037 = vadd.f32 %v1763, %v1979
      %v2038 = vadd.f32 %v1764, %v1984
      %v2039 = vadd.f32 %v1765, %v1987
      %v2040 = vadd.f32 %v1766, %v1992
      %v2041 = vadd.f32 %v1767, %v1995
      %v2042 = vadd.f32 %v1768, %v2000
      %v2043 = vadd.f32 %v1769, %v2003
      %v2044 = vadd.f32 %v1770, %v2008
      %v2045 = vadd.f32 %v1771, %v2011
      %v2047 = vshrl.u32 %v232, 16
      %v2049 = vrot.slane %v2047, 4
      %v2050 = vshll.u32 %v232, 16
      %v2052 = vrot.slane %v2050, 5
      %v2053 = vor.u32 %v2049, %v2052
      %v2054 = vrot.slane %v2053, 4
      %v2056 = vshll.u32 %v233, 16
      %v2058 = vrot.slane %v2056, 5
      %v2059 = vsel %vm300, %v2054, %v2058
      %v2061 = vshrl.u32 %v252, 16
      %v2063 = vrot.slane %v2061, 4
      %v2064 = vshll.u32 %v252, 16
      %v2066 = vrot.slane %v2064, 5
      %v2067 = vor.u32 %v2063, %v2066
      %v2068 = vrot.slane %v2067, 4
      %v2070 = vshll.u32 %v253, 16
      %v2072 = vrot.slane %v2070, 5
      %v2073 = vsel %vm300, %v2068, %v2072
      %v2075 = vshrl.u32 %v272, 16
      %v2077 = vrot.slane %v2075, 4
      %v2078 = vshll.u32 %v272, 16
      %v2080 = vrot.slane %v2078, 5
      %v2081 = vor.u32 %v2077, %v2080
      %v2082 = vrot.slane %v2081, 4
      %v2084 = vshll.u32 %v273, 16
      %v2086 = vrot.slane %v2084, 5
      %v2087 = vsel %vm300, %v2082, %v2086
      %v2089 = vshrl.u32 %v292, 16
      %v2091 = vrot.slane %v2089, 4
      %v2092 = vshll.u32 %v292, 16
      %v2094 = vrot.slane %v2092, 5
      %v2095 = vor.u32 %v2091, %v2094
      %v2096 = vrot.slane %v2095, 4
      %v2098 = vshll.u32 %v293, 16
      %v2100 = vrot.slane %v2098, 5
      %v2101 = vsel %vm300, %v2096, %v2100
      %s2102 = scalar_lea.vmem %s1, 32
      %v2103 = vld [vmem:[%s2102] sm:$0xf]
      %v2104 = vld [vmem:[%s2102 + $0x4] sm:$0xf]
      %v2105 = vunpack.c.l.b16 %v2059
      %v2106 = vunpack.c.l.b16 %v2073
      %v2107 = vunpack.c.l.b16 %v2087
      %v2108 = vunpack.c.l.b16 %v2101
      %v2109 = vpack.c.b16 %v754, %v753
      %v2110 = vpack.c.b16 %v756, %v755
      %v2111 = vpack.c.b16 %v758, %v757
      %v2112 = vpack.c.b16 %v2105, %v759
      %v2113 = vpack.c.b16 %v762, %v761
      %v2114 = vpack.c.b16 %v764, %v763
      %v2115 = vpack.c.b16 %v766, %v765
      %v2116 = vpack.c.b16 %v2106, %v767
      %v2117 = vpack.c.b16 %v770, %v769
      %v2118 = vpack.c.b16 %v772, %v771
      %v2119 = vpack.c.b16 %v774, %v773
      %v2120 = vpack.c.b16 %v2107, %v775
      %v2121 = vpack.c.b16 %v778, %v777
      %v2122 = vpack.c.b16 %v780, %v779
      %v2123 = vpack.c.b16 %v782, %v781
      %v2124 = vpack.c.b16 %v2108, %v783
      %v2127 = vunpack.c.l.b16 %v2103
      %v2128 = vunpack.c.l.b16 %v2104
      %v2129 = vpack.c.b16 %v2128, %v2127
      %v2132 = vsel %vm806, %v2109, 0
      %v2135 = vsel %vm806, %v2110, 0
      %v2138 = vsel %vm806, %v2111, 0
      %v2141 = vsel %vm806, %v2112, 0
      %v2144 = vsel %vm806, %v2113, 0
      %v2147 = vsel %vm806, %v2114, 0
      %v2150 = vsel %vm806, %v2115, 0
      %v2153 = vsel %vm806, %v2116, 0
      %v2156 = vsel %vm806, %v2117, 0
      %v2159 = vsel %vm806, %v2118, 0
      %v2162 = vsel %vm806, %v2119, 0
      %v2165 = vsel %vm806, %v2120, 0
      %v2168 = vsel %vm806, %v2121, 0
      %v2171 = vsel %vm806, %v2122, 0
      %v2174 = vsel %vm806, %v2123, 0
      %v2177 = vsel %vm806, %v2124, 0
      %2179 = vmatprep.subr.bf16.mxu0 0
      %2180 = vmatpush1.bf16.msra.mxu0 0
      %2181 = vmatprep.subr.bf16.mxu0 0
      %2182 = vmatpush1.bf16.msra.mxu0 0
      %2183 = vmatprep.subr.bf16.mxu0 0
      %2184 = vmatpush1.bf16.msra.mxu0 0
      %2185 = vmatprep.subr.bf16.mxu0 0
      %2186 = vmatpush1.bf16.msra.mxu0 0
      %2187 = vmatprep.subr.bf16.mxu0 0
      %2188 = vmatpush1.bf16.msra.mxu0 0
      %2189 = vmatprep.subr.bf16.mxu0 0
      %2190 = vmatpush1.bf16.msra.mxu0 0
      %2191 = vmatprep.subr.bf16.mxu0 0
      %2192 = vmatpush1.bf16.msra.mxu0 0
      %2193 = vmatprep.subr.bf16.mxu0 0
      %2194 = vmatpush1.bf16.msra.mxu0 %v2129
      %2195 = vmatprep.subr.bf16.mxu0 0
      %2196 = vmatpush2.bf16.msra.mxu0 0
      %2197 = vmatprep.subr.bf16.mxu0 0
      %2198 = vmatpush2.bf16.msra.mxu0 0
      %2199 = vmatprep.subr.bf16.mxu0 0
      %2200 = vmatpush2.bf16.msra.mxu0 0
      %2201 = vmatprep.subr.bf16.mxu0 0
      %2202 = vmatpush2.bf16.msra.mxu0 0
      %2203 = vmatprep.subr.bf16.mxu0 0
      %2204 = vmatpush2.bf16.msra.mxu0 0
      %2205 = vmatprep.subr.bf16.mxu0 0
      %2206 = vmatpush2.bf16.msra.mxu0 0
      %2207 = vmatprep.subr.bf16.mxu0 0
      %2208 = vmatpush2.bf16.msra.mxu0 0
      %2209 = vmatprep.subr.bf16.mxu0 0
      %2210 = vmatpush2.bf16.msra.mxu0 0
      %2211 = vmatprep.mubr.bf16.mxu0 0
      %2212 = vmatmul.mubr.bf16.gmra.mxu0 %v2132
      %v2213 = vpop.f32.mrf.mxu0
      %v2214 = vadd.f32 0.0, %v2213
      %v2215 = vpop.f32.mrf.mxu0
      %v2216 = vpop.f32.mrf.mxu0
      %v2217 = vadd.f32 0.0, %v2216
      %v2218 = vpop.f32.mrf.mxu0
      %2219 = vmatprep.mubr.bf16.mxu0 0
      %2220 = vmatmul.mubr.bf16.gmra.mxu0 %v2135
      %v2221 = vpop.f32.mrf.mxu0
      %v2222 = vadd.f32 0.0, %v2221
      %v2223 = vpop.f32.mrf.mxu0
      %v2224 = vpop.f32.mrf.mxu0
      %v2225 = vadd.f32 0.0, %v2224
      %v2226 = vpop.f32.mrf.mxu0
      %2227 = vmatprep.mubr.bf16.mxu0 0
      %2228 = vmatmul.mubr.bf16.gmra.mxu0 %v2138
      %v2229 = vpop.f32.mrf.mxu0
      %v2230 = vadd.f32 0.0, %v2229
      %v2231 = vpop.f32.mrf.mxu0
      %v2232 = vpop.f32.mrf.mxu0
      %v2233 = vadd.f32 0.0, %v2232
      %v2234 = vpop.f32.mrf.mxu0
      %2235 = vmatprep.mubr.bf16.mxu0 0
      %2236 = vmatmul.mubr.bf16.gmra.mxu0 %v2141
      %v2237 = vpop.f32.mrf.mxu0
      %v2238 = vadd.f32 0.0, %v2237
      %v2239 = vpop.f32.mrf.mxu0
      %v2240 = vpop.f32.mrf.mxu0
      %v2241 = vadd.f32 0.0, %v2240
      %v2242 = vpop.f32.mrf.mxu0
      %2243 = vmatprep.mubr.bf16.mxu0 0
      %2244 = vmatmul.mubr.bf16.gmra.mxu0 %v2144
      %v2245 = vpop.f32.mrf.mxu0
      %v2246 = vadd.f32 0.0, %v2245
      %v2247 = vpop.f32.mrf.mxu0
      %v2248 = vpop.f32.mrf.mxu0
      %v2249 = vadd.f32 0.0, %v2248
      %v2250 = vpop.f32.mrf.mxu0
      %2251 = vmatprep.mubr.bf16.mxu0 0
      %2252 = vmatmul.mubr.bf16.gmra.mxu0 %v2147
      %v2253 = vpop.f32.mrf.mxu0
      %v2254 = vadd.f32 0.0, %v2253
      %v2255 = vpop.f32.mrf.mxu0
      %v2256 = vpop.f32.mrf.mxu0
      %v2257 = vadd.f32 0.0, %v2256
      %v2258 = vpop.f32.mrf.mxu0
      %2259 = vmatprep.mubr.bf16.mxu0 0
      %2260 = vmatmul.mubr.bf16.gmra.mxu0 %v2150
      %v2261 = vpop.f32.mrf.mxu0
      %v2262 = vadd.f32 0.0, %v2261
      %v2263 = vpop.f32.mrf.mxu0
      %v2264 = vpop.f32.mrf.mxu0
      %v2265 = vadd.f32 0.0, %v2264
      %v2266 = vpop.f32.mrf.mxu0
      %2267 = vmatprep.mubr.bf16.mxu0 0
      %2268 = vmatmul.mubr.bf16.gmra.mxu0 %v2153
      %v2269 = vpop.f32.mrf.mxu0
      %v2270 = vadd.f32 0.0, %v2269
      %v2271 = vpop.f32.mrf.mxu0
      %v2272 = vpop.f32.mrf.mxu0
      %v2273 = vadd.f32 0.0, %v2272
      %v2274 = vpop.f32.mrf.mxu0
      %2275 = vmatprep.mubr.bf16.mxu0 0
      %2276 = vmatmul.mubr.bf16.gmra.mxu0 %v2156
      %v2277 = vpop.f32.mrf.mxu0
      %v2278 = vadd.f32 0.0, %v2277
      %v2279 = vpop.f32.mrf.mxu0
      %v2280 = vpop.f32.mrf.mxu0
      %v2281 = vadd.f32 0.0, %v2280
      %v2282 = vpop.f32.mrf.mxu0
      %2283 = vmatprep.mubr.bf16.mxu0 0
      %2284 = vmatmul.mubr.bf16.gmra.mxu0 %v2159
      %v2285 = vpop.f32.mrf.mxu0
      %v2286 = vadd.f32 0.0, %v2285
      %v2287 = vpop.f32.mrf.mxu0
      %v2288 = vpop.f32.mrf.mxu0
      %v2289 = vadd.f32 0.0, %v2288
      %v2290 = vpop.f32.mrf.mxu0
      %2291 = vmatprep.mubr.bf16.mxu0 0
      %2292 = vmatmul.mubr.bf16.gmra.mxu0 %v2162
      %v2293 = vpop.f32.mrf.mxu0
      %v2294 = vadd.f32 0.0, %v2293
      %v2295 = vpop.f32.mrf.mxu0
      %v2296 = vpop.f32.mrf.mxu0
      %v2297 = vadd.f32 0.0, %v2296
      %v2298 = vpop.f32.mrf.mxu0
      %2299 = vmatprep.mubr.bf16.mxu0 0
      %2300 = vmatmul.mubr.bf16.gmra.mxu0 %v2165
      %v2301 = vpop.f32.mrf.mxu0
      %v2302 = vadd.f32 0.0, %v2301
      %v2303 = vpop.f32.mrf.mxu0
      %v2304 = vpop.f32.mrf.mxu0
      %v2305 = vadd.f32 0.0, %v2304
      %v2306 = vpop.f32.mrf.mxu0
      %2307 = vmatprep.mubr.bf16.mxu0 0
      %2308 = vmatmul.mubr.bf16.gmra.mxu0 %v2168
      %v2309 = vpop.f32.mrf.mxu0
      %v2310 = vadd.f32 0.0, %v2309
      %v2311 = vpop.f32.mrf.mxu0
      %v2312 = vpop.f32.mrf.mxu0
      %v2313 = vadd.f32 0.0, %v2312
      %v2314 = vpop.f32.mrf.mxu0
      %2315 = vmatprep.mubr.bf16.mxu0 0
      %2316 = vmatmul.mubr.bf16.gmra.mxu0 %v2171
      %v2317 = vpop.f32.mrf.mxu0
      %v2318 = vadd.f32 0.0, %v2317
      %v2319 = vpop.f32.mrf.mxu0
      %v2320 = vpop.f32.mrf.mxu0
      %v2321 = vadd.f32 0.0, %v2320
      %v2322 = vpop.f32.mrf.mxu0
      %2323 = vmatprep.mubr.bf16.mxu0 0
      %2324 = vmatmul.mubr.bf16.gmra.mxu0 %v2174
      %v2325 = vpop.f32.mrf.mxu0
      %v2326 = vadd.f32 0.0, %v2325
      %v2327 = vpop.f32.mrf.mxu0
      %v2328 = vpop.f32.mrf.mxu0
      %v2329 = vadd.f32 0.0, %v2328
      %v2330 = vpop.f32.mrf.mxu0
      %2331 = vmatprep.mubr.bf16.mxu0 0
      %2332 = vmatmul.mubr.bf16.gmra.mxu0 %v2177
      %v2333 = vpop.f32.mrf.mxu0
      %v2334 = vadd.f32 0.0, %v2333
      %v2335 = vpop.f32.mrf.mxu0
      %v2336 = vpop.f32.mrf.mxu0
      %v2337 = vadd.f32 0.0, %v2336
      %v2338 = vpop.f32.mrf.mxu0
      %2339 = vdwg.mxu0
      %v2340 = vadd.f32 %v2014, %v2214
      %v2341 = vadd.f32 %v2015, %v2217
      %v2342 = vadd.f32 %v2016, %v2222
      %v2343 = vadd.f32 %v2017, %v2225
      %v2344 = vadd.f32 %v2018, %v2230
      %v2345 = vadd.f32 %v2019, %v2233
      %v2346 = vadd.f32 %v2020, %v2238
      %v2347 = vadd.f32 %v2021, %v2241
      %v2348 = vadd.f32 %v2022, %v2246
      %v2349 = vadd.f32 %v2023, %v2249
      %v2350 = vadd.f32 %v2024, %v2254
      %v2351 = vadd.f32 %v2025, %v2257
      %v2352 = vadd.f32 %v2026, %v2262
      %v2353 = vadd.f32 %v2027, %v2265
      %v2354 = vadd.f32 %v2028, %v2270
      %v2355 = vadd.f32 %v2029, %v2273
      %v2356 = vadd.f32 %v2030, %v2278
      %v2357 = vadd.f32 %v2031, %v2281
      %v2358 = vadd.f32 %v2032, %v2286
      %v2359 = vadd.f32 %v2033, %v2289
      %v2360 = vadd.f32 %v2034, %v2294
      %v2361 = vadd.f32 %v2035, %v2297
      %v2362 = vadd.f32 %v2036, %v2302
      %v2363 = vadd.f32 %v2037, %v2305
      %v2364 = vadd.f32 %v2038, %v2310
      %v2365 = vadd.f32 %v2039, %v2313
      %v2366 = vadd.f32 %v2040, %v2318
      %v2367 = vadd.f32 %v2041, %v2321
      %v2368 = vadd.f32 %v2042, %v2326
      %v2369 = vadd.f32 %v2043, %v2329
      %v2370 = vadd.f32 %v2044, %v2334
      %v2371 = vadd.f32 %v2045, %v2337
      %v2376 = vrot.slane %v232, 5
      %v2377 = vrot.slane %v2376, 4
      %v2378 = vrot.slane %v233, 5
      %v2379 = vsel %vm1345, %v2377, %v2378
      %v2380 = vrot.slane %v252, 5
      %v2381 = vrot.slane %v2380, 4
      %v2382 = vrot.slane %v253, 5
      %v2383 = vsel %vm1345, %v2381, %v2382
      %v2384 = vrot.slane %v272, 5
      %v2385 = vrot.slane %v2384, 4
      %v2386 = vrot.slane %v273, 5
      %v2387 = vsel %vm1345, %v2385, %v2386
      %v2388 = vrot.slane %v292, 5
      %v2389 = vrot.slane %v2388, 4
      %v2390 = vrot.slane %v293, 5
      %v2391 = vsel %vm1345, %v2389, %v2390
      %s2392 = scalar_lea.vmem %s1, 40
      %v2393 = vld [vmem:[%s2392] sm:$0xf]
      %v2394 = vld [vmem:[%s2392 + $0x4] sm:$0xf]
      %v2395 = vunpack.c.l.b16 %v2379
      %v2396 = vunpack.c.l.b16 %v2383
      %v2397 = vunpack.c.l.b16 %v2387
      %v2398 = vunpack.c.l.b16 %v2391
      %v2399 = vpack.c.b16 %v1479, %v1478
      %v2400 = vpack.c.b16 %v1481, %v1480
      %v2401 = vpack.c.b16 %v1483, %v1482
      %v2402 = vpack.c.b16 %v2395, %v1484
      %v2403 = vpack.c.b16 %v1487, %v1486
      %v2404 = vpack.c.b16 %v1489, %v1488
      %v2405 = vpack.c.b16 %v1491, %v1490
      %v2406 = vpack.c.b16 %v2396, %v1492
      %v2407 = vpack.c.b16 %v1495, %v1494
      %v2408 = vpack.c.b16 %v1497, %v1496
      %v2409 = vpack.c.b16 %v1499, %v1498
      %v2410 = vpack.c.b16 %v2397, %v1500
      %v2411 = vpack.c.b16 %v1503, %v1502
      %v2412 = vpack.c.b16 %v1505, %v1504
      %v2413 = vpack.c.b16 %v1507, %v1506
      %v2414 = vpack.c.b16 %v2398, %v1508
      %v2417 = vunpack.c.l.b16 %v2393
      %v2418 = vunpack.c.l.b16 %v2394
      %v2419 = vpack.c.b16 %v2418, %v2417
      %v2422 = vsel %vm806, %v2399, 0
      %v2425 = vsel %vm806, %v2400, 0
      %v2428 = vsel %vm806, %v2401, 0
      %v2431 = vsel %vm806, %v2402, 0
      %v2434 = vsel %vm806, %v2403, 0
      %v2437 = vsel %vm806, %v2404, 0
      %v2440 = vsel %vm806, %v2405, 0
      %v2443 = vsel %vm806, %v2406, 0
      %v2446 = vsel %vm806, %v2407, 0
      %v2449 = vsel %vm806, %v2408, 0
      %v2452 = vsel %vm806, %v2409, 0
      %v2455 = vsel %vm806, %v2410, 0
      %v2458 = vsel %vm806, %v2411, 0
      %v2461 = vsel %vm806, %v2412, 0
      %v2464 = vsel %vm806, %v2413, 0
      %v2467 = vsel %vm806, %v2414, 0
      %2469 = vmatprep.subr.bf16.mxu0 0
      %2470 = vmatpush1.bf16.msra.mxu0 0
      %2471 = vmatprep.subr.bf16.mxu0 0
      %2472 = vmatpush1.bf16.msra.mxu0 0
      %2473 = vmatprep.subr.bf16.mxu0 0
      %2474 = vmatpush1.bf16.msra.mxu0 0
      %2475 = vmatprep.subr.bf16.mxu0 0
      %2476 = vmatpush1.bf16.msra.mxu0 0
      %2477 = vmatprep.subr.bf16.mxu0 0
      %2478 = vmatpush1.bf16.msra.mxu0 0
      %2479 = vmatprep.subr.bf16.mxu0 0
      %2480 = vmatpush1.bf16.msra.mxu0 0
      %2481 = vmatprep.subr.bf16.mxu0 0
      %2482 = vmatpush1.bf16.msra.mxu0 0
      %2483 = vmatprep.subr.bf16.mxu0 0
      %2484 = vmatpush1.bf16.msra.mxu0 %v2419
      %2485 = vmatprep.subr.bf16.mxu0 0
      %2486 = vmatpush2.bf16.msra.mxu0 0
      %2487 = vmatprep.subr.bf16.mxu0 0
      %2488 = vmatpush2.bf16.msra.mxu0 0
      %2489 = vmatprep.subr.bf16.mxu0 0
      %2490 = vmatpush2.bf16.msra.mxu0 0
      %2491 = vmatprep.subr.bf16.mxu0 0
      %2492 = vmatpush2.bf16.msra.mxu0 0
      %2493 = vmatprep.subr.bf16.mxu0 0
      %2494 = vmatpush2.bf16.msra.mxu0 0
      %2495 = vmatprep.subr.bf16.mxu0 0
      %2496 = vmatpush2.bf16.msra.mxu0 0
      %2497 = vmatprep.subr.bf16.mxu0 0
      %2498 = vmatpush2.bf16.msra.mxu0 0
      %2499 = vmatprep.subr.bf16.mxu0 0
      %2500 = vmatpush2.bf16.msra.mxu0 0
      %2501 = vmatprep.mubr.bf16.mxu0 0
      %2502 = vmatmul.mubr.bf16.gmra.mxu0 %v2422
      %v2503 = vpop.f32.mrf.mxu0
      %v2504 = vadd.f32 0.0, %v2503
      %v2505 = vpop.f32.mrf.mxu0
      %v2506 = vpop.f32.mrf.mxu0
      %v2507 = vadd.f32 0.0, %v2506
      %v2508 = vpop.f32.mrf.mxu0
      %2509 = vmatprep.mubr.bf16.mxu0 0
      %2510 = vmatmul.mubr.bf16.gmra.mxu0 %v2425
      %v2511 = vpop.f32.mrf.mxu0
      %v2512 = vadd.f32 0.0, %v2511
      %v2513 = vpop.f32.mrf.mxu0
      %v2514 = vpop.f32.mrf.mxu0
      %v2515 = vadd.f32 0.0, %v2514
      %v2516 = vpop.f32.mrf.mxu0
      %2517 = vmatprep.mubr.bf16.mxu0 0
      %2518 = vmatmul.mubr.bf16.gmra.mxu0 %v2428
      %v2519 = vpop.f32.mrf.mxu0
      %v2520 = vadd.f32 0.0, %v2519
      %v2521 = vpop.f32.mrf.mxu0
      %v2522 = vpop.f32.mrf.mxu0
      %v2523 = vadd.f32 0.0, %v2522
      %v2524 = vpop.f32.mrf.mxu0
      %2525 = vmatprep.mubr.bf16.mxu0 0
      %2526 = vmatmul.mubr.bf16.gmra.mxu0 %v2431
      %v2527 = vpop.f32.mrf.mxu0
      %v2528 = vadd.f32 0.0, %v2527
      %v2529 = vpop.f32.mrf.mxu0
      %v2530 = vpop.f32.mrf.mxu0
      %v2531 = vadd.f32 0.0, %v2530
      %v2532 = vpop.f32.mrf.mxu0
      %2533 = vmatprep.mubr.bf16.mxu0 0
      %2534 = vmatmul.mubr.bf16.gmra.mxu0 %v2434
      %v2535 = vpop.f32.mrf.mxu0
      %v2536 = vadd.f32 0.0, %v2535
      %v2537 = vpop.f32.mrf.mxu0
      %v2538 = vpop.f32.mrf.mxu0
      %v2539 = vadd.f32 0.0, %v2538
      %v2540 = vpop.f32.mrf.mxu0
      %2541 = vmatprep.mubr.bf16.mxu0 0
      %2542 = vmatmul.mubr.bf16.gmra.mxu0 %v2437
      %v2543 = vpop.f32.mrf.mxu0
      %v2544 = vadd.f32 0.0, %v2543
      %v2545 = vpop.f32.mrf.mxu0
      %v2546 = vpop.f32.mrf.mxu0
      %v2547 = vadd.f32 0.0, %v2546
      %v2548 = vpop.f32.mrf.mxu0
      %2549 = vmatprep.mubr.bf16.mxu0 0
      %2550 = vmatmul.mubr.bf16.gmra.mxu0 %v2440
      %v2551 = vpop.f32.mrf.mxu0
      %v2552 = vadd.f32 0.0, %v2551
      %v2553 = vpop.f32.mrf.mxu0
      %v2554 = vpop.f32.mrf.mxu0
      %v2555 = vadd.f32 0.0, %v2554
      %v2556 = vpop.f32.mrf.mxu0
      %2557 = vmatprep.mubr.bf16.mxu0 0
      %2558 = vmatmul.mubr.bf16.gmra.mxu0 %v2443
      %v2559 = vpop.f32.mrf.mxu0
      %v2560 = vadd.f32 0.0, %v2559
      %v2561 = vpop.f32.mrf.mxu0
      %v2562 = vpop.f32.mrf.mxu0
      %v2563 = vadd.f32 0.0, %v2562
      %v2564 = vpop.f32.mrf.mxu0
      %2565 = vmatprep.mubr.bf16.mxu0 0
      %2566 = vmatmul.mubr.bf16.gmra.mxu0 %v2446
      %v2567 = vpop.f32.mrf.mxu0
      %v2568 = vadd.f32 0.0, %v2567
      %v2569 = vpop.f32.mrf.mxu0
      %v2570 = vpop.f32.mrf.mxu0
      %v2571 = vadd.f32 0.0, %v2570
      %v2572 = vpop.f32.mrf.mxu0
      %2573 = vmatprep.mubr.bf16.mxu0 0
      %2574 = vmatmul.mubr.bf16.gmra.mxu0 %v2449
      %v2575 = vpop.f32.mrf.mxu0
      %v2576 = vadd.f32 0.0, %v2575
      %v2577 = vpop.f32.mrf.mxu0
      %v2578 = vpop.f32.mrf.mxu0
      %v2579 = vadd.f32 0.0, %v2578
      %v2580 = vpop.f32.mrf.mxu0
      %2581 = vmatprep.mubr.bf16.mxu0 0
      %2582 = vmatmul.mubr.bf16.gmra.mxu0 %v2452
      %v2583 = vpop.f32.mrf.mxu0
      %v2584 = vadd.f32 0.0, %v2583
      %v2585 = vpop.f32.mrf.mxu0
      %v2586 = vpop.f32.mrf.mxu0
      %v2587 = vadd.f32 0.0, %v2586
      %v2588 = vpop.f32.mrf.mxu0
      %2589 = vmatprep.mubr.bf16.mxu0 0
      %2590 = vmatmul.mubr.bf16.gmra.mxu0 %v2455
      %v2591 = vpop.f32.mrf.mxu0
      %v2592 = vadd.f32 0.0, %v2591
      %v2593 = vpop.f32.mrf.mxu0
      %v2594 = vpop.f32.mrf.mxu0
      %v2595 = vadd.f32 0.0, %v2594
      %v2596 = vpop.f32.mrf.mxu0
      %2597 = vmatprep.mubr.bf16.mxu0 0
      %2598 = vmatmul.mubr.bf16.gmra.mxu0 %v2458
      %v2599 = vpop.f32.mrf.mxu0
      %v2600 = vadd.f32 0.0, %v2599
      %v2601 = vpop.f32.mrf.mxu0
      %v2602 = vpop.f32.mrf.mxu0
      %v2603 = vadd.f32 0.0, %v2602
      %v2604 = vpop.f32.mrf.mxu0
      %2605 = vmatprep.mubr.bf16.mxu0 0
      %2606 = vmatmul.mubr.bf16.gmra.mxu0 %v2461
      %v2607 = vpop.f32.mrf.mxu0
      %v2608 = vadd.f32 0.0, %v2607
      %v2609 = vpop.f32.mrf.mxu0
      %v2610 = vpop.f32.mrf.mxu0
      %v2611 = vadd.f32 0.0, %v2610
      %v2612 = vpop.f32.mrf.mxu0
      %2613 = vmatprep.mubr.bf16.mxu0 0
      %2614 = vmatmul.mubr.bf16.gmra.mxu0 %v2464
      %v2615 = vpop.f32.mrf.mxu0
      %v2616 = vadd.f32 0.0, %v2615
      %v2617 = vpop.f32.mrf.mxu0
      %v2618 = vpop.f32.mrf.mxu0
      %v2619 = vadd.f32 0.0, %v2618
      %v2620 = vpop.f32.mrf.mxu0
      %2621 = vmatprep.mubr.bf16.mxu0 0
      %2622 = vmatmul.mubr.bf16.gmra.mxu0 %v2467
      %v2623 = vpop.f32.mrf.mxu0
      %v2624 = vadd.f32 0.0, %v2623
      %v2625 = vpop.f32.mrf.mxu0
      %v2626 = vpop.f32.mrf.mxu0
      %v2627 = vadd.f32 0.0, %v2626
      %v2628 = vpop.f32.mrf.mxu0
      %2629 = vdwg.mxu0
      %v2630 = vadd.f32 %v2340, %v2504
      %v2631 = vadd.f32 %v2341, %v2507
      %v2632 = vadd.f32 %v2342, %v2512
      %v2633 = vadd.f32 %v2343, %v2515
      %v2634 = vadd.f32 %v2344, %v2520
      %v2635 = vadd.f32 %v2345, %v2523
      %v2636 = vadd.f32 %v2346, %v2528
      %v2637 = vadd.f32 %v2347, %v2531
      %v2638 = vadd.f32 %v2348, %v2536
      %v2639 = vadd.f32 %v2349, %v2539
      %v2640 = vadd.f32 %v2350, %v2544
      %v2641 = vadd.f32 %v2351, %v2547
      %v2642 = vadd.f32 %v2352, %v2552
      %v2643 = vadd.f32 %v2353, %v2555
      %v2644 = vadd.f32 %v2354, %v2560
      %v2645 = vadd.f32 %v2355, %v2563
      %v2646 = vadd.f32 %v2356, %v2568
      %v2647 = vadd.f32 %v2357, %v2571
      %v2648 = vadd.f32 %v2358, %v2576
      %v2649 = vadd.f32 %v2359, %v2579
      %v2650 = vadd.f32 %v2360, %v2584
      %v2651 = vadd.f32 %v2361, %v2587
      %v2652 = vadd.f32 %v2362, %v2592
      %v2653 = vadd.f32 %v2363, %v2595
      %v2654 = vadd.f32 %v2364, %v2600
      %v2655 = vadd.f32 %v2365, %v2603
      %v2656 = vadd.f32 %v2366, %v2608
      %v2657 = vadd.f32 %v2367, %v2611
      %v2658 = vadd.f32 %v2368, %v2616
      %v2659 = vadd.f32 %v2369, %v2619
      %v2660 = vadd.f32 %v2370, %v2624
      %v2661 = vadd.f32 %v2371, %v2627
      %s2662 = scalar_lea.vmem %s1, 48
      %v2663 = vld [vmem:[%s2662] sm:$0xf]
      %v2664 = vld [vmem:[%s2662 + $0x4] sm:$0xf]
      %v2669 = vunpack.c.l.b16 %v234
      %v2670 = vunpack.c.l.b16 %v254
      %v2671 = vunpack.c.l.b16 %v274
      %v2672 = vunpack.c.l.b16 %v294
      %v2673 = vpack.c.b16 %v2669, %v1779
      %v2674 = vpack.c.b16 %v2670, %v1780
      %v2675 = vpack.c.b16 %v2671, %v1781
      %v2676 = vpack.c.b16 %v2672, %v1782
      %v2679 = vunpack.c.l.b16 %v2663
      %v2680 = vunpack.c.l.b16 %v2664
      %v2681 = vpack.c.b16 %v2680, %v2679
      %v2684 = vsel %vm806, %v2673, 0
      %v2687 = vsel %vm806, %v2674, 0
      %v2690 = vsel %vm806, %v2675, 0
      %v2693 = vsel %vm806, %v2676, 0
      %2695 = vmatprep.subr.bf16.mxu0 0
      %2696 = vmatpush1.bf16.msra.mxu0 0
      %2697 = vmatprep.subr.bf16.mxu0 0
      %2698 = vmatpush1.bf16.msra.mxu0 0
      %2699 = vmatprep.subr.bf16.mxu0 0
      %2700 = vmatpush1.bf16.msra.mxu0 0
      %2701 = vmatprep.subr.bf16.mxu0 0
      %2702 = vmatpush1.bf16.msra.mxu0 0
      %2703 = vmatprep.subr.bf16.mxu0 0
      %2704 = vmatpush1.bf16.msra.mxu0 0
      %2705 = vmatprep.subr.bf16.mxu0 0
      %2706 = vmatpush1.bf16.msra.mxu0 0
      %2707 = vmatprep.subr.bf16.mxu0 0
      %2708 = vmatpush1.bf16.msra.mxu0 0
      %2709 = vmatprep.subr.bf16.mxu0 0
      %2710 = vmatpush1.bf16.msra.mxu0 %v2681
      %2711 = vmatprep.subr.bf16.mxu0 0
      %2712 = vmatpush2.bf16.msra.mxu0 0
      %2713 = vmatprep.subr.bf16.mxu0 0
      %2714 = vmatpush2.bf16.msra.mxu0 0
      %2715 = vmatprep.subr.bf16.mxu0 0
      %2716 = vmatpush2.bf16.msra.mxu0 0
      %2717 = vmatprep.subr.bf16.mxu0 0
      %2718 = vmatpush2.bf16.msra.mxu0 0
      %2719 = vmatprep.subr.bf16.mxu0 0
      %2720 = vmatpush2.bf16.msra.mxu0 0
      %2721 = vmatprep.subr.bf16.mxu0 0
      %2722 = vmatpush2.bf16.msra.mxu0 0
      %2723 = vmatprep.subr.bf16.mxu0 0
      %2724 = vmatpush2.bf16.msra.mxu0 0
      %2725 = vmatprep.subr.bf16.mxu0 0
      %2726 = vmatpush2.bf16.msra.mxu0 0
      %2727 = vmatprep.mubr.bf16.mxu0 0
      %2728 = vmatmul.mubr.bf16.gmra.mxu0 %v1106
      %v2729 = vpop.f32.mrf.mxu0
      %v2730 = vadd.f32 0.0, %v2729
      %v2731 = vpop.f32.mrf.mxu0
      %v2732 = vpop.f32.mrf.mxu0
      %v2733 = vadd.f32 0.0, %v2732
      %v2734 = vpop.f32.mrf.mxu0
      %2735 = vmatprep.mubr.bf16.mxu0 0
      %2736 = vmatmul.mubr.bf16.gmra.mxu0 %v1109
      %v2737 = vpop.f32.mrf.mxu0
      %v2738 = vadd.f32 0.0, %v2737
      %v2739 = vpop.f32.mrf.mxu0
      %v2740 = vpop.f32.mrf.mxu0
      %v2741 = vadd.f32 0.0, %v2740
      %v2742 = vpop.f32.mrf.mxu0
      %2743 = vmatprep.mubr.bf16.mxu0 0
      %2744 = vmatmul.mubr.bf16.gmra.mxu0 %v1112
      %v2745 = vpop.f32.mrf.mxu0
      %v2746 = vadd.f32 0.0, %v2745
      %v2747 = vpop.f32.mrf.mxu0
      %v2748 = vpop.f32.mrf.mxu0
      %v2749 = vadd.f32 0.0, %v2748
      %v2750 = vpop.f32.mrf.mxu0
      %2751 = vmatprep.mubr.bf16.mxu0 0
      %2752 = vmatmul.mubr.bf16.gmra.mxu0 %v2684
      %v2753 = vpop.f32.mrf.mxu0
      %v2754 = vadd.f32 0.0, %v2753
      %v2755 = vpop.f32.mrf.mxu0
      %v2756 = vpop.f32.mrf.mxu0
      %v2757 = vadd.f32 0.0, %v2756
      %v2758 = vpop.f32.mrf.mxu0
      %2759 = vmatprep.mubr.bf16.mxu0 0
      %2760 = vmatmul.mubr.bf16.gmra.mxu0 %v1118
      %v2761 = vpop.f32.mrf.mxu0
      %v2762 = vadd.f32 0.0, %v2761
      %v2763 = vpop.f32.mrf.mxu0
      %v2764 = vpop.f32.mrf.mxu0
      %v2765 = vadd.f32 0.0, %v2764
      %v2766 = vpop.f32.mrf.mxu0
      %2767 = vmatprep.mubr.bf16.mxu0 0
      %2768 = vmatmul.mubr.bf16.gmra.mxu0 %v1121
      %v2769 = vpop.f32.mrf.mxu0
      %v2770 = vadd.f32 0.0, %v2769
      %v2771 = vpop.f32.mrf.mxu0
      %v2772 = vpop.f32.mrf.mxu0
      %v2773 = vadd.f32 0.0, %v2772
      %v2774 = vpop.f32.mrf.mxu0
      %2775 = vmatprep.mubr.bf16.mxu0 0
      %2776 = vmatmul.mubr.bf16.gmra.mxu0 %v1124
      %v2777 = vpop.f32.mrf.mxu0
      %v2778 = vadd.f32 0.0, %v2777
      %v2779 = vpop.f32.mrf.mxu0
      %v2780 = vpop.f32.mrf.mxu0
      %v2781 = vadd.f32 0.0, %v2780
      %v2782 = vpop.f32.mrf.mxu0
      %2783 = vmatprep.mubr.bf16.mxu0 0
      %2784 = vmatmul.mubr.bf16.gmra.mxu0 %v2687
      %v2785 = vpop.f32.mrf.mxu0
      %v2786 = vadd.f32 0.0, %v2785
      %v2787 = vpop.f32.mrf.mxu0
      %v2788 = vpop.f32.mrf.mxu0
      %v2789 = vadd.f32 0.0, %v2788
      %v2790 = vpop.f32.mrf.mxu0
      %2791 = vmatprep.mubr.bf16.mxu0 0
      %2792 = vmatmul.mubr.bf16.gmra.mxu0 %v1130
      %v2793 = vpop.f32.mrf.mxu0
      %v2794 = vadd.f32 0.0, %v2793
      %v2795 = vpop.f32.mrf.mxu0
      %v2796 = vpop.f32.mrf.mxu0
      %v2797 = vadd.f32 0.0, %v2796
      %v2798 = vpop.f32.mrf.mxu0
      %2799 = vmatprep.mubr.bf16.mxu0 0
      %2800 = vmatmul.mubr.bf16.gmra.mxu0 %v1133
      %v2801 = vpop.f32.mrf.mxu0
      %v2802 = vadd.f32 0.0, %v2801
      %v2803 = vpop.f32.mrf.mxu0
      %v2804 = vpop.f32.mrf.mxu0
      %v2805 = vadd.f32 0.0, %v2804
      %v2806 = vpop.f32.mrf.mxu0
      %2807 = vmatprep.mubr.bf16.mxu0 0
      %2808 = vmatmul.mubr.bf16.gmra.mxu0 %v1136
      %v2809 = vpop.f32.mrf.mxu0
      %v2810 = vadd.f32 0.0, %v2809
      %v2811 = vpop.f32.mrf.mxu0
      %v2812 = vpop.f32.mrf.mxu0
      %v2813 = vadd.f32 0.0, %v2812
      %v2814 = vpop.f32.mrf.mxu0
      %2815 = vmatprep.mubr.bf16.mxu0 0
      %2816 = vmatmul.mubr.bf16.gmra.mxu0 %v2690
      %v2817 = vpop.f32.mrf.mxu0
      %v2818 = vadd.f32 0.0, %v2817
      %v2819 = vpop.f32.mrf.mxu0
      %v2820 = vpop.f32.mrf.mxu0
      %v2821 = vadd.f32 0.0, %v2820
      %v2822 = vpop.f32.mrf.mxu0
      %2823 = vmatprep.mubr.bf16.mxu0 0
      %2824 = vmatmul.mubr.bf16.gmra.mxu0 %v1142
      %v2825 = vpop.f32.mrf.mxu0
      %v2826 = vadd.f32 0.0, %v2825
      %v2827 = vpop.f32.mrf.mxu0
      %v2828 = vpop.f32.mrf.mxu0
      %v2829 = vadd.f32 0.0, %v2828
      %v2830 = vpop.f32.mrf.mxu0
      %2831 = vmatprep.mubr.bf16.mxu0 0
      %2832 = vmatmul.mubr.bf16.gmra.mxu0 %v1145
      %v2833 = vpop.f32.mrf.mxu0
      %v2834 = vadd.f32 0.0, %v2833
      %v2835 = vpop.f32.mrf.mxu0
      %v2836 = vpop.f32.mrf.mxu0
      %v2837 = vadd.f32 0.0, %v2836
      %v2838 = vpop.f32.mrf.mxu0
      %2839 = vmatprep.mubr.bf16.mxu0 0
      %2840 = vmatmul.mubr.bf16.gmra.mxu0 %v1148
      %v2841 = vpop.f32.mrf.mxu0
      %v2842 = vadd.f32 0.0, %v2841
      %v2843 = vpop.f32.mrf.mxu0
      %v2844 = vpop.f32.mrf.mxu0
      %v2845 = vadd.f32 0.0, %v2844
      %v2846 = vpop.f32.mrf.mxu0
      %2847 = vmatprep.mubr.bf16.mxu0 0
      %2848 = vmatmul.mubr.bf16.gmra.mxu0 %v2693
      %v2849 = vpop.f32.mrf.mxu0
      %v2850 = vadd.f32 0.0, %v2849
      %v2851 = vpop.f32.mrf.mxu0
      %v2852 = vpop.f32.mrf.mxu0
      %v2853 = vadd.f32 0.0, %v2852
      %v2854 = vpop.f32.mrf.mxu0
      %2855 = vdwg.mxu0
      %v2856 = vadd.f32 %v2630, %v2730
      %v2857 = vadd.f32 %v2631, %v2733
      %v2858 = vadd.f32 %v2632, %v2738
      %v2859 = vadd.f32 %v2633, %v2741
      %v2860 = vadd.f32 %v2634, %v2746
      %v2861 = vadd.f32 %v2635, %v2749
      %v2862 = vadd.f32 %v2636, %v2754
      %v2863 = vadd.f32 %v2637, %v2757
      %v2864 = vadd.f32 %v2638, %v2762
      %v2865 = vadd.f32 %v2639, %v2765
      %v2866 = vadd.f32 %v2640, %v2770
      %v2867 = vadd.f32 %v2641, %v2773
      %v2868 = vadd.f32 %v2642, %v2778
      %v2869 = vadd.f32 %v2643, %v2781
      %v2870 = vadd.f32 %v2644, %v2786
      %v2871 = vadd.f32 %v2645, %v2789
      %v2872 = vadd.f32 %v2646, %v2794
      %v2873 = vadd.f32 %v2647, %v2797
      %v2874 = vadd.f32 %v2648, %v2802
      %v2875 = vadd.f32 %v2649, %v2805
      %v2876 = vadd.f32 %v2650, %v2810
      %v2877 = vadd.f32 %v2651, %v2813
      %v2878 = vadd.f32 %v2652, %v2818
      %v2879 = vadd.f32 %v2653, %v2821
      %v2880 = vadd.f32 %v2654, %v2826
      %v2881 = vadd.f32 %v2655, %v2829
      %v2882 = vadd.f32 %v2656, %v2834
      %v2883 = vadd.f32 %v2657, %v2837
      %v2884 = vadd.f32 %v2658, %v2842
      %v2885 = vadd.f32 %v2659, %v2845
      %v2886 = vadd.f32 %v2660, %v2850
      %v2887 = vadd.f32 %v2661, %v2853
      %v2889 = vshrl.u32 %v234, 16
      %v2891 = vrot.slane %v2889, 4
      %v2892 = vshll.u32 %v234, 16
      %v2894 = vrot.slane %v2892, 5
      %v2895 = vor.u32 %v2891, %v2894
      %v2896 = vrot.slane %v2895, 4
      %v2898 = vshll.u32 %v235, 16
      %v2900 = vrot.slane %v2898, 5
      %v2901 = vsel %vm300, %v2896, %v2900
      %v2903 = vshrl.u32 %v254, 16
      %v2905 = vrot.slane %v2903, 4
      %v2906 = vshll.u32 %v254, 16
      %v2908 = vrot.slane %v2906, 5
      %v2909 = vor.u32 %v2905, %v2908
      %v2910 = vrot.slane %v2909, 4
      %v2912 = vshll.u32 %v255, 16
      %v2914 = vrot.slane %v2912, 5
      %v2915 = vsel %vm300, %v2910, %v2914
      %v2917 = vshrl.u32 %v274, 16
      %v2919 = vrot.slane %v2917, 4
      %v2920 = vshll.u32 %v274, 16
      %v2922 = vrot.slane %v2920, 5
      %v2923 = vor.u32 %v2919, %v2922
      %v2924 = vrot.slane %v2923, 4
      %v2926 = vshll.u32 %v275, 16
      %v2928 = vrot.slane %v2926, 5
      %v2929 = vsel %vm300, %v2924, %v2928
      %v2931 = vshrl.u32 %v294, 16
      %v2933 = vrot.slane %v2931, 4
      %v2934 = vshll.u32 %v294, 16
      %v2936 = vrot.slane %v2934, 5
      %v2937 = vor.u32 %v2933, %v2936
      %v2938 = vrot.slane %v2937, 4
      %v2940 = vshll.u32 %v295, 16
      %v2942 = vrot.slane %v2940, 5
      %v2943 = vsel %vm300, %v2938, %v2942
      %s2944 = scalar_lea.vmem %s1, 56
      %v2945 = vld [vmem:[%s2944] sm:$0xf]
      %v2946 = vld [vmem:[%s2944 + $0x4] sm:$0xf]
      %v2947 = vunpack.c.l.b16 %v2901
      %v2948 = vunpack.c.l.b16 %v2915
      %v2949 = vunpack.c.l.b16 %v2929
      %v2950 = vunpack.c.l.b16 %v2943
      %v2951 = vpack.c.b16 %v2947, %v2105
      %v2952 = vpack.c.b16 %v2948, %v2106
      %v2953 = vpack.c.b16 %v2949, %v2107
      %v2954 = vpack.c.b16 %v2950, %v2108
      %v2957 = vunpack.c.l.b16 %v2945
      %v2958 = vunpack.c.l.b16 %v2946
      %v2959 = vpack.c.b16 %v2958, %v2957
      %v2962 = vsel %vm806, %v2951, 0
      %v2965 = vsel %vm806, %v2952, 0
      %v2968 = vsel %vm806, %v2953, 0
      %v2971 = vsel %vm806, %v2954, 0
      %2973 = vmatprep.subr.bf16.mxu0 0
      %2974 = vmatpush1.bf16.msra.mxu0 0
      %2975 = vmatprep.subr.bf16.mxu0 0
      %2976 = vmatpush1.bf16.msra.mxu0 0
      %2977 = vmatprep.subr.bf16.mxu0 0
      %2978 = vmatpush1.bf16.msra.mxu0 0
      %2979 = vmatprep.subr.bf16.mxu0 0
      %2980 = vmatpush1.bf16.msra.mxu0 0
      %2981 = vmatprep.subr.bf16.mxu0 0
      %2982 = vmatpush1.bf16.msra.mxu0 0
      %2983 = vmatprep.subr.bf16.mxu0 0
      %2984 = vmatpush1.bf16.msra.mxu0 0
      %2985 = vmatprep.subr.bf16.mxu0 0
      %2986 = vmatpush1.bf16.msra.mxu0 0
      %2987 = vmatprep.subr.bf16.mxu0 0
      %2988 = vmatpush1.bf16.msra.mxu0 %v2959
      %2989 = vmatprep.subr.bf16.mxu0 0
      %2990 = vmatpush2.bf16.msra.mxu0 0
      %2991 = vmatprep.subr.bf16.mxu0 0
      %2992 = vmatpush2.bf16.msra.mxu0 0
      %2993 = vmatprep.subr.bf16.mxu0 0
      %2994 = vmatpush2.bf16.msra.mxu0 0
      %2995 = vmatprep.subr.bf16.mxu0 0
      %2996 = vmatpush2.bf16.msra.mxu0 0
      %2997 = vmatprep.subr.bf16.mxu0 0
      %2998 = vmatpush2.bf16.msra.mxu0 0
      %2999 = vmatprep.subr.bf16.mxu0 0
      %3000 = vmatpush2.bf16.msra.mxu0 0
      %3001 = vmatprep.subr.bf16.mxu0 0
      %3002 = vmatpush2.bf16.msra.mxu0 0
      %3003 = vmatprep.subr.bf16.mxu0 0
      %3004 = vmatpush2.bf16.msra.mxu0 0
      %3005 = vmatprep.mubr.bf16.mxu0 0
      %3006 = vmatmul.mubr.bf16.gmra.mxu0 %v811
      %v3007 = vpop.f32.mrf.mxu0
      %v3008 = vadd.f32 0.0, %v3007
      %v3009 = vpop.f32.mrf.mxu0
      %v3010 = vpop.f32.mrf.mxu0
      %v3011 = vadd.f32 0.0, %v3010
      %v3012 = vpop.f32.mrf.mxu0
      %3013 = vmatprep.mubr.bf16.mxu0 0
      %3014 = vmatmul.mubr.bf16.gmra.mxu0 %v814
      %v3015 = vpop.f32.mrf.mxu0
      %v3016 = vadd.f32 0.0, %v3015
      %v3017 = vpop.f32.mrf.mxu0
      %v3018 = vpop.f32.mrf.mxu0
      %v3019 = vadd.f32 0.0, %v3018
      %v3020 = vpop.f32.mrf.mxu0
      %3021 = vmatprep.mubr.bf16.mxu0 0
      %3022 = vmatmul.mubr.bf16.gmra.mxu0 %v817
      %v3023 = vpop.f32.mrf.mxu0
      %v3024 = vadd.f32 0.0, %v3023
      %v3025 = vpop.f32.mrf.mxu0
      %v3026 = vpop.f32.mrf.mxu0
      %v3027 = vadd.f32 0.0, %v3026
      %v3028 = vpop.f32.mrf.mxu0
      %3029 = vmatprep.mubr.bf16.mxu0 0
      %3030 = vmatmul.mubr.bf16.gmra.mxu0 %v2962
      %v3031 = vpop.f32.mrf.mxu0
      %v3032 = vadd.f32 0.0, %v3031
      %v3033 = vpop.f32.mrf.mxu0
      %v3034 = vpop.f32.mrf.mxu0
      %v3035 = vadd.f32 0.0, %v3034
      %v3036 = vpop.f32.mrf.mxu0
      %3037 = vmatprep.mubr.bf16.mxu0 0
      %3038 = vmatmul.mubr.bf16.gmra.mxu0 %v823
      %v3039 = vpop.f32.mrf.mxu0
      %v3040 = vadd.f32 0.0, %v3039
      %v3041 = vpop.f32.mrf.mxu0
      %v3042 = vpop.f32.mrf.mxu0
      %v3043 = vadd.f32 0.0, %v3042
      %v3044 = vpop.f32.mrf.mxu0
      %3045 = vmatprep.mubr.bf16.mxu0 0
      %3046 = vmatmul.mubr.bf16.gmra.mxu0 %v826
      %v3047 = vpop.f32.mrf.mxu0
      %v3048 = vadd.f32 0.0, %v3047
      %v3049 = vpop.f32.mrf.mxu0
      %v3050 = vpop.f32.mrf.mxu0
      %v3051 = vadd.f32 0.0, %v3050
      %v3052 = vpop.f32.mrf.mxu0
      %3053 = vmatprep.mubr.bf16.mxu0 0
      %3054 = vmatmul.mubr.bf16.gmra.mxu0 %v829
      %v3055 = vpop.f32.mrf.mxu0
      %v3056 = vadd.f32 0.0, %v3055
      %v3057 = vpop.f32.mrf.mxu0
      %v3058 = vpop.f32.mrf.mxu0
      %v3059 = vadd.f32 0.0, %v3058
      %v3060 = vpop.f32.mrf.mxu0
      %3061 = vmatprep.mubr.bf16.mxu0 0
      %3062 = vmatmul.mubr.bf16.gmra.mxu0 %v2965
      %v3063 = vpop.f32.mrf.mxu0
      %v3064 = vadd.f32 0.0, %v3063
      %v3065 = vpop.f32.mrf.mxu0
      %v3066 = vpop.f32.mrf.mxu0
      %v3067 = vadd.f32 0.0, %v3066
      %v3068 = vpop.f32.mrf.mxu0
      %3069 = vmatprep.mubr.bf16.mxu0 0
      %3070 = vmatmul.mubr.bf16.gmra.mxu0 %v835
      %v3071 = vpop.f32.mrf.mxu0
      %v3072 = vadd.f32 0.0, %v3071
      %v3073 = vpop.f32.mrf.mxu0
      %v3074 = vpop.f32.mrf.mxu0
      %v3075 = vadd.f32 0.0, %v3074
      %v3076 = vpop.f32.mrf.mxu0
      %3077 = vmatprep.mubr.bf16.mxu0 0
      %3078 = vmatmul.mubr.bf16.gmra.mxu0 %v838
      %v3079 = vpop.f32.mrf.mxu0
      %v3080 = vadd.f32 0.0, %v3079
      %v3081 = vpop.f32.mrf.mxu0
      %v3082 = vpop.f32.mrf.mxu0
      %v3083 = vadd.f32 0.0, %v3082
      %v3084 = vpop.f32.mrf.mxu0
      %3085 = vmatprep.mubr.bf16.mxu0 0
      %3086 = vmatmul.mubr.bf16.gmra.mxu0 %v841
      %v3087 = vpop.f32.mrf.mxu0
      %v3088 = vadd.f32 0.0, %v3087
      %v3089 = vpop.f32.mrf.mxu0
      %v3090 = vpop.f32.mrf.mxu0
      %v3091 = vadd.f32 0.0, %v3090
      %v3092 = vpop.f32.mrf.mxu0
      %3093 = vmatprep.mubr.bf16.mxu0 0
      %3094 = vmatmul.mubr.bf16.gmra.mxu0 %v2968
      %v3095 = vpop.f32.mrf.mxu0
      %v3096 = vadd.f32 0.0, %v3095
      %v3097 = vpop.f32.mrf.mxu0
      %v3098 = vpop.f32.mrf.mxu0
      %v3099 = vadd.f32 0.0, %v3098
      %v3100 = vpop.f32.mrf.mxu0
      %3101 = vmatprep.mubr.bf16.mxu0 0
      %3102 = vmatmul.mubr.bf16.gmra.mxu0 %v847
      %v3103 = vpop.f32.mrf.mxu0
      %v3104 = vadd.f32 0.0, %v3103
      %v3105 = vpop.f32.mrf.mxu0
      %v3106 = vpop.f32.mrf.mxu0
      %v3107 = vadd.f32 0.0, %v3106
      %v3108 = vpop.f32.mrf.mxu0
      %3109 = vmatprep.mubr.bf16.mxu0 0
      %3110 = vmatmul.mubr.bf16.gmra.mxu0 %v850
      %v3111 = vpop.f32.mrf.mxu0
      %v3112 = vadd.f32 0.0, %v3111
      %v3113 = vpop.f32.mrf.mxu0
      %v3114 = vpop.f32.mrf.mxu0
      %v3115 = vadd.f32 0.0, %v3114
      %v3116 = vpop.f32.mrf.mxu0
      %3117 = vmatprep.mubr.bf16.mxu0 0
      %3118 = vmatmul.mubr.bf16.gmra.mxu0 %v853
      %v3119 = vpop.f32.mrf.mxu0
      %v3120 = vadd.f32 0.0, %v3119
      %v3121 = vpop.f32.mrf.mxu0
      %v3122 = vpop.f32.mrf.mxu0
      %v3123 = vadd.f32 0.0, %v3122
      %v3124 = vpop.f32.mrf.mxu0
      %3125 = vmatprep.mubr.bf16.mxu0 0
      %3126 = vmatmul.mubr.bf16.gmra.mxu0 %v2971
      %v3127 = vpop.f32.mrf.mxu0
      %v3128 = vadd.f32 0.0, %v3127
      %v3129 = vpop.f32.mrf.mxu0
      %v3130 = vpop.f32.mrf.mxu0
      %v3131 = vadd.f32 0.0, %v3130
      %v3132 = vpop.f32.mrf.mxu0
      %3133 = vdwg.mxu0
      %v3134 = vadd.f32 %v2856, %v3008
      %v3135 = vadd.f32 %v2857, %v3011
      %v3136 = vadd.f32 %v2858, %v3016
      %v3137 = vadd.f32 %v2859, %v3019
      %v3138 = vadd.f32 %v2860, %v3024
      %v3139 = vadd.f32 %v2861, %v3027
      %v3140 = vadd.f32 %v2862, %v3032
      %v3141 = vadd.f32 %v2863, %v3035
      %v3142 = vadd.f32 %v2864, %v3040
      %v3143 = vadd.f32 %v2865, %v3043
      %v3144 = vadd.f32 %v2866, %v3048
      %v3145 = vadd.f32 %v2867, %v3051
      %v3146 = vadd.f32 %v2868, %v3056
      %v3147 = vadd.f32 %v2869, %v3059
      %v3148 = vadd.f32 %v2870, %v3064
      %v3149 = vadd.f32 %v2871, %v3067
      %v3150 = vadd.f32 %v2872, %v3072
      %v3151 = vadd.f32 %v2873, %v3075
      %v3152 = vadd.f32 %v2874, %v3080
      %v3153 = vadd.f32 %v2875, %v3083
      %v3154 = vadd.f32 %v2876, %v3088
      %v3155 = vadd.f32 %v2877, %v3091
      %v3156 = vadd.f32 %v2878, %v3096
      %v3157 = vadd.f32 %v2879, %v3099
      %v3158 = vadd.f32 %v2880, %v3104
      %v3159 = vadd.f32 %v2881, %v3107
      %v3160 = vadd.f32 %v2882, %v3112
      %v3161 = vadd.f32 %v2883, %v3115
      %v3162 = vadd.f32 %v2884, %v3120
      %v3163 = vadd.f32 %v2885, %v3123
      %v3164 = vadd.f32 %v2886, %v3128
      %v3165 = vadd.f32 %v2887, %v3131
      %v3170 = vrot.slane %v234, 5
      %v3171 = vrot.slane %v3170, 4
      %v3172 = vrot.slane %v235, 5
      %v3173 = vsel %vm1345, %v3171, %v3172
      %v3174 = vrot.slane %v254, 5
      %v3175 = vrot.slane %v3174, 4
      %v3176 = vrot.slane %v255, 5
      %v3177 = vsel %vm1345, %v3175, %v3176
      %v3178 = vrot.slane %v274, 5
      %v3179 = vrot.slane %v3178, 4
      %v3180 = vrot.slane %v275, 5
      %v3181 = vsel %vm1345, %v3179, %v3180
      %v3182 = vrot.slane %v294, 5
      %v3183 = vrot.slane %v3182, 4
      %v3184 = vrot.slane %v295, 5
      %v3185 = vsel %vm1345, %v3183, %v3184
      %s3186 = scalar_lea.vmem %s1, 64
      %v3187 = vld [vmem:[%s3186] sm:$0xf]
      %v3188 = vld [vmem:[%s3186 + $0x4] sm:$0xf]
      %v3189 = vunpack.c.l.b16 %v3173
      %v3190 = vunpack.c.l.b16 %v3177
      %v3191 = vunpack.c.l.b16 %v3181
      %v3192 = vunpack.c.l.b16 %v3185
      %v3193 = vpack.c.b16 %v3189, %v2395
      %v3194 = vpack.c.b16 %v3190, %v2396
      %v3195 = vpack.c.b16 %v3191, %v2397
      %v3196 = vpack.c.b16 %v3192, %v2398
      %v3199 = vunpack.c.l.b16 %v3187
      %v3200 = vunpack.c.l.b16 %v3188
      %v3201 = vpack.c.b16 %v3200, %v3199
      %v3204 = vsel %vm806, %v3193, 0
      %v3207 = vsel %vm806, %v3194, 0
      %v3210 = vsel %vm806, %v3195, 0
      %v3213 = vsel %vm806, %v3196, 0
      %3215 = vmatprep.subr.bf16.mxu0 0
      %3216 = vmatpush1.bf16.msra.mxu0 0
      %3217 = vmatprep.subr.bf16.mxu0 0
      %3218 = vmatpush1.bf16.msra.mxu0 0
      %3219 = vmatprep.subr.bf16.mxu0 0
      %3220 = vmatpush1.bf16.msra.mxu0 0
      %3221 = vmatprep.subr.bf16.mxu0 0
      %3222 = vmatpush1.bf16.msra.mxu0 0
      %3223 = vmatprep.subr.bf16.mxu0 0
      %3224 = vmatpush1.bf16.msra.mxu0 0
      %3225 = vmatprep.subr.bf16.mxu0 0
      %3226 = vmatpush1.bf16.msra.mxu0 0
      %3227 = vmatprep.subr.bf16.mxu0 0
      %3228 = vmatpush1.bf16.msra.mxu0 0
      %3229 = vmatprep.subr.bf16.mxu0 0
      %3230 = vmatpush1.bf16.msra.mxu0 %v3201
      %3231 = vmatprep.subr.bf16.mxu0 0
      %3232 = vmatpush2.bf16.msra.mxu0 0
      %3233 = vmatprep.subr.bf16.mxu0 0
      %3234 = vmatpush2.bf16.msra.mxu0 0
      %3235 = vmatprep.subr.bf16.mxu0 0
      %3236 = vmatpush2.bf16.msra.mxu0 0
      %3237 = vmatprep.subr.bf16.mxu0 0
      %3238 = vmatpush2.bf16.msra.mxu0 0
      %3239 = vmatprep.subr.bf16.mxu0 0
      %3240 = vmatpush2.bf16.msra.mxu0 0
      %3241 = vmatprep.subr.bf16.mxu0 0
      %3242 = vmatpush2.bf16.msra.mxu0 0
      %3243 = vmatprep.subr.bf16.mxu0 0
      %3244 = vmatpush2.bf16.msra.mxu0 0
      %3245 = vmatprep.subr.bf16.mxu0 0
      %3246 = vmatpush2.bf16.msra.mxu0 0
      %3247 = vmatprep.mubr.bf16.mxu0 0
      %3248 = vmatmul.mubr.bf16.gmra.mxu0 %v1535
      %v3249 = vpop.f32.mrf.mxu0
      %v3250 = vadd.f32 0.0, %v3249
      %v3251 = vpop.f32.mrf.mxu0
      %v3252 = vpop.f32.mrf.mxu0
      %v3253 = vadd.f32 0.0, %v3252
      %v3254 = vpop.f32.mrf.mxu0
      %3255 = vmatprep.mubr.bf16.mxu0 0
      %3256 = vmatmul.mubr.bf16.gmra.mxu0 %v1538
      %v3257 = vpop.f32.mrf.mxu0
      %v3258 = vadd.f32 0.0, %v3257
      %v3259 = vpop.f32.mrf.mxu0
      %v3260 = vpop.f32.mrf.mxu0
      %v3261 = vadd.f32 0.0, %v3260
      %v3262 = vpop.f32.mrf.mxu0
      %3263 = vmatprep.mubr.bf16.mxu0 0
      %3264 = vmatmul.mubr.bf16.gmra.mxu0 %v1541
      %v3265 = vpop.f32.mrf.mxu0
      %v3266 = vadd.f32 0.0, %v3265
      %v3267 = vpop.f32.mrf.mxu0
      %v3268 = vpop.f32.mrf.mxu0
      %v3269 = vadd.f32 0.0, %v3268
      %v3270 = vpop.f32.mrf.mxu0
      %3271 = vmatprep.mubr.bf16.mxu0 0
      %3272 = vmatmul.mubr.bf16.gmra.mxu0 %v3204
      %v3273 = vpop.f32.mrf.mxu0
      %v3274 = vadd.f32 0.0, %v3273
      %v3275 = vpop.f32.mrf.mxu0
      %v3276 = vpop.f32.mrf.mxu0
      %v3277 = vadd.f32 0.0, %v3276
      %v3278 = vpop.f32.mrf.mxu0
      %3279 = vmatprep.mubr.bf16.mxu0 0
      %3280 = vmatmul.mubr.bf16.gmra.mxu0 %v1547
      %v3281 = vpop.f32.mrf.mxu0
      %v3282 = vadd.f32 0.0, %v3281
      %v3283 = vpop.f32.mrf.mxu0
      %v3284 = vpop.f32.mrf.mxu0
      %v3285 = vadd.f32 0.0, %v3284
      %v3286 = vpop.f32.mrf.mxu0
      %3287 = vmatprep.mubr.bf16.mxu0 0
      %3288 = vmatmul.mubr.bf16.gmra.mxu0 %v1550
      %v3289 = vpop.f32.mrf.mxu0
      %v3290 = vadd.f32 0.0, %v3289
      %v3291 = vpop.f32.mrf.mxu0
      %v3292 = vpop.f32.mrf.mxu0
      %v3293 = vadd.f32 0.0, %v3292
      %v3294 = vpop.f32.mrf.mxu0
      %3295 = vmatprep.mubr.bf16.mxu0 0
      %3296 = vmatmul.mubr.bf16.gmra.mxu0 %v1553
      %v3297 = vpop.f32.mrf.mxu0
      %v3298 = vadd.f32 0.0, %v3297
      %v3299 = vpop.f32.mrf.mxu0
      %v3300 = vpop.f32.mrf.mxu0
      %v3301 = vadd.f32 0.0, %v3300
      %v3302 = vpop.f32.mrf.mxu0
      %3303 = vmatprep.mubr.bf16.mxu0 0
      %3304 = vmatmul.mubr.bf16.gmra.mxu0 %v3207
      %v3305 = vpop.f32.mrf.mxu0
      %v3306 = vadd.f32 0.0, %v3305
      %v3307 = vpop.f32.mrf.mxu0
      %v3308 = vpop.f32.mrf.mxu0
      %v3309 = vadd.f32 0.0, %v3308
      %v3310 = vpop.f32.mrf.mxu0
      %3311 = vmatprep.mubr.bf16.mxu0 0
      %3312 = vmatmul.mubr.bf16.gmra.mxu0 %v1559
      %v3313 = vpop.f32.mrf.mxu0
      %v3314 = vadd.f32 0.0, %v3313
      %v3315 = vpop.f32.mrf.mxu0
      %v3316 = vpop.f32.mrf.mxu0
      %v3317 = vadd.f32 0.0, %v3316
      %v3318 = vpop.f32.mrf.mxu0
      %3319 = vmatprep.mubr.bf16.mxu0 0
      %3320 = vmatmul.mubr.bf16.gmra.mxu0 %v1562
      %v3321 = vpop.f32.mrf.mxu0
      %v3322 = vadd.f32 0.0, %v3321
      %v3323 = vpop.f32.mrf.mxu0
      %v3324 = vpop.f32.mrf.mxu0
      %v3325 = vadd.f32 0.0, %v3324
      %v3326 = vpop.f32.mrf.mxu0
      %3327 = vmatprep.mubr.bf16.mxu0 0
      %3328 = vmatmul.mubr.bf16.gmra.mxu0 %v1565
      %v3329 = vpop.f32.mrf.mxu0
      %v3330 = vadd.f32 0.0, %v3329
      %v3331 = vpop.f32.mrf.mxu0
      %v3332 = vpop.f32.mrf.mxu0
      %v3333 = vadd.f32 0.0, %v3332
      %v3334 = vpop.f32.mrf.mxu0
      %3335 = vmatprep.mubr.bf16.mxu0 0
      %3336 = vmatmul.mubr.bf16.gmra.mxu0 %v3210
      %v3337 = vpop.f32.mrf.mxu0
      %v3338 = vadd.f32 0.0, %v3337
      %v3339 = vpop.f32.mrf.mxu0
      %v3340 = vpop.f32.mrf.mxu0
      %v3341 = vadd.f32 0.0, %v3340
      %v3342 = vpop.f32.mrf.mxu0
      %3343 = vmatprep.mubr.bf16.mxu0 0
      %3344 = vmatmul.mubr.bf16.gmra.mxu0 %v1571
      %v3345 = vpop.f32.mrf.mxu0
      %v3346 = vadd.f32 0.0, %v3345
      %v3347 = vpop.f32.mrf.mxu0
      %v3348 = vpop.f32.mrf.mxu0
      %v3349 = vadd.f32 0.0, %v3348
      %v3350 = vpop.f32.mrf.mxu0
      %3351 = vmatprep.mubr.bf16.mxu0 0
      %3352 = vmatmul.mubr.bf16.gmra.mxu0 %v1574
      %v3353 = vpop.f32.mrf.mxu0
      %v3354 = vadd.f32 0.0, %v3353
      %v3355 = vpop.f32.mrf.mxu0
      %v3356 = vpop.f32.mrf.mxu0
      %v3357 = vadd.f32 0.0, %v3356
      %v3358 = vpop.f32.mrf.mxu0
      %3359 = vmatprep.mubr.bf16.mxu0 0
      %3360 = vmatmul.mubr.bf16.gmra.mxu0 %v1577
      %v3361 = vpop.f32.mrf.mxu0
      %v3362 = vadd.f32 0.0, %v3361
      %v3363 = vpop.f32.mrf.mxu0
      %v3364 = vpop.f32.mrf.mxu0
      %v3365 = vadd.f32 0.0, %v3364
      %v3366 = vpop.f32.mrf.mxu0
      %3367 = vmatprep.mubr.bf16.mxu0 0
      %3368 = vmatmul.mubr.bf16.gmra.mxu0 %v3213
      %v3369 = vpop.f32.mrf.mxu0
      %v3370 = vadd.f32 0.0, %v3369
      %v3371 = vpop.f32.mrf.mxu0
      %v3372 = vpop.f32.mrf.mxu0
      %v3373 = vadd.f32 0.0, %v3372
      %v3374 = vpop.f32.mrf.mxu0
      %3375 = vdwg.mxu0
      %v3376 = vadd.f32 %v3134, %v3250
      %v3377 = vadd.f32 %v3135, %v3253
      %v3378 = vadd.f32 %v3136, %v3258
      %v3379 = vadd.f32 %v3137, %v3261
      %v3380 = vadd.f32 %v3138, %v3266
      %v3381 = vadd.f32 %v3139, %v3269
      %v3382 = vadd.f32 %v3140, %v3274
      %v3383 = vadd.f32 %v3141, %v3277
      %v3384 = vadd.f32 %v3142, %v3282
      %v3385 = vadd.f32 %v3143, %v3285
      %v3386 = vadd.f32 %v3144, %v3290
      %v3387 = vadd.f32 %v3145, %v3293
      %v3388 = vadd.f32 %v3146, %v3298
      %v3389 = vadd.f32 %v3147, %v3301
      %v3390 = vadd.f32 %v3148, %v3306
      %v3391 = vadd.f32 %v3149, %v3309
      %v3392 = vadd.f32 %v3150, %v3314
      %v3393 = vadd.f32 %v3151, %v3317
      %v3394 = vadd.f32 %v3152, %v3322
      %v3395 = vadd.f32 %v3153, %v3325
      %v3396 = vadd.f32 %v3154, %v3330
      %v3397 = vadd.f32 %v3155, %v3333
      %v3398 = vadd.f32 %v3156, %v3338
      %v3399 = vadd.f32 %v3157, %v3341
      %v3400 = vadd.f32 %v3158, %v3346
      %v3401 = vadd.f32 %v3159, %v3349
      %v3402 = vadd.f32 %v3160, %v3354
      %v3403 = vadd.f32 %v3161, %v3357
      %v3404 = vadd.f32 %v3162, %v3362
      %v3405 = vadd.f32 %v3163, %v3365
      %v3406 = vadd.f32 %v3164, %v3370
      %v3407 = vadd.f32 %v3165, %v3373
      %v3408 = vld [vmem:[%s2] sm:$0x1]
      %v3410 = vlaneseq
      %v3411 = vshrl.u32 %v3410, 7
      %v3412 = vsub.s32 0, %v3411
      %v3413 = vrot.slane %v3408, %v3412
      %v3415 = vadd.f32 %v3376, %v3413
      %v3416 = vadd.f32 %v3377, %v3413
      %v3417 = vadd.f32 %v3378, %v3413
      %v3418 = vadd.f32 %v3379, %v3413
      %v3419 = vadd.f32 %v3380, %v3413
      %v3420 = vadd.f32 %v3381, %v3413
      %v3421 = vadd.f32 %v3382, %v3413
      %v3422 = vadd.f32 %v3383, %v3413
      %v3423 = vadd.f32 %v3384, %v3413
      %v3424 = vadd.f32 %v3385, %v3413
      %v3425 = vadd.f32 %v3386, %v3413
      %v3426 = vadd.f32 %v3387, %v3413
      %v3427 = vadd.f32 %v3388, %v3413
      %v3428 = vadd.f32 %v3389, %v3413
      %v3429 = vadd.f32 %v3390, %v3413
      %v3430 = vadd.f32 %v3391, %v3413
      %v3431 = vadd.f32 %v3392, %v3413
      %v3432 = vadd.f32 %v3393, %v3413
      %v3433 = vadd.f32 %v3394, %v3413
      %v3434 = vadd.f32 %v3395, %v3413
      %v3435 = vadd.f32 %v3396, %v3413
      %v3436 = vadd.f32 %v3397, %v3413
      %v3437 = vadd.f32 %v3398, %v3413
      %v3438 = vadd.f32 %v3399, %v3413
      %v3439 = vadd.f32 %v3400, %v3413
      %v3440 = vadd.f32 %v3401, %v3413
      %v3441 = vadd.f32 %v3402, %v3413
      %v3442 = vadd.f32 %v3403, %v3413
      %v3443 = vadd.f32 %v3404, %v3413
      %v3444 = vadd.f32 %v3405, %v3413
      %v3445 = vadd.f32 %v3406, %v3413
      %v3446 = vadd.f32 %v3407, %v3413
      %v3447 = vmax.f32 %v3415, 0.0
      %v3448 = vmax.f32 %v3416, 0.0
      %v3449 = vmax.f32 %v3417, 0.0
      %v3450 = vmax.f32 %v3418, 0.0
      %v3451 = vmax.f32 %v3419, 0.0
      %v3452 = vmax.f32 %v3420, 0.0
      %v3453 = vmax.f32 %v3421, 0.0
      %v3454 = vmax.f32 %v3422, 0.0
      %v3455 = vmax.f32 %v3423, 0.0
      %v3456 = vmax.f32 %v3424, 0.0
      %v3457 = vmax.f32 %v3425, 0.0
      %v3458 = vmax.f32 %v3426, 0.0
      %v3459 = vmax.f32 %v3427, 0.0
      %v3460 = vmax.f32 %v3428, 0.0
      %v3461 = vmax.f32 %v3429, 0.0
      %v3462 = vmax.f32 %v3430, 0.0
      %v3463 = vmax.f32 %v3431, 0.0
      %v3464 = vmax.f32 %v3432, 0.0
      %v3465 = vmax.f32 %v3433, 0.0
      %v3466 = vmax.f32 %v3434, 0.0
      %v3467 = vmax.f32 %v3435, 0.0
      %v3468 = vmax.f32 %v3436, 0.0
      %v3469 = vmax.f32 %v3437, 0.0
      %v3470 = vmax.f32 %v3438, 0.0
      %v3471 = vmax.f32 %v3439, 0.0
      %v3472 = vmax.f32 %v3440, 0.0
      %v3473 = vmax.f32 %v3441, 0.0
      %v3474 = vmax.f32 %v3442, 0.0
      %v3475 = vmax.f32 %v3443, 0.0
      %v3476 = vmax.f32 %v3444, 0.0
      %v3477 = vmax.f32 %v3445, 0.0
      %v3478 = vmax.f32 %v3446, 0.0
      %v3479 = vpack.c.bf16 %v3447, %v3447
      %v3480 = vpack.c.bf16 %v3448, %v3448
      %v3481 = vpack.c.bf16 %v3449, %v3449
      %v3482 = vpack.c.bf16 %v3450, %v3450
      %v3483 = vpack.c.bf16 %v3451, %v3451
      %v3484 = vpack.c.bf16 %v3452, %v3452
      %v3485 = vpack.c.bf16 %v3453, %v3453
      %v3486 = vpack.c.bf16 %v3454, %v3454
      %v3487 = vpack.c.bf16 %v3455, %v3455
      %v3488 = vpack.c.bf16 %v3456, %v3456
      %v3489 = vpack.c.bf16 %v3457, %v3457
      %v3490 = vpack.c.bf16 %v3458, %v3458
      %v3491 = vpack.c.bf16 %v3459, %v3459
      %v3492 = vpack.c.bf16 %v3460, %v3460
      %v3493 = vpack.c.bf16 %v3461, %v3461
      %v3494 = vpack.c.bf16 %v3462, %v3462
      %v3495 = vpack.c.bf16 %v3463, %v3463
      %v3496 = vpack.c.bf16 %v3464, %v3464
      %v3497 = vpack.c.bf16 %v3465, %v3465
      %v3498 = vpack.c.bf16 %v3466, %v3466
      %v3499 = vpack.c.bf16 %v3467, %v3467
      %v3500 = vpack.c.bf16 %v3468, %v3468
      %v3501 = vpack.c.bf16 %v3469, %v3469
      %v3502 = vpack.c.bf16 %v3470, %v3470
      %v3503 = vpack.c.bf16 %v3471, %v3471
      %v3504 = vpack.c.bf16 %v3472, %v3472
      %v3505 = vpack.c.bf16 %v3473, %v3473
      %v3506 = vpack.c.bf16 %v3474, %v3474
      %v3507 = vpack.c.bf16 %v3475, %v3475
      %v3508 = vpack.c.bf16 %v3476, %v3476
      %v3509 = vpack.c.bf16 %v3477, %v3477
      %v3510 = vpack.c.bf16 %v3478, %v3478
      %vm3511 = vcmask 257024
      %3512 = vst.msk [vmem:[%s213] sm:$0xf] %vm3511, %v3479
      %3513 = vst.msk [vmem:[%s213 + $0x4] sm:$0xf] %vm3511, %v3480
      %3514 = vst.msk [vmem:[%s213 + $0x8] sm:$0xf] %vm3511, %v3481
      %3515 = vst.msk [vmem:[%s213 + $0xc] sm:$0xf] %vm3511, %v3482
      %3516 = vst.msk [vmem:[%s213 + $0x10] sm:$0xf] %vm3511, %v3483
      %3517 = vst.msk [vmem:[%s213 + $0x14] sm:$0xf] %vm3511, %v3484
      %3518 = vst.msk [vmem:[%s213 + $0x18] sm:$0xf] %vm3511, %v3485
      %3519 = vst.msk [vmem:[%s213 + $0x1c] sm:$0xf] %vm3511, %v3486
      %3520 = vst.msk [vmem:[%s213 + $0x20] sm:$0xf] %vm3511, %v3487
      %3521 = vst.msk [vmem:[%s213 + $0x24] sm:$0xf] %vm3511, %v3488
      %3522 = vst.msk [vmem:[%s213 + $0x28] sm:$0xf] %vm3511, %v3489
      %3523 = vst.msk [vmem:[%s213 + $0x2c] sm:$0xf] %vm3511, %v3490
      %3524 = vst.msk [vmem:[%s213 + $0x30] sm:$0xf] %vm3511, %v3491
      %3525 = vst.msk [vmem:[%s213 + $0x34] sm:$0xf] %vm3511, %v3492
      %3526 = vst.msk [vmem:[%s213 + $0x38] sm:$0xf] %vm3511, %v3493
      %3527 = vst.msk [vmem:[%s213 + $0x3c] sm:$0xf] %vm3511, %v3494
      %3528 = vst.msk [vmem:[%s213 + $0x40] sm:$0xf] %vm3511, %v3495
      %3529 = vst.msk [vmem:[%s213 + $0x44] sm:$0xf] %vm3511, %v3496
      %3530 = vst.msk [vmem:[%s213 + $0x48] sm:$0xf] %vm3511, %v3497
      %3531 = vst.msk [vmem:[%s213 + $0x4c] sm:$0xf] %vm3511, %v3498
      %3532 = vst.msk [vmem:[%s213 + $0x50] sm:$0xf] %vm3511, %v3499
      %3533 = vst.msk [vmem:[%s213 + $0x54] sm:$0xf] %vm3511, %v3500
      %3534 = vst.msk [vmem:[%s213 + $0x58] sm:$0xf] %vm3511, %v3501
      %3535 = vst.msk [vmem:[%s213 + $0x5c] sm:$0xf] %vm3511, %v3502
      %3536 = vst.msk [vmem:[%s213 + $0x60] sm:$0xf] %vm3511, %v3503
      %3537 = vst.msk [vmem:[%s213 + $0x64] sm:$0xf] %vm3511, %v3504
      %3538 = vst.msk [vmem:[%s213 + $0x68] sm:$0xf] %vm3511, %v3505
      %3539 = vst.msk [vmem:[%s213 + $0x6c] sm:$0xf] %vm3511, %v3506
      %3540 = vst.msk [vmem:[%s213 + $0x70] sm:$0xf] %vm3511, %v3507
      %3541 = vst.msk [vmem:[%s213 + $0x74] sm:$0xf] %vm3511, %v3508
      %3542 = vst.msk [vmem:[%s213 + $0x78] sm:$0xf] %vm3511, %v3509
      %3543 = vst.msk [vmem:[%s213 + $0x7c] sm:$0xf] %vm3511, %v3510
      %s3544 = smul.u32 4, %s19
      %p3545 = scmp.lt.s32.totalorder %s18, 1
      %s3546 = scalar_select %p3545, %s18, 1
      %p3547 = scmp.lt.s32.totalorder %s3544, 3
      %s3548 = scalar_select %p3547, %s3544, 3
      %s3549 = smul.addr %s3548, 8
      %s3550 = smul.addr %s3546, 32
      %s3551 = sadd.s32 %s3549, %s3550
      %s3552 = smul.addr %s3551, 4
      %s3553 = scalar_lea.vmem %s3, %s3552
      // Predicated region
      $region33: #{mixed_3b_forward.9} parent=31 // pred_check
        %p3554 = pneg %p116
      $region34: #{mixed_3b_forward.9} parent=31 // pred_check_branch
        %3556 = sbr.rel (%p3554) target = $region36
      $region35: #{mixed_3b_forward.9} parent=31 // pred_region
        %s3557 = smul.u32 4, %s19
      $region36: #{mixed_3b_forward.9} parent=31 // pred_fallthru
        _
    $region32: #{mixed_3b_forward.9} parent=5 // pred_fallthru
      _
    %p3558 = scmp.le.s32.totalorder 2, %s9
    // Predicated region
    $region37: #{mixed_3b_forward.9} parent=5 // pred_check
      %p3559 = pneg %p3558
    $region38: #{mixed_3b_forward.9} parent=5 // pred_check_branch
      %3561 = sbr.rel (%p3559) target = $region40
    $region39: #{mixed_3b_forward.9} parent=5 // pred_region
      %s3562 = ssub.s32 %s9, 2
      // Predicated region
      $region41: #{mixed_3b_forward.9} parent=39 // pred_check
        %p3563 = pneg %p122
      $region42: #{mixed_3b_forward.9} parent=39 // pred_check_branch
        %3565 = sbr.rel (%p3563) target = $region44
      $region43: #{mixed_3b_forward.9} parent=39 // pred_region
        %s3566 = smul.u32 4, %s21
        %p3567 = scmp.lt.s32.totalorder %s20, 1
        %s3568 = scalar_select %p3567, %s20, 1
        %p3569 = scmp.lt.s32.totalorder %s3566, 3
        %s3570 = scalar_select %p3569, %s3566, 3
        %s3571 = smul.addr %s3570, 8
        %s3572 = smul.addr %s3568, 32
        %s3573 = sadd.s32 %s3571, %s3572
        %s3574 = smul.addr %s3573, 4
        %s3575 = scalar_lea.vmem %s3, %s3574
      $region44: #{mixed_3b_forward.9} parent=39 // pred_fallthru
        _
    $region40: #{mixed_3b_forward.9} parent=5 // pred_fallthru
      _
  $region6: #{mixed_3b_forward.9} parent=0 // loop_footer
    %s13 = sadd.s32 1, %s9
  $region7: #{mixed_3b_forward.9} parent=0 // loop_footer_branch
    %8 = sbr.rel target = $region3
  $region8: #{mixed_3b_forward.9} parent=0 // loop_exit
    _

// kernel: mixed_3b_forward.8
$region0: #{mixed_3b_forward.8}
  #allocation0 [shape = 'u32[]', space=smem, size = 0x4, offset = 0x4, fixed_abs, tag = 'smem constant byte address 0x4 - core index']
  #allocation1 [shape = 'u32[144,128]{1,0:T(1,128)}', space=vmem, size = 0x12000, scoped, tag = 'internal scratch']
  %s0 = inlined_call_operand.vmem [shape: bf16[2,6,8,8,128], index: 0, kind: input, shape index: {}]
  %s1 = inlined_call_operand.vmem [shape: bf16[3,128,128], index: 1, kind: input, shape index: {}]
  %s2 = inlined_call_operand.vmem [shape: f32[1,128], index: 2, kind: input, shape index: {}]
  %s3 = inlined_call_operand.vmem [shape: f32[2,4,8,8,128], index: 3, kind: output, shape index: {}]
  %s4 = sld [smem:[#allocation0]]
  $region45: #{mixed_3b_forward.8} parent=0
    _
  %s6 = ssub.s32 1, %s4
  %s7 = scalar_select 0, %s6, %s4
  loop: start=0, step=1, limit=4
  $region2: #{mixed_3b_forward.8} parent=0 // loop_pre_header
    _
  $region3: #{mixed_3b_forward.8} parent=0 // loop_header
    %s9 = sphi 0, %s13
    %p10 = scmp.ge.s32.totalorder %s9, 4
    %s19 = sphi 0, %s21
    %s22 = sphi 0, %s19
    %s23 = sphi 0, %s22
    %s39 = sphi 0, %s23
    %s43 = sphi 0, %s43
    %s45 = sphi 0, %s43
    %s46 = sphi 0, %s45
    %s60 = sphi 0, %s46
    %s64 = sphi 0, %s64
    %s66 = sphi 0, %s64
    %s67 = sphi 0, %s66
    %s81 = sphi 0, %s67
    %s87 = sphi 0, %s89
    %s90 = sphi 0, %s87
    %s91 = sphi 0, %s90
    %s107 = sphi 0, %s91
  $region4: #{mixed_3b_forward.8} parent=0 // loop_header_branch
    %12 = sbr.rel (%p10) target = $region8
  $region5: #{mixed_3b_forward.8} parent=0 // loop_body
    %s14 = ssub.s32 %s9, 1
    %s15 = ssub.s32 %s9, 2
    %s16 = sadd.s32 %s9, 1
    %s17 = ssub.s32 %s9, %s16
    %p18 = scmp.eq.s32.totalorder %s17, 0
    %s20 = sadd.s32 %s19, 1
    %s21 = scalar_select %p18, %s19, %s20
    %p24 = pneg %p18
    %p25 = scmp.eq.s32.totalorder %s9, 1
    %p26 = por %p24, %p25
    %p27 = scmp.ne.s32.totalorder %s19, %s22
    %p28 = scmp.eq.s32.totalorder %s9, 0
    %p29 = por %p27, %p28
    %p30 = scmp.ne.s32.totalorder %s19, %s22
    %p31 = scmp.eq.s32.totalorder %s14, 1
    %p32 = por %p30, %p31
    %p33 = scmp.ne.s32.totalorder %s22, %s23
    %p34 = scmp.eq.s32.totalorder %s14, 0
    %p35 = por %p33, %p34
    %p36 = scmp.ne.s32.totalorder %s22, %s23
    %p37 = scmp.eq.s32.totalorder %s15, 1
    %p38 = por %p36, %p37
    %p40 = scmp.ne.s32.totalorder %s23, %s39
    %p41 = scmp.eq.s32.totalorder %s15, 0
    %p42 = por %p40, %p41
    %s44 = sadd.s32 %s43, 1
    %p47 = scmp.eq.s32.totalorder %s9, 1
    %p48 = scmp.ne.s32.totalorder %s43, %s45
    %p49 = scmp.eq.s32.totalorder %s9, 0
    %p50 = por %p48, %p49
    %p51 = scmp.ne.s32.totalorder %s43, %s45
    %p52 = scmp.eq.s32.totalorder %s14, 1
    %p53 = por %p51, %p52
    %p54 = scmp.ne.s32.totalorder %s45, %s46
    %p55 = scmp.eq.s32.totalorder %s14, 0
    %p56 = por %p54, %p55
    %p57 = scmp.ne.s32.totalorder %s45, %s46
    %p58 = scmp.eq.s32.totalorder %s15, 1
    %p59 = por %p57, %p58
    %p61 = scmp.ne.s32.totalorder %s46, %s60
    %p62 = scmp.eq.s32.totalorder %s15, 0
    %p63 = por %p61, %p62
    %s65 = sadd.s32 %s64, 1
    %p68 = scmp.eq.s32.totalorder %s9, 1
    %p69 = scmp.ne.s32.totalorder %s64, %s66
    %p70 = scmp.eq.s32.totalorder %s9, 0
    %p71 = por %p69, %p70
    %p72 = scmp.ne.s32.totalorder %s64, %s66
    %p73 = scmp.eq.s32.totalorder %s14, 1
    %p74 = por %p72, %p73
    %p75 = scmp.ne.s32.totalorder %s66, %s67
    %p76 = scmp.eq.s32.totalorder %s14, 0
    %p77 = por %p75, %p76
    %p78 = scmp.ne.s32.totalorder %s66, %s67
    %p79 = scmp.eq.s32.totalorder %s15, 1
    %p80 = por %p78, %p79
    %p82 = scmp.ne.s32.totalorder %s67, %s81
    %p83 = scmp.eq.s32.totalorder %s15, 0
    %p84 = por %p82, %p83
    %s85 = ssub.s32 %s9, %s16
    %p86 = scmp.eq.s32.totalorder %s85, 0
    %s88 = sadd.s32 %s87, 1
    %s89 = scalar_select %p86, %s87, %s88
    %p92 = pneg %p86
    %p93 = scmp.eq.s32.totalorder %s9, 1
    %p94 = por %p92, %p93
    %p95 = scmp.ne.s32.totalorder %s87, %s90
    %p96 = scmp.eq.s32.totalorder %s9, 0
    %p97 = por %p95, %p96
    %p98 = scmp.ne.s32.totalorder %s87, %s90
    %p99 = scmp.eq.s32.totalorder %s14, 1
    %p100 = por %p98, %p99
    %p101 = scmp.ne.s32.totalorder %s90, %s91
    %p102 = scmp.eq.s32.totalorder %s14, 0
    %p103 = por %p101, %p102
    %p104 = scmp.ne.s32.totalorder %s90, %s91
    %p105 = scmp.eq.s32.totalorder %s15, 1
    %p106 = por %p104, %p105
    %p108 = scmp.ne.s32.totalorder %s91, %s107
    %p109 = scmp.eq.s32.totalorder %s15, 0
    %p110 = por %p108, %p109
    %p111 = scmp.le.s32.totalorder 1, %s9
    %p112 = scmp.lt.s32.totalorder %s9, 3
    %p113 = pnand %p111, %p112
    %p114 = pneg %p113
    // Predicated region
    $region9: #{mixed_3b_forward.8} parent=5 // pred_check
      _
    $region10: #{mixed_3b_forward.8} parent=5 // pred_check_branch
      %116 = sbr.rel (%p113) target = $region12
    $region11: #{mixed_3b_forward.8} parent=5 // pred_region
      %s117 = ssub.s32 %s9, 1
      // Predicated region
      $region13: #{mixed_3b_forward.8} parent=11 // pred_check
        %p118 = pneg %p56
      $region14: #{mixed_3b_forward.8} parent=11 // pred_check_branch
        %120 = sbr.rel (%p118) target = $region16
      $region15: #{mixed_3b_forward.8} parent=11 // pred_region
        _
      $region16: #{mixed_3b_forward.8} parent=11 // pred_fallthru
        _
      // Predicated region
      $region17: #{mixed_3b_forward.8} parent=11 // pred_check
        %p121 = pneg %p77
      $region18: #{mixed_3b_forward.8} parent=11 // pred_check_branch
        %123 = sbr.rel (%p121) target = $region20
      $region19: #{mixed_3b_forward.8} parent=11 // pred_region
        _
      $region20: #{mixed_3b_forward.8} parent=11 // pred_fallthru
        _
    $region12: #{mixed_3b_forward.8} parent=5 // pred_fallthru
      _
    %p124 = scmp.lt.s32.totalorder %s9, 2
    // Predicated region
    $region21: #{mixed_3b_forward.8} parent=5 // pred_check
      %p125 = pneg %p124
    $region22: #{mixed_3b_forward.8} parent=5 // pred_check_branch
      %127 = sbr.rel (%p125) target = $region24
    $region23: #{mixed_3b_forward.8} parent=5 // pred_region
      // Predicated region
      $region25: #{mixed_3b_forward.8} parent=23 // pred_check
        %p128 = pneg %p29
      $region26: #{mixed_3b_forward.8} parent=23 // pred_check_branch
        %130 = sbr.rel (%p128) target = $region28
      $region27: #{mixed_3b_forward.8} parent=23 // pred_region
        %p131 = scmp.lt.s32.totalorder %s9, 1
        %s132 = scalar_select %p131, %s9, 1
        %s133 = smul.addr %s132, 48
        %s134 = smul.addr %s133, 4
        %s135 = scalar_lea.vmem %s0, %s134
      $region28: #{mixed_3b_forward.8} parent=23 // pred_fallthru
        _
    $region24: #{mixed_3b_forward.8} parent=5 // pred_fallthru
      _
    %p136 = scmp.le.s32.totalorder 1, %s9
    %p137 = scmp.lt.s32.totalorder %s9, 3
    %p138 = pnand %p136, %p137
    %p139 = pneg %p138
    // Predicated region
    $region29: #{mixed_3b_forward.8} parent=5 // pred_check
      _
    $region30: #{mixed_3b_forward.8} parent=5 // pred_check_branch
      %141 = sbr.rel (%p138) target = $region32
    $region31: #{mixed_3b_forward.8} parent=5 // pred_region
      %s142 = ssub.s32 %s9, 1
      %p143 = scmp.lt.s32.totalorder %s14, 1
      %s144 = scalar_select %p143, %s14, 1
      %s145 = smul.addr %s144, 48
      %s146 = smul.addr %s145, 4
      %s147 = scalar_lea.vmem %s0, %s146
      %p148 = pneg %p35
      %p149 = pneg %p32
      %p150 = pneg %p56
      %p151 = pneg %p53
      %p152 = pneg %p77
      %p153 = pneg %p74
      %p154 = pneg %p103
      %p155 = pneg %p100
      %p156 = scmp.lt.s32.totalorder %s14, 1
      %s157 = scalar_select %p156, %s14, 1
      %s158 = smul.addr %s157, 32
      %s159 = smul.addr %s158, 8
      %s160 = scalar_lea.vmem %s3, %s159
      %p161 = scmp.lt.s32.totalorder %s14, 1
      %s162 = scalar_select %p161, %s14, 1
      %s163 = smul.addr %s162, 48
      %s164 = smul.addr %s163, 4
      %s165 = scalar_lea.vmem %s0, %s164
      %p166 = scmp.lt.s32.totalorder %s14, 1
      %s167 = scalar_select %p166, %s14, 1
      %s168 = smul.addr %s167, 32
      %s169 = smul.addr %s168, 8
      %s170 = scalar_lea.vmem %s3, %s169
      %v172 = vld [vmem:[%s165] sm:$0xf]
      %v173 = vld [vmem:[%s165 + $0x4] sm:$0xf]
      %v174 = vld [vmem:[%s165 + $0x8] sm:$0xf]
      %v175 = vld [vmem:[%s165 + $0xc] sm:$0xf]
      %v176 = vld [vmem:[%s165 + $0x10] sm:$0xf]
      %v177 = vld [vmem:[%s165 + $0x14] sm:$0xf]
      %v178 = vld [vmem:[%s165 + $0x18] sm:$0xf]
      %v179 = vld [vmem:[%s165 + $0x1c] sm:$0xf]
      %v180 = vld [vmem:[%s165 + $0x20] sm:$0xf]
      %v181 = vld [vmem:[%s165 + $0x24] sm:$0xf]
      %v182 = vld [vmem:[%s165 + $0x28] sm:$0xf]
      %v183 = vld [vmem:[%s165 + $0x2c] sm:$0xf]
      %v184 = vld [vmem:[%s165 + $0x30] sm:$0xf]
      %v185 = vld [vmem:[%s165 + $0x34] sm:$0xf]
      %v186 = vld [vmem:[%s165 + $0x38] sm:$0xf]
      %v187 = vld [vmem:[%s165 + $0x3c] sm:$0xf]
      %v188 = vld [vmem:[%s165 + $0x40] sm:$0xf]
      %v189 = vld [vmem:[%s165 + $0x44] sm:$0xf]
      %v190 = vld [vmem:[%s165 + $0x48] sm:$0xf]
      %v191 = vld [vmem:[%s165 + $0x4c] sm:$0xf]
      %v192 = vld [vmem:[%s165 + $0x50] sm:$0xf]
      %v193 = vld [vmem:[%s165 + $0x54] sm:$0xf]
      %v194 = vld [vmem:[%s165 + $0x58] sm:$0xf]
      %v195 = vld [vmem:[%s165 + $0x5c] sm:$0xf]
      %v196 = vld [vmem:[%s165 + $0x60] sm:$0xf]
      %v197 = vld [vmem:[%s165 + $0x64] sm:$0xf]
      %v198 = vld [vmem:[%s165 + $0x68] sm:$0xf]
      %v199 = vld [vmem:[%s165 + $0x6c] sm:$0xf]
      %v200 = vld [vmem:[%s165 + $0x70] sm:$0xf]
      %v201 = vld [vmem:[%s165 + $0x74] sm:$0xf]
      %v202 = vld [vmem:[%s165 + $0x78] sm:$0xf]
      %v203 = vld [vmem:[%s165 + $0x7c] sm:$0xf]
      %v204 = vld [vmem:[%s165 + $0x80] sm:$0xf]
      %v205 = vld [vmem:[%s165 + $0x84] sm:$0xf]
      %v206 = vld [vmem:[%s165 + $0x88] sm:$0xf]
      %v207 = vld [vmem:[%s165 + $0x8c] sm:$0xf]
      %v208 = vld [vmem:[%s165 + $0x90] sm:$0xf]
      %v209 = vld [vmem:[%s165 + $0x94] sm:$0xf]
      %v210 = vld [vmem:[%s165 + $0x98] sm:$0xf]
      %v211 = vld [vmem:[%s165 + $0x9c] sm:$0xf]
      %v212 = vld [vmem:[%s165 + $0xa0] sm:$0xf]
      %v213 = vld [vmem:[%s165 + $0xa4] sm:$0xf]
      %v214 = vld [vmem:[%s165 + $0xa8] sm:$0xf]
      %v215 = vld [vmem:[%s165 + $0xac] sm:$0xf]
      %v216 = vld [vmem:[%s165 + $0xb0] sm:$0xf]
      %v217 = vld [vmem:[%s165 + $0xb4] sm:$0xf]
      %v218 = vld [vmem:[%s165 + $0xb8] sm:$0xf]
      %v219 = vld [vmem:[%s165 + $0xbc] sm:$0xf]
      %v220 = vld [vmem:[%s1] sm:$0xf]
      %v221 = vld [vmem:[%s1 + $0x4] sm:$0xf]
      %v222 = vld [vmem:[%s1 + $0x8] sm:$0xf]
      %v223 = vld [vmem:[%s1 + $0xc] sm:$0xf]
      %v224 = vld [vmem:[%s1 + $0x10] sm:$0xf]
      %v225 = vld [vmem:[%s1 + $0x14] sm:$0xf]
      %v226 = vld [vmem:[%s1 + $0x18] sm:$0xf]
      %v227 = vld [vmem:[%s1 + $0x1c] sm:$0xf]
      %v228 = vld [vmem:[%s1 + $0x20] sm:$0xf]
      %v229 = vld [vmem:[%s1 + $0x24] sm:$0xf]
      %v230 = vld [vmem:[%s1 + $0x28] sm:$0xf]
      %v231 = vld [vmem:[%s1 + $0x2c] sm:$0xf]
      %v232 = vld [vmem:[%s1 + $0x30] sm:$0xf]
      %v233 = vld [vmem:[%s1 + $0x34] sm:$0xf]
      %v234 = vld [vmem:[%s1 + $0x38] sm:$0xf]
      %v235 = vld [vmem:[%s1 + $0x3c] sm:$0xf]
      %s236 = scalar_lea.vmem %s1, 64
      %v237 = vld [vmem:[%s236] sm:$0xf]
      %v238 = vld [vmem:[%s236 + $0x4] sm:$0xf]
      %v239 = vld [vmem:[%s236 + $0x8] sm:$0xf]
      %v240 = vld [vmem:[%s236 + $0xc] sm:$0xf]
      %v241 = vld [vmem:[%s236 + $0x10] sm:$0xf]
      %v242 = vld [vmem:[%s236 + $0x14] sm:$0xf]
      %v243 = vld [vmem:[%s236 + $0x18] sm:$0xf]
      %v244 = vld [vmem:[%s236 + $0x1c] sm:$0xf]
      %v245 = vld [vmem:[%s236 + $0x20] sm:$0xf]
      %v246 = vld [vmem:[%s236 + $0x24] sm:$0xf]
      %v247 = vld [vmem:[%s236 + $0x28] sm:$0xf]
      %v248 = vld [vmem:[%s236 + $0x2c] sm:$0xf]
      %v249 = vld [vmem:[%s236 + $0x30] sm:$0xf]
      %v250 = vld [vmem:[%s236 + $0x34] sm:$0xf]
      %v251 = vld [vmem:[%s236 + $0x38] sm:$0xf]
      %v252 = vld [vmem:[%s236 + $0x3c] sm:$0xf]
      %v285 = vunpack.c.l.b16 %v180
      %v286 = vunpack.c.l.b16 %v181
      %v287 = vunpack.c.l.b16 %v182
      %v288 = vunpack.c.l.b16 %v183
      %v289 = vunpack.c.l.b16 %v184
      %v290 = vunpack.c.l.b16 %v185
      %v291 = vunpack.c.l.b16 %v186
      %v292 = vunpack.c.l.b16 %v187
      %v293 = vunpack.c.l.b16 %v188
      %v294 = vunpack.c.l.b16 %v189
      %v295 = vunpack.c.l.b16 %v190
      %v296 = vunpack.c.l.b16 %v191
      %v297 = vunpack.c.l.b16 %v192
      %v298 = vunpack.c.l.b16 %v193
      %v299 = vunpack.c.l.b16 %v194
      %v300 = vunpack.c.l.b16 %v195
      %v301 = vunpack.c.l.b16 %v196
      %v302 = vunpack.c.l.b16 %v197
      %v303 = vunpack.c.l.b16 %v198
      %v304 = vunpack.c.l.b16 %v199
      %v305 = vunpack.c.l.b16 %v200
      %v306 = vunpack.c.l.b16 %v201
      %v307 = vunpack.c.l.b16 %v202
      %v308 = vunpack.c.l.b16 %v203
      %v309 = vunpack.c.l.b16 %v204
      %v310 = vunpack.c.l.b16 %v205
      %v311 = vunpack.c.l.b16 %v206
      %v312 = vunpack.c.l.b16 %v207
      %v313 = vunpack.c.l.b16 %v208
      %v314 = vunpack.c.l.b16 %v209
      %v315 = vunpack.c.l.b16 %v210
      %v316 = vunpack.c.l.b16 %v211
      %v317 = vpack.c.b16 %v286, %v285
      %v318 = vpack.c.b16 %v288, %v287
      %v319 = vpack.c.b16 %v290, %v289
      %v320 = vpack.c.b16 %v292, %v291
      %v321 = vpack.c.b16 %v294, %v293
      %v322 = vpack.c.b16 %v296, %v295
      %v323 = vpack.c.b16 %v298, %v297
      %v324 = vpack.c.b16 %v300, %v299
      %v325 = vpack.c.b16 %v302, %v301
      %v326 = vpack.c.b16 %v304, %v303
      %v327 = vpack.c.b16 %v306, %v305
      %v328 = vpack.c.b16 %v308, %v307
      %v329 = vpack.c.b16 %v310, %v309
      %v330 = vpack.c.b16 %v312, %v311
      %v331 = vpack.c.b16 %v314, %v313
      %v332 = vpack.c.b16 %v316, %v315
      %v365 = vunpack.c.l.b16 %v237
      %v366 = vunpack.c.l.b16 %v238
      %v367 = vunpack.c.l.b16 %v239
      %v368 = vunpack.c.l.b16 %v240
      %v369 = vunpack.c.l.b16 %v241
      %v370 = vunpack.c.l.b16 %v242
      %v371 = vunpack.c.l.b16 %v243
      %v372 = vunpack.c.l.b16 %v244
      %v373 = vunpack.c.l.b16 %v245
      %v374 = vunpack.c.l.b16 %v246
      %v375 = vunpack.c.l.b16 %v247
      %v376 = vunpack.c.l.b16 %v248
      %v377 = vunpack.c.l.b16 %v249
      %v378 = vunpack.c.l.b16 %v250
      %v379 = vunpack.c.l.b16 %v251
      %v380 = vunpack.c.l.b16 %v252
      %v381 = vpack.c.b16 %v366, %v365
      %v382 = vpack.c.b16 %v368, %v367
      %v383 = vpack.c.b16 %v370, %v369
      %v384 = vpack.c.b16 %v372, %v371
      %v385 = vpack.c.b16 %v374, %v373
      %v386 = vpack.c.b16 %v376, %v375
      %v387 = vpack.c.b16 %v378, %v377
      %v388 = vpack.c.b16 %v380, %v379
      %397 = vmatprep.subr.bf16.mxu0 0
      %398 = vmatpush1.bf16.msra.mxu0 %v388
      %399 = vmatprep.subr.bf16.mxu0 0
      %400 = vmatpush1.bf16.msra.mxu0 %v387
      %401 = vmatprep.subr.bf16.mxu0 0
      %402 = vmatpush1.bf16.msra.mxu0 %v386
      %403 = vmatprep.subr.bf16.mxu0 0
      %404 = vmatpush1.bf16.msra.mxu0 %v385
      %405 = vmatprep.subr.bf16.mxu0 0
      %406 = vmatpush1.bf16.msra.mxu0 %v384
      %407 = vmatprep.subr.bf16.mxu0 0
      %408 = vmatpush1.bf16.msra.mxu0 %v383
      %409 = vmatprep.subr.bf16.mxu0 0
      %410 = vmatpush1.bf16.msra.mxu0 %v382
      %411 = vmatprep.subr.bf16.mxu0 0
      %412 = vmatpush1.bf16.msra.mxu0 %v381
      %413 = vmatprep.subr.bf16.mxu0 0
      %414 = vmatpush2.bf16.msra.mxu0 0
      %415 = vmatprep.subr.bf16.mxu0 0
      %416 = vmatpush2.bf16.msra.mxu0 0
      %417 = vmatprep.subr.bf16.mxu0 0
      %418 = vmatpush2.bf16.msra.mxu0 0
      %419 = vmatprep.subr.bf16.mxu0 0
      %420 = vmatpush2.bf16.msra.mxu0 0
      %421 = vmatprep.subr.bf16.mxu0 0
      %422 = vmatpush2.bf16.msra.mxu0 0
      %423 = vmatprep.subr.bf16.mxu0 0
      %424 = vmatpush2.bf16.msra.mxu0 0
      %425 = vmatprep.subr.bf16.mxu0 0
      %426 = vmatpush2.bf16.msra.mxu0 0
      %427 = vmatprep.subr.bf16.mxu0 0
      %428 = vmatpush2.bf16.msra.mxu0 0
      %429 = vmatprep.mubr.bf16.mxu0 0
      %430 = vmatmul.mubr.bf16.gmra.mxu0 %v317
      %v431 = vpop.f32.mrf.mxu0
      %v432 = vadd.f32 0.0, %v431
      %v433 = vpop.f32.mrf.mxu0
      %v434 = vpop.f32.mrf.mxu0
      %v435 = vadd.f32 0.0, %v434
      %v436 = vpop.f32.mrf.mxu0
      %437 = vmatprep.mubr.bf16.mxu0 0
      %438 = vmatmul.mubr.bf16.gmra.mxu0 %v318
      %v439 = vpop.f32.mrf.mxu0
      %v440 = vadd.f32 0.0, %v439
      %v441 = vpop.f32.mrf.mxu0
      %v442 = vpop.f32.mrf.mxu0
      %v443 = vadd.f32 0.0, %v442
      %v444 = vpop.f32.mrf.mxu0
      %445 = vmatprep.mubr.bf16.mxu0 0
      %446 = vmatmul.mubr.bf16.gmra.mxu0 %v319
      %v447 = vpop.f32.mrf.mxu0
      %v448 = vadd.f32 0.0, %v447
      %v449 = vpop.f32.mrf.mxu0
      %v450 = vpop.f32.mrf.mxu0
      %v451 = vadd.f32 0.0, %v450
      %v452 = vpop.f32.mrf.mxu0
      %453 = vmatprep.mubr.bf16.mxu0 0
      %454 = vmatmul.mubr.bf16.gmra.mxu0 %v320
      %v455 = vpop.f32.mrf.mxu0
      %v456 = vadd.f32 0.0, %v455
      %v457 = vpop.f32.mrf.mxu0
      %v458 = vpop.f32.mrf.mxu0
      %v459 = vadd.f32 0.0, %v458
      %v460 = vpop.f32.mrf.mxu0
      %461 = vmatprep.mubr.bf16.mxu0 0
      %462 = vmatmul.mubr.bf16.gmra.mxu0 %v321
      %v463 = vpop.f32.mrf.mxu0
      %v464 = vadd.f32 0.0, %v463
      %v465 = vpop.f32.mrf.mxu0
      %v466 = vpop.f32.mrf.mxu0
      %v467 = vadd.f32 0.0, %v466
      %v468 = vpop.f32.mrf.mxu0
      %469 = vmatprep.mubr.bf16.mxu0 0
      %470 = vmatmul.mubr.bf16.gmra.mxu0 %v322
      %v471 = vpop.f32.mrf.mxu0
      %v472 = vadd.f32 0.0, %v471
      %v473 = vpop.f32.mrf.mxu0
      %v474 = vpop.f32.mrf.mxu0
      %v475 = vadd.f32 0.0, %v474
      %v476 = vpop.f32.mrf.mxu0
      %477 = vmatprep.mubr.bf16.mxu0 0
      %478 = vmatmul.mubr.bf16.gmra.mxu0 %v323
      %v479 = vpop.f32.mrf.mxu0
      %v480 = vadd.f32 0.0, %v479
      %v481 = vpop.f32.mrf.mxu0
      %v482 = vpop.f32.mrf.mxu0
      %v483 = vadd.f32 0.0, %v482
      %v484 = vpop.f32.mrf.mxu0
      %485 = vmatprep.mubr.bf16.mxu0 0
      %486 = vmatmul.mubr.bf16.gmra.mxu0 %v324
      %v487 = vpop.f32.mrf.mxu0
      %v488 = vadd.f32 0.0, %v487
      %v489 = vpop.f32.mrf.mxu0
      %v490 = vpop.f32.mrf.mxu0
      %v491 = vadd.f32 0.0, %v490
      %v492 = vpop.f32.mrf.mxu0
      %493 = vmatprep.mubr.bf16.mxu0 0
      %494 = vmatmul.mubr.bf16.gmra.mxu0 %v325
      %v495 = vpop.f32.mrf.mxu0
      %v496 = vadd.f32 0.0, %v495
      %v497 = vpop.f32.mrf.mxu0
      %v498 = vpop.f32.mrf.mxu0
      %v499 = vadd.f32 0.0, %v498
      %v500 = vpop.f32.mrf.mxu0
      %501 = vmatprep.mubr.bf16.mxu0 0
      %502 = vmatmul.mubr.bf16.gmra.mxu0 %v326
      %v503 = vpop.f32.mrf.mxu0
      %v504 = vadd.f32 0.0, %v503
      %v505 = vpop.f32.mrf.mxu0
      %v506 = vpop.f32.mrf.mxu0
      %v507 = vadd.f32 0.0, %v506
      %v508 = vpop.f32.mrf.mxu0
      %509 = vmatprep.mubr.bf16.mxu0 0
      %510 = vmatmul.mubr.bf16.gmra.mxu0 %v327
      %v511 = vpop.f32.mrf.mxu0
      %v512 = vadd.f32 0.0, %v511
      %v513 = vpop.f32.mrf.mxu0
      %v514 = vpop.f32.mrf.mxu0
      %v515 = vadd.f32 0.0, %v514
      %v516 = vpop.f32.mrf.mxu0
      %517 = vmatprep.mubr.bf16.mxu0 0
      %518 = vmatmul.mubr.bf16.gmra.mxu0 %v328
      %v519 = vpop.f32.mrf.mxu0
      %v520 = vadd.f32 0.0, %v519
      %v521 = vpop.f32.mrf.mxu0
      %v522 = vpop.f32.mrf.mxu0
      %v523 = vadd.f32 0.0, %v522
      %v524 = vpop.f32.mrf.mxu0
      %525 = vmatprep.mubr.bf16.mxu0 0
      %526 = vmatmul.mubr.bf16.gmra.mxu0 %v329
      %v527 = vpop.f32.mrf.mxu0
      %v528 = vadd.f32 0.0, %v527
      %v529 = vpop.f32.mrf.mxu0
      %v530 = vpop.f32.mrf.mxu0
      %v531 = vadd.f32 0.0, %v530
      %v532 = vpop.f32.mrf.mxu0
      %533 = vmatprep.mubr.bf16.mxu0 0
      %534 = vmatmul.mubr.bf16.gmra.mxu0 %v330
      %v535 = vpop.f32.mrf.mxu0
      %v536 = vadd.f32 0.0, %v535
      %v537 = vpop.f32.mrf.mxu0
      %v538 = vpop.f32.mrf.mxu0
      %v539 = vadd.f32 0.0, %v538
      %v540 = vpop.f32.mrf.mxu0
      %541 = vmatprep.mubr.bf16.mxu0 0
      %542 = vmatmul.mubr.bf16.gmra.mxu0 %v331
      %v543 = vpop.f32.mrf.mxu0
      %v544 = vadd.f32 0.0, %v543
      %v545 = vpop.f32.mrf.mxu0
      %v546 = vpop.f32.mrf.mxu0
      %v547 = vadd.f32 0.0, %v546
      %v548 = vpop.f32.mrf.mxu0
      %549 = vmatprep.mubr.bf16.mxu0 0
      %550 = vmatmul.mubr.bf16.gmra.mxu0 %v332
      %v551 = vpop.f32.mrf.mxu0
      %v552 = vadd.f32 0.0, %v551
      %v553 = vpop.f32.mrf.mxu0
      %v554 = vpop.f32.mrf.mxu0
      %v555 = vadd.f32 0.0, %v554
      %v556 = vpop.f32.mrf.mxu0
      %557 = vdwg.mxu0
      %v566 = vunpack.c.l.b16 %v172
      %v567 = vunpack.c.l.b16 %v173
      %v568 = vunpack.c.l.b16 %v174
      %v569 = vunpack.c.l.b16 %v175
      %v570 = vunpack.c.l.b16 %v176
      %v571 = vunpack.c.l.b16 %v177
      %v572 = vunpack.c.l.b16 %v178
      %v573 = vunpack.c.l.b16 %v179
      %v574 = vpack.c.b16 %v567, %v566
      %v575 = vpack.c.b16 %v569, %v568
      %v576 = vpack.c.b16 %v571, %v570
      %v577 = vpack.c.b16 %v573, %v572
      %v598 = vunpack.c.l.b16 %v220
      %v599 = vunpack.c.l.b16 %v221
      %v600 = vunpack.c.l.b16 %v222
      %v601 = vunpack.c.l.b16 %v223
      %v602 = vunpack.c.l.b16 %v224
      %v603 = vunpack.c.l.b16 %v225
      %v604 = vunpack.c.l.b16 %v226
      %v605 = vunpack.c.l.b16 %v227
      %v606 = vunpack.c.l.b16 %v228
      %v607 = vunpack.c.l.b16 %v229
      %v608 = vunpack.c.l.b16 %v230
      %v609 = vunpack.c.l.b16 %v231
      %v610 = vunpack.c.l.b16 %v232
      %v611 = vunpack.c.l.b16 %v233
      %v612 = vunpack.c.l.b16 %v234
      %v613 = vunpack.c.l.b16 %v235
      %v614 = vpack.c.b16 %v599, %v598
      %v615 = vpack.c.b16 %v601, %v600
      %v616 = vpack.c.b16 %v603, %v602
      %v617 = vpack.c.b16 %v605, %v604
      %v618 = vpack.c.b16 %v607, %v606
      %v619 = vpack.c.b16 %v609, %v608
      %v620 = vpack.c.b16 %v611, %v610
      %v621 = vpack.c.b16 %v613, %v612
      %630 = vmatprep.subr.bf16.mxu0 0
      %631 = vmatpush1.bf16.msra.mxu0 %v621
      %632 = vmatprep.subr.bf16.mxu0 0
      %633 = vmatpush1.bf16.msra.mxu0 %v620
      %634 = vmatprep.subr.bf16.mxu0 0
      %635 = vmatpush1.bf16.msra.mxu0 %v619
      %636 = vmatprep.subr.bf16.mxu0 0
      %637 = vmatpush1.bf16.msra.mxu0 %v618
      %638 = vmatprep.subr.bf16.mxu0 0
      %639 = vmatpush1.bf16.msra.mxu0 %v617
      %640 = vmatprep.subr.bf16.mxu0 0
      %641 = vmatpush1.bf16.msra.mxu0 %v616
      %642 = vmatprep.subr.bf16.mxu0 0
      %643 = vmatpush1.bf16.msra.mxu0 %v615
      %644 = vmatprep.subr.bf16.mxu0 0
      %645 = vmatpush1.bf16.msra.mxu0 %v614
      %646 = vmatprep.subr.bf16.mxu0 0
      %647 = vmatpush2.bf16.msra.mxu0 0
      %648 = vmatprep.subr.bf16.mxu0 0
      %649 = vmatpush2.bf16.msra.mxu0 0
      %650 = vmatprep.subr.bf16.mxu0 0
      %651 = vmatpush2.bf16.msra.mxu0 0
      %652 = vmatprep.subr.bf16.mxu0 0
      %653 = vmatpush2.bf16.msra.mxu0 0
      %654 = vmatprep.subr.bf16.mxu0 0
      %655 = vmatpush2.bf16.msra.mxu0 0
      %656 = vmatprep.subr.bf16.mxu0 0
      %657 = vmatpush2.bf16.msra.mxu0 0
      %658 = vmatprep.subr.bf16.mxu0 0
      %659 = vmatpush2.bf16.msra.mxu0 0
      %660 = vmatprep.subr.bf16.mxu0 0
      %661 = vmatpush2.bf16.msra.mxu0 0
      %662 = vmatprep.mubr.bf16.mxu0 0
      %663 = vmatmul.mubr.bf16.gmra.mxu0 %v574
      %v664 = vpop.f32.mrf.mxu0
      %v665 = vadd.f32 %v432, %v664
      %v666 = vpop.f32.mrf.mxu0
      %v667 = vpop.f32.mrf.mxu0
      %v668 = vadd.f32 %v435, %v667
      %v669 = vpop.f32.mrf.mxu0
      %670 = vmatprep.mubr.bf16.mxu0 0
      %671 = vmatmul.mubr.bf16.gmra.mxu0 %v575
      %v672 = vpop.f32.mrf.mxu0
      %v673 = vadd.f32 %v440, %v672
      %v674 = vpop.f32.mrf.mxu0
      %v675 = vpop.f32.mrf.mxu0
      %v676 = vadd.f32 %v443, %v675
      %v677 = vpop.f32.mrf.mxu0
      %678 = vmatprep.mubr.bf16.mxu0 0
      %679 = vmatmul.mubr.bf16.gmra.mxu0 %v576
      %v680 = vpop.f32.mrf.mxu0
      %v681 = vadd.f32 %v448, %v680
      %v682 = vpop.f32.mrf.mxu0
      %v683 = vpop.f32.mrf.mxu0
      %v684 = vadd.f32 %v451, %v683
      %v685 = vpop.f32.mrf.mxu0
      %686 = vmatprep.mubr.bf16.mxu0 0
      %687 = vmatmul.mubr.bf16.gmra.mxu0 %v577
      %v688 = vpop.f32.mrf.mxu0
      %v689 = vadd.f32 %v456, %v688
      %v690 = vpop.f32.mrf.mxu0
      %v691 = vpop.f32.mrf.mxu0
      %v692 = vadd.f32 %v459, %v691
      %v693 = vpop.f32.mrf.mxu0
      %694 = vmatprep.mubr.bf16.mxu0 0
      %695 = vmatmul.mubr.bf16.gmra.mxu0 %v317
      %v696 = vpop.f32.mrf.mxu0
      %v697 = vadd.f32 %v464, %v696
      %v698 = vpop.f32.mrf.mxu0
      %v699 = vpop.f32.mrf.mxu0
      %v700 = vadd.f32 %v467, %v699
      %v701 = vpop.f32.mrf.mxu0
      %702 = vmatprep.mubr.bf16.mxu0 0
      %703 = vmatmul.mubr.bf16.gmra.mxu0 %v318
      %v704 = vpop.f32.mrf.mxu0
      %v705 = vadd.f32 %v472, %v704
      %v706 = vpop.f32.mrf.mxu0
      %v707 = vpop.f32.mrf.mxu0
      %v708 = vadd.f32 %v475, %v707
      %v709 = vpop.f32.mrf.mxu0
      %710 = vmatprep.mubr.bf16.mxu0 0
      %711 = vmatmul.mubr.bf16.gmra.mxu0 %v319
      %v712 = vpop.f32.mrf.mxu0
      %v713 = vadd.f32 %v480, %v712
      %v714 = vpop.f32.mrf.mxu0
      %v715 = vpop.f32.mrf.mxu0
      %v716 = vadd.f32 %v483, %v715
      %v717 = vpop.f32.mrf.mxu0
      %718 = vmatprep.mubr.bf16.mxu0 0
      %719 = vmatmul.mubr.bf16.gmra.mxu0 %v320
      %v720 = vpop.f32.mrf.mxu0
      %v721 = vadd.f32 %v488, %v720
      %v722 = vpop.f32.mrf.mxu0
      %v723 = vpop.f32.mrf.mxu0
      %v724 = vadd.f32 %v491, %v723
      %v725 = vpop.f32.mrf.mxu0
      %726 = vmatprep.mubr.bf16.mxu0 0
      %727 = vmatmul.mubr.bf16.gmra.mxu0 %v321
      %v728 = vpop.f32.mrf.mxu0
      %v729 = vadd.f32 %v496, %v728
      %v730 = vpop.f32.mrf.mxu0
      %v731 = vpop.f32.mrf.mxu0
      %v732 = vadd.f32 %v499, %v731
      %v733 = vpop.f32.mrf.mxu0
      %734 = vmatprep.mubr.bf16.mxu0 0
      %735 = vmatmul.mubr.bf16.gmra.mxu0 %v322
      %v736 = vpop.f32.mrf.mxu0
      %v737 = vadd.f32 %v504, %v736
      %v738 = vpop.f32.mrf.mxu0
      %v739 = vpop.f32.mrf.mxu0
      %v740 = vadd.f32 %v507, %v739
      %v741 = vpop.f32.mrf.mxu0
      %742 = vmatprep.mubr.bf16.mxu0 0
      %743 = vmatmul.mubr.bf16.gmra.mxu0 %v323
      %v744 = vpop.f32.mrf.mxu0
      %v745 = vadd.f32 %v512, %v744
      %v746 = vpop.f32.mrf.mxu0
      %v747 = vpop.f32.mrf.mxu0
      %v748 = vadd.f32 %v515, %v747
      %v749 = vpop.f32.mrf.mxu0
      %750 = vmatprep.mubr.bf16.mxu0 0
      %751 = vmatmul.mubr.bf16.gmra.mxu0 %v324
      %v752 = vpop.f32.mrf.mxu0
      %v753 = vadd.f32 %v520, %v752
      %v754 = vpop.f32.mrf.mxu0
      %v755 = vpop.f32.mrf.mxu0
      %v756 = vadd.f32 %v523, %v755
      %v757 = vpop.f32.mrf.mxu0
      %758 = vmatprep.mubr.bf16.mxu0 0
      %759 = vmatmul.mubr.bf16.gmra.mxu0 %v325
      %v760 = vpop.f32.mrf.mxu0
      %v761 = vadd.f32 %v528, %v760
      %v762 = vpop.f32.mrf.mxu0
      %v763 = vpop.f32.mrf.mxu0
      %v764 = vadd.f32 %v531, %v763
      %v765 = vpop.f32.mrf.mxu0
      %766 = vmatprep.mubr.bf16.mxu0 0
      %767 = vmatmul.mubr.bf16.gmra.mxu0 %v326
      %v768 = vpop.f32.mrf.mxu0
      %v769 = vadd.f32 %v536, %v768
      %v770 = vpop.f32.mrf.mxu0
      %v771 = vpop.f32.mrf.mxu0
      %v772 = vadd.f32 %v539, %v771
      %v773 = vpop.f32.mrf.mxu0
      %774 = vmatprep.mubr.bf16.mxu0 0
      %775 = vmatmul.mubr.bf16.gmra.mxu0 %v327
      %v776 = vpop.f32.mrf.mxu0
      %v777 = vadd.f32 %v544, %v776
      %v778 = vpop.f32.mrf.mxu0
      %v779 = vpop.f32.mrf.mxu0
      %v780 = vadd.f32 %v547, %v779
      %v781 = vpop.f32.mrf.mxu0
      %782 = vmatprep.mubr.bf16.mxu0 0
      %783 = vmatmul.mubr.bf16.gmra.mxu0 %v328
      %v784 = vpop.f32.mrf.mxu0
      %v785 = vadd.f32 %v552, %v784
      %v786 = vpop.f32.mrf.mxu0
      %v787 = vpop.f32.mrf.mxu0
      %v788 = vadd.f32 %v555, %v787
      %v789 = vpop.f32.mrf.mxu0
      %790 = vdwg.mxu0
      %s791 = scalar_lea.vmem %s1, 128
      %v792 = vld [vmem:[%s791] sm:$0xf]
      %v793 = vld [vmem:[%s791 + $0x4] sm:$0xf]
      %v794 = vld [vmem:[%s791 + $0x8] sm:$0xf]
      %v795 = vld [vmem:[%s791 + $0xc] sm:$0xf]
      %v796 = vld [vmem:[%s791 + $0x10] sm:$0xf]
      %v797 = vld [vmem:[%s791 + $0x14] sm:$0xf]
      %v798 = vld [vmem:[%s791 + $0x18] sm:$0xf]
      %v799 = vld [vmem:[%s791 + $0x1c] sm:$0xf]
      %v800 = vld [vmem:[%s791 + $0x20] sm:$0xf]
      %v801 = vld [vmem:[%s791 + $0x24] sm:$0xf]
      %v802 = vld [vmem:[%s791 + $0x28] sm:$0xf]
      %v803 = vld [vmem:[%s791 + $0x2c] sm:$0xf]
      %v804 = vld [vmem:[%s791 + $0x30] sm:$0xf]
      %v805 = vld [vmem:[%s791 + $0x34] sm:$0xf]
      %v806 = vld [vmem:[%s791 + $0x38] sm:$0xf]
      %v807 = vld [vmem:[%s791 + $0x3c] sm:$0xf]
      %v816 = vunpack.c.l.b16 %v212
      %v817 = vunpack.c.l.b16 %v213
      %v818 = vunpack.c.l.b16 %v214
      %v819 = vunpack.c.l.b16 %v215
      %v820 = vunpack.c.l.b16 %v216
      %v821 = vunpack.c.l.b16 %v217
      %v822 = vunpack.c.l.b16 %v218
      %v823 = vunpack.c.l.b16 %v219
      %v824 = vpack.c.b16 %v817, %v816
      %v825 = vpack.c.b16 %v819, %v818
      %v826 = vpack.c.b16 %v821, %v820
      %v827 = vpack.c.b16 %v823, %v822
      %v848 = vunpack.c.l.b16 %v792
      %v849 = vunpack.c.l.b16 %v793
      %v850 = vunpack.c.l.b16 %v794
      %v851 = vunpack.c.l.b16 %v795
      %v852 = vunpack.c.l.b16 %v796
      %v853 = vunpack.c.l.b16 %v797
      %v854 = vunpack.c.l.b16 %v798
      %v855 = vunpack.c.l.b16 %v799
      %v856 = vunpack.c.l.b16 %v800
      %v857 = vunpack.c.l.b16 %v801
      %v858 = vunpack.c.l.b16 %v802
      %v859 = vunpack.c.l.b16 %v803
      %v860 = vunpack.c.l.b16 %v804
      %v861 = vunpack.c.l.b16 %v805
      %v862 = vunpack.c.l.b16 %v806
      %v863 = vunpack.c.l.b16 %v807
      %v864 = vpack.c.b16 %v849, %v848
      %v865 = vpack.c.b16 %v851, %v850
      %v866 = vpack.c.b16 %v853, %v852
      %v867 = vpack.c.b16 %v855, %v854
      %v868 = vpack.c.b16 %v857, %v856
      %v869 = vpack.c.b16 %v859, %v858
      %v870 = vpack.c.b16 %v861, %v860
      %v871 = vpack.c.b16 %v863, %v862
      %880 = vmatprep.subr.bf16.mxu0 0
      %881 = vmatpush1.bf16.msra.mxu0 %v871
      %882 = vmatprep.subr.bf16.mxu0 0
      %883 = vmatpush1.bf16.msra.mxu0 %v870
      %884 = vmatprep.subr.bf16.mxu0 0
      %885 = vmatpush1.bf16.msra.mxu0 %v869
      %886 = vmatprep.subr.bf16.mxu0 0
      %887 = vmatpush1.bf16.msra.mxu0 %v868
      %888 = vmatprep.subr.bf16.mxu0 0
      %889 = vmatpush1.bf16.msra.mxu0 %v867
      %890 = vmatprep.subr.bf16.mxu0 0
      %891 = vmatpush1.bf16.msra.mxu0 %v866
      %892 = vmatprep.subr.bf16.mxu0 0
      %893 = vmatpush1.bf16.msra.mxu0 %v865
      %894 = vmatprep.subr.bf16.mxu0 0
      %895 = vmatpush1.bf16.msra.mxu0 %v864
      %896 = vmatprep.subr.bf16.mxu0 0
      %897 = vmatpush2.bf16.msra.mxu0 0
      %898 = vmatprep.subr.bf16.mxu0 0
      %899 = vmatpush2.bf16.msra.mxu0 0
      %900 = vmatprep.subr.bf16.mxu0 0
      %901 = vmatpush2.bf16.msra.mxu0 0
      %902 = vmatprep.subr.bf16.mxu0 0
      %903 = vmatpush2.bf16.msra.mxu0 0
      %904 = vmatprep.subr.bf16.mxu0 0
      %905 = vmatpush2.bf16.msra.mxu0 0
      %906 = vmatprep.subr.bf16.mxu0 0
      %907 = vmatpush2.bf16.msra.mxu0 0
      %908 = vmatprep.subr.bf16.mxu0 0
      %909 = vmatpush2.bf16.msra.mxu0 0
      %910 = vmatprep.subr.bf16.mxu0 0
      %911 = vmatpush2.bf16.msra.mxu0 0
      %912 = vmatprep.mubr.bf16.mxu0 0
      %913 = vmatmul.mubr.bf16.gmra.mxu0 %v321
      %v914 = vpop.f32.mrf.mxu0
      %v915 = vadd.f32 0.0, %v914
      %v916 = vpop.f32.mrf.mxu0
      %v917 = vpop.f32.mrf.mxu0
      %v918 = vadd.f32 0.0, %v917
      %v919 = vpop.f32.mrf.mxu0
      %920 = vmatprep.mubr.bf16.mxu0 0
      %921 = vmatmul.mubr.bf16.gmra.mxu0 %v322
      %v922 = vpop.f32.mrf.mxu0
      %v923 = vadd.f32 0.0, %v922
      %v924 = vpop.f32.mrf.mxu0
      %v925 = vpop.f32.mrf.mxu0
      %v926 = vadd.f32 0.0, %v925
      %v927 = vpop.f32.mrf.mxu0
      %928 = vmatprep.mubr.bf16.mxu0 0
      %929 = vmatmul.mubr.bf16.gmra.mxu0 %v323
      %v930 = vpop.f32.mrf.mxu0
      %v931 = vadd.f32 0.0, %v930
      %v932 = vpop.f32.mrf.mxu0
      %v933 = vpop.f32.mrf.mxu0
      %v934 = vadd.f32 0.0, %v933
      %v935 = vpop.f32.mrf.mxu0
      %936 = vmatprep.mubr.bf16.mxu0 0
      %937 = vmatmul.mubr.bf16.gmra.mxu0 %v324
      %v938 = vpop.f32.mrf.mxu0
      %v939 = vadd.f32 0.0, %v938
      %v940 = vpop.f32.mrf.mxu0
      %v941 = vpop.f32.mrf.mxu0
      %v942 = vadd.f32 0.0, %v941
      %v943 = vpop.f32.mrf.mxu0
      %944 = vmatprep.mubr.bf16.mxu0 0
      %945 = vmatmul.mubr.bf16.gmra.mxu0 %v325
      %v946 = vpop.f32.mrf.mxu0
      %v947 = vadd.f32 0.0, %v946
      %v948 = vpop.f32.mrf.mxu0
      %v949 = vpop.f32.mrf.mxu0
      %v950 = vadd.f32 0.0, %v949
      %v951 = vpop.f32.mrf.mxu0
      %952 = vmatprep.mubr.bf16.mxu0 0
      %953 = vmatmul.mubr.bf16.gmra.mxu0 %v326
      %v954 = vpop.f32.mrf.mxu0
      %v955 = vadd.f32 0.0, %v954
      %v956 = vpop.f32.mrf.mxu0
      %v957 = vpop.f32.mrf.mxu0
      %v958 = vadd.f32 0.0, %v957
      %v959 = vpop.f32.mrf.mxu0
      %960 = vmatprep.mubr.bf16.mxu0 0
      %961 = vmatmul.mubr.bf16.gmra.mxu0 %v327
      %v962 = vpop.f32.mrf.mxu0
      %v963 = vadd.f32 0.0, %v962
      %v964 = vpop.f32.mrf.mxu0
      %v965 = vpop.f32.mrf.mxu0
      %v966 = vadd.f32 0.0, %v965
      %v967 = vpop.f32.mrf.mxu0
      %968 = vmatprep.mubr.bf16.mxu0 0
      %969 = vmatmul.mubr.bf16.gmra.mxu0 %v328
      %v970 = vpop.f32.mrf.mxu0
      %v971 = vadd.f32 0.0, %v970
      %v972 = vpop.f32.mrf.mxu0
      %v973 = vpop.f32.mrf.mxu0
      %v974 = vadd.f32 0.0, %v973
      %v975 = vpop.f32.mrf.mxu0
      %976 = vmatprep.mubr.bf16.mxu0 0
      %977 = vmatmul.mubr.bf16.gmra.mxu0 %v329
      %v978 = vpop.f32.mrf.mxu0
      %v979 = vadd.f32 0.0, %v978
      %v980 = vpop.f32.mrf.mxu0
      %v981 = vpop.f32.mrf.mxu0
      %v982 = vadd.f32 0.0, %v981
      %v983 = vpop.f32.mrf.mxu0
      %984 = vmatprep.mubr.bf16.mxu0 0
      %985 = vmatmul.mubr.bf16.gmra.mxu0 %v330
      %v986 = vpop.f32.mrf.mxu0
      %v987 = vadd.f32 0.0, %v986
      %v988 = vpop.f32.mrf.mxu0
      %v989 = vpop.f32.mrf.mxu0
      %v990 = vadd.f32 0.0, %v989
      %v991 = vpop.f32.mrf.mxu0
      %992 = vmatprep.mubr.bf16.mxu0 0
      %993 = vmatmul.mubr.bf16.gmra.mxu0 %v331
      %v994 = vpop.f32.mrf.mxu0
      %v995 = vadd.f32 0.0, %v994
      %v996 = vpop.f32.mrf.mxu0
      %v997 = vpop.f32.mrf.mxu0
      %v998 = vadd.f32 0.0, %v997
      %v999 = vpop.f32.mrf.mxu0
      %1000 = vmatprep.mubr.bf16.mxu0 0
      %1001 = vmatmul.mubr.bf16.gmra.mxu0 %v332
      %v1002 = vpop.f32.mrf.mxu0
      %v1003 = vadd.f32 0.0, %v1002
      %v1004 = vpop.f32.mrf.mxu0
      %v1005 = vpop.f32.mrf.mxu0
      %v1006 = vadd.f32 0.0, %v1005
      %v1007 = vpop.f32.mrf.mxu0
      %1008 = vmatprep.mubr.bf16.mxu0 0
      %1009 = vmatmul.mubr.bf16.gmra.mxu0 %v824
      %v1010 = vpop.f32.mrf.mxu0
      %v1011 = vadd.f32 0.0, %v1010
      %v1012 = vpop.f32.mrf.mxu0
      %v1013 = vpop.f32.mrf.mxu0
      %v1014 = vadd.f32 0.0, %v1013
      %v1015 = vpop.f32.mrf.mxu0
      %1016 = vmatprep.mubr.bf16.mxu0 0
      %1017 = vmatmul.mubr.bf16.gmra.mxu0 %v825
      %v1018 = vpop.f32.mrf.mxu0
      %v1019 = vadd.f32 0.0, %v1018
      %v1020 = vpop.f32.mrf.mxu0
      %v1021 = vpop.f32.mrf.mxu0
      %v1022 = vadd.f32 0.0, %v1021
      %v1023 = vpop.f32.mrf.mxu0
      %1024 = vmatprep.mubr.bf16.mxu0 0
      %1025 = vmatmul.mubr.bf16.gmra.mxu0 %v826
      %v1026 = vpop.f32.mrf.mxu0
      %v1027 = vadd.f32 0.0, %v1026
      %v1028 = vpop.f32.mrf.mxu0
      %v1029 = vpop.f32.mrf.mxu0
      %v1030 = vadd.f32 0.0, %v1029
      %v1031 = vpop.f32.mrf.mxu0
      %1032 = vmatprep.mubr.bf16.mxu0 0
      %1033 = vmatmul.mubr.bf16.gmra.mxu0 %v827
      %v1034 = vpop.f32.mrf.mxu0
      %v1035 = vadd.f32 0.0, %v1034
      %v1036 = vpop.f32.mrf.mxu0
      %v1037 = vpop.f32.mrf.mxu0
      %v1038 = vadd.f32 0.0, %v1037
      %v1039 = vpop.f32.mrf.mxu0
      %1040 = vdwg.mxu0
      %v1041 = vadd.f32 %v665, %v915
      %v1042 = vadd.f32 %v668, %v918
      %v1043 = vadd.f32 %v673, %v923
      %v1044 = vadd.f32 %v676, %v926
      %v1045 = vadd.f32 %v681, %v931
      %v1046 = vadd.f32 %v684, %v934
      %v1047 = vadd.f32 %v689, %v939
      %v1048 = vadd.f32 %v692, %v942
      %v1049 = vadd.f32 %v697, %v947
      %v1050 = vadd.f32 %v700, %v950
      %v1051 = vadd.f32 %v705, %v955
      %v1052 = vadd.f32 %v708, %v958
      %v1053 = vadd.f32 %v713, %v963
      %v1054 = vadd.f32 %v716, %v966
      %v1055 = vadd.f32 %v721, %v971
      %v1056 = vadd.f32 %v724, %v974
      %v1057 = vadd.f32 %v729, %v979
      %v1058 = vadd.f32 %v732, %v982
      %v1059 = vadd.f32 %v737, %v987
      %v1060 = vadd.f32 %v740, %v990
      %v1061 = vadd.f32 %v745, %v995
      %v1062 = vadd.f32 %v748, %v998
      %v1063 = vadd.f32 %v753, %v1003
      %v1064 = vadd.f32 %v756, %v1006
      %v1065 = vadd.f32 %v761, %v1011
      %v1066 = vadd.f32 %v764, %v1014
      %v1067 = vadd.f32 %v769, %v1019
      %v1068 = vadd.f32 %v772, %v1022
      %v1069 = vadd.f32 %v777, %v1027
      %v1070 = vadd.f32 %v780, %v1030
      %v1071 = vadd.f32 %v785, %v1035
      %v1072 = vadd.f32 %v788, %v1038
      %v1073 = vld [vmem:[%s2] sm:$0x1]
      %v1075 = vlaneseq
      %v1076 = vshrl.u32 %v1075, 7
      %v1077 = vsub.s32 0, %v1076
      %v1078 = vrot.slane %v1073, %v1077
      %v1080 = vadd.f32 %v1041, %v1078
      %v1081 = vadd.f32 %v1042, %v1078
      %v1082 = vadd.f32 %v1043, %v1078
      %v1083 = vadd.f32 %v1044, %v1078
      %v1084 = vadd.f32 %v1045, %v1078
      %v1085 = vadd.f32 %v1046, %v1078
      %v1086 = vadd.f32 %v1047, %v1078
      %v1087 = vadd.f32 %v1048, %v1078
      %v1088 = vadd.f32 %v1049, %v1078
      %v1089 = vadd.f32 %v1050, %v1078
      %v1090 = vadd.f32 %v1051, %v1078
      %v1091 = vadd.f32 %v1052, %v1078
      %v1092 = vadd.f32 %v1053, %v1078
      %v1093 = vadd.f32 %v1054, %v1078
      %v1094 = vadd.f32 %v1055, %v1078
      %v1095 = vadd.f32 %v1056, %v1078
      %v1096 = vadd.f32 %v1057, %v1078
      %v1097 = vadd.f32 %v1058, %v1078
      %v1098 = vadd.f32 %v1059, %v1078
      %v1099 = vadd.f32 %v1060, %v1078
      %v1100 = vadd.f32 %v1061, %v1078
      %v1101 = vadd.f32 %v1062, %v1078
      %v1102 = vadd.f32 %v1063, %v1078
      %v1103 = vadd.f32 %v1064, %v1078
      %v1104 = vadd.f32 %v1065, %v1078
      %v1105 = vadd.f32 %v1066, %v1078
      %v1106 = vadd.f32 %v1067, %v1078
      %v1107 = vadd.f32 %v1068, %v1078
      %v1108 = vadd.f32 %v1069, %v1078
      %v1109 = vadd.f32 %v1070, %v1078
      %v1110 = vadd.f32 %v1071, %v1078
      %v1111 = vadd.f32 %v1072, %v1078
      %v1112 = vmax.f32 %v1080, 0.0
      %v1113 = vmax.f32 %v1081, 0.0
      %v1114 = vmax.f32 %v1082, 0.0
      %v1115 = vmax.f32 %v1083, 0.0
      %v1116 = vmax.f32 %v1084, 0.0
      %v1117 = vmax.f32 %v1085, 0.0
      %v1118 = vmax.f32 %v1086, 0.0
      %v1119 = vmax.f32 %v1087, 0.0
      %v1120 = vmax.f32 %v1088, 0.0
      %v1121 = vmax.f32 %v1089, 0.0
      %v1122 = vmax.f32 %v1090, 0.0
      %v1123 = vmax.f32 %v1091, 0.0
      %v1124 = vmax.f32 %v1092, 0.0
      %v1125 = vmax.f32 %v1093, 0.0
      %v1126 = vmax.f32 %v1094, 0.0
      %v1127 = vmax.f32 %v1095, 0.0
      %v1128 = vmax.f32 %v1096, 0.0
      %v1129 = vmax.f32 %v1097, 0.0
      %v1130 = vmax.f32 %v1098, 0.0
      %v1131 = vmax.f32 %v1099, 0.0
      %v1132 = vmax.f32 %v1100, 0.0
      %v1133 = vmax.f32 %v1101, 0.0
      %v1134 = vmax.f32 %v1102, 0.0
      %v1135 = vmax.f32 %v1103, 0.0
      %v1136 = vmax.f32 %v1104, 0.0
      %v1137 = vmax.f32 %v1105, 0.0
      %v1138 = vmax.f32 %v1106, 0.0
      %v1139 = vmax.f32 %v1107, 0.0
      %v1140 = vmax.f32 %v1108, 0.0
      %v1141 = vmax.f32 %v1109, 0.0
      %v1142 = vmax.f32 %v1110, 0.0
      %v1143 = vmax.f32 %v1111, 0.0
      %1144 = vst [vmem:[%s170] sm:$0xff] %v1112
      %1145 = vst [vmem:[%s170 + $0x8] sm:$0xff] %v1113
      %1146 = vst [vmem:[%s170 + $0x10] sm:$0xff] %v1114
      %1147 = vst [vmem:[%s170 + $0x18] sm:$0xff] %v1115
      %1148 = vst [vmem:[%s170 + $0x20] sm:$0xff] %v1116
      %1149 = vst [vmem:[%s170 + $0x28] sm:$0xff] %v1117
      %1150 = vst [vmem:[%s170 + $0x30] sm:$0xff] %v1118
      %1151 = vst [vmem:[%s170 + $0x38] sm:$0xff] %v1119
      %1152 = vst [vmem:[%s170 + $0x40] sm:$0xff] %v1120
      %1153 = vst [vmem:[%s170 + $0x48] sm:$0xff] %v1121
      %1154 = vst [vmem:[%s170 + $0x50] sm:$0xff] %v1122
      %1155 = vst [vmem:[%s170 + $0x58] sm:$0xff] %v1123
      %1156 = vst [vmem:[%s170 + $0x60] sm:$0xff] %v1124
      %1157 = vst [vmem:[%s170 + $0x68] sm:$0xff] %v1125
      %1158 = vst [vmem:[%s170 + $0x70] sm:$0xff] %v1126
      %1159 = vst [vmem:[%s170 + $0x78] sm:$0xff] %v1127
      %1160 = vst [vmem:[%s170 + $0x80] sm:$0xff] %v1128
      %1161 = vst [vmem:[%s170 + $0x88] sm:$0xff] %v1129
      %1162 = vst [vmem:[%s170 + $0x90] sm:$0xff] %v1130
      %1163 = vst [vmem:[%s170 + $0x98] sm:$0xff] %v1131
      %1164 = vst [vmem:[%s170 + $0xa0] sm:$0xff] %v1132
      %1165 = vst [vmem:[%s170 + $0xa8] sm:$0xff] %v1133
      %1166 = vst [vmem:[%s170 + $0xb0] sm:$0xff] %v1134
      %1167 = vst [vmem:[%s170 + $0xb8] sm:$0xff] %v1135
      %1168 = vst [vmem:[%s170 + $0xc0] sm:$0xff] %v1136
      %1169 = vst [vmem:[%s170 + $0xc8] sm:$0xff] %v1137
      %1170 = vst [vmem:[%s170 + $0xd0] sm:$0xff] %v1138
      %1171 = vst [vmem:[%s170 + $0xd8] sm:$0xff] %v1139
      %1172 = vst [vmem:[%s170 + $0xe0] sm:$0xff] %v1140
      %1173 = vst [vmem:[%s170 + $0xe8] sm:$0xff] %v1141
      %1174 = vst [vmem:[%s170 + $0xf0] sm:$0xff] %v1142
      %1175 = vst [vmem:[%s170 + $0xf8] sm:$0xff] %v1143
      %p1176 = scmp.lt.s32.totalorder %s14, 1
      %s1177 = scalar_select %p1176, %s14, 1
      %s1178 = smul.addr %s1177, 32
      %s1179 = smul.addr %s1178, 8
      %s1180 = scalar_lea.vmem %s3, %s1179
      // Predicated region
      $region33: #{mixed_3b_forward.8} parent=31 // pred_check
        %p1181 = pneg %p100
      $region34: #{mixed_3b_forward.8} parent=31 // pred_check_branch
        %1183 = sbr.rel (%p1181) target = $region36
      $region35: #{mixed_3b_forward.8} parent=31 // pred_region
        _
      $region36: #{mixed_3b_forward.8} parent=31 // pred_fallthru
        _
    $region32: #{mixed_3b_forward.8} parent=5 // pred_fallthru
      _
    %p1184 = scmp.le.s32.totalorder 2, %s9
    // Predicated region
    $region37: #{mixed_3b_forward.8} parent=5 // pred_check
      %p1185 = pneg %p1184
    $region38: #{mixed_3b_forward.8} parent=5 // pred_check_branch
      %1187 = sbr.rel (%p1185) target = $region40
    $region39: #{mixed_3b_forward.8} parent=5 // pred_region
      %s1188 = ssub.s32 %s9, 2
      // Predicated region
      $region41: #{mixed_3b_forward.8} parent=39 // pred_check
        %p1189 = pneg %p106
      $region42: #{mixed_3b_forward.8} parent=39 // pred_check_branch
        %1191 = sbr.rel (%p1189) target = $region44
      $region43: #{mixed_3b_forward.8} parent=39 // pred_region
        %p1192 = scmp.lt.s32.totalorder %s15, 1
        %s1193 = scalar_select %p1192, %s15, 1
        %s1194 = smul.addr %s1193, 32
        %s1195 = smul.addr %s1194, 8
        %s1196 = scalar_lea.vmem %s3, %s1195
      $region44: #{mixed_3b_forward.8} parent=39 // pred_fallthru
        _
    $region40: #{mixed_3b_forward.8} parent=5 // pred_fallthru
      _
  $region6: #{mixed_3b_forward.8} parent=0 // loop_footer
    %s13 = sadd.s32 1, %s9
  $region7: #{mixed_3b_forward.8} parent=0 // loop_footer_branch
    %8 = sbr.rel target = $region3
  $region8: #{mixed_3b_forward.8} parent=0 // loop_exit
    _

// kernel: mixed_3b_forward.7
$region0: #{mixed_3b_forward.7}
  #allocation0 [shape = 'u32[]', space=smem, size = 0x4, offset = 0x4, fixed_abs, tag = 'smem constant byte address 0x4 - core index']
  #allocation1 [shape = 'u32[144,128]{1,0:T(1,128)}', space=vmem, size = 0x12000, scoped, tag = 'internal scratch']
  %s0 = inlined_call_operand.vmem [shape: bf16[2,4,10,10,96], index: 0, kind: input, shape index: {}]
  %s1 = inlined_call_operand.vmem [shape: bf16[9,96,128], index: 1, kind: input, shape index: {}]
  %s2 = inlined_call_operand.vmem [shape: f32[1,128], index: 2, kind: input, shape index: {}]
  %s3 = inlined_call_operand.vmem [shape: bf16[2,4,8,8,128], index: 3, kind: output, shape index: {}]
  %s4 = sld [smem:[#allocation0]]
  $region45: #{mixed_3b_forward.7} parent=0
    _
  %s6 = ssub.s32 1, %s4
  %s7 = scalar_select 0, %s6, %s4
  loop: start=0, step=1, limit=4
  $region2: #{mixed_3b_forward.7} parent=0 // loop_pre_header
    _
  $region3: #{mixed_3b_forward.7} parent=0 // loop_header
    %s9 = sphi 0, %s13
    %p10 = scmp.ge.s32.totalorder %s9, 4
    %s16 = sphi 0, %s28
    %s17 = sphi 0, %s24
    %s18 = sphi 0, %s16
    %s19 = sphi 0, %s17
    %s20 = sphi 0, %s18
    %s21 = sphi 0, %s19
    %s33 = sphi 0, %s35
    %s36 = sphi 0, %s33
    %s37 = sphi 0, %s36
    %s53 = sphi 0, %s37
    %s57 = sphi 0, %s57
    %s59 = sphi 0, %s57
    %s60 = sphi 0, %s59
    %s74 = sphi 0, %s60
    %s78 = sphi 0, %s78
    %s80 = sphi 0, %s78
    %s81 = sphi 0, %s80
    %s95 = sphi 0, %s81
    %s103 = sphi 0, %s105
    %s106 = sphi 0, %s103
    %s107 = sphi 0, %s106
    %s123 = sphi 0, %s107
  $region4: #{mixed_3b_forward.7} parent=0 // loop_header_branch
    %12 = sbr.rel (%p10) target = $region8
  $region5: #{mixed_3b_forward.7} parent=0 // loop_body
    %s14 = ssub.s32 %s9, 1
    %s15 = ssub.s32 %s9, 2
    %s22 = sadd.s32 1, %s17
    %p23 = scmp.ge.s32.totalorder %s22, 1
    %s24 = scalar_select %p23, 0, %s22
    %s25 = sadd.s32 1, %s16
    %s26 = scalar_select %p23, %s25, %s16
    %p27 = scmp.ge.s32.totalorder %s26, 2
    %s28 = scalar_select %p27, 0, %s26
    %s29 = ssub.s32 %s16, %s28
    %s30 = ssub.s32 %s17, %s24
    %s31 = sor.u32 %s29, %s30
    %p32 = scmp.eq.s32.totalorder %s31, 0
    %s34 = sadd.s32 %s33, 1
    %s35 = scalar_select %p32, %s33, %s34
    %p38 = pneg %p32
    %p39 = scmp.eq.s32.totalorder %s9, 1
    %p40 = por %p38, %p39
    %p41 = scmp.ne.s32.totalorder %s33, %s36
    %p42 = scmp.eq.s32.totalorder %s9, 0
    %p43 = por %p41, %p42
    %p44 = scmp.ne.s32.totalorder %s33, %s36
    %p45 = scmp.eq.s32.totalorder %s14, 1
    %p46 = por %p44, %p45
    %p47 = scmp.ne.s32.totalorder %s36, %s37
    %p48 = scmp.eq.s32.totalorder %s14, 0
    %p49 = por %p47, %p48
    %p50 = scmp.ne.s32.totalorder %s36, %s37
    %p51 = scmp.eq.s32.totalorder %s15, 1
    %p52 = por %p50, %p51
    %p54 = scmp.ne.s32.totalorder %s37, %s53
    %p55 = scmp.eq.s32.totalorder %s15, 0
    %p56 = por %p54, %p55
    %s58 = sadd.s32 %s57, 1
    %p61 = scmp.eq.s32.totalorder %s9, 1
    %p62 = scmp.ne.s32.totalorder %s57, %s59
    %p63 = scmp.eq.s32.totalorder %s9, 0
    %p64 = por %p62, %p63
    %p65 = scmp.ne.s32.totalorder %s57, %s59
    %p66 = scmp.eq.s32.totalorder %s14, 1
    %p67 = por %p65, %p66
    %p68 = scmp.ne.s32.totalorder %s59, %s60
    %p69 = scmp.eq.s32.totalorder %s14, 0
    %p70 = por %p68, %p69
    %p71 = scmp.ne.s32.totalorder %s59, %s60
    %p72 = scmp.eq.s32.totalorder %s15, 1
    %p73 = por %p71, %p72
    %p75 = scmp.ne.s32.totalorder %s60, %s74
    %p76 = scmp.eq.s32.totalorder %s15, 0
    %p77 = por %p75, %p76
    %s79 = sadd.s32 %s78, 1
    %p82 = scmp.eq.s32.totalorder %s9, 1
    %p83 = scmp.ne.s32.totalorder %s78, %s80
    %p84 = scmp.eq.s32.totalorder %s9, 0
    %p85 = por %p83, %p84
    %p86 = scmp.ne.s32.totalorder %s78, %s80
    %p87 = scmp.eq.s32.totalorder %s14, 1
    %p88 = por %p86, %p87
    %p89 = scmp.ne.s32.totalorder %s80, %s81
    %p90 = scmp.eq.s32.totalorder %s14, 0
    %p91 = por %p89, %p90
    %p92 = scmp.ne.s32.totalorder %s80, %s81
    %p93 = scmp.eq.s32.totalorder %s15, 1
    %p94 = por %p92, %p93
    %p96 = scmp.ne.s32.totalorder %s81, %s95
    %p97 = scmp.eq.s32.totalorder %s15, 0
    %p98 = por %p96, %p97
    %s99 = ssub.s32 %s16, %s28
    %s100 = ssub.s32 %s17, %s24
    %s101 = sor.u32 %s99, %s100
    %p102 = scmp.eq.s32.totalorder %s101, 0
    %s104 = sadd.s32 %s103, 1
    %s105 = scalar_select %p102, %s103, %s104
    %p108 = pneg %p102
    %p109 = scmp.eq.s32.totalorder %s9, 1
    %p110 = por %p108, %p109
    %p111 = scmp.ne.s32.totalorder %s103, %s106
    %p112 = scmp.eq.s32.totalorder %s9, 0
    %p113 = por %p111, %p112
    %p114 = scmp.ne.s32.totalorder %s103, %s106
    %p115 = scmp.eq.s32.totalorder %s14, 1
    %p116 = por %p114, %p115
    %p117 = scmp.ne.s32.totalorder %s106, %s107
    %p118 = scmp.eq.s32.totalorder %s14, 0
    %p119 = por %p117, %p118
    %p120 = scmp.ne.s32.totalorder %s106, %s107
    %p121 = scmp.eq.s32.totalorder %s15, 1
    %p122 = por %p120, %p121
    %p124 = scmp.ne.s32.totalorder %s107, %s123
    %p125 = scmp.eq.s32.totalorder %s15, 0
    %p126 = por %p124, %p125
    %p127 = scmp.le.s32.totalorder 1, %s9
    %p128 = scmp.lt.s32.totalorder %s9, 3
    %p129 = pnand %p127, %p128
    %p130 = pneg %p129
    // Predicated region
    $region9: #{mixed_3b_forward.7} parent=5 // pred_check
      _
    $region10: #{mixed_3b_forward.7} parent=5 // pred_check_branch
      %132 = sbr.rel (%p129) target = $region12
    $region11: #{mixed_3b_forward.7} parent=5 // pred_region
      %s133 = ssub.s32 %s9, 1
      // Predicated region
      $region13: #{mixed_3b_forward.7} parent=11 // pred_check
        %p134 = pneg %p70
      $region14: #{mixed_3b_forward.7} parent=11 // pred_check_branch
        %136 = sbr.rel (%p134) target = $region16
      $region15: #{mixed_3b_forward.7} parent=11 // pred_region
        _
      $region16: #{mixed_3b_forward.7} parent=11 // pred_fallthru
        _
      // Predicated region
      $region17: #{mixed_3b_forward.7} parent=11 // pred_check
        %p137 = pneg %p91
      $region18: #{mixed_3b_forward.7} parent=11 // pred_check_branch
        %139 = sbr.rel (%p137) target = $region20
      $region19: #{mixed_3b_forward.7} parent=11 // pred_region
        _
      $region20: #{mixed_3b_forward.7} parent=11 // pred_fallthru
        _
    $region12: #{mixed_3b_forward.7} parent=5 // pred_fallthru
      _
    %p140 = scmp.lt.s32.totalorder %s9, 2
    // Predicated region
    $region21: #{mixed_3b_forward.7} parent=5 // pred_check
      %p141 = pneg %p140
    $region22: #{mixed_3b_forward.7} parent=5 // pred_check_branch
      %143 = sbr.rel (%p141) target = $region24
    $region23: #{mixed_3b_forward.7} parent=5 // pred_region
      // Predicated region
      $region25: #{mixed_3b_forward.7} parent=23 // pred_check
        %p144 = pneg %p43
      $region26: #{mixed_3b_forward.7} parent=23 // pred_check_branch
        %146 = sbr.rel (%p144) target = $region28
      $region27: #{mixed_3b_forward.7} parent=23 // pred_region
        %s147 = smul.u32 4, %s17
        %p148 = scmp.lt.s32.totalorder %s16, 1
        %s149 = scalar_select %p148, %s16, 1
        %p150 = scmp.lt.s32.totalorder %s147, 3
        %s151 = scalar_select %p150, %s147, 3
        %s152 = smul.addr %s151, 20
        %s153 = smul.addr %s149, 80
        %s154 = sadd.s32 %s152, %s153
        %s155 = smul.addr %s154, 4
        %s156 = scalar_lea.vmem %s0, %s155
        %s157 = smul.u32 4, %s17
      $region28: #{mixed_3b_forward.7} parent=23 // pred_fallthru
        _
    $region24: #{mixed_3b_forward.7} parent=5 // pred_fallthru
      _
    %p158 = scmp.le.s32.totalorder 1, %s9
    %p159 = scmp.lt.s32.totalorder %s9, 3
    %p160 = pnand %p158, %p159
    %p161 = pneg %p160
    // Predicated region
    $region29: #{mixed_3b_forward.7} parent=5 // pred_check
      _
    $region30: #{mixed_3b_forward.7} parent=5 // pred_check_branch
      %163 = sbr.rel (%p160) target = $region32
    $region31: #{mixed_3b_forward.7} parent=5 // pred_region
      %s164 = ssub.s32 %s9, 1
      %s165 = smul.u32 4, %s19
      %p166 = scmp.lt.s32.totalorder %s18, 1
      %s167 = scalar_select %p166, %s18, 1
      %p168 = scmp.lt.s32.totalorder %s165, 3
      %s169 = scalar_select %p168, %s165, 3
      %s170 = smul.addr %s169, 20
      %s171 = smul.addr %s167, 80
      %s172 = sadd.s32 %s170, %s171
      %s173 = smul.addr %s172, 4
      %s174 = scalar_lea.vmem %s0, %s173
      %p175 = pneg %p49
      %p176 = pneg %p46
      %p177 = pneg %p70
      %p178 = pneg %p67
      %p179 = pneg %p91
      %p180 = pneg %p88
      %p181 = pneg %p119
      %p182 = pneg %p116
      %s183 = smul.u32 4, %s19
      %p184 = scmp.lt.s32.totalorder %s18, 1
      %s185 = scalar_select %p184, %s18, 1
      %p186 = scmp.lt.s32.totalorder %s183, 3
      %s187 = scalar_select %p186, %s183, 3
      %s188 = smul.addr %s187, 8
      %s189 = smul.addr %s185, 32
      %s190 = sadd.s32 %s188, %s189
      %s191 = smul.addr %s190, 4
      %s192 = scalar_lea.vmem %s3, %s191
      %s193 = smul.u32 4, %s19
      %p194 = scmp.lt.s32.totalorder %s18, 1
      %s195 = scalar_select %p194, %s18, 1
      %p196 = scmp.lt.s32.totalorder %s193, 3
      %s197 = scalar_select %p196, %s193, 3
      %s198 = smul.addr %s197, 20
      %s199 = smul.addr %s195, 80
      %s200 = sadd.s32 %s198, %s199
      %s201 = smul.addr %s200, 4
      %s202 = scalar_lea.vmem %s0, %s201
      %s203 = smul.u32 4, %s19
      %s204 = smul.u32 4, %s19
      %p205 = scmp.lt.s32.totalorder %s18, 1
      %s206 = scalar_select %p205, %s18, 1
      %p207 = scmp.lt.s32.totalorder %s204, 3
      %s208 = scalar_select %p207, %s204, 3
      %s209 = smul.addr %s208, 8
      %s210 = smul.addr %s206, 32
      %s211 = sadd.s32 %s209, %s210
      %s212 = smul.addr %s211, 4
      %s213 = scalar_lea.vmem %s3, %s212
      %s214 = smul.u32 4, %s19
      %v216 = vld [vmem:[%s202] sm:$0xf]
      %v217 = vld [vmem:[%s202 + $0x4] sm:$0x1]
      %v218 = vld [vmem:[%s202 + $0x8] sm:$0xf]
      %v219 = vld [vmem:[%s202 + $0xc] sm:$0x1]
      %v220 = vld [vmem:[%s202 + $0x10] sm:$0xf]
      %v221 = vld [vmem:[%s202 + $0x14] sm:$0x1]
      %v222 = vld [vmem:[%s202 + $0x18] sm:$0xf]
      %v223 = vld [vmem:[%s202 + $0x1c] sm:$0x1]
      %v224 = vld [vmem:[%s202 + $0x20] sm:$0xf]
      %v225 = vld [vmem:[%s202 + $0x24] sm:$0x1]
      %v226 = vld [vmem:[%s202 + $0x28] sm:$0xf]
      %v227 = vld [vmem:[%s202 + $0x2c] sm:$0x1]
      %v228 = vld [vmem:[%s202 + $0x30] sm:$0xf]
      %v229 = vld [vmem:[%s202 + $0x34] sm:$0x1]
      %v230 = vld [vmem:[%s202 + $0x38] sm:$0xf]
      %v231 = vld [vmem:[%s202 + $0x3c] sm:$0x1]
      %v232 = vld [vmem:[%s202 + $0x40] sm:$0xf]
      %v233 = vld [vmem:[%s202 + $0x44] sm:$0x1]
      %v234 = vld [vmem:[%s202 + $0x48] sm:$0xf]
      %v235 = vld [vmem:[%s202 + $0x4c] sm:$0x1]
      %v236 = vld [vmem:[%s202 + $0x50] sm:$0xf]
      %v237 = vld [vmem:[%s202 + $0x54] sm:$0x1]
      %v238 = vld [vmem:[%s202 + $0x58] sm:$0xf]
      %v239 = vld [vmem:[%s202 + $0x5c] sm:$0x1]
      %v240 = vld [vmem:[%s202 + $0x60] sm:$0xf]
      %v241 = vld [vmem:[%s202 + $0x64] sm:$0x1]
      %v242 = vld [vmem:[%s202 + $0x68] sm:$0xf]
      %v243 = vld [vmem:[%s202 + $0x6c] sm:$0x1]
      %v244 = vld [vmem:[%s202 + $0x70] sm:$0xf]
      %v245 = vld [vmem:[%s202 + $0x74] sm:$0x1]
      %v246 = vld [vmem:[%s202 + $0x78] sm:$0xf]
      %v247 = vld [vmem:[%s202 + $0x7c] sm:$0x1]
      %v248 = vld [vmem:[%s202 + $0x80] sm:$0xf]
      %v249 = vld [vmem:[%s202 + $0x84] sm:$0x1]
      %v250 = vld [vmem:[%s202 + $0x88] sm:$0xf]
      %v251 = vld [vmem:[%s202 + $0x8c] sm:$0x1]
      %v252 = vld [vmem:[%s202 + $0x90] sm:$0xf]
      %v253 = vld [vmem:[%s202 + $0x94] sm:$0x1]
      %v254 = vld [vmem:[%s202 + $0x98] sm:$0xf]
      %v255 = vld [vmem:[%s202 + $0x9c] sm:$0x1]
      %v256 = vld [vmem:[%s202 + $0xa0] sm:$0xf]
      %v257 = vld [vmem:[%s202 + $0xa4] sm:$0x1]
      %v258 = vld [vmem:[%s202 + $0xa8] sm:$0xf]
      %v259 = vld [vmem:[%s202 + $0xac] sm:$0x1]
      %v260 = vld [vmem:[%s202 + $0xb0] sm:$0xf]
      %v261 = vld [vmem:[%s202 + $0xb4] sm:$0x1]
      %v262 = vld [vmem:[%s202 + $0xb8] sm:$0xf]
      %v263 = vld [vmem:[%s202 + $0xbc] sm:$0x1]
      %v264 = vld [vmem:[%s202 + $0xc0] sm:$0xf]
      %v265 = vld [vmem:[%s202 + $0xc4] sm:$0x1]
      %v266 = vld [vmem:[%s202 + $0xc8] sm:$0xf]
      %v267 = vld [vmem:[%s202 + $0xcc] sm:$0x1]
      %v268 = vld [vmem:[%s202 + $0xd0] sm:$0xf]
      %v269 = vld [vmem:[%s202 + $0xd4] sm:$0x1]
      %v270 = vld [vmem:[%s202 + $0xd8] sm:$0xf]
      %v271 = vld [vmem:[%s202 + $0xdc] sm:$0x1]
      %v272 = vld [vmem:[%s202 + $0xe0] sm:$0xf]
      %v273 = vld [vmem:[%s202 + $0xe4] sm:$0x1]
      %v274 = vld [vmem:[%s202 + $0xe8] sm:$0xf]
      %v275 = vld [vmem:[%s202 + $0xec] sm:$0x1]
      %v276 = vld [vmem:[%s202 + $0xf0] sm:$0xf]
      %v277 = vld [vmem:[%s202 + $0xf4] sm:$0x1]
      %v278 = vld [vmem:[%s202 + $0xf8] sm:$0xf]
      %v279 = vld [vmem:[%s202 + $0xfc] sm:$0x1]
      %v280 = vld [vmem:[%s202 + $0x100] sm:$0xf]
      %v281 = vld [vmem:[%s202 + $0x104] sm:$0x1]
      %v282 = vld [vmem:[%s202 + $0x108] sm:$0xf]
      %v283 = vld [vmem:[%s202 + $0x10c] sm:$0x1]
      %v284 = vld [vmem:[%s202 + $0x110] sm:$0xf]
      %v285 = vld [vmem:[%s202 + $0x114] sm:$0x1]
      %v286 = vld [vmem:[%s202 + $0x118] sm:$0xf]
      %v287 = vld [vmem:[%s202 + $0x11c] sm:$0x1]
      %v288 = vld [vmem:[%s202 + $0x120] sm:$0xf]
      %v289 = vld [vmem:[%s202 + $0x124] sm:$0x1]
      %v290 = vld [vmem:[%s202 + $0x128] sm:$0xf]
      %v291 = vld [vmem:[%s202 + $0x12c] sm:$0x1]
      %v292 = vld [vmem:[%s202 + $0x130] sm:$0xf]
      %v293 = vld [vmem:[%s202 + $0x134] sm:$0x1]
      %v294 = vld [vmem:[%s202 + $0x138] sm:$0xf]
      %v295 = vld [vmem:[%s202 + $0x13c] sm:$0x1]
      %v296 = vld [vmem:[%s1] sm:$0xf]
      %v297 = vld [vmem:[%s1 + $0x4] sm:$0xf]
      %v298 = vld [vmem:[%s1 + $0x8] sm:$0xf]
      %v299 = vld [vmem:[%s1 + $0xc] sm:$0xf]
      %v300 = vld [vmem:[%s1 + $0x10] sm:$0xf]
      %v301 = vld [vmem:[%s1 + $0x14] sm:$0xf]
      %v302 = vld [vmem:[%s1 + $0x18] sm:$0xf]
      %v303 = vld [vmem:[%s1 + $0x1c] sm:$0xf]
      %v304 = vld [vmem:[%s1 + $0x20] sm:$0xf]
      %v305 = vld [vmem:[%s1 + $0x24] sm:$0xf]
      %v306 = vld [vmem:[%s1 + $0x28] sm:$0xf]
      %v307 = vld [vmem:[%s1 + $0x2c] sm:$0xf]
      %vm308 = vsmask.f32 3328
      %vm309 = vsmask.f32 7440
      %vm310 = vmor %vm308, %vm309
      %v312 = vshrl.u32 %v216, 16
      %v314 = vrot.slane %v312, 4
      %v315 = vshll.u32 %v216, 16
      %v317 = vrot.slane %v315, 5
      %v318 = vor.u32 %v314, %v317
      %v319 = vrot.slane %v318, 4
      %v321 = vshll.u32 %v217, 16
      %v323 = vrot.slane %v321, 5
      %v324 = vsel %vm310, %v319, %v323
      %v326 = vshrl.u32 %v218, 16
      %v328 = vrot.slane %v326, 4
      %v329 = vshll.u32 %v218, 16
      %v331 = vrot.slane %v329, 5
      %v332 = vor.u32 %v328, %v331
      %v333 = vrot.slane %v332, 4
      %v335 = vshll.u32 %v219, 16
      %v337 = vrot.slane %v335, 5
      %v338 = vsel %vm310, %v333, %v337
      %v340 = vshrl.u32 %v220, 16
      %v342 = vrot.slane %v340, 4
      %v343 = vshll.u32 %v220, 16
      %v345 = vrot.slane %v343, 5
      %v346 = vor.u32 %v342, %v345
      %v347 = vrot.slane %v346, 4
      %v349 = vshll.u32 %v221, 16
      %v351 = vrot.slane %v349, 5
      %v352 = vsel %vm310, %v347, %v351
      %v354 = vshrl.u32 %v222, 16
      %v356 = vrot.slane %v354, 4
      %v357 = vshll.u32 %v222, 16
      %v359 = vrot.slane %v357, 5
      %v360 = vor.u32 %v356, %v359
      %v361 = vrot.slane %v360, 4
      %v363 = vshll.u32 %v223, 16
      %v365 = vrot.slane %v363, 5
      %v366 = vsel %vm310, %v361, %v365
      %v368 = vshrl.u32 %v224, 16
      %v370 = vrot.slane %v368, 4
      %v371 = vshll.u32 %v224, 16
      %v373 = vrot.slane %v371, 5
      %v374 = vor.u32 %v370, %v373
      %v375 = vrot.slane %v374, 4
      %v377 = vshll.u32 %v225, 16
      %v379 = vrot.slane %v377, 5
      %v380 = vsel %vm310, %v375, %v379
      %v382 = vshrl.u32 %v226, 16
      %v384 = vrot.slane %v382, 4
      %v385 = vshll.u32 %v226, 16
      %v387 = vrot.slane %v385, 5
      %v388 = vor.u32 %v384, %v387
      %v389 = vrot.slane %v388, 4
      %v391 = vshll.u32 %v227, 16
      %v393 = vrot.slane %v391, 5
      %v394 = vsel %vm310, %v389, %v393
      %v396 = vshrl.u32 %v228, 16
      %v398 = vrot.slane %v396, 4
      %v399 = vshll.u32 %v228, 16
      %v401 = vrot.slane %v399, 5
      %v402 = vor.u32 %v398, %v401
      %v403 = vrot.slane %v402, 4
      %v405 = vshll.u32 %v229, 16
      %v407 = vrot.slane %v405, 5
      %v408 = vsel %vm310, %v403, %v407
      %v410 = vshrl.u32 %v230, 16
      %v412 = vrot.slane %v410, 4
      %v413 = vshll.u32 %v230, 16
      %v415 = vrot.slane %v413, 5
      %v416 = vor.u32 %v412, %v415
      %v417 = vrot.slane %v416, 4
      %v419 = vshll.u32 %v231, 16
      %v421 = vrot.slane %v419, 5
      %v422 = vsel %vm310, %v417, %v421
      %v424 = vshrl.u32 %v236, 16
      %v426 = vrot.slane %v424, 4
      %v427 = vshll.u32 %v236, 16
      %v429 = vrot.slane %v427, 5
      %v430 = vor.u32 %v426, %v429
      %v431 = vrot.slane %v430, 4
      %v433 = vshll.u32 %v237, 16
      %v435 = vrot.slane %v433, 5
      %v436 = vsel %vm310, %v431, %v435
      %v438 = vshrl.u32 %v238, 16
      %v440 = vrot.slane %v438, 4
      %v441 = vshll.u32 %v238, 16
      %v443 = vrot.slane %v441, 5
      %v444 = vor.u32 %v440, %v443
      %v445 = vrot.slane %v444, 4
      %v447 = vshll.u32 %v239, 16
      %v449 = vrot.slane %v447, 5
      %v450 = vsel %vm310, %v445, %v449
      %v452 = vshrl.u32 %v240, 16
      %v454 = vrot.slane %v452, 4
      %v455 = vshll.u32 %v240, 16
      %v457 = vrot.slane %v455, 5
      %v458 = vor.u32 %v454, %v457
      %v459 = vrot.slane %v458, 4
      %v461 = vshll.u32 %v241, 16
      %v463 = vrot.slane %v461, 5
      %v464 = vsel %vm310, %v459, %v463
      %v466 = vshrl.u32 %v242, 16
      %v468 = vrot.slane %v466, 4
      %v469 = vshll.u32 %v242, 16
      %v471 = vrot.slane %v469, 5
      %v472 = vor.u32 %v468, %v471
      %v473 = vrot.slane %v472, 4
      %v475 = vshll.u32 %v243, 16
      %v477 = vrot.slane %v475, 5
      %v478 = vsel %vm310, %v473, %v477
      %v480 = vshrl.u32 %v244, 16
      %v482 = vrot.slane %v480, 4
      %v483 = vshll.u32 %v244, 16
      %v485 = vrot.slane %v483, 5
      %v486 = vor.u32 %v482, %v485
      %v487 = vrot.slane %v486, 4
      %v489 = vshll.u32 %v245, 16
      %v491 = vrot.slane %v489, 5
      %v492 = vsel %vm310, %v487, %v491
      %v494 = vshrl.u32 %v246, 16
      %v496 = vrot.slane %v494, 4
      %v497 = vshll.u32 %v246, 16
      %v499 = vrot.slane %v497, 5
      %v500 = vor.u32 %v496, %v499
      %v501 = vrot.slane %v500, 4
      %v503 = vshll.u32 %v247, 16
      %v505 = vrot.slane %v503, 5
      %v506 = vsel %vm310, %v501, %v505
      %v508 = vshrl.u32 %v248, 16
      %v510 = vrot.slane %v508, 4
      %v511 = vshll.u32 %v248, 16
      %v513 = vrot.slane %v511, 5
      %v514 = vor.u32 %v510, %v513
      %v515 = vrot.slane %v514, 4
      %v517 = vshll.u32 %v249, 16
      %v519 = vrot.slane %v517, 5
      %v520 = vsel %vm310, %v515, %v519
      %v522 = vshrl.u32 %v250, 16
      %v524 = vrot.slane %v522, 4
      %v525 = vshll.u32 %v250, 16
      %v527 = vrot.slane %v525, 5
      %v528 = vor.u32 %v524, %v527
      %v529 = vrot.slane %v528, 4
      %v531 = vshll.u32 %v251, 16
      %v533 = vrot.slane %v531, 5
      %v534 = vsel %vm310, %v529, %v533
      %v536 = vshrl.u32 %v256, 16
      %v538 = vrot.slane %v536, 4
      %v539 = vshll.u32 %v256, 16
      %v541 = vrot.slane %v539, 5
      %v542 = vor.u32 %v538, %v541
      %v543 = vrot.slane %v542, 4
      %v545 = vshll.u32 %v257, 16
      %v547 = vrot.slane %v545, 5
      %v548 = vsel %vm310, %v543, %v547
      %v550 = vshrl.u32 %v258, 16
      %v552 = vrot.slane %v550, 4
      %v553 = vshll.u32 %v258, 16
      %v555 = vrot.slane %v553, 5
      %v556 = vor.u32 %v552, %v555
      %v557 = vrot.slane %v556, 4
      %v559 = vshll.u32 %v259, 16
      %v561 = vrot.slane %v559, 5
      %v562 = vsel %vm310, %v557, %v561
      %v564 = vshrl.u32 %v260, 16
      %v566 = vrot.slane %v564, 4
      %v567 = vshll.u32 %v260, 16
      %v569 = vrot.slane %v567, 5
      %v570 = vor.u32 %v566, %v569
      %v571 = vrot.slane %v570, 4
      %v573 = vshll.u32 %v261, 16
      %v575 = vrot.slane %v573, 5
      %v576 = vsel %vm310, %v571, %v575
      %v578 = vshrl.u32 %v262, 16
      %v580 = vrot.slane %v578, 4
      %v581 = vshll.u32 %v262, 16
      %v583 = vrot.slane %v581, 5
      %v584 = vor.u32 %v580, %v583
      %v585 = vrot.slane %v584, 4
      %v587 = vshll.u32 %v263, 16
      %v589 = vrot.slane %v587, 5
      %v590 = vsel %vm310, %v585, %v589
      %v592 = vshrl.u32 %v264, 16
      %v594 = vrot.slane %v592, 4
      %v595 = vshll.u32 %v264, 16
      %v597 = vrot.slane %v595, 5
      %v598 = vor.u32 %v594, %v597
      %v599 = vrot.slane %v598, 4
      %v601 = vshll.u32 %v265, 16
      %v603 = vrot.slane %v601, 5
      %v604 = vsel %vm310, %v599, %v603
      %v606 = vshrl.u32 %v266, 16
      %v608 = vrot.slane %v606, 4
      %v609 = vshll.u32 %v266, 16
      %v611 = vrot.slane %v609, 5
      %v612 = vor.u32 %v608, %v611
      %v613 = vrot.slane %v612, 4
      %v615 = vshll.u32 %v267, 16
      %v617 = vrot.slane %v615, 5
      %v618 = vsel %vm310, %v613, %v617
      %v620 = vshrl.u32 %v268, 16
      %v622 = vrot.slane %v620, 4
      %v623 = vshll.u32 %v268, 16
      %v625 = vrot.slane %v623, 5
      %v626 = vor.u32 %v622, %v625
      %v627 = vrot.slane %v626, 4
      %v629 = vshll.u32 %v269, 16
      %v631 = vrot.slane %v629, 5
      %v632 = vsel %vm310, %v627, %v631
      %v634 = vshrl.u32 %v270, 16
      %v636 = vrot.slane %v634, 4
      %v637 = vshll.u32 %v270, 16
      %v639 = vrot.slane %v637, 5
      %v640 = vor.u32 %v636, %v639
      %v641 = vrot.slane %v640, 4
      %v643 = vshll.u32 %v271, 16
      %v645 = vrot.slane %v643, 5
      %v646 = vsel %vm310, %v641, %v645
      %v648 = vshrl.u32 %v276, 16
      %v650 = vrot.slane %v648, 4
      %v651 = vshll.u32 %v276, 16
      %v653 = vrot.slane %v651, 5
      %v654 = vor.u32 %v650, %v653
      %v655 = vrot.slane %v654, 4
      %v657 = vshll.u32 %v277, 16
      %v659 = vrot.slane %v657, 5
      %v660 = vsel %vm310, %v655, %v659
      %v662 = vshrl.u32 %v278, 16
      %v664 = vrot.slane %v662, 4
      %v665 = vshll.u32 %v278, 16
      %v667 = vrot.slane %v665, 5
      %v668 = vor.u32 %v664, %v667
      %v669 = vrot.slane %v668, 4
      %v671 = vshll.u32 %v279, 16
      %v673 = vrot.slane %v671, 5
      %v674 = vsel %vm310, %v669, %v673
      %v676 = vshrl.u32 %v280, 16
      %v678 = vrot.slane %v676, 4
      %v679 = vshll.u32 %v280, 16
      %v681 = vrot.slane %v679, 5
      %v682 = vor.u32 %v678, %v681
      %v683 = vrot.slane %v682, 4
      %v685 = vshll.u32 %v281, 16
      %v687 = vrot.slane %v685, 5
      %v688 = vsel %vm310, %v683, %v687
      %v690 = vshrl.u32 %v282, 16
      %v692 = vrot.slane %v690, 4
      %v693 = vshll.u32 %v282, 16
      %v695 = vrot.slane %v693, 5
      %v696 = vor.u32 %v692, %v695
      %v697 = vrot.slane %v696, 4
      %v699 = vshll.u32 %v283, 16
      %v701 = vrot.slane %v699, 5
      %v702 = vsel %vm310, %v697, %v701
      %v704 = vshrl.u32 %v284, 16
      %v706 = vrot.slane %v704, 4
      %v707 = vshll.u32 %v284, 16
      %v709 = vrot.slane %v707, 5
      %v710 = vor.u32 %v706, %v709
      %v711 = vrot.slane %v710, 4
      %v713 = vshll.u32 %v285, 16
      %v715 = vrot.slane %v713, 5
      %v716 = vsel %vm310, %v711, %v715
      %v718 = vshrl.u32 %v286, 16
      %v720 = vrot.slane %v718, 4
      %v721 = vshll.u32 %v286, 16
      %v723 = vrot.slane %v721, 5
      %v724 = vor.u32 %v720, %v723
      %v725 = vrot.slane %v724, 4
      %v727 = vshll.u32 %v287, 16
      %v729 = vrot.slane %v727, 5
      %v730 = vsel %vm310, %v725, %v729
      %v732 = vshrl.u32 %v288, 16
      %v734 = vrot.slane %v732, 4
      %v735 = vshll.u32 %v288, 16
      %v737 = vrot.slane %v735, 5
      %v738 = vor.u32 %v734, %v737
      %v739 = vrot.slane %v738, 4
      %v741 = vshll.u32 %v289, 16
      %v743 = vrot.slane %v741, 5
      %v744 = vsel %vm310, %v739, %v743
      %v746 = vshrl.u32 %v290, 16
      %v748 = vrot.slane %v746, 4
      %v749 = vshll.u32 %v290, 16
      %v751 = vrot.slane %v749, 5
      %v752 = vor.u32 %v748, %v751
      %v753 = vrot.slane %v752, 4
      %v755 = vshll.u32 %v291, 16
      %v757 = vrot.slane %v755, 5
      %v758 = vsel %vm310, %v753, %v757
      %s759 = scalar_lea.vmem %s1, 48
      %v760 = vld [vmem:[%s759] sm:$0xf]
      %v761 = vld [vmem:[%s759 + $0x4] sm:$0xf]
      %v762 = vld [vmem:[%s759 + $0x8] sm:$0xf]
      %v763 = vld [vmem:[%s759 + $0xc] sm:$0xf]
      %v764 = vld [vmem:[%s759 + $0x10] sm:$0xf]
      %v765 = vld [vmem:[%s759 + $0x14] sm:$0xf]
      %v766 = vld [vmem:[%s759 + $0x18] sm:$0xf]
      %v767 = vld [vmem:[%s759 + $0x1c] sm:$0xf]
      %v768 = vld [vmem:[%s759 + $0x20] sm:$0xf]
      %v769 = vld [vmem:[%s759 + $0x24] sm:$0xf]
      %v770 = vld [vmem:[%s759 + $0x28] sm:$0xf]
      %v771 = vld [vmem:[%s759 + $0x2c] sm:$0xf]
      %v772 = vunpack.c.l.b16 %v324
      %v773 = vunpack.c.l.b16 %v338
      %v774 = vunpack.c.l.b16 %v352
      %v775 = vunpack.c.l.b16 %v366
      %v776 = vunpack.c.l.b16 %v380
      %v777 = vunpack.c.l.b16 %v394
      %v778 = vunpack.c.l.b16 %v408
      %v779 = vunpack.c.l.b16 %v422
      %v780 = vunpack.c.l.b16 %v436
      %v781 = vunpack.c.l.b16 %v450
      %v782 = vunpack.c.l.b16 %v464
      %v783 = vunpack.c.l.b16 %v478
      %v784 = vunpack.c.l.b16 %v492
      %v785 = vunpack.c.l.b16 %v506
      %v786 = vunpack.c.l.b16 %v520
      %v787 = vunpack.c.l.b16 %v534
      %v788 = vunpack.c.l.b16 %v548
      %v789 = vunpack.c.l.b16 %v562
      %v790 = vunpack.c.l.b16 %v576
      %v791 = vunpack.c.l.b16 %v590
      %v792 = vunpack.c.l.b16 %v604
      %v793 = vunpack.c.l.b16 %v618
      %v794 = vunpack.c.l.b16 %v632
      %v795 = vunpack.c.l.b16 %v646
      %v796 = vunpack.c.l.b16 %v660
      %v797 = vunpack.c.l.b16 %v674
      %v798 = vunpack.c.l.b16 %v688
      %v799 = vunpack.c.l.b16 %v702
      %v800 = vunpack.c.l.b16 %v716
      %v801 = vunpack.c.l.b16 %v730
      %v802 = vunpack.c.l.b16 %v744
      %v803 = vunpack.c.l.b16 %v758
      %v804 = vpack.c.b16 %v773, %v772
      %v805 = vpack.c.b16 %v775, %v774
      %v806 = vpack.c.b16 %v777, %v776
      %v807 = vpack.c.b16 %v779, %v778
      %v808 = vpack.c.b16 %v781, %v780
      %v809 = vpack.c.b16 %v783, %v782
      %v810 = vpack.c.b16 %v785, %v784
      %v811 = vpack.c.b16 %v787, %v786
      %v812 = vpack.c.b16 %v789, %v788
      %v813 = vpack.c.b16 %v791, %v790
      %v814 = vpack.c.b16 %v793, %v792
      %v815 = vpack.c.b16 %v795, %v794
      %v816 = vpack.c.b16 %v797, %v796
      %v817 = vpack.c.b16 %v799, %v798
      %v818 = vpack.c.b16 %v801, %v800
      %v819 = vpack.c.b16 %v803, %v802
      %v832 = vunpack.c.l.b16 %v760
      %v833 = vunpack.c.l.b16 %v761
      %v834 = vunpack.c.l.b16 %v762
      %v835 = vunpack.c.l.b16 %v763
      %v836 = vunpack.c.l.b16 %v764
      %v837 = vunpack.c.l.b16 %v765
      %v838 = vunpack.c.l.b16 %v766
      %v839 = vunpack.c.l.b16 %v767
      %v840 = vunpack.c.l.b16 %v768
      %v841 = vunpack.c.l.b16 %v769
      %v842 = vunpack.c.l.b16 %v770
      %v843 = vunpack.c.l.b16 %v771
      %v844 = vpack.c.b16 %v833, %v832
      %v845 = vpack.c.b16 %v835, %v834
      %v846 = vpack.c.b16 %v837, %v836
      %v847 = vpack.c.b16 %v839, %v838
      %v848 = vpack.c.b16 %v841, %v840
      %v849 = vpack.c.b16 %v843, %v842
      %vm856 = vcmask 785408
      %v858 = vsel %vm856, %v804, 0
      %v861 = vsel %vm856, %v805, 0
      %v864 = vsel %vm856, %v806, 0
      %v867 = vsel %vm856, %v807, 0
      %v870 = vsel %vm856, %v808, 0
      %v873 = vsel %vm856, %v809, 0
      %v876 = vsel %vm856, %v810, 0
      %v879 = vsel %vm856, %v811, 0
      %v882 = vsel %vm856, %v812, 0
      %v885 = vsel %vm856, %v813, 0
      %v888 = vsel %vm856, %v814, 0
      %v891 = vsel %vm856, %v815, 0
      %v894 = vsel %vm856, %v816, 0
      %v897 = vsel %vm856, %v817, 0
      %v900 = vsel %vm856, %v818, 0
      %v903 = vsel %vm856, %v819, 0
      %905 = vmatprep.subr.bf16.mxu0 0
      %906 = vmatpush1.bf16.msra.mxu0 0
      %907 = vmatprep.subr.bf16.mxu0 0
      %908 = vmatpush1.bf16.msra.mxu0 0
      %909 = vmatprep.subr.bf16.mxu0 0
      %910 = vmatpush1.bf16.msra.mxu0 %v849
      %911 = vmatprep.subr.bf16.mxu0 0
      %912 = vmatpush1.bf16.msra.mxu0 %v848
      %913 = vmatprep.subr.bf16.mxu0 0
      %914 = vmatpush1.bf16.msra.mxu0 %v847
      %915 = vmatprep.subr.bf16.mxu0 0
      %916 = vmatpush1.bf16.msra.mxu0 %v846
      %917 = vmatprep.subr.bf16.mxu0 0
      %918 = vmatpush1.bf16.msra.mxu0 %v845
      %919 = vmatprep.subr.bf16.mxu0 0
      %920 = vmatpush1.bf16.msra.mxu0 %v844
      %921 = vmatprep.subr.bf16.mxu0 0
      %922 = vmatpush2.bf16.msra.mxu0 0
      %923 = vmatprep.subr.bf16.mxu0 0
      %924 = vmatpush2.bf16.msra.mxu0 0
      %925 = vmatprep.subr.bf16.mxu0 0
      %926 = vmatpush2.bf16.msra.mxu0 0
      %927 = vmatprep.subr.bf16.mxu0 0
      %928 = vmatpush2.bf16.msra.mxu0 0
      %929 = vmatprep.subr.bf16.mxu0 0
      %930 = vmatpush2.bf16.msra.mxu0 0
      %931 = vmatprep.subr.bf16.mxu0 0
      %932 = vmatpush2.bf16.msra.mxu0 0
      %933 = vmatprep.subr.bf16.mxu0 0
      %934 = vmatpush2.bf16.msra.mxu0 0
      %935 = vmatprep.subr.bf16.mxu0 0
      %936 = vmatpush2.bf16.msra.mxu0 0
      %937 = vmatprep.mubr.bf16.mxu0 0
      %938 = vmatmul.mubr.bf16.gmra.mxu0 %v858
      %v939 = vpop.f32.mrf.mxu0
      %v940 = vadd.f32 0.0, %v939
      %v941 = vpop.f32.mrf.mxu0
      %v942 = vpop.f32.mrf.mxu0
      %v943 = vadd.f32 0.0, %v942
      %v944 = vpop.f32.mrf.mxu0
      %945 = vmatprep.mubr.bf16.mxu0 0
      %946 = vmatmul.mubr.bf16.gmra.mxu0 %v861
      %v947 = vpop.f32.mrf.mxu0
      %v948 = vadd.f32 0.0, %v947
      %v949 = vpop.f32.mrf.mxu0
      %v950 = vpop.f32.mrf.mxu0
      %v951 = vadd.f32 0.0, %v950
      %v952 = vpop.f32.mrf.mxu0
      %953 = vmatprep.mubr.bf16.mxu0 0
      %954 = vmatmul.mubr.bf16.gmra.mxu0 %v864
      %v955 = vpop.f32.mrf.mxu0
      %v956 = vadd.f32 0.0, %v955
      %v957 = vpop.f32.mrf.mxu0
      %v958 = vpop.f32.mrf.mxu0
      %v959 = vadd.f32 0.0, %v958
      %v960 = vpop.f32.mrf.mxu0
      %961 = vmatprep.mubr.bf16.mxu0 0
      %962 = vmatmul.mubr.bf16.gmra.mxu0 %v867
      %v963 = vpop.f32.mrf.mxu0
      %v964 = vadd.f32 0.0, %v963
      %v965 = vpop.f32.mrf.mxu0
      %v966 = vpop.f32.mrf.mxu0
      %v967 = vadd.f32 0.0, %v966
      %v968 = vpop.f32.mrf.mxu0
      %969 = vmatprep.mubr.bf16.mxu0 0
      %970 = vmatmul.mubr.bf16.gmra.mxu0 %v870
      %v971 = vpop.f32.mrf.mxu0
      %v972 = vadd.f32 0.0, %v971
      %v973 = vpop.f32.mrf.mxu0
      %v974 = vpop.f32.mrf.mxu0
      %v975 = vadd.f32 0.0, %v974
      %v976 = vpop.f32.mrf.mxu0
      %977 = vmatprep.mubr.bf16.mxu0 0
      %978 = vmatmul.mubr.bf16.gmra.mxu0 %v873
      %v979 = vpop.f32.mrf.mxu0
      %v980 = vadd.f32 0.0, %v979
      %v981 = vpop.f32.mrf.mxu0
      %v982 = vpop.f32.mrf.mxu0
      %v983 = vadd.f32 0.0, %v982
      %v984 = vpop.f32.mrf.mxu0
      %985 = vmatprep.mubr.bf16.mxu0 0
      %986 = vmatmul.mubr.bf16.gmra.mxu0 %v876
      %v987 = vpop.f32.mrf.mxu0
      %v988 = vadd.f32 0.0, %v987
      %v989 = vpop.f32.mrf.mxu0
      %v990 = vpop.f32.mrf.mxu0
      %v991 = vadd.f32 0.0, %v990
      %v992 = vpop.f32.mrf.mxu0
      %993 = vmatprep.mubr.bf16.mxu0 0
      %994 = vmatmul.mubr.bf16.gmra.mxu0 %v879
      %v995 = vpop.f32.mrf.mxu0
      %v996 = vadd.f32 0.0, %v995
      %v997 = vpop.f32.mrf.mxu0
      %v998 = vpop.f32.mrf.mxu0
      %v999 = vadd.f32 0.0, %v998
      %v1000 = vpop.f32.mrf.mxu0
      %1001 = vmatprep.mubr.bf16.mxu0 0
      %1002 = vmatmul.mubr.bf16.gmra.mxu0 %v882
      %v1003 = vpop.f32.mrf.mxu0
      %v1004 = vadd.f32 0.0, %v1003
      %v1005 = vpop.f32.mrf.mxu0
      %v1006 = vpop.f32.mrf.mxu0
      %v1007 = vadd.f32 0.0, %v1006
      %v1008 = vpop.f32.mrf.mxu0
      %1009 = vmatprep.mubr.bf16.mxu0 0
      %1010 = vmatmul.mubr.bf16.gmra.mxu0 %v885
      %v1011 = vpop.f32.mrf.mxu0
      %v1012 = vadd.f32 0.0, %v1011
      %v1013 = vpop.f32.mrf.mxu0
      %v1014 = vpop.f32.mrf.mxu0
      %v1015 = vadd.f32 0.0, %v1014
      %v1016 = vpop.f32.mrf.mxu0
      %1017 = vmatprep.mubr.bf16.mxu0 0
      %1018 = vmatmul.mubr.bf16.gmra.mxu0 %v888
      %v1019 = vpop.f32.mrf.mxu0
      %v1020 = vadd.f32 0.0, %v1019
      %v1021 = vpop.f32.mrf.mxu0
      %v1022 = vpop.f32.mrf.mxu0
      %v1023 = vadd.f32 0.0, %v1022
      %v1024 = vpop.f32.mrf.mxu0
      %1025 = vmatprep.mubr.bf16.mxu0 0
      %1026 = vmatmul.mubr.bf16.gmra.mxu0 %v891
      %v1027 = vpop.f32.mrf.mxu0
      %v1028 = vadd.f32 0.0, %v1027
      %v1029 = vpop.f32.mrf.mxu0
      %v1030 = vpop.f32.mrf.mxu0
      %v1031 = vadd.f32 0.0, %v1030
      %v1032 = vpop.f32.mrf.mxu0
      %1033 = vmatprep.mubr.bf16.mxu0 0
      %1034 = vmatmul.mubr.bf16.gmra.mxu0 %v894
      %v1035 = vpop.f32.mrf.mxu0
      %v1036 = vadd.f32 0.0, %v1035
      %v1037 = vpop.f32.mrf.mxu0
      %v1038 = vpop.f32.mrf.mxu0
      %v1039 = vadd.f32 0.0, %v1038
      %v1040 = vpop.f32.mrf.mxu0
      %1041 = vmatprep.mubr.bf16.mxu0 0
      %1042 = vmatmul.mubr.bf16.gmra.mxu0 %v897
      %v1043 = vpop.f32.mrf.mxu0
      %v1044 = vadd.f32 0.0, %v1043
      %v1045 = vpop.f32.mrf.mxu0
      %v1046 = vpop.f32.mrf.mxu0
      %v1047 = vadd.f32 0.0, %v1046
      %v1048 = vpop.f32.mrf.mxu0
      %1049 = vmatprep.mubr.bf16.mxu0 0
      %1050 = vmatmul.mubr.bf16.gmra.mxu0 %v900
      %v1051 = vpop.f32.mrf.mxu0
      %v1052 = vadd.f32 0.0, %v1051
      %v1053 = vpop.f32.mrf.mxu0
      %v1054 = vpop.f32.mrf.mxu0
      %v1055 = vadd.f32 0.0, %v1054
      %v1056 = vpop.f32.mrf.mxu0
      %1057 = vmatprep.mubr.bf16.mxu0 0
      %1058 = vmatmul.mubr.bf16.gmra.mxu0 %v903
      %v1059 = vpop.f32.mrf.mxu0
      %v1060 = vadd.f32 0.0, %v1059
      %v1061 = vpop.f32.mrf.mxu0
      %v1062 = vpop.f32.mrf.mxu0
      %v1063 = vadd.f32 0.0, %v1062
      %v1064 = vpop.f32.mrf.mxu0
      %1065 = vdwg.mxu0
      %v1098 = vunpack.c.l.b16 %v216
      %v1099 = vunpack.c.l.b16 %v218
      %v1100 = vunpack.c.l.b16 %v220
      %v1101 = vunpack.c.l.b16 %v222
      %v1102 = vunpack.c.l.b16 %v224
      %v1103 = vunpack.c.l.b16 %v226
      %v1104 = vunpack.c.l.b16 %v228
      %v1105 = vunpack.c.l.b16 %v230
      %v1106 = vunpack.c.l.b16 %v236
      %v1107 = vunpack.c.l.b16 %v238
      %v1108 = vunpack.c.l.b16 %v240
      %v1109 = vunpack.c.l.b16 %v242
      %v1110 = vunpack.c.l.b16 %v244
      %v1111 = vunpack.c.l.b16 %v246
      %v1112 = vunpack.c.l.b16 %v248
      %v1113 = vunpack.c.l.b16 %v250
      %v1114 = vunpack.c.l.b16 %v256
      %v1115 = vunpack.c.l.b16 %v258
      %v1116 = vunpack.c.l.b16 %v260
      %v1117 = vunpack.c.l.b16 %v262
      %v1118 = vunpack.c.l.b16 %v264
      %v1119 = vunpack.c.l.b16 %v266
      %v1120 = vunpack.c.l.b16 %v268
      %v1121 = vunpack.c.l.b16 %v270
      %v1122 = vunpack.c.l.b16 %v276
      %v1123 = vunpack.c.l.b16 %v278
      %v1124 = vunpack.c.l.b16 %v280
      %v1125 = vunpack.c.l.b16 %v282
      %v1126 = vunpack.c.l.b16 %v284
      %v1127 = vunpack.c.l.b16 %v286
      %v1128 = vunpack.c.l.b16 %v288
      %v1129 = vunpack.c.l.b16 %v290
      %v1130 = vpack.c.b16 %v1099, %v1098
      %v1131 = vpack.c.b16 %v1101, %v1100
      %v1132 = vpack.c.b16 %v1103, %v1102
      %v1133 = vpack.c.b16 %v1105, %v1104
      %v1134 = vpack.c.b16 %v1107, %v1106
      %v1135 = vpack.c.b16 %v1109, %v1108
      %v1136 = vpack.c.b16 %v1111, %v1110
      %v1137 = vpack.c.b16 %v1113, %v1112
      %v1138 = vpack.c.b16 %v1115, %v1114
      %v1139 = vpack.c.b16 %v1117, %v1116
      %v1140 = vpack.c.b16 %v1119, %v1118
      %v1141 = vpack.c.b16 %v1121, %v1120
      %v1142 = vpack.c.b16 %v1123, %v1122
      %v1143 = vpack.c.b16 %v1125, %v1124
      %v1144 = vpack.c.b16 %v1127, %v1126
      %v1145 = vpack.c.b16 %v1129, %v1128
      %v1158 = vunpack.c.l.b16 %v296
      %v1159 = vunpack.c.l.b16 %v297
      %v1160 = vunpack.c.l.b16 %v298
      %v1161 = vunpack.c.l.b16 %v299
      %v1162 = vunpack.c.l.b16 %v300
      %v1163 = vunpack.c.l.b16 %v301
      %v1164 = vunpack.c.l.b16 %v302
      %v1165 = vunpack.c.l.b16 %v303
      %v1166 = vunpack.c.l.b16 %v304
      %v1167 = vunpack.c.l.b16 %v305
      %v1168 = vunpack.c.l.b16 %v306
      %v1169 = vunpack.c.l.b16 %v307
      %v1170 = vpack.c.b16 %v1159, %v1158
      %v1171 = vpack.c.b16 %v1161, %v1160
      %v1172 = vpack.c.b16 %v1163, %v1162
      %v1173 = vpack.c.b16 %v1165, %v1164
      %v1174 = vpack.c.b16 %v1167, %v1166
      %v1175 = vpack.c.b16 %v1169, %v1168
      %v1183 = vsel %vm856, %v1130, 0
      %v1186 = vsel %vm856, %v1131, 0
      %v1189 = vsel %vm856, %v1132, 0
      %v1192 = vsel %vm856, %v1133, 0
      %v1195 = vsel %vm856, %v1134, 0
      %v1198 = vsel %vm856, %v1135, 0
      %v1201 = vsel %vm856, %v1136, 0
      %v1204 = vsel %vm856, %v1137, 0
      %v1207 = vsel %vm856, %v1138, 0
      %v1210 = vsel %vm856, %v1139, 0
      %v1213 = vsel %vm856, %v1140, 0
      %v1216 = vsel %vm856, %v1141, 0
      %v1219 = vsel %vm856, %v1142, 0
      %v1222 = vsel %vm856, %v1143, 0
      %v1225 = vsel %vm856, %v1144, 0
      %v1228 = vsel %vm856, %v1145, 0
      %1230 = vmatprep.subr.bf16.mxu0 0
      %1231 = vmatpush1.bf16.msra.mxu0 0
      %1232 = vmatprep.subr.bf16.mxu0 0
      %1233 = vmatpush1.bf16.msra.mxu0 0
      %1234 = vmatprep.subr.bf16.mxu0 0
      %1235 = vmatpush1.bf16.msra.mxu0 %v1175
      %1236 = vmatprep.subr.bf16.mxu0 0
      %1237 = vmatpush1.bf16.msra.mxu0 %v1174
      %1238 = vmatprep.subr.bf16.mxu0 0
      %1239 = vmatpush1.bf16.msra.mxu0 %v1173
      %1240 = vmatprep.subr.bf16.mxu0 0
      %1241 = vmatpush1.bf16.msra.mxu0 %v1172
      %1242 = vmatprep.subr.bf16.mxu0 0
      %1243 = vmatpush1.bf16.msra.mxu0 %v1171
      %1244 = vmatprep.subr.bf16.mxu0 0
      %1245 = vmatpush1.bf16.msra.mxu0 %v1170
      %1246 = vmatprep.subr.bf16.mxu0 0
      %1247 = vmatpush2.bf16.msra.mxu0 0
      %1248 = vmatprep.subr.bf16.mxu0 0
      %1249 = vmatpush2.bf16.msra.mxu0 0
      %1250 = vmatprep.subr.bf16.mxu0 0
      %1251 = vmatpush2.bf16.msra.mxu0 0
      %1252 = vmatprep.subr.bf16.mxu0 0
      %1253 = vmatpush2.bf16.msra.mxu0 0
      %1254 = vmatprep.subr.bf16.mxu0 0
      %1255 = vmatpush2.bf16.msra.mxu0 0
      %1256 = vmatprep.subr.bf16.mxu0 0
      %1257 = vmatpush2.bf16.msra.mxu0 0
      %1258 = vmatprep.subr.bf16.mxu0 0
      %1259 = vmatpush2.bf16.msra.mxu0 0
      %1260 = vmatprep.subr.bf16.mxu0 0
      %1261 = vmatpush2.bf16.msra.mxu0 0
      %1262 = vmatprep.mubr.bf16.mxu0 0
      %1263 = vmatmul.mubr.bf16.gmra.mxu0 %v1183
      %v1264 = vpop.f32.mrf.mxu0
      %v1265 = vadd.f32 %v940, %v1264
      %v1266 = vpop.f32.mrf.mxu0
      %v1267 = vpop.f32.mrf.mxu0
      %v1268 = vadd.f32 %v943, %v1267
      %v1269 = vpop.f32.mrf.mxu0
      %1270 = vmatprep.mubr.bf16.mxu0 0
      %1271 = vmatmul.mubr.bf16.gmra.mxu0 %v1186
      %v1272 = vpop.f32.mrf.mxu0
      %v1273 = vadd.f32 %v948, %v1272
      %v1274 = vpop.f32.mrf.mxu0
      %v1275 = vpop.f32.mrf.mxu0
      %v1276 = vadd.f32 %v951, %v1275
      %v1277 = vpop.f32.mrf.mxu0
      %1278 = vmatprep.mubr.bf16.mxu0 0
      %1279 = vmatmul.mubr.bf16.gmra.mxu0 %v1189
      %v1280 = vpop.f32.mrf.mxu0
      %v1281 = vadd.f32 %v956, %v1280
      %v1282 = vpop.f32.mrf.mxu0
      %v1283 = vpop.f32.mrf.mxu0
      %v1284 = vadd.f32 %v959, %v1283
      %v1285 = vpop.f32.mrf.mxu0
      %1286 = vmatprep.mubr.bf16.mxu0 0
      %1287 = vmatmul.mubr.bf16.gmra.mxu0 %v1192
      %v1288 = vpop.f32.mrf.mxu0
      %v1289 = vadd.f32 %v964, %v1288
      %v1290 = vpop.f32.mrf.mxu0
      %v1291 = vpop.f32.mrf.mxu0
      %v1292 = vadd.f32 %v967, %v1291
      %v1293 = vpop.f32.mrf.mxu0
      %1294 = vmatprep.mubr.bf16.mxu0 0
      %1295 = vmatmul.mubr.bf16.gmra.mxu0 %v1195
      %v1296 = vpop.f32.mrf.mxu0
      %v1297 = vadd.f32 %v972, %v1296
      %v1298 = vpop.f32.mrf.mxu0
      %v1299 = vpop.f32.mrf.mxu0
      %v1300 = vadd.f32 %v975, %v1299
      %v1301 = vpop.f32.mrf.mxu0
      %1302 = vmatprep.mubr.bf16.mxu0 0
      %1303 = vmatmul.mubr.bf16.gmra.mxu0 %v1198
      %v1304 = vpop.f32.mrf.mxu0
      %v1305 = vadd.f32 %v980, %v1304
      %v1306 = vpop.f32.mrf.mxu0
      %v1307 = vpop.f32.mrf.mxu0
      %v1308 = vadd.f32 %v983, %v1307
      %v1309 = vpop.f32.mrf.mxu0
      %1310 = vmatprep.mubr.bf16.mxu0 0
      %1311 = vmatmul.mubr.bf16.gmra.mxu0 %v1201
      %v1312 = vpop.f32.mrf.mxu0
      %v1313 = vadd.f32 %v988, %v1312
      %v1314 = vpop.f32.mrf.mxu0
      %v1315 = vpop.f32.mrf.mxu0
      %v1316 = vadd.f32 %v991, %v1315
      %v1317 = vpop.f32.mrf.mxu0
      %1318 = vmatprep.mubr.bf16.mxu0 0
      %1319 = vmatmul.mubr.bf16.gmra.mxu0 %v1204
      %v1320 = vpop.f32.mrf.mxu0
      %v1321 = vadd.f32 %v996, %v1320
      %v1322 = vpop.f32.mrf.mxu0
      %v1323 = vpop.f32.mrf.mxu0
      %v1324 = vadd.f32 %v999, %v1323
      %v1325 = vpop.f32.mrf.mxu0
      %1326 = vmatprep.mubr.bf16.mxu0 0
      %1327 = vmatmul.mubr.bf16.gmra.mxu0 %v1207
      %v1328 = vpop.f32.mrf.mxu0
      %v1329 = vadd.f32 %v1004, %v1328
      %v1330 = vpop.f32.mrf.mxu0
      %v1331 = vpop.f32.mrf.mxu0
      %v1332 = vadd.f32 %v1007, %v1331
      %v1333 = vpop.f32.mrf.mxu0
      %1334 = vmatprep.mubr.bf16.mxu0 0
      %1335 = vmatmul.mubr.bf16.gmra.mxu0 %v1210
      %v1336 = vpop.f32.mrf.mxu0
      %v1337 = vadd.f32 %v1012, %v1336
      %v1338 = vpop.f32.mrf.mxu0
      %v1339 = vpop.f32.mrf.mxu0
      %v1340 = vadd.f32 %v1015, %v1339
      %v1341 = vpop.f32.mrf.mxu0
      %1342 = vmatprep.mubr.bf16.mxu0 0
      %1343 = vmatmul.mubr.bf16.gmra.mxu0 %v1213
      %v1344 = vpop.f32.mrf.mxu0
      %v1345 = vadd.f32 %v1020, %v1344
      %v1346 = vpop.f32.mrf.mxu0
      %v1347 = vpop.f32.mrf.mxu0
      %v1348 = vadd.f32 %v1023, %v1347
      %v1349 = vpop.f32.mrf.mxu0
      %1350 = vmatprep.mubr.bf16.mxu0 0
      %1351 = vmatmul.mubr.bf16.gmra.mxu0 %v1216
      %v1352 = vpop.f32.mrf.mxu0
      %v1353 = vadd.f32 %v1028, %v1352
      %v1354 = vpop.f32.mrf.mxu0
      %v1355 = vpop.f32.mrf.mxu0
      %v1356 = vadd.f32 %v1031, %v1355
      %v1357 = vpop.f32.mrf.mxu0
      %1358 = vmatprep.mubr.bf16.mxu0 0
      %1359 = vmatmul.mubr.bf16.gmra.mxu0 %v1219
      %v1360 = vpop.f32.mrf.mxu0
      %v1361 = vadd.f32 %v1036, %v1360
      %v1362 = vpop.f32.mrf.mxu0
      %v1363 = vpop.f32.mrf.mxu0
      %v1364 = vadd.f32 %v1039, %v1363
      %v1365 = vpop.f32.mrf.mxu0
      %1366 = vmatprep.mubr.bf16.mxu0 0
      %1367 = vmatmul.mubr.bf16.gmra.mxu0 %v1222
      %v1368 = vpop.f32.mrf.mxu0
      %v1369 = vadd.f32 %v1044, %v1368
      %v1370 = vpop.f32.mrf.mxu0
      %v1371 = vpop.f32.mrf.mxu0
      %v1372 = vadd.f32 %v1047, %v1371
      %v1373 = vpop.f32.mrf.mxu0
      %1374 = vmatprep.mubr.bf16.mxu0 0
      %1375 = vmatmul.mubr.bf16.gmra.mxu0 %v1225
      %v1376 = vpop.f32.mrf.mxu0
      %v1377 = vadd.f32 %v1052, %v1376
      %v1378 = vpop.f32.mrf.mxu0
      %v1379 = vpop.f32.mrf.mxu0
      %v1380 = vadd.f32 %v1055, %v1379
      %v1381 = vpop.f32.mrf.mxu0
      %1382 = vmatprep.mubr.bf16.mxu0 0
      %1383 = vmatmul.mubr.bf16.gmra.mxu0 %v1228
      %v1384 = vpop.f32.mrf.mxu0
      %v1385 = vadd.f32 %v1060, %v1384
      %v1386 = vpop.f32.mrf.mxu0
      %v1387 = vpop.f32.mrf.mxu0
      %v1388 = vadd.f32 %v1063, %v1387
      %v1389 = vpop.f32.mrf.mxu0
      %1390 = vdwg.mxu0
      %vm1423 = vcmask 1042432
      %vm1424 = vcmask 1046532
      %vm1425 = vmor %vm1423, %vm1424
      %v1426 = vrot.slane %v216, 5
      %v1427 = vrot.slane %v1426, 4
      %v1428 = vrot.slane %v217, 5
      %v1429 = vsel %vm1425, %v1427, %v1428
      %v1430 = vrot.slane %v218, 5
      %v1431 = vrot.slane %v1430, 4
      %v1432 = vrot.slane %v219, 5
      %v1433 = vsel %vm1425, %v1431, %v1432
      %v1434 = vrot.slane %v220, 5
      %v1435 = vrot.slane %v1434, 4
      %v1436 = vrot.slane %v221, 5
      %v1437 = vsel %vm1425, %v1435, %v1436
      %v1438 = vrot.slane %v222, 5
      %v1439 = vrot.slane %v1438, 4
      %v1440 = vrot.slane %v223, 5
      %v1441 = vsel %vm1425, %v1439, %v1440
      %v1442 = vrot.slane %v224, 5
      %v1443 = vrot.slane %v1442, 4
      %v1444 = vrot.slane %v225, 5
      %v1445 = vsel %vm1425, %v1443, %v1444
      %v1446 = vrot.slane %v226, 5
      %v1447 = vrot.slane %v1446, 4
      %v1448 = vrot.slane %v227, 5
      %v1449 = vsel %vm1425, %v1447, %v1448
      %v1450 = vrot.slane %v228, 5
      %v1451 = vrot.slane %v1450, 4
      %v1452 = vrot.slane %v229, 5
      %v1453 = vsel %vm1425, %v1451, %v1452
      %v1454 = vrot.slane %v230, 5
      %v1455 = vrot.slane %v1454, 4
      %v1456 = vrot.slane %v231, 5
      %v1457 = vsel %vm1425, %v1455, %v1456
      %v1458 = vrot.slane %v236, 5
      %v1459 = vrot.slane %v1458, 4
      %v1460 = vrot.slane %v237, 5
      %v1461 = vsel %vm1425, %v1459, %v1460
      %v1462 = vrot.slane %v238, 5
      %v1463 = vrot.slane %v1462, 4
      %v1464 = vrot.slane %v239, 5
      %v1465 = vsel %vm1425, %v1463, %v1464
      %v1466 = vrot.slane %v240, 5
      %v1467 = vrot.slane %v1466, 4
      %v1468 = vrot.slane %v241, 5
      %v1469 = vsel %vm1425, %v1467, %v1468
      %v1470 = vrot.slane %v242, 5
      %v1471 = vrot.slane %v1470, 4
      %v1472 = vrot.slane %v243, 5
      %v1473 = vsel %vm1425, %v1471, %v1472
      %v1474 = vrot.slane %v244, 5
      %v1475 = vrot.slane %v1474, 4
      %v1476 = vrot.slane %v245, 5
      %v1477 = vsel %vm1425, %v1475, %v1476
      %v1478 = vrot.slane %v246, 5
      %v1479 = vrot.slane %v1478, 4
      %v1480 = vrot.slane %v247, 5
      %v1481 = vsel %vm1425, %v1479, %v1480
      %v1482 = vrot.slane %v248, 5
      %v1483 = vrot.slane %v1482, 4
      %v1484 = vrot.slane %v249, 5
      %v1485 = vsel %vm1425, %v1483, %v1484
      %v1486 = vrot.slane %v250, 5
      %v1487 = vrot.slane %v1486, 4
      %v1488 = vrot.slane %v251, 5
      %v1489 = vsel %vm1425, %v1487, %v1488
      %v1490 = vrot.slane %v256, 5
      %v1491 = vrot.slane %v1490, 4
      %v1492 = vrot.slane %v257, 5
      %v1493 = vsel %vm1425, %v1491, %v1492
      %v1494 = vrot.slane %v258, 5
      %v1495 = vrot.slane %v1494, 4
      %v1496 = vrot.slane %v259, 5
      %v1497 = vsel %vm1425, %v1495, %v1496
      %v1498 = vrot.slane %v260, 5
      %v1499 = vrot.slane %v1498, 4
      %v1500 = vrot.slane %v261, 5
      %v1501 = vsel %vm1425, %v1499, %v1500
      %v1502 = vrot.slane %v262, 5
      %v1503 = vrot.slane %v1502, 4
      %v1504 = vrot.slane %v263, 5
      %v1505 = vsel %vm1425, %v1503, %v1504
      %v1506 = vrot.slane %v264, 5
      %v1507 = vrot.slane %v1506, 4
      %v1508 = vrot.slane %v265, 5
      %v1509 = vsel %vm1425, %v1507, %v1508
      %v1510 = vrot.slane %v266, 5
      %v1511 = vrot.slane %v1510, 4
      %v1512 = vrot.slane %v267, 5
      %v1513 = vsel %vm1425, %v1511, %v1512
      %v1514 = vrot.slane %v268, 5
      %v1515 = vrot.slane %v1514, 4
      %v1516 = vrot.slane %v269, 5
      %v1517 = vsel %vm1425, %v1515, %v1516
      %v1518 = vrot.slane %v270, 5
      %v1519 = vrot.slane %v1518, 4
      %v1520 = vrot.slane %v271, 5
      %v1521 = vsel %vm1425, %v1519, %v1520
      %v1522 = vrot.slane %v276, 5
      %v1523 = vrot.slane %v1522, 4
      %v1524 = vrot.slane %v277, 5
      %v1525 = vsel %vm1425, %v1523, %v1524
      %v1526 = vrot.slane %v278, 5
      %v1527 = vrot.slane %v1526, 4
      %v1528 = vrot.slane %v279, 5
      %v1529 = vsel %vm1425, %v1527, %v1528
      %v1530 = vrot.slane %v280, 5
      %v1531 = vrot.slane %v1530, 4
      %v1532 = vrot.slane %v281, 5
      %v1533 = vsel %vm1425, %v1531, %v1532
      %v1534 = vrot.slane %v282, 5
      %v1535 = vrot.slane %v1534, 4
      %v1536 = vrot.slane %v283, 5
      %v1537 = vsel %vm1425, %v1535, %v1536
      %v1538 = vrot.slane %v284, 5
      %v1539 = vrot.slane %v1538, 4
      %v1540 = vrot.slane %v285, 5
      %v1541 = vsel %vm1425, %v1539, %v1540
      %v1542 = vrot.slane %v286, 5
      %v1543 = vrot.slane %v1542, 4
      %v1544 = vrot.slane %v287, 5
      %v1545 = vsel %vm1425, %v1543, %v1544
      %v1546 = vrot.slane %v288, 5
      %v1547 = vrot.slane %v1546, 4
      %v1548 = vrot.slane %v289, 5
      %v1549 = vsel %vm1425, %v1547, %v1548
      %v1550 = vrot.slane %v290, 5
      %v1551 = vrot.slane %v1550, 4
      %v1552 = vrot.slane %v291, 5
      %v1553 = vsel %vm1425, %v1551, %v1552
      %s1554 = scalar_lea.vmem %s1, 96
      %v1555 = vld [vmem:[%s1554] sm:$0xf]
      %v1556 = vld [vmem:[%s1554 + $0x4] sm:$0xf]
      %v1557 = vld [vmem:[%s1554 + $0x8] sm:$0xf]
      %v1558 = vld [vmem:[%s1554 + $0xc] sm:$0xf]
      %v1559 = vld [vmem:[%s1554 + $0x10] sm:$0xf]
      %v1560 = vld [vmem:[%s1554 + $0x14] sm:$0xf]
      %v1561 = vld [vmem:[%s1554 + $0x18] sm:$0xf]
      %v1562 = vld [vmem:[%s1554 + $0x1c] sm:$0xf]
      %v1563 = vld [vmem:[%s1554 + $0x20] sm:$0xf]
      %v1564 = vld [vmem:[%s1554 + $0x24] sm:$0xf]
      %v1565 = vld [vmem:[%s1554 + $0x28] sm:$0xf]
      %v1566 = vld [vmem:[%s1554 + $0x2c] sm:$0xf]
      %v1567 = vunpack.c.l.b16 %v1429
      %v1568 = vunpack.c.l.b16 %v1433
      %v1569 = vunpack.c.l.b16 %v1437
      %v1570 = vunpack.c.l.b16 %v1441
      %v1571 = vunpack.c.l.b16 %v1445
      %v1572 = vunpack.c.l.b16 %v1449
      %v1573 = vunpack.c.l.b16 %v1453
      %v1574 = vunpack.c.l.b16 %v1457
      %v1575 = vunpack.c.l.b16 %v1461
      %v1576 = vunpack.c.l.b16 %v1465
      %v1577 = vunpack.c.l.b16 %v1469
      %v1578 = vunpack.c.l.b16 %v1473
      %v1579 = vunpack.c.l.b16 %v1477
      %v1580 = vunpack.c.l.b16 %v1481
      %v1581 = vunpack.c.l.b16 %v1485
      %v1582 = vunpack.c.l.b16 %v1489
      %v1583 = vunpack.c.l.b16 %v1493
      %v1584 = vunpack.c.l.b16 %v1497
      %v1585 = vunpack.c.l.b16 %v1501
      %v1586 = vunpack.c.l.b16 %v1505
      %v1587 = vunpack.c.l.b16 %v1509
      %v1588 = vunpack.c.l.b16 %v1513
      %v1589 = vunpack.c.l.b16 %v1517
      %v1590 = vunpack.c.l.b16 %v1521
      %v1591 = vunpack.c.l.b16 %v1525
      %v1592 = vunpack.c.l.b16 %v1529
      %v1593 = vunpack.c.l.b16 %v1533
      %v1594 = vunpack.c.l.b16 %v1537
      %v1595 = vunpack.c.l.b16 %v1541
      %v1596 = vunpack.c.l.b16 %v1545
      %v1597 = vunpack.c.l.b16 %v1549
      %v1598 = vunpack.c.l.b16 %v1553
      %v1599 = vpack.c.b16 %v1568, %v1567
      %v1600 = vpack.c.b16 %v1570, %v1569
      %v1601 = vpack.c.b16 %v1572, %v1571
      %v1602 = vpack.c.b16 %v1574, %v1573
      %v1603 = vpack.c.b16 %v1576, %v1575
      %v1604 = vpack.c.b16 %v1578, %v1577
      %v1605 = vpack.c.b16 %v1580, %v1579
      %v1606 = vpack.c.b16 %v1582, %v1581
      %v1607 = vpack.c.b16 %v1584, %v1583
      %v1608 = vpack.c.b16 %v1586, %v1585
      %v1609 = vpack.c.b16 %v1588, %v1587
      %v1610 = vpack.c.b16 %v1590, %v1589
      %v1611 = vpack.c.b16 %v1592, %v1591
      %v1612 = vpack.c.b16 %v1594, %v1593
      %v1613 = vpack.c.b16 %v1596, %v1595
      %v1614 = vpack.c.b16 %v1598, %v1597
      %v1627 = vunpack.c.l.b16 %v1555
      %v1628 = vunpack.c.l.b16 %v1556
      %v1629 = vunpack.c.l.b16 %v1557
      %v1630 = vunpack.c.l.b16 %v1558
      %v1631 = vunpack.c.l.b16 %v1559
      %v1632 = vunpack.c.l.b16 %v1560
      %v1633 = vunpack.c.l.b16 %v1561
      %v1634 = vunpack.c.l.b16 %v1562
      %v1635 = vunpack.c.l.b16 %v1563
      %v1636 = vunpack.c.l.b16 %v1564
      %v1637 = vunpack.c.l.b16 %v1565
      %v1638 = vunpack.c.l.b16 %v1566
      %v1639 = vpack.c.b16 %v1628, %v1627
      %v1640 = vpack.c.b16 %v1630, %v1629
      %v1641 = vpack.c.b16 %v1632, %v1631
      %v1642 = vpack.c.b16 %v1634, %v1633
      %v1643 = vpack.c.b16 %v1636, %v1635
      %v1644 = vpack.c.b16 %v1638, %v1637
      %v1652 = vsel %vm856, %v1599, 0
      %v1655 = vsel %vm856, %v1600, 0
      %v1658 = vsel %vm856, %v1601, 0
      %v1661 = vsel %vm856, %v1602, 0
      %v1664 = vsel %vm856, %v1603, 0
      %v1667 = vsel %vm856, %v1604, 0
      %v1670 = vsel %vm856, %v1605, 0
      %v1673 = vsel %vm856, %v1606, 0
      %v1676 = vsel %vm856, %v1607, 0
      %v1679 = vsel %vm856, %v1608, 0
      %v1682 = vsel %vm856, %v1609, 0
      %v1685 = vsel %vm856, %v1610, 0
      %v1688 = vsel %vm856, %v1611, 0
      %v1691 = vsel %vm856, %v1612, 0
      %v1694 = vsel %vm856, %v1613, 0
      %v1697 = vsel %vm856, %v1614, 0
      %1699 = vmatprep.subr.bf16.mxu0 0
      %1700 = vmatpush1.bf16.msra.mxu0 0
      %1701 = vmatprep.subr.bf16.mxu0 0
      %1702 = vmatpush1.bf16.msra.mxu0 0
      %1703 = vmatprep.subr.bf16.mxu0 0
      %1704 = vmatpush1.bf16.msra.mxu0 %v1644
      %1705 = vmatprep.subr.bf16.mxu0 0
      %1706 = vmatpush1.bf16.msra.mxu0 %v1643
      %1707 = vmatprep.subr.bf16.mxu0 0
      %1708 = vmatpush1.bf16.msra.mxu0 %v1642
      %1709 = vmatprep.subr.bf16.mxu0 0
      %1710 = vmatpush1.bf16.msra.mxu0 %v1641
      %1711 = vmatprep.subr.bf16.mxu0 0
      %1712 = vmatpush1.bf16.msra.mxu0 %v1640
      %1713 = vmatprep.subr.bf16.mxu0 0
      %1714 = vmatpush1.bf16.msra.mxu0 %v1639
      %1715 = vmatprep.subr.bf16.mxu0 0
      %1716 = vmatpush2.bf16.msra.mxu0 0
      %1717 = vmatprep.subr.bf16.mxu0 0
      %1718 = vmatpush2.bf16.msra.mxu0 0
      %1719 = vmatprep.subr.bf16.mxu0 0
      %1720 = vmatpush2.bf16.msra.mxu0 0
      %1721 = vmatprep.subr.bf16.mxu0 0
      %1722 = vmatpush2.bf16.msra.mxu0 0
      %1723 = vmatprep.subr.bf16.mxu0 0
      %1724 = vmatpush2.bf16.msra.mxu0 0
      %1725 = vmatprep.subr.bf16.mxu0 0
      %1726 = vmatpush2.bf16.msra.mxu0 0
      %1727 = vmatprep.subr.bf16.mxu0 0
      %1728 = vmatpush2.bf16.msra.mxu0 0
      %1729 = vmatprep.subr.bf16.mxu0 0
      %1730 = vmatpush2.bf16.msra.mxu0 0
      %1731 = vmatprep.mubr.bf16.mxu0 0
      %1732 = vmatmul.mubr.bf16.gmra.mxu0 %v1652
      %v1733 = vpop.f32.mrf.mxu0
      %v1734 = vadd.f32 0.0, %v1733
      %v1735 = vpop.f32.mrf.mxu0
      %v1736 = vpop.f32.mrf.mxu0
      %v1737 = vadd.f32 0.0, %v1736
      %v1738 = vpop.f32.mrf.mxu0
      %1739 = vmatprep.mubr.bf16.mxu0 0
      %1740 = vmatmul.mubr.bf16.gmra.mxu0 %v1655
      %v1741 = vpop.f32.mrf.mxu0
      %v1742 = vadd.f32 0.0, %v1741
      %v1743 = vpop.f32.mrf.mxu0
      %v1744 = vpop.f32.mrf.mxu0
      %v1745 = vadd.f32 0.0, %v1744
      %v1746 = vpop.f32.mrf.mxu0
      %1747 = vmatprep.mubr.bf16.mxu0 0
      %1748 = vmatmul.mubr.bf16.gmra.mxu0 %v1658
      %v1749 = vpop.f32.mrf.mxu0
      %v1750 = vadd.f32 0.0, %v1749
      %v1751 = vpop.f32.mrf.mxu0
      %v1752 = vpop.f32.mrf.mxu0
      %v1753 = vadd.f32 0.0, %v1752
      %v1754 = vpop.f32.mrf.mxu0
      %1755 = vmatprep.mubr.bf16.mxu0 0
      %1756 = vmatmul.mubr.bf16.gmra.mxu0 %v1661
      %v1757 = vpop.f32.mrf.mxu0
      %v1758 = vadd.f32 0.0, %v1757
      %v1759 = vpop.f32.mrf.mxu0
      %v1760 = vpop.f32.mrf.mxu0
      %v1761 = vadd.f32 0.0, %v1760
      %v1762 = vpop.f32.mrf.mxu0
      %1763 = vmatprep.mubr.bf16.mxu0 0
      %1764 = vmatmul.mubr.bf16.gmra.mxu0 %v1664
      %v1765 = vpop.f32.mrf.mxu0
      %v1766 = vadd.f32 0.0, %v1765
      %v1767 = vpop.f32.mrf.mxu0
      %v1768 = vpop.f32.mrf.mxu0
      %v1769 = vadd.f32 0.0, %v1768
      %v1770 = vpop.f32.mrf.mxu0
      %1771 = vmatprep.mubr.bf16.mxu0 0
      %1772 = vmatmul.mubr.bf16.gmra.mxu0 %v1667
      %v1773 = vpop.f32.mrf.mxu0
      %v1774 = vadd.f32 0.0, %v1773
      %v1775 = vpop.f32.mrf.mxu0
      %v1776 = vpop.f32.mrf.mxu0
      %v1777 = vadd.f32 0.0, %v1776
      %v1778 = vpop.f32.mrf.mxu0
      %1779 = vmatprep.mubr.bf16.mxu0 0
      %1780 = vmatmul.mubr.bf16.gmra.mxu0 %v1670
      %v1781 = vpop.f32.mrf.mxu0
      %v1782 = vadd.f32 0.0, %v1781
      %v1783 = vpop.f32.mrf.mxu0
      %v1784 = vpop.f32.mrf.mxu0
      %v1785 = vadd.f32 0.0, %v1784
      %v1786 = vpop.f32.mrf.mxu0
      %1787 = vmatprep.mubr.bf16.mxu0 0
      %1788 = vmatmul.mubr.bf16.gmra.mxu0 %v1673
      %v1789 = vpop.f32.mrf.mxu0
      %v1790 = vadd.f32 0.0, %v1789
      %v1791 = vpop.f32.mrf.mxu0
      %v1792 = vpop.f32.mrf.mxu0
      %v1793 = vadd.f32 0.0, %v1792
      %v1794 = vpop.f32.mrf.mxu0
      %1795 = vmatprep.mubr.bf16.mxu0 0
      %1796 = vmatmul.mubr.bf16.gmra.mxu0 %v1676
      %v1797 = vpop.f32.mrf.mxu0
      %v1798 = vadd.f32 0.0, %v1797
      %v1799 = vpop.f32.mrf.mxu0
      %v1800 = vpop.f32.mrf.mxu0
      %v1801 = vadd.f32 0.0, %v1800
      %v1802 = vpop.f32.mrf.mxu0
      %1803 = vmatprep.mubr.bf16.mxu0 0
      %1804 = vmatmul.mubr.bf16.gmra.mxu0 %v1679
      %v1805 = vpop.f32.mrf.mxu0
      %v1806 = vadd.f32 0.0, %v1805
      %v1807 = vpop.f32.mrf.mxu0
      %v1808 = vpop.f32.mrf.mxu0
      %v1809 = vadd.f32 0.0, %v1808
      %v1810 = vpop.f32.mrf.mxu0
      %1811 = vmatprep.mubr.bf16.mxu0 0
      %1812 = vmatmul.mubr.bf16.gmra.mxu0 %v1682
      %v1813 = vpop.f32.mrf.mxu0
      %v1814 = vadd.f32 0.0, %v1813
      %v1815 = vpop.f32.mrf.mxu0
      %v1816 = vpop.f32.mrf.mxu0
      %v1817 = vadd.f32 0.0, %v1816
      %v1818 = vpop.f32.mrf.mxu0
      %1819 = vmatprep.mubr.bf16.mxu0 0
      %1820 = vmatmul.mubr.bf16.gmra.mxu0 %v1685
      %v1821 = vpop.f32.mrf.mxu0
      %v1822 = vadd.f32 0.0, %v1821
      %v1823 = vpop.f32.mrf.mxu0
      %v1824 = vpop.f32.mrf.mxu0
      %v1825 = vadd.f32 0.0, %v1824
      %v1826 = vpop.f32.mrf.mxu0
      %1827 = vmatprep.mubr.bf16.mxu0 0
      %1828 = vmatmul.mubr.bf16.gmra.mxu0 %v1688
      %v1829 = vpop.f32.mrf.mxu0
      %v1830 = vadd.f32 0.0, %v1829
      %v1831 = vpop.f32.mrf.mxu0
      %v1832 = vpop.f32.mrf.mxu0
      %v1833 = vadd.f32 0.0, %v1832
      %v1834 = vpop.f32.mrf.mxu0
      %1835 = vmatprep.mubr.bf16.mxu0 0
      %1836 = vmatmul.mubr.bf16.gmra.mxu0 %v1691
      %v1837 = vpop.f32.mrf.mxu0
      %v1838 = vadd.f32 0.0, %v1837
      %v1839 = vpop.f32.mrf.mxu0
      %v1840 = vpop.f32.mrf.mxu0
      %v1841 = vadd.f32 0.0, %v1840
      %v1842 = vpop.f32.mrf.mxu0
      %1843 = vmatprep.mubr.bf16.mxu0 0
      %1844 = vmatmul.mubr.bf16.gmra.mxu0 %v1694
      %v1845 = vpop.f32.mrf.mxu0
      %v1846 = vadd.f32 0.0, %v1845
      %v1847 = vpop.f32.mrf.mxu0
      %v1848 = vpop.f32.mrf.mxu0
      %v1849 = vadd.f32 0.0, %v1848
      %v1850 = vpop.f32.mrf.mxu0
      %1851 = vmatprep.mubr.bf16.mxu0 0
      %1852 = vmatmul.mubr.bf16.gmra.mxu0 %v1697
      %v1853 = vpop.f32.mrf.mxu0
      %v1854 = vadd.f32 0.0, %v1853
      %v1855 = vpop.f32.mrf.mxu0
      %v1856 = vpop.f32.mrf.mxu0
      %v1857 = vadd.f32 0.0, %v1856
      %v1858 = vpop.f32.mrf.mxu0
      %1859 = vdwg.mxu0
      %v1860 = vadd.f32 %v1265, %v1734
      %v1861 = vadd.f32 %v1268, %v1737
      %v1862 = vadd.f32 %v1273, %v1742
      %v1863 = vadd.f32 %v1276, %v1745
      %v1864 = vadd.f32 %v1281, %v1750
      %v1865 = vadd.f32 %v1284, %v1753
      %v1866 = vadd.f32 %v1289, %v1758
      %v1867 = vadd.f32 %v1292, %v1761
      %v1868 = vadd.f32 %v1297, %v1766
      %v1869 = vadd.f32 %v1300, %v1769
      %v1870 = vadd.f32 %v1305, %v1774
      %v1871 = vadd.f32 %v1308, %v1777
      %v1872 = vadd.f32 %v1313, %v1782
      %v1873 = vadd.f32 %v1316, %v1785
      %v1874 = vadd.f32 %v1321, %v1790
      %v1875 = vadd.f32 %v1324, %v1793
      %v1876 = vadd.f32 %v1329, %v1798
      %v1877 = vadd.f32 %v1332, %v1801
      %v1878 = vadd.f32 %v1337, %v1806
      %v1879 = vadd.f32 %v1340, %v1809
      %v1880 = vadd.f32 %v1345, %v1814
      %v1881 = vadd.f32 %v1348, %v1817
      %v1882 = vadd.f32 %v1353, %v1822
      %v1883 = vadd.f32 %v1356, %v1825
      %v1884 = vadd.f32 %v1361, %v1830
      %v1885 = vadd.f32 %v1364, %v1833
      %v1886 = vadd.f32 %v1369, %v1838
      %v1887 = vadd.f32 %v1372, %v1841
      %v1888 = vadd.f32 %v1377, %v1846
      %v1889 = vadd.f32 %v1380, %v1849
      %v1890 = vadd.f32 %v1385, %v1854
      %v1891 = vadd.f32 %v1388, %v1857
      %s1892 = scalar_lea.vmem %s1, 144
      %v1893 = vld [vmem:[%s1892] sm:$0xf]
      %v1894 = vld [vmem:[%s1892 + $0x4] sm:$0xf]
      %v1895 = vld [vmem:[%s1892 + $0x8] sm:$0xf]
      %v1896 = vld [vmem:[%s1892 + $0xc] sm:$0xf]
      %v1897 = vld [vmem:[%s1892 + $0x10] sm:$0xf]
      %v1898 = vld [vmem:[%s1892 + $0x14] sm:$0xf]
      %v1899 = vld [vmem:[%s1892 + $0x18] sm:$0xf]
      %v1900 = vld [vmem:[%s1892 + $0x1c] sm:$0xf]
      %v1901 = vld [vmem:[%s1892 + $0x20] sm:$0xf]
      %v1902 = vld [vmem:[%s1892 + $0x24] sm:$0xf]
      %v1903 = vld [vmem:[%s1892 + $0x28] sm:$0xf]
      %v1904 = vld [vmem:[%s1892 + $0x2c] sm:$0xf]
      %v1909 = vunpack.c.l.b16 %v232
      %v1910 = vunpack.c.l.b16 %v252
      %v1911 = vunpack.c.l.b16 %v272
      %v1912 = vunpack.c.l.b16 %v292
      %v1913 = vpack.c.b16 %v1100, %v1099
      %v1914 = vpack.c.b16 %v1102, %v1101
      %v1915 = vpack.c.b16 %v1104, %v1103
      %v1916 = vpack.c.b16 %v1909, %v1105
      %v1917 = vpack.c.b16 %v1108, %v1107
      %v1918 = vpack.c.b16 %v1110, %v1109
      %v1919 = vpack.c.b16 %v1112, %v1111
      %v1920 = vpack.c.b16 %v1910, %v1113
      %v1921 = vpack.c.b16 %v1116, %v1115
      %v1922 = vpack.c.b16 %v1118, %v1117
      %v1923 = vpack.c.b16 %v1120, %v1119
      %v1924 = vpack.c.b16 %v1911, %v1121
      %v1925 = vpack.c.b16 %v1124, %v1123
      %v1926 = vpack.c.b16 %v1126, %v1125
      %v1927 = vpack.c.b16 %v1128, %v1127
      %v1928 = vpack.c.b16 %v1912, %v1129
      %v1941 = vunpack.c.l.b16 %v1893
      %v1942 = vunpack.c.l.b16 %v1894
      %v1943 = vunpack.c.l.b16 %v1895
      %v1944 = vunpack.c.l.b16 %v1896
      %v1945 = vunpack.c.l.b16 %v1897
      %v1946 = vunpack.c.l.b16 %v1898
      %v1947 = vunpack.c.l.b16 %v1899
      %v1948 = vunpack.c.l.b16 %v1900
      %v1949 = vunpack.c.l.b16 %v1901
      %v1950 = vunpack.c.l.b16 %v1902
      %v1951 = vunpack.c.l.b16 %v1903
      %v1952 = vunpack.c.l.b16 %v1904
      %v1953 = vpack.c.b16 %v1942, %v1941
      %v1954 = vpack.c.b16 %v1944, %v1943
      %v1955 = vpack.c.b16 %v1946, %v1945
      %v1956 = vpack.c.b16 %v1948, %v1947
      %v1957 = vpack.c.b16 %v1950, %v1949
      %v1958 = vpack.c.b16 %v1952, %v1951
      %v1966 = vsel %vm856, %v1913, 0
      %v1969 = vsel %vm856, %v1914, 0
      %v1972 = vsel %vm856, %v1915, 0
      %v1975 = vsel %vm856, %v1916, 0
      %v1978 = vsel %vm856, %v1917, 0
      %v1981 = vsel %vm856, %v1918, 0
      %v1984 = vsel %vm856, %v1919, 0
      %v1987 = vsel %vm856, %v1920, 0
      %v1990 = vsel %vm856, %v1921, 0
      %v1993 = vsel %vm856, %v1922, 0
      %v1996 = vsel %vm856, %v1923, 0
      %v1999 = vsel %vm856, %v1924, 0
      %v2002 = vsel %vm856, %v1925, 0
      %v2005 = vsel %vm856, %v1926, 0
      %v2008 = vsel %vm856, %v1927, 0
      %v2011 = vsel %vm856, %v1928, 0
      %2013 = vmatprep.subr.bf16.mxu0 0
      %2014 = vmatpush1.bf16.msra.mxu0 0
      %2015 = vmatprep.subr.bf16.mxu0 0
      %2016 = vmatpush1.bf16.msra.mxu0 0
      %2017 = vmatprep.subr.bf16.mxu0 0
      %2018 = vmatpush1.bf16.msra.mxu0 %v1958
      %2019 = vmatprep.subr.bf16.mxu0 0
      %2020 = vmatpush1.bf16.msra.mxu0 %v1957
      %2021 = vmatprep.subr.bf16.mxu0 0
      %2022 = vmatpush1.bf16.msra.mxu0 %v1956
      %2023 = vmatprep.subr.bf16.mxu0 0
      %2024 = vmatpush1.bf16.msra.mxu0 %v1955
      %2025 = vmatprep.subr.bf16.mxu0 0
      %2026 = vmatpush1.bf16.msra.mxu0 %v1954
      %2027 = vmatprep.subr.bf16.mxu0 0
      %2028 = vmatpush1.bf16.msra.mxu0 %v1953
      %2029 = vmatprep.subr.bf16.mxu0 0
      %2030 = vmatpush2.bf16.msra.mxu0 0
      %2031 = vmatprep.subr.bf16.mxu0 0
      %2032 = vmatpush2.bf16.msra.mxu0 0
      %2033 = vmatprep.subr.bf16.mxu0 0
      %2034 = vmatpush2.bf16.msra.mxu0 0
      %2035 = vmatprep.subr.bf16.mxu0 0
      %2036 = vmatpush2.bf16.msra.mxu0 0
      %2037 = vmatprep.subr.bf16.mxu0 0
      %2038 = vmatpush2.bf16.msra.mxu0 0
      %2039 = vmatprep.subr.bf16.mxu0 0
      %2040 = vmatpush2.bf16.msra.mxu0 0
      %2041 = vmatprep.subr.bf16.mxu0 0
      %2042 = vmatpush2.bf16.msra.mxu0 0
      %2043 = vmatprep.subr.bf16.mxu0 0
      %2044 = vmatpush2.bf16.msra.mxu0 0
      %2045 = vmatprep.mubr.bf16.mxu0 0
      %2046 = vmatmul.mubr.bf16.gmra.mxu0 %v1966
      %v2047 = vpop.f32.mrf.mxu0
      %v2048 = vadd.f32 0.0, %v2047
      %v2049 = vpop.f32.mrf.mxu0
      %v2050 = vpop.f32.mrf.mxu0
      %v2051 = vadd.f32 0.0, %v2050
      %v2052 = vpop.f32.mrf.mxu0
      %2053 = vmatprep.mubr.bf16.mxu0 0
      %2054 = vmatmul.mubr.bf16.gmra.mxu0 %v1969
      %v2055 = vpop.f32.mrf.mxu0
      %v2056 = vadd.f32 0.0, %v2055
      %v2057 = vpop.f32.mrf.mxu0
      %v2058 = vpop.f32.mrf.mxu0
      %v2059 = vadd.f32 0.0, %v2058
      %v2060 = vpop.f32.mrf.mxu0
      %2061 = vmatprep.mubr.bf16.mxu0 0
      %2062 = vmatmul.mubr.bf16.gmra.mxu0 %v1972
      %v2063 = vpop.f32.mrf.mxu0
      %v2064 = vadd.f32 0.0, %v2063
      %v2065 = vpop.f32.mrf.mxu0
      %v2066 = vpop.f32.mrf.mxu0
      %v2067 = vadd.f32 0.0, %v2066
      %v2068 = vpop.f32.mrf.mxu0
      %2069 = vmatprep.mubr.bf16.mxu0 0
      %2070 = vmatmul.mubr.bf16.gmra.mxu0 %v1975
      %v2071 = vpop.f32.mrf.mxu0
      %v2072 = vadd.f32 0.0, %v2071
      %v2073 = vpop.f32.mrf.mxu0
      %v2074 = vpop.f32.mrf.mxu0
      %v2075 = vadd.f32 0.0, %v2074
      %v2076 = vpop.f32.mrf.mxu0
      %2077 = vmatprep.mubr.bf16.mxu0 0
      %2078 = vmatmul.mubr.bf16.gmra.mxu0 %v1978
      %v2079 = vpop.f32.mrf.mxu0
      %v2080 = vadd.f32 0.0, %v2079
      %v2081 = vpop.f32.mrf.mxu0
      %v2082 = vpop.f32.mrf.mxu0
      %v2083 = vadd.f32 0.0, %v2082
      %v2084 = vpop.f32.mrf.mxu0
      %2085 = vmatprep.mubr.bf16.mxu0 0
      %2086 = vmatmul.mubr.bf16.gmra.mxu0 %v1981
      %v2087 = vpop.f32.mrf.mxu0
      %v2088 = vadd.f32 0.0, %v2087
      %v2089 = vpop.f32.mrf.mxu0
      %v2090 = vpop.f32.mrf.mxu0
      %v2091 = vadd.f32 0.0, %v2090
      %v2092 = vpop.f32.mrf.mxu0
      %2093 = vmatprep.mubr.bf16.mxu0 0
      %2094 = vmatmul.mubr.bf16.gmra.mxu0 %v1984
      %v2095 = vpop.f32.mrf.mxu0
      %v2096 = vadd.f32 0.0, %v2095
      %v2097 = vpop.f32.mrf.mxu0
      %v2098 = vpop.f32.mrf.mxu0
      %v2099 = vadd.f32 0.0, %v2098
      %v2100 = vpop.f32.mrf.mxu0
      %2101 = vmatprep.mubr.bf16.mxu0 0
      %2102 = vmatmul.mubr.bf16.gmra.mxu0 %v1987
      %v2103 = vpop.f32.mrf.mxu0
      %v2104 = vadd.f32 0.0, %v2103
      %v2105 = vpop.f32.mrf.mxu0
      %v2106 = vpop.f32.mrf.mxu0
      %v2107 = vadd.f32 0.0, %v2106
      %v2108 = vpop.f32.mrf.mxu0
      %2109 = vmatprep.mubr.bf16.mxu0 0
      %2110 = vmatmul.mubr.bf16.gmra.mxu0 %v1990
      %v2111 = vpop.f32.mrf.mxu0
      %v2112 = vadd.f32 0.0, %v2111
      %v2113 = vpop.f32.mrf.mxu0
      %v2114 = vpop.f32.mrf.mxu0
      %v2115 = vadd.f32 0.0, %v2114
      %v2116 = vpop.f32.mrf.mxu0
      %2117 = vmatprep.mubr.bf16.mxu0 0
      %2118 = vmatmul.mubr.bf16.gmra.mxu0 %v1993
      %v2119 = vpop.f32.mrf.mxu0
      %v2120 = vadd.f32 0.0, %v2119
      %v2121 = vpop.f32.mrf.mxu0
      %v2122 = vpop.f32.mrf.mxu0
      %v2123 = vadd.f32 0.0, %v2122
      %v2124 = vpop.f32.mrf.mxu0
      %2125 = vmatprep.mubr.bf16.mxu0 0
      %2126 = vmatmul.mubr.bf16.gmra.mxu0 %v1996
      %v2127 = vpop.f32.mrf.mxu0
      %v2128 = vadd.f32 0.0, %v2127
      %v2129 = vpop.f32.mrf.mxu0
      %v2130 = vpop.f32.mrf.mxu0
      %v2131 = vadd.f32 0.0, %v2130
      %v2132 = vpop.f32.mrf.mxu0
      %2133 = vmatprep.mubr.bf16.mxu0 0
      %2134 = vmatmul.mubr.bf16.gmra.mxu0 %v1999
      %v2135 = vpop.f32.mrf.mxu0
      %v2136 = vadd.f32 0.0, %v2135
      %v2137 = vpop.f32.mrf.mxu0
      %v2138 = vpop.f32.mrf.mxu0
      %v2139 = vadd.f32 0.0, %v2138
      %v2140 = vpop.f32.mrf.mxu0
      %2141 = vmatprep.mubr.bf16.mxu0 0
      %2142 = vmatmul.mubr.bf16.gmra.mxu0 %v2002
      %v2143 = vpop.f32.mrf.mxu0
      %v2144 = vadd.f32 0.0, %v2143
      %v2145 = vpop.f32.mrf.mxu0
      %v2146 = vpop.f32.mrf.mxu0
      %v2147 = vadd.f32 0.0, %v2146
      %v2148 = vpop.f32.mrf.mxu0
      %2149 = vmatprep.mubr.bf16.mxu0 0
      %2150 = vmatmul.mubr.bf16.gmra.mxu0 %v2005
      %v2151 = vpop.f32.mrf.mxu0
      %v2152 = vadd.f32 0.0, %v2151
      %v2153 = vpop.f32.mrf.mxu0
      %v2154 = vpop.f32.mrf.mxu0
      %v2155 = vadd.f32 0.0, %v2154
      %v2156 = vpop.f32.mrf.mxu0
      %2157 = vmatprep.mubr.bf16.mxu0 0
      %2158 = vmatmul.mubr.bf16.gmra.mxu0 %v2008
      %v2159 = vpop.f32.mrf.mxu0
      %v2160 = vadd.f32 0.0, %v2159
      %v2161 = vpop.f32.mrf.mxu0
      %v2162 = vpop.f32.mrf.mxu0
      %v2163 = vadd.f32 0.0, %v2162
      %v2164 = vpop.f32.mrf.mxu0
      %2165 = vmatprep.mubr.bf16.mxu0 0
      %2166 = vmatmul.mubr.bf16.gmra.mxu0 %v2011
      %v2167 = vpop.f32.mrf.mxu0
      %v2168 = vadd.f32 0.0, %v2167
      %v2169 = vpop.f32.mrf.mxu0
      %v2170 = vpop.f32.mrf.mxu0
      %v2171 = vadd.f32 0.0, %v2170
      %v2172 = vpop.f32.mrf.mxu0
      %2173 = vdwg.mxu0
      %v2174 = vadd.f32 %v1860, %v2048
      %v2175 = vadd.f32 %v1861, %v2051
      %v2176 = vadd.f32 %v1862, %v2056
      %v2177 = vadd.f32 %v1863, %v2059
      %v2178 = vadd.f32 %v1864, %v2064
      %v2179 = vadd.f32 %v1865, %v2067
      %v2180 = vadd.f32 %v1866, %v2072
      %v2181 = vadd.f32 %v1867, %v2075
      %v2182 = vadd.f32 %v1868, %v2080
      %v2183 = vadd.f32 %v1869, %v2083
      %v2184 = vadd.f32 %v1870, %v2088
      %v2185 = vadd.f32 %v1871, %v2091
      %v2186 = vadd.f32 %v1872, %v2096
      %v2187 = vadd.f32 %v1873, %v2099
      %v2188 = vadd.f32 %v1874, %v2104
      %v2189 = vadd.f32 %v1875, %v2107
      %v2190 = vadd.f32 %v1876, %v2112
      %v2191 = vadd.f32 %v1877, %v2115
      %v2192 = vadd.f32 %v1878, %v2120
      %v2193 = vadd.f32 %v1879, %v2123
      %v2194 = vadd.f32 %v1880, %v2128
      %v2195 = vadd.f32 %v1881, %v2131
      %v2196 = vadd.f32 %v1882, %v2136
      %v2197 = vadd.f32 %v1883, %v2139
      %v2198 = vadd.f32 %v1884, %v2144
      %v2199 = vadd.f32 %v1885, %v2147
      %v2200 = vadd.f32 %v1886, %v2152
      %v2201 = vadd.f32 %v1887, %v2155
      %v2202 = vadd.f32 %v1888, %v2160
      %v2203 = vadd.f32 %v1889, %v2163
      %v2204 = vadd.f32 %v1890, %v2168
      %v2205 = vadd.f32 %v1891, %v2171
      %v2207 = vshrl.u32 %v232, 16
      %v2209 = vrot.slane %v2207, 4
      %v2210 = vshll.u32 %v232, 16
      %v2212 = vrot.slane %v2210, 5
      %v2213 = vor.u32 %v2209, %v2212
      %v2214 = vrot.slane %v2213, 4
      %v2216 = vshll.u32 %v233, 16
      %v2218 = vrot.slane %v2216, 5
      %v2219 = vsel %vm310, %v2214, %v2218
      %v2221 = vshrl.u32 %v252, 16
      %v2223 = vrot.slane %v2221, 4
      %v2224 = vshll.u32 %v252, 16
      %v2226 = vrot.slane %v2224, 5
      %v2227 = vor.u32 %v2223, %v2226
      %v2228 = vrot.slane %v2227, 4
      %v2230 = vshll.u32 %v253, 16
      %v2232 = vrot.slane %v2230, 5
      %v2233 = vsel %vm310, %v2228, %v2232
      %v2235 = vshrl.u32 %v272, 16
      %v2237 = vrot.slane %v2235, 4
      %v2238 = vshll.u32 %v272, 16
      %v2240 = vrot.slane %v2238, 5
      %v2241 = vor.u32 %v2237, %v2240
      %v2242 = vrot.slane %v2241, 4
      %v2244 = vshll.u32 %v273, 16
      %v2246 = vrot.slane %v2244, 5
      %v2247 = vsel %vm310, %v2242, %v2246
      %v2249 = vshrl.u32 %v292, 16
      %v2251 = vrot.slane %v2249, 4
      %v2252 = vshll.u32 %v292, 16
      %v2254 = vrot.slane %v2252, 5
      %v2255 = vor.u32 %v2251, %v2254
      %v2256 = vrot.slane %v2255, 4
      %v2258 = vshll.u32 %v293, 16
      %v2260 = vrot.slane %v2258, 5
      %v2261 = vsel %vm310, %v2256, %v2260
      %s2262 = scalar_lea.vmem %s1, 192
      %v2263 = vld [vmem:[%s2262] sm:$0xf]
      %v2264 = vld [vmem:[%s2262 + $0x4] sm:$0xf]
      %v2265 = vld [vmem:[%s2262 + $0x8] sm:$0xf]
      %v2266 = vld [vmem:[%s2262 + $0xc] sm:$0xf]
      %v2267 = vld [vmem:[%s2262 + $0x10] sm:$0xf]
      %v2268 = vld [vmem:[%s2262 + $0x14] sm:$0xf]
      %v2269 = vld [vmem:[%s2262 + $0x18] sm:$0xf]
      %v2270 = vld [vmem:[%s2262 + $0x1c] sm:$0xf]
      %v2271 = vld [vmem:[%s2262 + $0x20] sm:$0xf]
      %v2272 = vld [vmem:[%s2262 + $0x24] sm:$0xf]
      %v2273 = vld [vmem:[%s2262 + $0x28] sm:$0xf]
      %v2274 = vld [vmem:[%s2262 + $0x2c] sm:$0xf]
      %v2275 = vunpack.c.l.b16 %v2219
      %v2276 = vunpack.c.l.b16 %v2233
      %v2277 = vunpack.c.l.b16 %v2247
      %v2278 = vunpack.c.l.b16 %v2261
      %v2279 = vpack.c.b16 %v774, %v773
      %v2280 = vpack.c.b16 %v776, %v775
      %v2281 = vpack.c.b16 %v778, %v777
      %v2282 = vpack.c.b16 %v2275, %v779
      %v2283 = vpack.c.b16 %v782, %v781
      %v2284 = vpack.c.b16 %v784, %v783
      %v2285 = vpack.c.b16 %v786, %v785
      %v2286 = vpack.c.b16 %v2276, %v787
      %v2287 = vpack.c.b16 %v790, %v789
      %v2288 = vpack.c.b16 %v792, %v791
      %v2289 = vpack.c.b16 %v794, %v793
      %v2290 = vpack.c.b16 %v2277, %v795
      %v2291 = vpack.c.b16 %v798, %v797
      %v2292 = vpack.c.b16 %v800, %v799
      %v2293 = vpack.c.b16 %v802, %v801
      %v2294 = vpack.c.b16 %v2278, %v803
      %v2307 = vunpack.c.l.b16 %v2263
      %v2308 = vunpack.c.l.b16 %v2264
      %v2309 = vunpack.c.l.b16 %v2265
      %v2310 = vunpack.c.l.b16 %v2266
      %v2311 = vunpack.c.l.b16 %v2267
      %v2312 = vunpack.c.l.b16 %v2268
      %v2313 = vunpack.c.l.b16 %v2269
      %v2314 = vunpack.c.l.b16 %v2270
      %v2315 = vunpack.c.l.b16 %v2271
      %v2316 = vunpack.c.l.b16 %v2272
      %v2317 = vunpack.c.l.b16 %v2273
      %v2318 = vunpack.c.l.b16 %v2274
      %v2319 = vpack.c.b16 %v2308, %v2307
      %v2320 = vpack.c.b16 %v2310, %v2309
      %v2321 = vpack.c.b16 %v2312, %v2311
      %v2322 = vpack.c.b16 %v2314, %v2313
      %v2323 = vpack.c.b16 %v2316, %v2315
      %v2324 = vpack.c.b16 %v2318, %v2317
      %v2332 = vsel %vm856, %v2279, 0
      %v2335 = vsel %vm856, %v2280, 0
      %v2338 = vsel %vm856, %v2281, 0
      %v2341 = vsel %vm856, %v2282, 0
      %v2344 = vsel %vm856, %v2283, 0
      %v2347 = vsel %vm856, %v2284, 0
      %v2350 = vsel %vm856, %v2285, 0
      %v2353 = vsel %vm856, %v2286, 0
      %v2356 = vsel %vm856, %v2287, 0
      %v2359 = vsel %vm856, %v2288, 0
      %v2362 = vsel %vm856, %v2289, 0
      %v2365 = vsel %vm856, %v2290, 0
      %v2368 = vsel %vm856, %v2291, 0
      %v2371 = vsel %vm856, %v2292, 0
      %v2374 = vsel %vm856, %v2293, 0
      %v2377 = vsel %vm856, %v2294, 0
      %2379 = vmatprep.subr.bf16.mxu0 0
      %2380 = vmatpush1.bf16.msra.mxu0 0
      %2381 = vmatprep.subr.bf16.mxu0 0
      %2382 = vmatpush1.bf16.msra.mxu0 0
      %2383 = vmatprep.subr.bf16.mxu0 0
      %2384 = vmatpush1.bf16.msra.mxu0 %v2324
      %2385 = vmatprep.subr.bf16.mxu0 0
      %2386 = vmatpush1.bf16.msra.mxu0 %v2323
      %2387 = vmatprep.subr.bf16.mxu0 0
      %2388 = vmatpush1.bf16.msra.mxu0 %v2322
      %2389 = vmatprep.subr.bf16.mxu0 0
      %2390 = vmatpush1.bf16.msra.mxu0 %v2321
      %2391 = vmatprep.subr.bf16.mxu0 0
      %2392 = vmatpush1.bf16.msra.mxu0 %v2320
      %2393 = vmatprep.subr.bf16.mxu0 0
      %2394 = vmatpush1.bf16.msra.mxu0 %v2319
      %2395 = vmatprep.subr.bf16.mxu0 0
      %2396 = vmatpush2.bf16.msra.mxu0 0
      %2397 = vmatprep.subr.bf16.mxu0 0
      %2398 = vmatpush2.bf16.msra.mxu0 0
      %2399 = vmatprep.subr.bf16.mxu0 0
      %2400 = vmatpush2.bf16.msra.mxu0 0
      %2401 = vmatprep.subr.bf16.mxu0 0
      %2402 = vmatpush2.bf16.msra.mxu0 0
      %2403 = vmatprep.subr.bf16.mxu0 0
      %2404 = vmatpush2.bf16.msra.mxu0 0
      %2405 = vmatprep.subr.bf16.mxu0 0
      %2406 = vmatpush2.bf16.msra.mxu0 0
      %2407 = vmatprep.subr.bf16.mxu0 0
      %2408 = vmatpush2.bf16.msra.mxu0 0
      %2409 = vmatprep.subr.bf16.mxu0 0
      %2410 = vmatpush2.bf16.msra.mxu0 0
      %2411 = vmatprep.mubr.bf16.mxu0 0
      %2412 = vmatmul.mubr.bf16.gmra.mxu0 %v2332
      %v2413 = vpop.f32.mrf.mxu0
      %v2414 = vadd.f32 0.0, %v2413
      %v2415 = vpop.f32.mrf.mxu0
      %v2416 = vpop.f32.mrf.mxu0
      %v2417 = vadd.f32 0.0, %v2416
      %v2418 = vpop.f32.mrf.mxu0
      %2419 = vmatprep.mubr.bf16.mxu0 0
      %2420 = vmatmul.mubr.bf16.gmra.mxu0 %v2335
      %v2421 = vpop.f32.mrf.mxu0
      %v2422 = vadd.f32 0.0, %v2421
      %v2423 = vpop.f32.mrf.mxu0
      %v2424 = vpop.f32.mrf.mxu0
      %v2425 = vadd.f32 0.0, %v2424
      %v2426 = vpop.f32.mrf.mxu0
      %2427 = vmatprep.mubr.bf16.mxu0 0
      %2428 = vmatmul.mubr.bf16.gmra.mxu0 %v2338
      %v2429 = vpop.f32.mrf.mxu0
      %v2430 = vadd.f32 0.0, %v2429
      %v2431 = vpop.f32.mrf.mxu0
      %v2432 = vpop.f32.mrf.mxu0
      %v2433 = vadd.f32 0.0, %v2432
      %v2434 = vpop.f32.mrf.mxu0
      %2435 = vmatprep.mubr.bf16.mxu0 0
      %2436 = vmatmul.mubr.bf16.gmra.mxu0 %v2341
      %v2437 = vpop.f32.mrf.mxu0
      %v2438 = vadd.f32 0.0, %v2437
      %v2439 = vpop.f32.mrf.mxu0
      %v2440 = vpop.f32.mrf.mxu0
      %v2441 = vadd.f32 0.0, %v2440
      %v2442 = vpop.f32.mrf.mxu0
      %2443 = vmatprep.mubr.bf16.mxu0 0
      %2444 = vmatmul.mubr.bf16.gmra.mxu0 %v2344
      %v2445 = vpop.f32.mrf.mxu0
      %v2446 = vadd.f32 0.0, %v2445
      %v2447 = vpop.f32.mrf.mxu0
      %v2448 = vpop.f32.mrf.mxu0
      %v2449 = vadd.f32 0.0, %v2448
      %v2450 = vpop.f32.mrf.mxu0
      %2451 = vmatprep.mubr.bf16.mxu0 0
      %2452 = vmatmul.mubr.bf16.gmra.mxu0 %v2347
      %v2453 = vpop.f32.mrf.mxu0
      %v2454 = vadd.f32 0.0, %v2453
      %v2455 = vpop.f32.mrf.mxu0
      %v2456 = vpop.f32.mrf.mxu0
      %v2457 = vadd.f32 0.0, %v2456
      %v2458 = vpop.f32.mrf.mxu0
      %2459 = vmatprep.mubr.bf16.mxu0 0
      %2460 = vmatmul.mubr.bf16.gmra.mxu0 %v2350
      %v2461 = vpop.f32.mrf.mxu0
      %v2462 = vadd.f32 0.0, %v2461
      %v2463 = vpop.f32.mrf.mxu0
      %v2464 = vpop.f32.mrf.mxu0
      %v2465 = vadd.f32 0.0, %v2464
      %v2466 = vpop.f32.mrf.mxu0
      %2467 = vmatprep.mubr.bf16.mxu0 0
      %2468 = vmatmul.mubr.bf16.gmra.mxu0 %v2353
      %v2469 = vpop.f32.mrf.mxu0
      %v2470 = vadd.f32 0.0, %v2469
      %v2471 = vpop.f32.mrf.mxu0
      %v2472 = vpop.f32.mrf.mxu0
      %v2473 = vadd.f32 0.0, %v2472
      %v2474 = vpop.f32.mrf.mxu0
      %2475 = vmatprep.mubr.bf16.mxu0 0
      %2476 = vmatmul.mubr.bf16.gmra.mxu0 %v2356
      %v2477 = vpop.f32.mrf.mxu0
      %v2478 = vadd.f32 0.0, %v2477
      %v2479 = vpop.f32.mrf.mxu0
      %v2480 = vpop.f32.mrf.mxu0
      %v2481 = vadd.f32 0.0, %v2480
      %v2482 = vpop.f32.mrf.mxu0
      %2483 = vmatprep.mubr.bf16.mxu0 0
      %2484 = vmatmul.mubr.bf16.gmra.mxu0 %v2359
      %v2485 = vpop.f32.mrf.mxu0
      %v2486 = vadd.f32 0.0, %v2485
      %v2487 = vpop.f32.mrf.mxu0
      %v2488 = vpop.f32.mrf.mxu0
      %v2489 = vadd.f32 0.0, %v2488
      %v2490 = vpop.f32.mrf.mxu0
      %2491 = vmatprep.mubr.bf16.mxu0 0
      %2492 = vmatmul.mubr.bf16.gmra.mxu0 %v2362
      %v2493 = vpop.f32.mrf.mxu0
      %v2494 = vadd.f32 0.0, %v2493
      %v2495 = vpop.f32.mrf.mxu0
      %v2496 = vpop.f32.mrf.mxu0
      %v2497 = vadd.f32 0.0, %v2496
      %v2498 = vpop.f32.mrf.mxu0
      %2499 = vmatprep.mubr.bf16.mxu0 0
      %2500 = vmatmul.mubr.bf16.gmra.mxu0 %v2365
      %v2501 = vpop.f32.mrf.mxu0
      %v2502 = vadd.f32 0.0, %v2501
      %v2503 = vpop.f32.mrf.mxu0
      %v2504 = vpop.f32.mrf.mxu0
      %v2505 = vadd.f32 0.0, %v2504
      %v2506 = vpop.f32.mrf.mxu0
      %2507 = vmatprep.mubr.bf16.mxu0 0
      %2508 = vmatmul.mubr.bf16.gmra.mxu0 %v2368
      %v2509 = vpop.f32.mrf.mxu0
      %v2510 = vadd.f32 0.0, %v2509
      %v2511 = vpop.f32.mrf.mxu0
      %v2512 = vpop.f32.mrf.mxu0
      %v2513 = vadd.f32 0.0, %v2512
      %v2514 = vpop.f32.mrf.mxu0
      %2515 = vmatprep.mubr.bf16.mxu0 0
      %2516 = vmatmul.mubr.bf16.gmra.mxu0 %v2371
      %v2517 = vpop.f32.mrf.mxu0
      %v2518 = vadd.f32 0.0, %v2517
      %v2519 = vpop.f32.mrf.mxu0
      %v2520 = vpop.f32.mrf.mxu0
      %v2521 = vadd.f32 0.0, %v2520
      %v2522 = vpop.f32.mrf.mxu0
      %2523 = vmatprep.mubr.bf16.mxu0 0
      %2524 = vmatmul.mubr.bf16.gmra.mxu0 %v2374
      %v2525 = vpop.f32.mrf.mxu0
      %v2526 = vadd.f32 0.0, %v2525
      %v2527 = vpop.f32.mrf.mxu0
      %v2528 = vpop.f32.mrf.mxu0
      %v2529 = vadd.f32 0.0, %v2528
      %v2530 = vpop.f32.mrf.mxu0
      %2531 = vmatprep.mubr.bf16.mxu0 0
      %2532 = vmatmul.mubr.bf16.gmra.mxu0 %v2377
      %v2533 = vpop.f32.mrf.mxu0
      %v2534 = vadd.f32 0.0, %v2533
      %v2535 = vpop.f32.mrf.mxu0
      %v2536 = vpop.f32.mrf.mxu0
      %v2537 = vadd.f32 0.0, %v2536
      %v2538 = vpop.f32.mrf.mxu0
      %2539 = vdwg.mxu0
      %v2540 = vadd.f32 %v2174, %v2414
      %v2541 = vadd.f32 %v2175, %v2417
      %v2542 = vadd.f32 %v2176, %v2422
      %v2543 = vadd.f32 %v2177, %v2425
      %v2544 = vadd.f32 %v2178, %v2430
      %v2545 = vadd.f32 %v2179, %v2433
      %v2546 = vadd.f32 %v2180, %v2438
      %v2547 = vadd.f32 %v2181, %v2441
      %v2548 = vadd.f32 %v2182, %v2446
      %v2549 = vadd.f32 %v2183, %v2449
      %v2550 = vadd.f32 %v2184, %v2454
      %v2551 = vadd.f32 %v2185, %v2457
      %v2552 = vadd.f32 %v2186, %v2462
      %v2553 = vadd.f32 %v2187, %v2465
      %v2554 = vadd.f32 %v2188, %v2470
      %v2555 = vadd.f32 %v2189, %v2473
      %v2556 = vadd.f32 %v2190, %v2478
      %v2557 = vadd.f32 %v2191, %v2481
      %v2558 = vadd.f32 %v2192, %v2486
      %v2559 = vadd.f32 %v2193, %v2489
      %v2560 = vadd.f32 %v2194, %v2494
      %v2561 = vadd.f32 %v2195, %v2497
      %v2562 = vadd.f32 %v2196, %v2502
      %v2563 = vadd.f32 %v2197, %v2505
      %v2564 = vadd.f32 %v2198, %v2510
      %v2565 = vadd.f32 %v2199, %v2513
      %v2566 = vadd.f32 %v2200, %v2518
      %v2567 = vadd.f32 %v2201, %v2521
      %v2568 = vadd.f32 %v2202, %v2526
      %v2569 = vadd.f32 %v2203, %v2529
      %v2570 = vadd.f32 %v2204, %v2534
      %v2571 = vadd.f32 %v2205, %v2537
      %v2576 = vrot.slane %v232, 5
      %v2577 = vrot.slane %v2576, 4
      %v2578 = vrot.slane %v233, 5
      %v2579 = vsel %vm1425, %v2577, %v2578
      %v2580 = vrot.slane %v252, 5
      %v2581 = vrot.slane %v2580, 4
      %v2582 = vrot.slane %v253, 5
      %v2583 = vsel %vm1425, %v2581, %v2582
      %v2584 = vrot.slane %v272, 5
      %v2585 = vrot.slane %v2584, 4
      %v2586 = vrot.slane %v273, 5
      %v2587 = vsel %vm1425, %v2585, %v2586
      %v2588 = vrot.slane %v292, 5
      %v2589 = vrot.slane %v2588, 4
      %v2590 = vrot.slane %v293, 5
      %v2591 = vsel %vm1425, %v2589, %v2590
      %s2592 = scalar_lea.vmem %s1, 240
      %v2593 = vld [vmem:[%s2592] sm:$0xf]
      %v2594 = vld [vmem:[%s2592 + $0x4] sm:$0xf]
      %v2595 = vld [vmem:[%s2592 + $0x8] sm:$0xf]
      %v2596 = vld [vmem:[%s2592 + $0xc] sm:$0xf]
      %v2597 = vld [vmem:[%s2592 + $0x10] sm:$0xf]
      %v2598 = vld [vmem:[%s2592 + $0x14] sm:$0xf]
      %v2599 = vld [vmem:[%s2592 + $0x18] sm:$0xf]
      %v2600 = vld [vmem:[%s2592 + $0x1c] sm:$0xf]
      %v2601 = vld [vmem:[%s2592 + $0x20] sm:$0xf]
      %v2602 = vld [vmem:[%s2592 + $0x24] sm:$0xf]
      %v2603 = vld [vmem:[%s2592 + $0x28] sm:$0xf]
      %v2604 = vld [vmem:[%s2592 + $0x2c] sm:$0xf]
      %v2605 = vunpack.c.l.b16 %v2579
      %v2606 = vunpack.c.l.b16 %v2583
      %v2607 = vunpack.c.l.b16 %v2587
      %v2608 = vunpack.c.l.b16 %v2591
      %v2609 = vpack.c.b16 %v1569, %v1568
      %v2610 = vpack.c.b16 %v1571, %v1570
      %v2611 = vpack.c.b16 %v1573, %v1572
      %v2612 = vpack.c.b16 %v2605, %v1574
      %v2613 = vpack.c.b16 %v1577, %v1576
      %v2614 = vpack.c.b16 %v1579, %v1578
      %v2615 = vpack.c.b16 %v1581, %v1580
      %v2616 = vpack.c.b16 %v2606, %v1582
      %v2617 = vpack.c.b16 %v1585, %v1584
      %v2618 = vpack.c.b16 %v1587, %v1586
      %v2619 = vpack.c.b16 %v1589, %v1588
      %v2620 = vpack.c.b16 %v2607, %v1590
      %v2621 = vpack.c.b16 %v1593, %v1592
      %v2622 = vpack.c.b16 %v1595, %v1594
      %v2623 = vpack.c.b16 %v1597, %v1596
      %v2624 = vpack.c.b16 %v2608, %v1598
      %v2637 = vunpack.c.l.b16 %v2593
      %v2638 = vunpack.c.l.b16 %v2594
      %v2639 = vunpack.c.l.b16 %v2595
      %v2640 = vunpack.c.l.b16 %v2596
      %v2641 = vunpack.c.l.b16 %v2597
      %v2642 = vunpack.c.l.b16 %v2598
      %v2643 = vunpack.c.l.b16 %v2599
      %v2644 = vunpack.c.l.b16 %v2600
      %v2645 = vunpack.c.l.b16 %v2601
      %v2646 = vunpack.c.l.b16 %v2602
      %v2647 = vunpack.c.l.b16 %v2603
      %v2648 = vunpack.c.l.b16 %v2604
      %v2649 = vpack.c.b16 %v2638, %v2637
      %v2650 = vpack.c.b16 %v2640, %v2639
      %v2651 = vpack.c.b16 %v2642, %v2641
      %v2652 = vpack.c.b16 %v2644, %v2643
      %v2653 = vpack.c.b16 %v2646, %v2645
      %v2654 = vpack.c.b16 %v2648, %v2647
      %v2662 = vsel %vm856, %v2609, 0
      %v2665 = vsel %vm856, %v2610, 0
      %v2668 = vsel %vm856, %v2611, 0
      %v2671 = vsel %vm856, %v2612, 0
      %v2674 = vsel %vm856, %v2613, 0
      %v2677 = vsel %vm856, %v2614, 0
      %v2680 = vsel %vm856, %v2615, 0
      %v2683 = vsel %vm856, %v2616, 0
      %v2686 = vsel %vm856, %v2617, 0
      %v2689 = vsel %vm856, %v2618, 0
      %v2692 = vsel %vm856, %v2619, 0
      %v2695 = vsel %vm856, %v2620, 0
      %v2698 = vsel %vm856, %v2621, 0
      %v2701 = vsel %vm856, %v2622, 0
      %v2704 = vsel %vm856, %v2623, 0
      %v2707 = vsel %vm856, %v2624, 0
      %2709 = vmatprep.subr.bf16.mxu0 0
      %2710 = vmatpush1.bf16.msra.mxu0 0
      %2711 = vmatprep.subr.bf16.mxu0 0
      %2712 = vmatpush1.bf16.msra.mxu0 0
      %2713 = vmatprep.subr.bf16.mxu0 0
      %2714 = vmatpush1.bf16.msra.mxu0 %v2654
      %2715 = vmatprep.subr.bf16.mxu0 0
      %2716 = vmatpush1.bf16.msra.mxu0 %v2653
      %2717 = vmatprep.subr.bf16.mxu0 0
      %2718 = vmatpush1.bf16.msra.mxu0 %v2652
      %2719 = vmatprep.subr.bf16.mxu0 0
      %2720 = vmatpush1.bf16.msra.mxu0 %v2651
      %2721 = vmatprep.subr.bf16.mxu0 0
      %2722 = vmatpush1.bf16.msra.mxu0 %v2650
      %2723 = vmatprep.subr.bf16.mxu0 0
      %2724 = vmatpush1.bf16.msra.mxu0 %v2649
      %2725 = vmatprep.subr.bf16.mxu0 0
      %2726 = vmatpush2.bf16.msra.mxu0 0
      %2727 = vmatprep.subr.bf16.mxu0 0
      %2728 = vmatpush2.bf16.msra.mxu0 0
      %2729 = vmatprep.subr.bf16.mxu0 0
      %2730 = vmatpush2.bf16.msra.mxu0 0
      %2731 = vmatprep.subr.bf16.mxu0 0
      %2732 = vmatpush2.bf16.msra.mxu0 0
      %2733 = vmatprep.subr.bf16.mxu0 0
      %2734 = vmatpush2.bf16.msra.mxu0 0
      %2735 = vmatprep.subr.bf16.mxu0 0
      %2736 = vmatpush2.bf16.msra.mxu0 0
      %2737 = vmatprep.subr.bf16.mxu0 0
      %2738 = vmatpush2.bf16.msra.mxu0 0
      %2739 = vmatprep.subr.bf16.mxu0 0
      %2740 = vmatpush2.bf16.msra.mxu0 0
      %2741 = vmatprep.mubr.bf16.mxu0 0
      %2742 = vmatmul.mubr.bf16.gmra.mxu0 %v2662
      %v2743 = vpop.f32.mrf.mxu0
      %v2744 = vadd.f32 0.0, %v2743
      %v2745 = vpop.f32.mrf.mxu0
      %v2746 = vpop.f32.mrf.mxu0
      %v2747 = vadd.f32 0.0, %v2746
      %v2748 = vpop.f32.mrf.mxu0
      %2749 = vmatprep.mubr.bf16.mxu0 0
      %2750 = vmatmul.mubr.bf16.gmra.mxu0 %v2665
      %v2751 = vpop.f32.mrf.mxu0
      %v2752 = vadd.f32 0.0, %v2751
      %v2753 = vpop.f32.mrf.mxu0
      %v2754 = vpop.f32.mrf.mxu0
      %v2755 = vadd.f32 0.0, %v2754
      %v2756 = vpop.f32.mrf.mxu0
      %2757 = vmatprep.mubr.bf16.mxu0 0
      %2758 = vmatmul.mubr.bf16.gmra.mxu0 %v2668
      %v2759 = vpop.f32.mrf.mxu0
      %v2760 = vadd.f32 0.0, %v2759
      %v2761 = vpop.f32.mrf.mxu0
      %v2762 = vpop.f32.mrf.mxu0
      %v2763 = vadd.f32 0.0, %v2762
      %v2764 = vpop.f32.mrf.mxu0
      %2765 = vmatprep.mubr.bf16.mxu0 0
      %2766 = vmatmul.mubr.bf16.gmra.mxu0 %v2671
      %v2767 = vpop.f32.mrf.mxu0
      %v2768 = vadd.f32 0.0, %v2767
      %v2769 = vpop.f32.mrf.mxu0
      %v2770 = vpop.f32.mrf.mxu0
      %v2771 = vadd.f32 0.0, %v2770
      %v2772 = vpop.f32.mrf.mxu0
      %2773 = vmatprep.mubr.bf16.mxu0 0
      %2774 = vmatmul.mubr.bf16.gmra.mxu0 %v2674
      %v2775 = vpop.f32.mrf.mxu0
      %v2776 = vadd.f32 0.0, %v2775
      %v2777 = vpop.f32.mrf.mxu0
      %v2778 = vpop.f32.mrf.mxu0
      %v2779 = vadd.f32 0.0, %v2778
      %v2780 = vpop.f32.mrf.mxu0
      %2781 = vmatprep.mubr.bf16.mxu0 0
      %2782 = vmatmul.mubr.bf16.gmra.mxu0 %v2677
      %v2783 = vpop.f32.mrf.mxu0
      %v2784 = vadd.f32 0.0, %v2783
      %v2785 = vpop.f32.mrf.mxu0
      %v2786 = vpop.f32.mrf.mxu0
      %v2787 = vadd.f32 0.0, %v2786
      %v2788 = vpop.f32.mrf.mxu0
      %2789 = vmatprep.mubr.bf16.mxu0 0
      %2790 = vmatmul.mubr.bf16.gmra.mxu0 %v2680
      %v2791 = vpop.f32.mrf.mxu0
      %v2792 = vadd.f32 0.0, %v2791
      %v2793 = vpop.f32.mrf.mxu0
      %v2794 = vpop.f32.mrf.mxu0
      %v2795 = vadd.f32 0.0, %v2794
      %v2796 = vpop.f32.mrf.mxu0
      %2797 = vmatprep.mubr.bf16.mxu0 0
      %2798 = vmatmul.mubr.bf16.gmra.mxu0 %v2683
      %v2799 = vpop.f32.mrf.mxu0
      %v2800 = vadd.f32 0.0, %v2799
      %v2801 = vpop.f32.mrf.mxu0
      %v2802 = vpop.f32.mrf.mxu0
      %v2803 = vadd.f32 0.0, %v2802
      %v2804 = vpop.f32.mrf.mxu0
      %2805 = vmatprep.mubr.bf16.mxu0 0
      %2806 = vmatmul.mubr.bf16.gmra.mxu0 %v2686
      %v2807 = vpop.f32.mrf.mxu0
      %v2808 = vadd.f32 0.0, %v2807
      %v2809 = vpop.f32.mrf.mxu0
      %v2810 = vpop.f32.mrf.mxu0
      %v2811 = vadd.f32 0.0, %v2810
      %v2812 = vpop.f32.mrf.mxu0
      %2813 = vmatprep.mubr.bf16.mxu0 0
      %2814 = vmatmul.mubr.bf16.gmra.mxu0 %v2689
      %v2815 = vpop.f32.mrf.mxu0
      %v2816 = vadd.f32 0.0, %v2815
      %v2817 = vpop.f32.mrf.mxu0
      %v2818 = vpop.f32.mrf.mxu0
      %v2819 = vadd.f32 0.0, %v2818
      %v2820 = vpop.f32.mrf.mxu0
      %2821 = vmatprep.mubr.bf16.mxu0 0
      %2822 = vmatmul.mubr.bf16.gmra.mxu0 %v2692
      %v2823 = vpop.f32.mrf.mxu0
      %v2824 = vadd.f32 0.0, %v2823
      %v2825 = vpop.f32.mrf.mxu0
      %v2826 = vpop.f32.mrf.mxu0
      %v2827 = vadd.f32 0.0, %v2826
      %v2828 = vpop.f32.mrf.mxu0
      %2829 = vmatprep.mubr.bf16.mxu0 0
      %2830 = vmatmul.mubr.bf16.gmra.mxu0 %v2695
      %v2831 = vpop.f32.mrf.mxu0
      %v2832 = vadd.f32 0.0, %v2831
      %v2833 = vpop.f32.mrf.mxu0
      %v2834 = vpop.f32.mrf.mxu0
      %v2835 = vadd.f32 0.0, %v2834
      %v2836 = vpop.f32.mrf.mxu0
      %2837 = vmatprep.mubr.bf16.mxu0 0
      %2838 = vmatmul.mubr.bf16.gmra.mxu0 %v2698
      %v2839 = vpop.f32.mrf.mxu0
      %v2840 = vadd.f32 0.0, %v2839
      %v2841 = vpop.f32.mrf.mxu0
      %v2842 = vpop.f32.mrf.mxu0
      %v2843 = vadd.f32 0.0, %v2842
      %v2844 = vpop.f32.mrf.mxu0
      %2845 = vmatprep.mubr.bf16.mxu0 0
      %2846 = vmatmul.mubr.bf16.gmra.mxu0 %v2701
      %v2847 = vpop.f32.mrf.mxu0
      %v2848 = vadd.f32 0.0, %v2847
      %v2849 = vpop.f32.mrf.mxu0
      %v2850 = vpop.f32.mrf.mxu0
      %v2851 = vadd.f32 0.0, %v2850
      %v2852 = vpop.f32.mrf.mxu0
      %2853 = vmatprep.mubr.bf16.mxu0 0
      %2854 = vmatmul.mubr.bf16.gmra.mxu0 %v2704
      %v2855 = vpop.f32.mrf.mxu0
      %v2856 = vadd.f32 0.0, %v2855
      %v2857 = vpop.f32.mrf.mxu0
      %v2858 = vpop.f32.mrf.mxu0
      %v2859 = vadd.f32 0.0, %v2858
      %v2860 = vpop.f32.mrf.mxu0
      %2861 = vmatprep.mubr.bf16.mxu0 0
      %2862 = vmatmul.mubr.bf16.gmra.mxu0 %v2707
      %v2863 = vpop.f32.mrf.mxu0
      %v2864 = vadd.f32 0.0, %v2863
      %v2865 = vpop.f32.mrf.mxu0
      %v2866 = vpop.f32.mrf.mxu0
      %v2867 = vadd.f32 0.0, %v2866
      %v2868 = vpop.f32.mrf.mxu0
      %2869 = vdwg.mxu0
      %v2870 = vadd.f32 %v2540, %v2744
      %v2871 = vadd.f32 %v2541, %v2747
      %v2872 = vadd.f32 %v2542, %v2752
      %v2873 = vadd.f32 %v2543, %v2755
      %v2874 = vadd.f32 %v2544, %v2760
      %v2875 = vadd.f32 %v2545, %v2763
      %v2876 = vadd.f32 %v2546, %v2768
      %v2877 = vadd.f32 %v2547, %v2771
      %v2878 = vadd.f32 %v2548, %v2776
      %v2879 = vadd.f32 %v2549, %v2779
      %v2880 = vadd.f32 %v2550, %v2784
      %v2881 = vadd.f32 %v2551, %v2787
      %v2882 = vadd.f32 %v2552, %v2792
      %v2883 = vadd.f32 %v2553, %v2795
      %v2884 = vadd.f32 %v2554, %v2800
      %v2885 = vadd.f32 %v2555, %v2803
      %v2886 = vadd.f32 %v2556, %v2808
      %v2887 = vadd.f32 %v2557, %v2811
      %v2888 = vadd.f32 %v2558, %v2816
      %v2889 = vadd.f32 %v2559, %v2819
      %v2890 = vadd.f32 %v2560, %v2824
      %v2891 = vadd.f32 %v2561, %v2827
      %v2892 = vadd.f32 %v2562, %v2832
      %v2893 = vadd.f32 %v2563, %v2835
      %v2894 = vadd.f32 %v2564, %v2840
      %v2895 = vadd.f32 %v2565, %v2843
      %v2896 = vadd.f32 %v2566, %v2848
      %v2897 = vadd.f32 %v2567, %v2851
      %v2898 = vadd.f32 %v2568, %v2856
      %v2899 = vadd.f32 %v2569, %v2859
      %v2900 = vadd.f32 %v2570, %v2864
      %v2901 = vadd.f32 %v2571, %v2867
      %s2902 = scalar_lea.vmem %s1, 288
      %v2903 = vld [vmem:[%s2902] sm:$0xf]
      %v2904 = vld [vmem:[%s2902 + $0x4] sm:$0xf]
      %v2905 = vld [vmem:[%s2902 + $0x8] sm:$0xf]
      %v2906 = vld [vmem:[%s2902 + $0xc] sm:$0xf]
      %v2907 = vld [vmem:[%s2902 + $0x10] sm:$0xf]
      %v2908 = vld [vmem:[%s2902 + $0x14] sm:$0xf]
      %v2909 = vld [vmem:[%s2902 + $0x18] sm:$0xf]
      %v2910 = vld [vmem:[%s2902 + $0x1c] sm:$0xf]
      %v2911 = vld [vmem:[%s2902 + $0x20] sm:$0xf]
      %v2912 = vld [vmem:[%s2902 + $0x24] sm:$0xf]
      %v2913 = vld [vmem:[%s2902 + $0x28] sm:$0xf]
      %v2914 = vld [vmem:[%s2902 + $0x2c] sm:$0xf]
      %v2919 = vunpack.c.l.b16 %v234
      %v2920 = vunpack.c.l.b16 %v254
      %v2921 = vunpack.c.l.b16 %v274
      %v2922 = vunpack.c.l.b16 %v294
      %v2923 = vpack.c.b16 %v2919, %v1909
      %v2924 = vpack.c.b16 %v2920, %v1910
      %v2925 = vpack.c.b16 %v2921, %v1911
      %v2926 = vpack.c.b16 %v2922, %v1912
      %v2939 = vunpack.c.l.b16 %v2903
      %v2940 = vunpack.c.l.b16 %v2904
      %v2941 = vunpack.c.l.b16 %v2905
      %v2942 = vunpack.c.l.b16 %v2906
      %v2943 = vunpack.c.l.b16 %v2907
      %v2944 = vunpack.c.l.b16 %v2908
      %v2945 = vunpack.c.l.b16 %v2909
      %v2946 = vunpack.c.l.b16 %v2910
      %v2947 = vunpack.c.l.b16 %v2911
      %v2948 = vunpack.c.l.b16 %v2912
      %v2949 = vunpack.c.l.b16 %v2913
      %v2950 = vunpack.c.l.b16 %v2914
      %v2951 = vpack.c.b16 %v2940, %v2939
      %v2952 = vpack.c.b16 %v2942, %v2941
      %v2953 = vpack.c.b16 %v2944, %v2943
      %v2954 = vpack.c.b16 %v2946, %v2945
      %v2955 = vpack.c.b16 %v2948, %v2947
      %v2956 = vpack.c.b16 %v2950, %v2949
      %v2964 = vsel %vm856, %v2923, 0
      %v2967 = vsel %vm856, %v2924, 0
      %v2970 = vsel %vm856, %v2925, 0
      %v2973 = vsel %vm856, %v2926, 0
      %2975 = vmatprep.subr.bf16.mxu0 0
      %2976 = vmatpush1.bf16.msra.mxu0 0
      %2977 = vmatprep.subr.bf16.mxu0 0
      %2978 = vmatpush1.bf16.msra.mxu0 0
      %2979 = vmatprep.subr.bf16.mxu0 0
      %2980 = vmatpush1.bf16.msra.mxu0 %v2956
      %2981 = vmatprep.subr.bf16.mxu0 0
      %2982 = vmatpush1.bf16.msra.mxu0 %v2955
      %2983 = vmatprep.subr.bf16.mxu0 0
      %2984 = vmatpush1.bf16.msra.mxu0 %v2954
      %2985 = vmatprep.subr.bf16.mxu0 0
      %2986 = vmatpush1.bf16.msra.mxu0 %v2953
      %2987 = vmatprep.subr.bf16.mxu0 0
      %2988 = vmatpush1.bf16.msra.mxu0 %v2952
      %2989 = vmatprep.subr.bf16.mxu0 0
      %2990 = vmatpush1.bf16.msra.mxu0 %v2951
      %2991 = vmatprep.subr.bf16.mxu0 0
      %2992 = vmatpush2.bf16.msra.mxu0 0
      %2993 = vmatprep.subr.bf16.mxu0 0
      %2994 = vmatpush2.bf16.msra.mxu0 0
      %2995 = vmatprep.subr.bf16.mxu0 0
      %2996 = vmatpush2.bf16.msra.mxu0 0
      %2997 = vmatprep.subr.bf16.mxu0 0
      %2998 = vmatpush2.bf16.msra.mxu0 0
      %2999 = vmatprep.subr.bf16.mxu0 0
      %3000 = vmatpush2.bf16.msra.mxu0 0
      %3001 = vmatprep.subr.bf16.mxu0 0
      %3002 = vmatpush2.bf16.msra.mxu0 0
      %3003 = vmatprep.subr.bf16.mxu0 0
      %3004 = vmatpush2.bf16.msra.mxu0 0
      %3005 = vmatprep.subr.bf16.mxu0 0
      %3006 = vmatpush2.bf16.msra.mxu0 0
      %3007 = vmatprep.mubr.bf16.mxu0 0
      %3008 = vmatmul.mubr.bf16.gmra.mxu0 %v1186
      %v3009 = vpop.f32.mrf.mxu0
      %v3010 = vadd.f32 0.0, %v3009
      %v3011 = vpop.f32.mrf.mxu0
      %v3012 = vpop.f32.mrf.mxu0
      %v3013 = vadd.f32 0.0, %v3012
      %v3014 = vpop.f32.mrf.mxu0
      %3015 = vmatprep.mubr.bf16.mxu0 0
      %3016 = vmatmul.mubr.bf16.gmra.mxu0 %v1189
      %v3017 = vpop.f32.mrf.mxu0
      %v3018 = vadd.f32 0.0, %v3017
      %v3019 = vpop.f32.mrf.mxu0
      %v3020 = vpop.f32.mrf.mxu0
      %v3021 = vadd.f32 0.0, %v3020
      %v3022 = vpop.f32.mrf.mxu0
      %3023 = vmatprep.mubr.bf16.mxu0 0
      %3024 = vmatmul.mubr.bf16.gmra.mxu0 %v1192
      %v3025 = vpop.f32.mrf.mxu0
      %v3026 = vadd.f32 0.0, %v3025
      %v3027 = vpop.f32.mrf.mxu0
      %v3028 = vpop.f32.mrf.mxu0
      %v3029 = vadd.f32 0.0, %v3028
      %v3030 = vpop.f32.mrf.mxu0
      %3031 = vmatprep.mubr.bf16.mxu0 0
      %3032 = vmatmul.mubr.bf16.gmra.mxu0 %v2964
      %v3033 = vpop.f32.mrf.mxu0
      %v3034 = vadd.f32 0.0, %v3033
      %v3035 = vpop.f32.mrf.mxu0
      %v3036 = vpop.f32.mrf.mxu0
      %v3037 = vadd.f32 0.0, %v3036
      %v3038 = vpop.f32.mrf.mxu0
      %3039 = vmatprep.mubr.bf16.mxu0 0
      %3040 = vmatmul.mubr.bf16.gmra.mxu0 %v1198
      %v3041 = vpop.f32.mrf.mxu0
      %v3042 = vadd.f32 0.0, %v3041
      %v3043 = vpop.f32.mrf.mxu0
      %v3044 = vpop.f32.mrf.mxu0
      %v3045 = vadd.f32 0.0, %v3044
      %v3046 = vpop.f32.mrf.mxu0
      %3047 = vmatprep.mubr.bf16.mxu0 0
      %3048 = vmatmul.mubr.bf16.gmra.mxu0 %v1201
      %v3049 = vpop.f32.mrf.mxu0
      %v3050 = vadd.f32 0.0, %v3049
      %v3051 = vpop.f32.mrf.mxu0
      %v3052 = vpop.f32.mrf.mxu0
      %v3053 = vadd.f32 0.0, %v3052
      %v3054 = vpop.f32.mrf.mxu0
      %3055 = vmatprep.mubr.bf16.mxu0 0
      %3056 = vmatmul.mubr.bf16.gmra.mxu0 %v1204
      %v3057 = vpop.f32.mrf.mxu0
      %v3058 = vadd.f32 0.0, %v3057
      %v3059 = vpop.f32.mrf.mxu0
      %v3060 = vpop.f32.mrf.mxu0
      %v3061 = vadd.f32 0.0, %v3060
      %v3062 = vpop.f32.mrf.mxu0
      %3063 = vmatprep.mubr.bf16.mxu0 0
      %3064 = vmatmul.mubr.bf16.gmra.mxu0 %v2967
      %v3065 = vpop.f32.mrf.mxu0
      %v3066 = vadd.f32 0.0, %v3065
      %v3067 = vpop.f32.mrf.mxu0
      %v3068 = vpop.f32.mrf.mxu0
      %v3069 = vadd.f32 0.0, %v3068
      %v3070 = vpop.f32.mrf.mxu0
      %3071 = vmatprep.mubr.bf16.mxu0 0
      %3072 = vmatmul.mubr.bf16.gmra.mxu0 %v1210
      %v3073 = vpop.f32.mrf.mxu0
      %v3074 = vadd.f32 0.0, %v3073
      %v3075 = vpop.f32.mrf.mxu0
      %v3076 = vpop.f32.mrf.mxu0
      %v3077 = vadd.f32 0.0, %v3076
      %v3078 = vpop.f32.mrf.mxu0
      %3079 = vmatprep.mubr.bf16.mxu0 0
      %3080 = vmatmul.mubr.bf16.gmra.mxu0 %v1213
      %v3081 = vpop.f32.mrf.mxu0
      %v3082 = vadd.f32 0.0, %v3081
      %v3083 = vpop.f32.mrf.mxu0
      %v3084 = vpop.f32.mrf.mxu0
      %v3085 = vadd.f32 0.0, %v3084
      %v3086 = vpop.f32.mrf.mxu0
      %3087 = vmatprep.mubr.bf16.mxu0 0
      %3088 = vmatmul.mubr.bf16.gmra.mxu0 %v1216
      %v3089 = vpop.f32.mrf.mxu0
      %v3090 = vadd.f32 0.0, %v3089
      %v3091 = vpop.f32.mrf.mxu0
      %v3092 = vpop.f32.mrf.mxu0
      %v3093 = vadd.f32 0.0, %v3092
      %v3094 = vpop.f32.mrf.mxu0
      %3095 = vmatprep.mubr.bf16.mxu0 0
      %3096 = vmatmul.mubr.bf16.gmra.mxu0 %v2970
      %v3097 = vpop.f32.mrf.mxu0
      %v3098 = vadd.f32 0.0, %v3097
      %v3099 = vpop.f32.mrf.mxu0
      %v3100 = vpop.f32.mrf.mxu0
      %v3101 = vadd.f32 0.0, %v3100
      %v3102 = vpop.f32.mrf.mxu0
      %3103 = vmatprep.mubr.bf16.mxu0 0
      %3104 = vmatmul.mubr.bf16.gmra.mxu0 %v1222
      %v3105 = vpop.f32.mrf.mxu0
      %v3106 = vadd.f32 0.0, %v3105
      %v3107 = vpop.f32.mrf.mxu0
      %v3108 = vpop.f32.mrf.mxu0
      %v3109 = vadd.f32 0.0, %v3108
      %v3110 = vpop.f32.mrf.mxu0
      %3111 = vmatprep.mubr.bf16.mxu0 0
      %3112 = vmatmul.mubr.bf16.gmra.mxu0 %v1225
      %v3113 = vpop.f32.mrf.mxu0
      %v3114 = vadd.f32 0.0, %v3113
      %v3115 = vpop.f32.mrf.mxu0
      %v3116 = vpop.f32.mrf.mxu0
      %v3117 = vadd.f32 0.0, %v3116
      %v3118 = vpop.f32.mrf.mxu0
      %3119 = vmatprep.mubr.bf16.mxu0 0
      %3120 = vmatmul.mubr.bf16.gmra.mxu0 %v1228
      %v3121 = vpop.f32.mrf.mxu0
      %v3122 = vadd.f32 0.0, %v3121
      %v3123 = vpop.f32.mrf.mxu0
      %v3124 = vpop.f32.mrf.mxu0
      %v3125 = vadd.f32 0.0, %v3124
      %v3126 = vpop.f32.mrf.mxu0
      %3127 = vmatprep.mubr.bf16.mxu0 0
      %3128 = vmatmul.mubr.bf16.gmra.mxu0 %v2973
      %v3129 = vpop.f32.mrf.mxu0
      %v3130 = vadd.f32 0.0, %v3129
      %v3131 = vpop.f32.mrf.mxu0
      %v3132 = vpop.f32.mrf.mxu0
      %v3133 = vadd.f32 0.0, %v3132
      %v3134 = vpop.f32.mrf.mxu0
      %3135 = vdwg.mxu0
      %v3136 = vadd.f32 %v2870, %v3010
      %v3137 = vadd.f32 %v2871, %v3013
      %v3138 = vadd.f32 %v2872, %v3018
      %v3139 = vadd.f32 %v2873, %v3021
      %v3140 = vadd.f32 %v2874, %v3026
      %v3141 = vadd.f32 %v2875, %v3029
      %v3142 = vadd.f32 %v2876, %v3034
      %v3143 = vadd.f32 %v2877, %v3037
      %v3144 = vadd.f32 %v2878, %v3042
      %v3145 = vadd.f32 %v2879, %v3045
      %v3146 = vadd.f32 %v2880, %v3050
      %v3147 = vadd.f32 %v2881, %v3053
      %v3148 = vadd.f32 %v2882, %v3058
      %v3149 = vadd.f32 %v2883, %v3061
      %v3150 = vadd.f32 %v2884, %v3066
      %v3151 = vadd.f32 %v2885, %v3069
      %v3152 = vadd.f32 %v2886, %v3074
      %v3153 = vadd.f32 %v2887, %v3077
      %v3154 = vadd.f32 %v2888, %v3082
      %v3155 = vadd.f32 %v2889, %v3085
      %v3156 = vadd.f32 %v2890, %v3090
      %v3157 = vadd.f32 %v2891, %v3093
      %v3158 = vadd.f32 %v2892, %v3098
      %v3159 = vadd.f32 %v2893, %v3101
      %v3160 = vadd.f32 %v2894, %v3106
      %v3161 = vadd.f32 %v2895, %v3109
      %v3162 = vadd.f32 %v2896, %v3114
      %v3163 = vadd.f32 %v2897, %v3117
      %v3164 = vadd.f32 %v2898, %v3122
      %v3165 = vadd.f32 %v2899, %v3125
      %v3166 = vadd.f32 %v2900, %v3130
      %v3167 = vadd.f32 %v2901, %v3133
      %v3169 = vshrl.u32 %v234, 16
      %v3171 = vrot.slane %v3169, 4
      %v3172 = vshll.u32 %v234, 16
      %v3174 = vrot.slane %v3172, 5
      %v3175 = vor.u32 %v3171, %v3174
      %v3176 = vrot.slane %v3175, 4
      %v3178 = vshll.u32 %v235, 16
      %v3180 = vrot.slane %v3178, 5
      %v3181 = vsel %vm310, %v3176, %v3180
      %v3183 = vshrl.u32 %v254, 16
      %v3185 = vrot.slane %v3183, 4
      %v3186 = vshll.u32 %v254, 16
      %v3188 = vrot.slane %v3186, 5
      %v3189 = vor.u32 %v3185, %v3188
      %v3190 = vrot.slane %v3189, 4
      %v3192 = vshll.u32 %v255, 16
      %v3194 = vrot.slane %v3192, 5
      %v3195 = vsel %vm310, %v3190, %v3194
      %v3197 = vshrl.u32 %v274, 16
      %v3199 = vrot.slane %v3197, 4
      %v3200 = vshll.u32 %v274, 16
      %v3202 = vrot.slane %v3200, 5
      %v3203 = vor.u32 %v3199, %v3202
      %v3204 = vrot.slane %v3203, 4
      %v3206 = vshll.u32 %v275, 16
      %v3208 = vrot.slane %v3206, 5
      %v3209 = vsel %vm310, %v3204, %v3208
      %v3211 = vshrl.u32 %v294, 16
      %v3213 = vrot.slane %v3211, 4
      %v3214 = vshll.u32 %v294, 16
      %v3216 = vrot.slane %v3214, 5
      %v3217 = vor.u32 %v3213, %v3216
      %v3218 = vrot.slane %v3217, 4
      %v3220 = vshll.u32 %v295, 16
      %v3222 = vrot.slane %v3220, 5
      %v3223 = vsel %vm310, %v3218, %v3222
      %s3224 = scalar_lea.vmem %s1, 336
      %v3225 = vld [vmem:[%s3224] sm:$0xf]
      %v3226 = vld [vmem:[%s3224 + $0x4] sm:$0xf]
      %v3227 = vld [vmem:[%s3224 + $0x8] sm:$0xf]
      %v3228 = vld [vmem:[%s3224 + $0xc] sm:$0xf]
      %v3229 = vld [vmem:[%s3224 + $0x10] sm:$0xf]
      %v3230 = vld [vmem:[%s3224 + $0x14] sm:$0xf]
      %v3231 = vld [vmem:[%s3224 + $0x18] sm:$0xf]
      %v3232 = vld [vmem:[%s3224 + $0x1c] sm:$0xf]
      %v3233 = vld [vmem:[%s3224 + $0x20] sm:$0xf]
      %v3234 = vld [vmem:[%s3224 + $0x24] sm:$0xf]
      %v3235 = vld [vmem:[%s3224 + $0x28] sm:$0xf]
      %v3236 = vld [vmem:[%s3224 + $0x2c] sm:$0xf]
      %v3237 = vunpack.c.l.b16 %v3181
      %v3238 = vunpack.c.l.b16 %v3195
      %v3239 = vunpack.c.l.b16 %v3209
      %v3240 = vunpack.c.l.b16 %v3223
      %v3241 = vpack.c.b16 %v3237, %v2275
      %v3242 = vpack.c.b16 %v3238, %v2276
      %v3243 = vpack.c.b16 %v3239, %v2277
      %v3244 = vpack.c.b16 %v3240, %v2278
      %v3257 = vunpack.c.l.b16 %v3225
      %v3258 = vunpack.c.l.b16 %v3226
      %v3259 = vunpack.c.l.b16 %v3227
      %v3260 = vunpack.c.l.b16 %v3228
      %v3261 = vunpack.c.l.b16 %v3229
      %v3262 = vunpack.c.l.b16 %v3230
      %v3263 = vunpack.c.l.b16 %v3231
      %v3264 = vunpack.c.l.b16 %v3232
      %v3265 = vunpack.c.l.b16 %v3233
      %v3266 = vunpack.c.l.b16 %v3234
      %v3267 = vunpack.c.l.b16 %v3235
      %v3268 = vunpack.c.l.b16 %v3236
      %v3269 = vpack.c.b16 %v3258, %v3257
      %v3270 = vpack.c.b16 %v3260, %v3259
      %v3271 = vpack.c.b16 %v3262, %v3261
      %v3272 = vpack.c.b16 %v3264, %v3263
      %v3273 = vpack.c.b16 %v3266, %v3265
      %v3274 = vpack.c.b16 %v3268, %v3267
      %v3282 = vsel %vm856, %v3241, 0
      %v3285 = vsel %vm856, %v3242, 0
      %v3288 = vsel %vm856, %v3243, 0
      %v3291 = vsel %vm856, %v3244, 0
      %3293 = vmatprep.subr.bf16.mxu0 0
      %3294 = vmatpush1.bf16.msra.mxu0 0
      %3295 = vmatprep.subr.bf16.mxu0 0
      %3296 = vmatpush1.bf16.msra.mxu0 0
      %3297 = vmatprep.subr.bf16.mxu0 0
      %3298 = vmatpush1.bf16.msra.mxu0 %v3274
      %3299 = vmatprep.subr.bf16.mxu0 0
      %3300 = vmatpush1.bf16.msra.mxu0 %v3273
      %3301 = vmatprep.subr.bf16.mxu0 0
      %3302 = vmatpush1.bf16.msra.mxu0 %v3272
      %3303 = vmatprep.subr.bf16.mxu0 0
      %3304 = vmatpush1.bf16.msra.mxu0 %v3271
      %3305 = vmatprep.subr.bf16.mxu0 0
      %3306 = vmatpush1.bf16.msra.mxu0 %v3270
      %3307 = vmatprep.subr.bf16.mxu0 0
      %3308 = vmatpush1.bf16.msra.mxu0 %v3269
      %3309 = vmatprep.subr.bf16.mxu0 0
      %3310 = vmatpush2.bf16.msra.mxu0 0
      %3311 = vmatprep.subr.bf16.mxu0 0
      %3312 = vmatpush2.bf16.msra.mxu0 0
      %3313 = vmatprep.subr.bf16.mxu0 0
      %3314 = vmatpush2.bf16.msra.mxu0 0
      %3315 = vmatprep.subr.bf16.mxu0 0
      %3316 = vmatpush2.bf16.msra.mxu0 0
      %3317 = vmatprep.subr.bf16.mxu0 0
      %3318 = vmatpush2.bf16.msra.mxu0 0
      %3319 = vmatprep.subr.bf16.mxu0 0
      %3320 = vmatpush2.bf16.msra.mxu0 0
      %3321 = vmatprep.subr.bf16.mxu0 0
      %3322 = vmatpush2.bf16.msra.mxu0 0
      %3323 = vmatprep.subr.bf16.mxu0 0
      %3324 = vmatpush2.bf16.msra.mxu0 0
      %3325 = vmatprep.mubr.bf16.mxu0 0
      %3326 = vmatmul.mubr.bf16.gmra.mxu0 %v861
      %v3327 = vpop.f32.mrf.mxu0
      %v3328 = vadd.f32 0.0, %v3327
      %v3329 = vpop.f32.mrf.mxu0
      %v3330 = vpop.f32.mrf.mxu0
      %v3331 = vadd.f32 0.0, %v3330
      %v3332 = vpop.f32.mrf.mxu0
      %3333 = vmatprep.mubr.bf16.mxu0 0
      %3334 = vmatmul.mubr.bf16.gmra.mxu0 %v864
      %v3335 = vpop.f32.mrf.mxu0
      %v3336 = vadd.f32 0.0, %v3335
      %v3337 = vpop.f32.mrf.mxu0
      %v3338 = vpop.f32.mrf.mxu0
      %v3339 = vadd.f32 0.0, %v3338
      %v3340 = vpop.f32.mrf.mxu0
      %3341 = vmatprep.mubr.bf16.mxu0 0
      %3342 = vmatmul.mubr.bf16.gmra.mxu0 %v867
      %v3343 = vpop.f32.mrf.mxu0
      %v3344 = vadd.f32 0.0, %v3343
      %v3345 = vpop.f32.mrf.mxu0
      %v3346 = vpop.f32.mrf.mxu0
      %v3347 = vadd.f32 0.0, %v3346
      %v3348 = vpop.f32.mrf.mxu0
      %3349 = vmatprep.mubr.bf16.mxu0 0
      %3350 = vmatmul.mubr.bf16.gmra.mxu0 %v3282
      %v3351 = vpop.f32.mrf.mxu0
      %v3352 = vadd.f32 0.0, %v3351
      %v3353 = vpop.f32.mrf.mxu0
      %v3354 = vpop.f32.mrf.mxu0
      %v3355 = vadd.f32 0.0, %v3354
      %v3356 = vpop.f32.mrf.mxu0
      %3357 = vmatprep.mubr.bf16.mxu0 0
      %3358 = vmatmul.mubr.bf16.gmra.mxu0 %v873
      %v3359 = vpop.f32.mrf.mxu0
      %v3360 = vadd.f32 0.0, %v3359
      %v3361 = vpop.f32.mrf.mxu0
      %v3362 = vpop.f32.mrf.mxu0
      %v3363 = vadd.f32 0.0, %v3362
      %v3364 = vpop.f32.mrf.mxu0
      %3365 = vmatprep.mubr.bf16.mxu0 0
      %3366 = vmatmul.mubr.bf16.gmra.mxu0 %v876
      %v3367 = vpop.f32.mrf.mxu0
      %v3368 = vadd.f32 0.0, %v3367
      %v3369 = vpop.f32.mrf.mxu0
      %v3370 = vpop.f32.mrf.mxu0
      %v3371 = vadd.f32 0.0, %v3370
      %v3372 = vpop.f32.mrf.mxu0
      %3373 = vmatprep.mubr.bf16.mxu0 0
      %3374 = vmatmul.mubr.bf16.gmra.mxu0 %v879
      %v3375 = vpop.f32.mrf.mxu0
      %v3376 = vadd.f32 0.0, %v3375
      %v3377 = vpop.f32.mrf.mxu0
      %v3378 = vpop.f32.mrf.mxu0
      %v3379 = vadd.f32 0.0, %v3378
      %v3380 = vpop.f32.mrf.mxu0
      %3381 = vmatprep.mubr.bf16.mxu0 0
      %3382 = vmatmul.mubr.bf16.gmra.mxu0 %v3285
      %v3383 = vpop.f32.mrf.mxu0
      %v3384 = vadd.f32 0.0, %v3383
      %v3385 = vpop.f32.mrf.mxu0
      %v3386 = vpop.f32.mrf.mxu0
      %v3387 = vadd.f32 0.0, %v3386
      %v3388 = vpop.f32.mrf.mxu0
      %3389 = vmatprep.mubr.bf16.mxu0 0
      %3390 = vmatmul.mubr.bf16.gmra.mxu0 %v885
      %v3391 = vpop.f32.mrf.mxu0
      %v3392 = vadd.f32 0.0, %v3391
      %v3393 = vpop.f32.mrf.mxu0
      %v3394 = vpop.f32.mrf.mxu0
      %v3395 = vadd.f32 0.0, %v3394
      %v3396 = vpop.f32.mrf.mxu0
      %3397 = vmatprep.mubr.bf16.mxu0 0
      %3398 = vmatmul.mubr.bf16.gmra.mxu0 %v888
      %v3399 = vpop.f32.mrf.mxu0
      %v3400 = vadd.f32 0.0, %v3399
      %v3401 = vpop.f32.mrf.mxu0
      %v3402 = vpop.f32.mrf.mxu0
      %v3403 = vadd.f32 0.0, %v3402
      %v3404 = vpop.f32.mrf.mxu0
      %3405 = vmatprep.mubr.bf16.mxu0 0
      %3406 = vmatmul.mubr.bf16.gmra.mxu0 %v891
      %v3407 = vpop.f32.mrf.mxu0
      %v3408 = vadd.f32 0.0, %v3407
      %v3409 = vpop.f32.mrf.mxu0
      %v3410 = vpop.f32.mrf.mxu0
      %v3411 = vadd.f32 0.0, %v3410
      %v3412 = vpop.f32.mrf.mxu0
      %3413 = vmatprep.mubr.bf16.mxu0 0
      %3414 = vmatmul.mubr.bf16.gmra.mxu0 %v3288
      %v3415 = vpop.f32.mrf.mxu0
      %v3416 = vadd.f32 0.0, %v3415
      %v3417 = vpop.f32.mrf.mxu0
      %v3418 = vpop.f32.mrf.mxu0
      %v3419 = vadd.f32 0.0, %v3418
      %v3420 = vpop.f32.mrf.mxu0
      %3421 = vmatprep.mubr.bf16.mxu0 0
      %3422 = vmatmul.mubr.bf16.gmra.mxu0 %v897
      %v3423 = vpop.f32.mrf.mxu0
      %v3424 = vadd.f32 0.0, %v3423
      %v3425 = vpop.f32.mrf.mxu0
      %v3426 = vpop.f32.mrf.mxu0
      %v3427 = vadd.f32 0.0, %v3426
      %v3428 = vpop.f32.mrf.mxu0
      %3429 = vmatprep.mubr.bf16.mxu0 0
      %3430 = vmatmul.mubr.bf16.gmra.mxu0 %v900
      %v3431 = vpop.f32.mrf.mxu0
      %v3432 = vadd.f32 0.0, %v3431
      %v3433 = vpop.f32.mrf.mxu0
      %v3434 = vpop.f32.mrf.mxu0
      %v3435 = vadd.f32 0.0, %v3434
      %v3436 = vpop.f32.mrf.mxu0
      %3437 = vmatprep.mubr.bf16.mxu0 0
      %3438 = vmatmul.mubr.bf16.gmra.mxu0 %v903
      %v3439 = vpop.f32.mrf.mxu0
      %v3440 = vadd.f32 0.0, %v3439
      %v3441 = vpop.f32.mrf.mxu0
      %v3442 = vpop.f32.mrf.mxu0
      %v3443 = vadd.f32 0.0, %v3442
      %v3444 = vpop.f32.mrf.mxu0
      %3445 = vmatprep.mubr.bf16.mxu0 0
      %3446 = vmatmul.mubr.bf16.gmra.mxu0 %v3291
      %v3447 = vpop.f32.mrf.mxu0
      %v3448 = vadd.f32 0.0, %v3447
      %v3449 = vpop.f32.mrf.mxu0
      %v3450 = vpop.f32.mrf.mxu0
      %v3451 = vadd.f32 0.0, %v3450
      %v3452 = vpop.f32.mrf.mxu0
      %3453 = vdwg.mxu0
      %v3454 = vadd.f32 %v3136, %v3328
      %v3455 = vadd.f32 %v3137, %v3331
      %v3456 = vadd.f32 %v3138, %v3336
      %v3457 = vadd.f32 %v3139, %v3339
      %v3458 = vadd.f32 %v3140, %v3344
      %v3459 = vadd.f32 %v3141, %v3347
      %v3460 = vadd.f32 %v3142, %v3352
      %v3461 = vadd.f32 %v3143, %v3355
      %v3462 = vadd.f32 %v3144, %v3360
      %v3463 = vadd.f32 %v3145, %v3363
      %v3464 = vadd.f32 %v3146, %v3368
      %v3465 = vadd.f32 %v3147, %v3371
      %v3466 = vadd.f32 %v3148, %v3376
      %v3467 = vadd.f32 %v3149, %v3379
      %v3468 = vadd.f32 %v3150, %v3384
      %v3469 = vadd.f32 %v3151, %v3387
      %v3470 = vadd.f32 %v3152, %v3392
      %v3471 = vadd.f32 %v3153, %v3395
      %v3472 = vadd.f32 %v3154, %v3400
      %v3473 = vadd.f32 %v3155, %v3403
      %v3474 = vadd.f32 %v3156, %v3408
      %v3475 = vadd.f32 %v3157, %v3411
      %v3476 = vadd.f32 %v3158, %v3416
      %v3477 = vadd.f32 %v3159, %v3419
      %v3478 = vadd.f32 %v3160, %v3424
      %v3479 = vadd.f32 %v3161, %v3427
      %v3480 = vadd.f32 %v3162, %v3432
      %v3481 = vadd.f32 %v3163, %v3435
      %v3482 = vadd.f32 %v3164, %v3440
      %v3483 = vadd.f32 %v3165, %v3443
      %v3484 = vadd.f32 %v3166, %v3448
      %v3485 = vadd.f32 %v3167, %v3451
      %v3490 = vrot.slane %v234, 5
      %v3491 = vrot.slane %v3490, 4
      %v3492 = vrot.slane %v235, 5
      %v3493 = vsel %vm1425, %v3491, %v3492
      %v3494 = vrot.slane %v254, 5
      %v3495 = vrot.slane %v3494, 4
      %v3496 = vrot.slane %v255, 5
      %v3497 = vsel %vm1425, %v3495, %v3496
      %v3498 = vrot.slane %v274, 5
      %v3499 = vrot.slane %v3498, 4
      %v3500 = vrot.slane %v275, 5
      %v3501 = vsel %vm1425, %v3499, %v3500
      %v3502 = vrot.slane %v294, 5
      %v3503 = vrot.slane %v3502, 4
      %v3504 = vrot.slane %v295, 5
      %v3505 = vsel %vm1425, %v3503, %v3504
      %s3506 = scalar_lea.vmem %s1, 384
      %v3507 = vld [vmem:[%s3506] sm:$0xf]
      %v3508 = vld [vmem:[%s3506 + $0x4] sm:$0xf]
      %v3509 = vld [vmem:[%s3506 + $0x8] sm:$0xf]
      %v3510 = vld [vmem:[%s3506 + $0xc] sm:$0xf]
      %v3511 = vld [vmem:[%s3506 + $0x10] sm:$0xf]
      %v3512 = vld [vmem:[%s3506 + $0x14] sm:$0xf]
      %v3513 = vld [vmem:[%s3506 + $0x18] sm:$0xf]
      %v3514 = vld [vmem:[%s3506 + $0x1c] sm:$0xf]
      %v3515 = vld [vmem:[%s3506 + $0x20] sm:$0xf]
      %v3516 = vld [vmem:[%s3506 + $0x24] sm:$0xf]
      %v3517 = vld [vmem:[%s3506 + $0x28] sm:$0xf]
      %v3518 = vld [vmem:[%s3506 + $0x2c] sm:$0xf]
      %v3519 = vunpack.c.l.b16 %v3493
      %v3520 = vunpack.c.l.b16 %v3497
      %v3521 = vunpack.c.l.b16 %v3501
      %v3522 = vunpack.c.l.b16 %v3505
      %v3523 = vpack.c.b16 %v3519, %v2605
      %v3524 = vpack.c.b16 %v3520, %v2606
      %v3525 = vpack.c.b16 %v3521, %v2607
      %v3526 = vpack.c.b16 %v3522, %v2608
      %v3539 = vunpack.c.l.b16 %v3507
      %v3540 = vunpack.c.l.b16 %v3508
      %v3541 = vunpack.c.l.b16 %v3509
      %v3542 = vunpack.c.l.b16 %v3510
      %v3543 = vunpack.c.l.b16 %v3511
      %v3544 = vunpack.c.l.b16 %v3512
      %v3545 = vunpack.c.l.b16 %v3513
      %v3546 = vunpack.c.l.b16 %v3514
      %v3547 = vunpack.c.l.b16 %v3515
      %v3548 = vunpack.c.l.b16 %v3516
      %v3549 = vunpack.c.l.b16 %v3517
      %v3550 = vunpack.c.l.b16 %v3518
      %v3551 = vpack.c.b16 %v3540, %v3539
      %v3552 = vpack.c.b16 %v3542, %v3541
      %v3553 = vpack.c.b16 %v3544, %v3543
      %v3554 = vpack.c.b16 %v3546, %v3545
      %v3555 = vpack.c.b16 %v3548, %v3547
      %v3556 = vpack.c.b16 %v3550, %v3549
      %v3564 = vsel %vm856, %v3523, 0
      %v3567 = vsel %vm856, %v3524, 0
      %v3570 = vsel %vm856, %v3525, 0
      %v3573 = vsel %vm856, %v3526, 0
      %3575 = vmatprep.subr.bf16.mxu0 0
      %3576 = vmatpush1.bf16.msra.mxu0 0
      %3577 = vmatprep.subr.bf16.mxu0 0
      %3578 = vmatpush1.bf16.msra.mxu0 0
      %3579 = vmatprep.subr.bf16.mxu0 0
      %3580 = vmatpush1.bf16.msra.mxu0 %v3556
      %3581 = vmatprep.subr.bf16.mxu0 0
      %3582 = vmatpush1.bf16.msra.mxu0 %v3555
      %3583 = vmatprep.subr.bf16.mxu0 0
      %3584 = vmatpush1.bf16.msra.mxu0 %v3554
      %3585 = vmatprep.subr.bf16.mxu0 0
      %3586 = vmatpush1.bf16.msra.mxu0 %v3553
      %3587 = vmatprep.subr.bf16.mxu0 0
      %3588 = vmatpush1.bf16.msra.mxu0 %v3552
      %3589 = vmatprep.subr.bf16.mxu0 0
      %3590 = vmatpush1.bf16.msra.mxu0 %v3551
      %3591 = vmatprep.subr.bf16.mxu0 0
      %3592 = vmatpush2.bf16.msra.mxu0 0
      %3593 = vmatprep.subr.bf16.mxu0 0
      %3594 = vmatpush2.bf16.msra.mxu0 0
      %3595 = vmatprep.subr.bf16.mxu0 0
      %3596 = vmatpush2.bf16.msra.mxu0 0
      %3597 = vmatprep.subr.bf16.mxu0 0
      %3598 = vmatpush2.bf16.msra.mxu0 0
      %3599 = vmatprep.subr.bf16.mxu0 0
      %3600 = vmatpush2.bf16.msra.mxu0 0
      %3601 = vmatprep.subr.bf16.mxu0 0
      %3602 = vmatpush2.bf16.msra.mxu0 0
      %3603 = vmatprep.subr.bf16.mxu0 0
      %3604 = vmatpush2.bf16.msra.mxu0 0
      %3605 = vmatprep.subr.bf16.mxu0 0
      %3606 = vmatpush2.bf16.msra.mxu0 0
      %3607 = vmatprep.mubr.bf16.mxu0 0
      %3608 = vmatmul.mubr.bf16.gmra.mxu0 %v1655
      %v3609 = vpop.f32.mrf.mxu0
      %v3610 = vadd.f32 0.0, %v3609
      %v3611 = vpop.f32.mrf.mxu0
      %v3612 = vpop.f32.mrf.mxu0
      %v3613 = vadd.f32 0.0, %v3612
      %v3614 = vpop.f32.mrf.mxu0
      %3615 = vmatprep.mubr.bf16.mxu0 0
      %3616 = vmatmul.mubr.bf16.gmra.mxu0 %v1658
      %v3617 = vpop.f32.mrf.mxu0
      %v3618 = vadd.f32 0.0, %v3617
      %v3619 = vpop.f32.mrf.mxu0
      %v3620 = vpop.f32.mrf.mxu0
      %v3621 = vadd.f32 0.0, %v3620
      %v3622 = vpop.f32.mrf.mxu0
      %3623 = vmatprep.mubr.bf16.mxu0 0
      %3624 = vmatmul.mubr.bf16.gmra.mxu0 %v1661
      %v3625 = vpop.f32.mrf.mxu0
      %v3626 = vadd.f32 0.0, %v3625
      %v3627 = vpop.f32.mrf.mxu0
      %v3628 = vpop.f32.mrf.mxu0
      %v3629 = vadd.f32 0.0, %v3628
      %v3630 = vpop.f32.mrf.mxu0
      %3631 = vmatprep.mubr.bf16.mxu0 0
      %3632 = vmatmul.mubr.bf16.gmra.mxu0 %v3564
      %v3633 = vpop.f32.mrf.mxu0
      %v3634 = vadd.f32 0.0, %v3633
      %v3635 = vpop.f32.mrf.mxu0
      %v3636 = vpop.f32.mrf.mxu0
      %v3637 = vadd.f32 0.0, %v3636
      %v3638 = vpop.f32.mrf.mxu0
      %3639 = vmatprep.mubr.bf16.mxu0 0
      %3640 = vmatmul.mubr.bf16.gmra.mxu0 %v1667
      %v3641 = vpop.f32.mrf.mxu0
      %v3642 = vadd.f32 0.0, %v3641
      %v3643 = vpop.f32.mrf.mxu0
      %v3644 = vpop.f32.mrf.mxu0
      %v3645 = vadd.f32 0.0, %v3644
      %v3646 = vpop.f32.mrf.mxu0
      %3647 = vmatprep.mubr.bf16.mxu0 0
      %3648 = vmatmul.mubr.bf16.gmra.mxu0 %v1670
      %v3649 = vpop.f32.mrf.mxu0
      %v3650 = vadd.f32 0.0, %v3649
      %v3651 = vpop.f32.mrf.mxu0
      %v3652 = vpop.f32.mrf.mxu0
      %v3653 = vadd.f32 0.0, %v3652
      %v3654 = vpop.f32.mrf.mxu0
      %3655 = vmatprep.mubr.bf16.mxu0 0
      %3656 = vmatmul.mubr.bf16.gmra.mxu0 %v1673
      %v3657 = vpop.f32.mrf.mxu0
      %v3658 = vadd.f32 0.0, %v3657
      %v3659 = vpop.f32.mrf.mxu0
      %v3660 = vpop.f32.mrf.mxu0
      %v3661 = vadd.f32 0.0, %v3660
      %v3662 = vpop.f32.mrf.mxu0
      %3663 = vmatprep.mubr.bf16.mxu0 0
      %3664 = vmatmul.mubr.bf16.gmra.mxu0 %v3567
      %v3665 = vpop.f32.mrf.mxu0
      %v3666 = vadd.f32 0.0, %v3665
      %v3667 = vpop.f32.mrf.mxu0
      %v3668 = vpop.f32.mrf.mxu0
      %v3669 = vadd.f32 0.0, %v3668
      %v3670 = vpop.f32.mrf.mxu0
      %3671 = vmatprep.mubr.bf16.mxu0 0
      %3672 = vmatmul.mubr.bf16.gmra.mxu0 %v1679
      %v3673 = vpop.f32.mrf.mxu0
      %v3674 = vadd.f32 0.0, %v3673
      %v3675 = vpop.f32.mrf.mxu0
      %v3676 = vpop.f32.mrf.mxu0
      %v3677 = vadd.f32 0.0, %v3676
      %v3678 = vpop.f32.mrf.mxu0
      %3679 = vmatprep.mubr.bf16.mxu0 0
      %3680 = vmatmul.mubr.bf16.gmra.mxu0 %v1682
      %v3681 = vpop.f32.mrf.mxu0
      %v3682 = vadd.f32 0.0, %v3681
      %v3683 = vpop.f32.mrf.mxu0
      %v3684 = vpop.f32.mrf.mxu0
      %v3685 = vadd.f32 0.0, %v3684
      %v3686 = vpop.f32.mrf.mxu0
      %3687 = vmatprep.mubr.bf16.mxu0 0
      %3688 = vmatmul.mubr.bf16.gmra.mxu0 %v1685
      %v3689 = vpop.f32.mrf.mxu0
      %v3690 = vadd.f32 0.0, %v3689
      %v3691 = vpop.f32.mrf.mxu0
      %v3692 = vpop.f32.mrf.mxu0
      %v3693 = vadd.f32 0.0, %v3692
      %v3694 = vpop.f32.mrf.mxu0
      %3695 = vmatprep.mubr.bf16.mxu0 0
      %3696 = vmatmul.mubr.bf16.gmra.mxu0 %v3570
      %v3697 = vpop.f32.mrf.mxu0
      %v3698 = vadd.f32 0.0, %v3697
      %v3699 = vpop.f32.mrf.mxu0
      %v3700 = vpop.f32.mrf.mxu0
      %v3701 = vadd.f32 0.0, %v3700
      %v3702 = vpop.f32.mrf.mxu0
      %3703 = vmatprep.mubr.bf16.mxu0 0
      %3704 = vmatmul.mubr.bf16.gmra.mxu0 %v1691
      %v3705 = vpop.f32.mrf.mxu0
      %v3706 = vadd.f32 0.0, %v3705
      %v3707 = vpop.f32.mrf.mxu0
      %v3708 = vpop.f32.mrf.mxu0
      %v3709 = vadd.f32 0.0, %v3708
      %v3710 = vpop.f32.mrf.mxu0
      %3711 = vmatprep.mubr.bf16.mxu0 0
      %3712 = vmatmul.mubr.bf16.gmra.mxu0 %v1694
      %v3713 = vpop.f32.mrf.mxu0
      %v3714 = vadd.f32 0.0, %v3713
      %v3715 = vpop.f32.mrf.mxu0
      %v3716 = vpop.f32.mrf.mxu0
      %v3717 = vadd.f32 0.0, %v3716
      %v3718 = vpop.f32.mrf.mxu0
      %3719 = vmatprep.mubr.bf16.mxu0 0
      %3720 = vmatmul.mubr.bf16.gmra.mxu0 %v1697
      %v3721 = vpop.f32.mrf.mxu0
      %v3722 = vadd.f32 0.0, %v3721
      %v3723 = vpop.f32.mrf.mxu0
      %v3724 = vpop.f32.mrf.mxu0
      %v3725 = vadd.f32 0.0, %v3724
      %v3726 = vpop.f32.mrf.mxu0
      %3727 = vmatprep.mubr.bf16.mxu0 0
      %3728 = vmatmul.mubr.bf16.gmra.mxu0 %v3573
      %v3729 = vpop.f32.mrf.mxu0
      %v3730 = vadd.f32 0.0, %v3729
      %v3731 = vpop.f32.mrf.mxu0
      %v3732 = vpop.f32.mrf.mxu0
      %v3733 = vadd.f32 0.0, %v3732
      %v3734 = vpop.f32.mrf.mxu0
      %3735 = vdwg.mxu0
      %v3736 = vadd.f32 %v3454, %v3610
      %v3737 = vadd.f32 %v3455, %v3613
      %v3738 = vadd.f32 %v3456, %v3618
      %v3739 = vadd.f32 %v3457, %v3621
      %v3740 = vadd.f32 %v3458, %v3626
      %v3741 = vadd.f32 %v3459, %v3629
      %v3742 = vadd.f32 %v3460, %v3634
      %v3743 = vadd.f32 %v3461, %v3637
      %v3744 = vadd.f32 %v3462, %v3642
      %v3745 = vadd.f32 %v3463, %v3645
      %v3746 = vadd.f32 %v3464, %v3650
      %v3747 = vadd.f32 %v3465, %v3653
      %v3748 = vadd.f32 %v3466, %v3658
      %v3749 = vadd.f32 %v3467, %v3661
      %v3750 = vadd.f32 %v3468, %v3666
      %v3751 = vadd.f32 %v3469, %v3669
      %v3752 = vadd.f32 %v3470, %v3674
      %v3753 = vadd.f32 %v3471, %v3677
      %v3754 = vadd.f32 %v3472, %v3682
      %v3755 = vadd.f32 %v3473, %v3685
      %v3756 = vadd.f32 %v3474, %v3690
      %v3757 = vadd.f32 %v3475, %v3693
      %v3758 = vadd.f32 %v3476, %v3698
      %v3759 = vadd.f32 %v3477, %v3701
      %v3760 = vadd.f32 %v3478, %v3706
      %v3761 = vadd.f32 %v3479, %v3709
      %v3762 = vadd.f32 %v3480, %v3714
      %v3763 = vadd.f32 %v3481, %v3717
      %v3764 = vadd.f32 %v3482, %v3722
      %v3765 = vadd.f32 %v3483, %v3725
      %v3766 = vadd.f32 %v3484, %v3730
      %v3767 = vadd.f32 %v3485, %v3733
      %v3768 = vld [vmem:[%s2] sm:$0x1]
      %v3770 = vlaneseq
      %v3771 = vshrl.u32 %v3770, 7
      %v3772 = vsub.s32 0, %v3771
      %v3773 = vrot.slane %v3768, %v3772
      %v3775 = vadd.f32 %v3736, %v3773
      %v3776 = vadd.f32 %v3737, %v3773
      %v3777 = vadd.f32 %v3738, %v3773
      %v3778 = vadd.f32 %v3739, %v3773
      %v3779 = vadd.f32 %v3740, %v3773
      %v3780 = vadd.f32 %v3741, %v3773
      %v3781 = vadd.f32 %v3742, %v3773
      %v3782 = vadd.f32 %v3743, %v3773
      %v3783 = vadd.f32 %v3744, %v3773
      %v3784 = vadd.f32 %v3745, %v3773
      %v3785 = vadd.f32 %v3746, %v3773
      %v3786 = vadd.f32 %v3747, %v3773
      %v3787 = vadd.f32 %v3748, %v3773
      %v3788 = vadd.f32 %v3749, %v3773
      %v3789 = vadd.f32 %v3750, %v3773
      %v3790 = vadd.f32 %v3751, %v3773
      %v3791 = vadd.f32 %v3752, %v3773
      %v3792 = vadd.f32 %v3753, %v3773
      %v3793 = vadd.f32 %v3754, %v3773
      %v3794 = vadd.f32 %v3755, %v3773
      %v3795 = vadd.f32 %v3756, %v3773
      %v3796 = vadd.f32 %v3757, %v3773
      %v3797 = vadd.f32 %v3758, %v3773
      %v3798 = vadd.f32 %v3759, %v3773
      %v3799 = vadd.f32 %v3760, %v3773
      %v3800 = vadd.f32 %v3761, %v3773
      %v3801 = vadd.f32 %v3762, %v3773
      %v3802 = vadd.f32 %v3763, %v3773
      %v3803 = vadd.f32 %v3764, %v3773
      %v3804 = vadd.f32 %v3765, %v3773
      %v3805 = vadd.f32 %v3766, %v3773
      %v3806 = vadd.f32 %v3767, %v3773
      %v3807 = vmax.f32 %v3775, 0.0
      %v3808 = vmax.f32 %v3776, 0.0
      %v3809 = vmax.f32 %v3777, 0.0
      %v3810 = vmax.f32 %v3778, 0.0
      %v3811 = vmax.f32 %v3779, 0.0
      %v3812 = vmax.f32 %v3780, 0.0
      %v3813 = vmax.f32 %v3781, 0.0
      %v3814 = vmax.f32 %v3782, 0.0
      %v3815 = vmax.f32 %v3783, 0.0
      %v3816 = vmax.f32 %v3784, 0.0
      %v3817 = vmax.f32 %v3785, 0.0
      %v3818 = vmax.f32 %v3786, 0.0
      %v3819 = vmax.f32 %v3787, 0.0
      %v3820 = vmax.f32 %v3788, 0.0
      %v3821 = vmax.f32 %v3789, 0.0
      %v3822 = vmax.f32 %v3790, 0.0
      %v3823 = vmax.f32 %v3791, 0.0
      %v3824 = vmax.f32 %v3792, 0.0
      %v3825 = vmax.f32 %v3793, 0.0
      %v3826 = vmax.f32 %v3794, 0.0
      %v3827 = vmax.f32 %v3795, 0.0
      %v3828 = vmax.f32 %v3796, 0.0
      %v3829 = vmax.f32 %v3797, 0.0
      %v3830 = vmax.f32 %v3798, 0.0
      %v3831 = vmax.f32 %v3799, 0.0
      %v3832 = vmax.f32 %v3800, 0.0
      %v3833 = vmax.f32 %v3801, 0.0
      %v3834 = vmax.f32 %v3802, 0.0
      %v3835 = vmax.f32 %v3803, 0.0
      %v3836 = vmax.f32 %v3804, 0.0
      %v3837 = vmax.f32 %v3805, 0.0
      %v3838 = vmax.f32 %v3806, 0.0
      %v3839 = vpack.c.bf16 %v3807, %v3807
      %v3840 = vpack.c.bf16 %v3808, %v3808
      %v3841 = vpack.c.bf16 %v3809, %v3809
      %v3842 = vpack.c.bf16 %v3810, %v3810
      %v3843 = vpack.c.bf16 %v3811, %v3811
      %v3844 = vpack.c.bf16 %v3812, %v3812
      %v3845 = vpack.c.bf16 %v3813, %v3813
      %v3846 = vpack.c.bf16 %v3814, %v3814
      %v3847 = vpack.c.bf16 %v3815, %v3815
      %v3848 = vpack.c.bf16 %v3816, %v3816
      %v3849 = vpack.c.bf16 %v3817, %v3817
      %v3850 = vpack.c.bf16 %v3818, %v3818
      %v3851 = vpack.c.bf16 %v3819, %v3819
      %v3852 = vpack.c.bf16 %v3820, %v3820
      %v3853 = vpack.c.bf16 %v3821, %v3821
      %v3854 = vpack.c.bf16 %v3822, %v3822
      %v3855 = vpack.c.bf16 %v3823, %v3823
      %v3856 = vpack.c.bf16 %v3824, %v3824
      %v3857 = vpack.c.bf16 %v3825, %v3825
      %v3858 = vpack.c.bf16 %v3826, %v3826
      %v3859 = vpack.c.bf16 %v3827, %v3827
      %v3860 = vpack.c.bf16 %v3828, %v3828
      %v3861 = vpack.c.bf16 %v3829, %v3829
      %v3862 = vpack.c.bf16 %v3830, %v3830
      %v3863 = vpack.c.bf16 %v3831, %v3831
      %v3864 = vpack.c.bf16 %v3832, %v3832
      %v3865 = vpack.c.bf16 %v3833, %v3833
      %v3866 = vpack.c.bf16 %v3834, %v3834
      %v3867 = vpack.c.bf16 %v3835, %v3835
      %v3868 = vpack.c.bf16 %v3836, %v3836
      %v3869 = vpack.c.bf16 %v3837, %v3837
      %v3870 = vpack.c.bf16 %v3838, %v3838
      %3871 = vst [vmem:[%s213] sm:$0xf] %v3839
      %3872 = vst [vmem:[%s213 + $0x4] sm:$0xf] %v3840
      %3873 = vst [vmem:[%s213 + $0x8] sm:$0xf] %v3841
      %3874 = vst [vmem:[%s213 + $0xc] sm:$0xf] %v3842
      %3875 = vst [vmem:[%s213 + $0x10] sm:$0xf] %v3843
      %3876 = vst [vmem:[%s213 + $0x14] sm:$0xf] %v3844
      %3877 = vst [vmem:[%s213 + $0x18] sm:$0xf] %v3845
      %3878 = vst [vmem:[%s213 + $0x1c] sm:$0xf] %v3846
      %3879 = vst [vmem:[%s213 + $0x20] sm:$0xf] %v3847
      %3880 = vst [vmem:[%s213 + $0x24] sm:$0xf] %v3848
      %3881 = vst [vmem:[%s213 + $0x28] sm:$0xf] %v3849
      %3882 = vst [vmem:[%s213 + $0x2c] sm:$0xf] %v3850
      %3883 = vst [vmem:[%s213 + $0x30] sm:$0xf] %v3851
      %3884 = vst [vmem:[%s213 + $0x34] sm:$0xf] %v3852
      %3885 = vst [vmem:[%s213 + $0x38] sm:$0xf] %v3853
      %3886 = vst [vmem:[%s213 + $0x3c] sm:$0xf] %v3854
      %3887 = vst [vmem:[%s213 + $0x40] sm:$0xf] %v3855
      %3888 = vst [vmem:[%s213 + $0x44] sm:$0xf] %v3856
      %3889 = vst [vmem:[%s213 + $0x48] sm:$0xf] %v3857
      %3890 = vst [vmem:[%s213 + $0x4c] sm:$0xf] %v3858
      %3891 = vst [vmem:[%s213 + $0x50] sm:$0xf] %v3859
      %3892 = vst [vmem:[%s213 + $0x54] sm:$0xf] %v3860
      %3893 = vst [vmem:[%s213 + $0x58] sm:$0xf] %v3861
      %3894 = vst [vmem:[%s213 + $0x5c] sm:$0xf] %v3862
      %3895 = vst [vmem:[%s213 + $0x60] sm:$0xf] %v3863
      %3896 = vst [vmem:[%s213 + $0x64] sm:$0xf] %v3864
      %3897 = vst [vmem:[%s213 + $0x68] sm:$0xf] %v3865
      %3898 = vst [vmem:[%s213 + $0x6c] sm:$0xf] %v3866
      %3899 = vst [vmem:[%s213 + $0x70] sm:$0xf] %v3867
      %3900 = vst [vmem:[%s213 + $0x74] sm:$0xf] %v3868
      %3901 = vst [vmem:[%s213 + $0x78] sm:$0xf] %v3869
      %3902 = vst [vmem:[%s213 + $0x7c] sm:$0xf] %v3870
      %s3903 = smul.u32 4, %s19
      %p3904 = scmp.lt.s32.totalorder %s18, 1
      %s3905 = scalar_select %p3904, %s18, 1
      %p3906 = scmp.lt.s32.totalorder %s3903, 3
      %s3907 = scalar_select %p3906, %s3903, 3
      %s3908 = smul.addr %s3907, 8
      %s3909 = smul.addr %s3905, 32
      %s3910 = sadd.s32 %s3908, %s3909
      %s3911 = smul.addr %s3910, 4
      %s3912 = scalar_lea.vmem %s3, %s3911
      // Predicated region
      $region33: #{mixed_3b_forward.7} parent=31 // pred_check
        %p3913 = pneg %p116
      $region34: #{mixed_3b_forward.7} parent=31 // pred_check_branch
        %3915 = sbr.rel (%p3913) target = $region36
      $region35: #{mixed_3b_forward.7} parent=31 // pred_region
        %s3916 = smul.u32 4, %s19
      $region36: #{mixed_3b_forward.7} parent=31 // pred_fallthru
        _
    $region32: #{mixed_3b_forward.7} parent=5 // pred_fallthru
      _
    %p3917 = scmp.le.s32.totalorder 2, %s9
    // Predicated region
    $region37: #{mixed_3b_forward.7} parent=5 // pred_check
      %p3918 = pneg %p3917
    $region38: #{mixed_3b_forward.7} parent=5 // pred_check_branch
      %3920 = sbr.rel (%p3918) target = $region40
    $region39: #{mixed_3b_forward.7} parent=5 // pred_region
      %s3921 = ssub.s32 %s9, 2
      // Predicated region
      $region41: #{mixed_3b_forward.7} parent=39 // pred_check
        %p3922 = pneg %p122
      $region42: #{mixed_3b_forward.7} parent=39 // pred_check_branch
        %3924 = sbr.rel (%p3922) target = $region44
      $region43: #{mixed_3b_forward.7} parent=39 // pred_region
        %s3925 = smul.u32 4, %s21
        %p3926 = scmp.lt.s32.totalorder %s20, 1
        %s3927 = scalar_select %p3926, %s20, 1
        %p3928 = scmp.lt.s32.totalorder %s3925, 3
        %s3929 = scalar_select %p3928, %s3925, 3
        %s3930 = smul.addr %s3929, 8
        %s3931 = smul.addr %s3927, 32
        %s3932 = sadd.s32 %s3930, %s3931
        %s3933 = smul.addr %s3932, 4
        %s3934 = scalar_lea.vmem %s3, %s3933
      $region44: #{mixed_3b_forward.7} parent=39 // pred_fallthru
        _
    $region40: #{mixed_3b_forward.7} parent=5 // pred_fallthru
      _
  $region6: #{mixed_3b_forward.7} parent=0 // loop_footer
    %s13 = sadd.s32 1, %s9
  $region7: #{mixed_3b_forward.7} parent=0 // loop_footer_branch
    %8 = sbr.rel target = $region3
  $region8: #{mixed_3b_forward.7} parent=0 // loop_exit
    _

</llo_original>
